<compile_context>
chip_gen: v7x
topology: tpu7x:2x2x1
jax: 0.10.0
libtpu: 0.0.40
codegen_flags: <defaults>
</compile_context>

<pallas_src>
import functools

import numpy as np
import jax
import jax.numpy as jnp
from jax.experimental import pallas as pl
from jax.experimental.pallas import tpu as pltpu


# ----------------------------------------------------------------------------
# Fused Pallas kernel (one grid step = `imgs` images, everything in VMEM)
# ----------------------------------------------------------------------------
def _fcn_kernel(x1_ref, xres_ref, w1_ref, aff1_ref, pm_ref, w2_ref,
                aff2_ref, rw_ref, out_ref, res_ref, *, conv2_taps):
    imgs = out_ref.shape[0]          # images in this grid step
    n_p1 = pm_ref.shape[1]           # conv1 output pixels per image (H1*W1)
    n_p2 = pm_ref.shape[0] // 9      # pooled pixels per image (H2*W2)
    c2 = w2_ref.shape[1] // 9        # conv2 output channels (64)
    cin = xres_ref.shape[1]          # input channels (3)
    hi = jax.lax.Precision.HIGHEST   # scoped per-dot (no global precision flag)

    pm = pm_ref[...]                 # (9*n_p2, n_p1) 0/1 pool-gather matrix
    w2 = w2_ref[...]                 # (32, 9*c2) tap-concatenated conv2 weights
    s2, b2 = aff2_ref[0:1, :], aff2_ref[1:2, :]
    rw = rw_ref[...]                 # (5, cin+1) folded residual affine

    # ---- conv1 + bn1 + relu for ALL images of this step: ONE MXU dot --------
    y1 = jnp.dot(x1_ref[...], w1_ref[...],
                 preferred_element_type=jnp.float32, precision=hi)
    y1 = jnp.maximum(y1 * aff1_ref[0:1, :] + aff1_ref[1:2, :], 0.0)

    for img in range(imgs):
        y1_i = y1[img * n_p1:(img + 1) * n_p1, :]          # aligned (n_p1, 32)

        # ---- maxpool 3x3/s2/p1: ONE 0/1-gather dot + 8 VPU maxes ------------
        # Padding taps gather 0 which is exact ONLY because y1 >= 0 (post-ReLU)
        # and every window has >= 1 valid element.  Keep fusion order intact.
        taps = jnp.dot(pm, y1_i,
                       preferred_element_type=jnp.float32, precision=hi)
        y2 = taps[0:n_p2, :]
        for t in range(1, 9):
            y2 = jnp.maximum(y2, taps[t * n_p2:(t + 1) * n_p2, :])   # (n_p2, 32)

        # ---- conv2 + bn2: ONE (n_p2,32)@(32,9*c2) dot + VPU tap-sum assembly
        # conv2_taps is a trace-time constant table of (tap, source-pixel)
        # pairs per output pixel (padding taps skipped -> exact zero padding).
        z = jnp.dot(y2, w2,
                    preferred_element_type=jnp.float32, precision=hi)  # (n_p2, 9*c2)
        rows = []
        for taps_p in conv2_taps:
            acc = None
            for (t, src) in taps_p:
                piece = z[src:src + 1, t * c2:(t + 1) * c2]            # (1, c2)
                acc = piece if acc is None else acc + piece
            rows.append(acc)
        out_flat = jnp.concatenate(rows, axis=1)    # (1, H3*W3*c2) lane-dense
        out_ref[img] = out_flat * s2 + b2

        # ---- residual: 1x1 conv (+bias) + bn, channels-first, pure VPU ------
        # K = cin = 3 is far too small for the MXU; 3 broadcast-FMAs on
        # (5, H*W) with H*W lanes.  rw = [scale-folded weights | folded shift].
        xr = xres_ref[img]                                  # (cin, H*W)
        r = rw[:, cin:cin + 1]                              # (5, 1) shift
        for ci in range(cin):
            r = r + rw[:, ci:ci + 1] * xr[ci:ci + 1, :]     # -> (5, H*W)
        res_ref[img] = r


# ----------------------------------------------------------------------------
# Trace-time helpers (tiny numpy / python)
# ----------------------------------------------------------------------------
def _out_sz(n):                      # k=3, s=2, p=1
    return (n - 1) // 2 + 1


def _pool_gather(H1, W1, H2, W2):
    """(9*H2*W2, H1*W1) 0/1 matrix: row t*H2*W2 + p selects pool tap t of
    output pixel p from the flattened conv1 output (zero row for padding)."""
    m = np.zeros((9 * H2 * W2, H1 * W1), np.float32)
    for dh in range(3):
        for dw in range(3):
            t = dh * 3 + dw
            for u in range(H2):
                for v in range(W2):
                    iy, jy = 2 * u - 1 + dh, 2 * v - 1 + dw
                    if 0 <= iy < H1 and 0 <= jy < W1:
                        m[t * H2 * W2 + u * W2 + v, iy * W1 + jy] = 1.0
    return m


def _conv2_taps(H2, W2, H3, W3):
    """Per conv2 output pixel: tuple of (tap index, source pixel) for the
    in-bounds taps (padding taps omitted)."""
    taps = []
    for s in range(H3):
        for q in range(W3):
            lst = []
            for kh in range(3):
                for kw in range(3):
                    iy, jy = 2 * s - 1 + kh, 2 * q - 1 + kw
                    if 0 <= iy < H2 and 0 <= jy < W2:
                        lst.append((kh * 3 + kw, iy * W2 + jy))
            taps.append(tuple(lst))
    return tuple(taps)


def _bn_fold(gamma, beta, mean, var, eps=1e-5):
    scale = gamma / jnp.sqrt(var + eps)
    return scale, beta - mean * scale


def _preferred_num_steps(batch):
    """1 folded step on single-TC chips (v5e/v6e); a 2-wide 'parallel' grid on
    2-core parts (v7x, v3/v4 megacore) so both TensorCores get work."""
    if batch < 2 or batch % 2:
        return 1
    try:
        kind = jax.devices()[0].device_kind.lower()
    except Exception:
        return 1
    return 2 if any(v in kind for v in ("v7", "v4", "v3")) else 1


# ----------------------------------------------------------------------------
# FCN forward
# ----------------------------------------------------------------------------
def fcn_forward(x_nchw, params, num_steps=None):
    B, cin, H, W = x_nchw.shape
    H1, W1 = _out_sz(H), _out_sz(W)          # after conv1 (k3, s2, p1)
    H2, W2 = _out_sz(H1), _out_sz(W1)        # after maxpool (k3, s2, p1)
    H3, W3 = _out_sz(H2), _out_sz(W2)        # after conv2 (k3, s2, p1)
    n_p1, n_p2, n_p3 = H1 * W1, H2 * W2, H3 * W3
    c2 = params["conv2_w"].shape[0]          # 64

    steps = num_steps or _preferred_num_steps(B)
    if B % steps:
        steps = 1
    imgs = B // steps

    # --- conv1 im2col, built in the wrapper (tap-major, channel-minor) -------
    x_nhwc = jnp.transpose(x_nchw, (0, 2, 3, 1))
    xpad = jnp.pad(x_nhwc, ((0, 0), (1, 1), (1, 1), (0, 0)))
    patches = [xpad[:, kh:kh + 2 * H1:2, kw:kw + 2 * W1:2, :]
               for kh in range(3) for kw in range(3)]
    x1 = jnp.concatenate(patches, axis=-1).reshape(B * n_p1, 9 * cin)

    # --- residual-branch input: channels-first, spatial flattened (lane-dense)
    xres = x_nchw.reshape(B, cin, H * W)

    # --- tap-concatenated weights + folded BN affines -------------------------
    w1 = jnp.transpose(params["conv1_w"], (2, 3, 1, 0)).reshape(9 * cin, 32)
    w2 = jnp.transpose(params["conv2_w"], (1, 2, 3, 0)).reshape(32, 9 * c2)
    s1, b1 = _bn_fold(*params["bn1"])
    aff1 = jnp.stack([s1, b1])                                   # (2, 32)
    s2, b2 = _bn_fold(*params["bn2"])
    aff2 = jnp.stack([jnp.tile(s2, n_p3), jnp.tile(b2, n_p3)])   # (2, n_p3*c2)
    sd, bd0 = _bn_fold(*params["ds_bn"])
    a_res = sd[:, None] * params["ds_w"].reshape(5, cin)         # scale-folded W
    c_res = params["ds_b"] * sd + bd0                            # bias folded in
    rw = jnp.concatenate([a_res, c_res[:, None]], axis=1)        # (5, cin+1)

    pm = jnp.asarray(_pool_gather(H1, W1, H2, W2))               # (9*n_p2, n_p1)
    conv2_taps = _conv2_taps(H2, W2, H3, W3)

    step2 = lambda s: (s, 0)
    step3 = lambda s: (s, 0, 0)
    const2 = lambda s: (0, 0)

    out_flat, res = pl.pallas_call(
        functools.partial(_fcn_kernel, conv2_taps=conv2_taps),
        out_shape=(
            jax.ShapeDtypeStruct((B, 1, n_p3 * c2), jnp.float32),  # lane-dense
            jax.ShapeDtypeStruct((B, 5, H * W), jnp.float32),
        ),
        grid=(steps,),
        in_specs=[
            pl.BlockSpec((imgs * n_p1, 9 * cin), step2),   # conv1 im2col rows
            pl.BlockSpec((imgs, cin, H * W), step3),       # residual input
            pl.BlockSpec((9 * cin, 32), const2),           # conv1 weights
            pl.BlockSpec((2, 32), const2),                 # bn1 scale/shift
            pl.BlockSpec((9 * n_p2, n_p1), const2),        # pool gather matrix
            pl.BlockSpec((32, 9 * c2), const2),            # conv2 tap-cat weights
            pl.BlockSpec((2, n_p3 * c2), const2),          # bn2 scale/shift (tiled)
            pl.BlockSpec((5, cin + 1), const2),            # residual affine
        ],
        out_specs=(
            pl.BlockSpec((imgs, 1, n_p3 * c2), step3),
            pl.BlockSpec((imgs, 5, H * W), step3),
        ),
        compiler_params=pltpu.CompilerParams(
            dimension_semantics=("parallel",)),
    )(x1, xres, w1, aff1, pm, w2, aff2, rw)

    out_nchw = jnp.transpose(out_flat.reshape(B, H3, W3, c2), (0, 3, 1, 2))
    res_nchw = res.reshape(B, 5, H, W)
    # TODO(synk): the reference PyTorch `out += residual` is ill-formed for all
    # inputs (shapes (B,64,H/8,W/8) vs (B,5,H,W) never broadcast and would
    # raise in PyTorch), so the add is skipped and both branches are returned.
    return out_nchw, res_nchw


# ----------------------------------------------------------------------------
# Pure-JAX reference (correctness check only; precision scoped per conv)
# ----------------------------------------------------------------------------
def reference(x, params):
    def conv(x, w, stride, pad):
        return jax.lax.conv_general_dilated(
            x, w, (stride, stride), [(pad, pad), (pad, pad)],
            dimension_numbers=("NCHW", "OIHW", "NCHW"),
            precision=jax.lax.Precision.HIGHEST)

    def bn(x, gamma, beta, mean, var, eps=1e-5):
        r = lambda a: a.reshape(1, -1, 1, 1)
        return (x - r(mean)) / jnp.sqrt(r(var) + eps) * r(gamma) + r(beta)

    out = conv(x, params["conv1_w"], 2, 1)
    out = jnp.maximum(bn(out, *params["bn1"]), 0.0)
    out = jax.lax.reduce_window(out, -jnp.inf, jax.lax.max,
                                (1, 1, 3, 3), (1, 1, 2, 2),
                                [(0, 0), (0, 0), (1, 1), (1, 1)])
    out = conv(out, params["conv2_w"], 2, 1)
    out = bn(out, *params["bn2"])
    res = conv(x, params["ds_w"], 1, 0) + params["ds_b"].reshape(1, -1, 1, 1)
    res = bn(res, *params["ds_bn"])
    return out, res


# ----------------------------------------------------------------------------
def make_params(key):
    ks = jax.random.split(key, 16)
    nrm = lambda k, s, sc=0.1: (jax.random.normal(k, s, jnp.float32) * sc)
    bn_params = lambda k0, k1, k2, k3, c: (
        1.0 + nrm(k0, (c,)),                                   # gamma
        nrm(k1, (c,)),                                         # beta
        nrm(k2, (c,)),                                         # running_mean
        jax.random.uniform(k3, (c,), jnp.float32, 0.5, 1.5),   # running_var
    )
    return {
        "conv1_w": nrm(ks[0], (32, 3, 3, 3)),
        "bn1": bn_params(ks[1], ks[2], ks[3], ks[4], 32),
        "conv2_w": nrm(ks[5], (64, 32, 3, 3)),
        "bn2": bn_params(ks[6], ks[7], ks[8], ks[9], 64),
        "ds_w": nrm(ks[10], (5, 3, 1, 1)),
        "ds_b": nrm(ks[11], (5,)),
        "ds_bn": bn_params(ks[12], ks[13], ks[14], ks[15], 5),
    }


if __name__ == "__main__":
    key = jax.random.PRNGKey(0)
    kp, kx = jax.random.split(key)
    params = make_params(kp)
    x = jax.random.normal(kx, (2, 3, 16, 16), jnp.float32)

    out, res = jax.jit(lambda xx: fcn_forward(xx, params))(x)
    out = jax.block_until_ready(out)
    res = jax.block_until_ready(res)

    ref_out, ref_res = reference(x, params)
    assert out.shape == (2, 64, 2, 2) and res.shape == (2, 5, 16, 16)
    assert jnp.allclose(out, ref_out, atol=2e-2, rtol=2e-2), "conv branch mismatch"
    assert jnp.allclose(res, ref_res, atol=2e-2, rtol=2e-2), "residual branch mismatch"

    print("KERNEL_OK")
</pallas_src>

<mosaic_0001>
module attributes {stable_mosaic.version = 11 : i64} {
  func.func @_fcn_kernel(%arg0: i32, %arg1: memref<128x27xf32, #tpu.memory_space<vmem>>, %arg2: memref<2x3x256xf32, #tpu.memory_space<vmem>>, %arg3: memref<27x32xf32, #tpu.memory_space<vmem>>, %arg4: memref<2x32xf32, #tpu.memory_space<vmem>>, %arg5: memref<144x64xf32, #tpu.memory_space<vmem>>, %arg6: memref<32x576xf32, #tpu.memory_space<vmem>>, %arg7: memref<2x256xf32, #tpu.memory_space<vmem>>, %arg8: memref<5x4xf32, #tpu.memory_space<vmem>>, %arg9: memref<2x1x256xf32, #tpu.memory_space<vmem>>, %arg10: memref<2x5x256xf32, #tpu.memory_space<vmem>>) attributes {dimension_semantics = [#tpu.dimension_semantics<parallel>], iteration_bounds = array<i64: 1>, scalar_prefetch = 0 : i64, scratch_operands = 0 : i64, tpu.core_type = #tpu.core_type<tc>, window_params = [{transform_indices = @transform_0, window_bounds = array<i64: 128, 27>}, {transform_indices = @transform_1, window_bounds = array<i64: 2, 3, 256>}, {pipeline_mode = #tpu.pipeline_mode<synchronous>, transform_indices = @transform_2, window_bounds = array<i64: 27, 32>}, {pipeline_mode = #tpu.pipeline_mode<synchronous>, transform_indices = @transform_3, window_bounds = array<i64: 2, 32>}, {pipeline_mode = #tpu.pipeline_mode<synchronous>, transform_indices = @transform_4, window_bounds = array<i64: 144, 64>}, {pipeline_mode = #tpu.pipeline_mode<synchronous>, transform_indices = @transform_5, window_bounds = array<i64: 32, 576>}, {pipeline_mode = #tpu.pipeline_mode<synchronous>, transform_indices = @transform_6, window_bounds = array<i64: 2, 256>}, {pipeline_mode = #tpu.pipeline_mode<synchronous>, transform_indices = @transform_7, window_bounds = array<i64: 5, 4>}, {transform_indices = @transform_8, window_bounds = array<i64: 2, 1, 256>}, {transform_indices = @transform_9, window_bounds = array<i64: 2, 5, 256>}]} {
    %c0 = arith.constant 0 : index
    %c0_0 = arith.constant 0 : index
    %0 = vector.load %arg5[%c0, %c0_0] : memref<144x64xf32, #tpu.memory_space<vmem>>, vector<144x64xf32>
    %c0_1 = arith.constant 0 : index
    %c0_2 = arith.constant 0 : index
    %1 = vector.load %arg6[%c0_1, %c0_2] : memref<32x576xf32, #tpu.memory_space<vmem>>, vector<32x576xf32>
    %c0_3 = arith.constant 0 : index
    %c0_4 = arith.constant 0 : index
    %2 = vector.load %arg7[%c0_3, %c0_4] : memref<2x256xf32, #tpu.memory_space<vmem>>, vector<1x256xf32>
    %c1 = arith.constant 1 : index
    %c0_5 = arith.constant 0 : index
    %3 = vector.load %arg7[%c1, %c0_5] : memref<2x256xf32, #tpu.memory_space<vmem>>, vector<1x256xf32>
    %c0_6 = arith.constant 0 : index
    %c0_7 = arith.constant 0 : index
    %4 = vector.load %arg8[%c0_6, %c0_7] : memref<5x4xf32, #tpu.memory_space<vmem>>, vector<5x4xf32>
    %c0_8 = arith.constant 0 : index
    %c0_9 = arith.constant 0 : index
    %5 = vector.load %arg1[%c0_8, %c0_9] : memref<128x27xf32, #tpu.memory_space<vmem>>, vector<128x27xf32>
    %c0_10 = arith.constant 0 : index
    %c0_11 = arith.constant 0 : index
    %6 = vector.load %arg3[%c0_10, %c0_11] : memref<27x32xf32, #tpu.memory_space<vmem>>, vector<27x32xf32>
    %cst = arith.constant dense<0.000000e+00> : vector<128x32xf32>
    %7 = tpu.matmul %5, %6, %cst {dimension_numbers = #tpu.dot_dimension_numbers<[1], [0], [0], [1], [0, 0, 1, 1], [], []>, precision = #tpu.contract_precision<fp32>} : vector<128x27xf32>, vector<27x32xf32>, vector<128x32xf32> -> vector<128x32xf32>
    %c0_12 = arith.constant 0 : index
    %c0_13 = arith.constant 0 : index
    %8 = vector.load %arg4[%c0_12, %c0_13] : memref<2x32xf32, #tpu.memory_space<vmem>>, vector<1x32xf32>
    %9 = vector.broadcast %8 : vector<1x32xf32> to vector<128x32xf32>
    %10 = arith.mulf %7, %9 : vector<128x32xf32>
    %c1_14 = arith.constant 1 : index
    %c0_15 = arith.constant 0 : index
    %11 = vector.load %arg4[%c1_14, %c0_15] : memref<2x32xf32, #tpu.memory_space<vmem>>, vector<1x32xf32>
    %12 = vector.broadcast %11 : vector<1x32xf32> to vector<128x32xf32>
    %13 = arith.addf %10, %12 : vector<128x32xf32>
    %cst_16 = arith.constant 0.000000e+00 : f32
    %14 = vector.broadcast %cst_16 : f32 to vector<128x32xf32>
    %15 = arith.maximumf %13, %14 : vector<128x32xf32>
    %16 = vector.extract_strided_slice %15 {offsets = [0, 0], sizes = [64, 32], strides = [1, 1]} : vector<128x32xf32> to vector<64x32xf32>
    %cst_17 = arith.constant dense<0.000000e+00> : vector<144x32xf32>
    %17 = tpu.matmul %0, %16, %cst_17 {dimension_numbers = #tpu.dot_dimension_numbers<[1], [0], [0], [1], [0, 0, 1, 1], [], []>, precision = #tpu.contract_precision<fp32>} : vector<144x64xf32>, vector<64x32xf32>, vector<144x32xf32> -> vector<144x32xf32>
    %18 = vector.extract_strided_slice %17 {offsets = [0, 0], sizes = [16, 32], strides = [1, 1]} : vector<144x32xf32> to vector<16x32xf32>
    %19 = vector.extract_strided_slice %17 {offsets = [16, 0], sizes = [16, 32], strides = [1, 1]} : vector<144x32xf32> to vector<16x32xf32>
    %20 = arith.maximumf %18, %19 : vector<16x32xf32>
    %21 = vector.extract_strided_slice %17 {offsets = [32, 0], sizes = [16, 32], strides = [1, 1]} : vector<144x32xf32> to vector<16x32xf32>
    %22 = arith.maximumf %20, %21 : vector<16x32xf32>
    %23 = vector.extract_strided_slice %17 {offsets = [48, 0], sizes = [16, 32], strides = [1, 1]} : vector<144x32xf32> to vector<16x32xf32>
    %24 = arith.maximumf %22, %23 : vector<16x32xf32>
    %25 = vector.extract_strided_slice %17 {offsets = [64, 0], sizes = [16, 32], strides = [1, 1]} : vector<144x32xf32> to vector<16x32xf32>
    %26 = arith.maximumf %24, %25 : vector<16x32xf32>
    %27 = vector.extract_strided_slice %17 {offsets = [80, 0], sizes = [16, 32], strides = [1, 1]} : vector<144x32xf32> to vector<16x32xf32>
    %28 = arith.maximumf %26, %27 : vector<16x32xf32>
    %29 = vector.extract_strided_slice %17 {offsets = [96, 0], sizes = [16, 32], strides = [1, 1]} : vector<144x32xf32> to vector<16x32xf32>
    %30 = arith.maximumf %28, %29 : vector<16x32xf32>
    %31 = vector.extract_strided_slice %17 {offsets = [112, 0], sizes = [16, 32], strides = [1, 1]} : vector<144x32xf32> to vector<16x32xf32>
    %32 = arith.maximumf %30, %31 : vector<16x32xf32>
    %33 = vector.extract_strided_slice %17 {offsets = [128, 0], sizes = [16, 32], strides = [1, 1]} : vector<144x32xf32> to vector<16x32xf32>
    %34 = arith.maximumf %32, %33 : vector<16x32xf32>
    %cst_18 = arith.constant dense<0.000000e+00> : vector<16x576xf32>
    %35 = tpu.matmul %34, %1, %cst_18 {dimension_numbers = #tpu.dot_dimension_numbers<[1], [0], [0], [1], [0, 0, 1, 1], [], []>, precision = #tpu.contract_precision<fp32>} : vector<16x32xf32>, vector<32x576xf32>, vector<16x576xf32> -> vector<16x576xf32>
    %36 = vector.extract_strided_slice %35 {offsets = [0, 256], sizes = [1, 64], strides = [1, 1]} : vector<16x576xf32> to vector<1x64xf32>
    %37 = vector.extract_strided_slice %35 {offsets = [1, 320], sizes = [1, 64], strides = [1, 1]} : vector<16x576xf32> to vector<1x64xf32>
    %38 = arith.addf %36, %37 : vector<1x64xf32>
    %39 = vector.extract_strided_slice %35 {offsets = [4, 448], sizes = [1, 64], strides = [1, 1]} : vector<16x576xf32> to vector<1x64xf32>
    %40 = arith.addf %38, %39 : vector<1x64xf32>
    %41 = vector.extract_strided_slice %35 {offsets = [5, 512], sizes = [1, 64], strides = [1, 1]} : vector<16x576xf32> to vector<1x64xf32>
    %42 = arith.addf %40, %41 : vector<1x64xf32>
    %43 = vector.extract_strided_slice %35 {offsets = [1, 192], sizes = [1, 64], strides = [1, 1]} : vector<16x576xf32> to vector<1x64xf32>
    %44 = vector.extract_strided_slice %35 {offsets = [2, 256], sizes = [1, 64], strides = [1, 1]} : vector<16x576xf32> to vector<1x64xf32>
    %45 = arith.addf %43, %44 : vector<1x64xf32>
    %46 = vector.extract_strided_slice %35 {offsets = [3, 320], sizes = [1, 64], strides = [1, 1]} : vector<16x576xf32> to vector<1x64xf32>
    %47 = arith.addf %45, %46 : vector<1x64xf32>
    %48 = vector.extract_strided_slice %35 {offsets = [5, 384], sizes = [1, 64], strides = [1, 1]} : vector<16x576xf32> to vector<1x64xf32>
    %49 = arith.addf %47, %48 : vector<1x64xf32>
    %50 = vector.extract_strided_slice %35 {offsets = [6, 448], sizes = [1, 64], strides = [1, 1]} : vector<16x576xf32> to vector<1x64xf32>
    %51 = arith.addf %49, %50 : vector<1x64xf32>
    %52 = vector.extract_strided_slice %35 {offsets = [7, 512], sizes = [1, 64], strides = [1, 1]} : vector<16x576xf32> to vector<1x64xf32>
    %53 = arith.addf %51, %52 : vector<1x64xf32>
    %54 = vector.extract_strided_slice %35 {offsets = [4, 64], sizes = [1, 64], strides = [1, 1]} : vector<16x576xf32> to vector<1x64xf32>
    %55 = vector.extract_strided_slice %35 {offsets = [5, 128], sizes = [1, 64], strides = [1, 1]} : vector<16x576xf32> to vector<1x64xf32>
    %56 = arith.addf %54, %55 : vector<1x64xf32>
    %57 = vector.extract_strided_slice %35 {offsets = [8, 256], sizes = [1, 64], strides = [1, 1]} : vector<16x576xf32> to vector<1x64xf32>
    %58 = arith.addf %56, %57 : vector<1x64xf32>
    %59 = vector.extract_strided_slice %35 {offsets = [9, 320], sizes = [1, 64], strides = [1, 1]} : vector<16x576xf32> to vector<1x64xf32>
    %60 = arith.addf %58, %59 : vector<1x64xf32>
    %61 = vector.extract_strided_slice %35 {offsets = [12, 448], sizes = [1, 64], strides = [1, 1]} : vector<16x576xf32> to vector<1x64xf32>
    %62 = arith.addf %60, %61 : vector<1x64xf32>
    %63 = vector.extract_strided_slice %35 {offsets = [13, 512], sizes = [1, 64], strides = [1, 1]} : vector<16x576xf32> to vector<1x64xf32>
    %64 = arith.addf %62, %63 : vector<1x64xf32>
    %65 = vector.extract_strided_slice %35 {offsets = [5, 0], sizes = [1, 64], strides = [1, 1]} : vector<16x576xf32> to vector<1x64xf32>
    %66 = vector.extract_strided_slice %35 {offsets = [6, 64], sizes = [1, 64], strides = [1, 1]} : vector<16x576xf32> to vector<1x64xf32>
    %67 = arith.addf %65, %66 : vector<1x64xf32>
    %68 = vector.extract_strided_slice %35 {offsets = [7, 128], sizes = [1, 64], strides = [1, 1]} : vector<16x576xf32> to vector<1x64xf32>
    %69 = arith.addf %67, %68 : vector<1x64xf32>
    %70 = vector.extract_strided_slice %35 {offsets = [9, 192], sizes = [1, 64], strides = [1, 1]} : vector<16x576xf32> to vector<1x64xf32>
    %71 = arith.addf %69, %70 : vector<1x64xf32>
    %72 = vector.extract_strided_slice %35 {offsets = [10, 256], sizes = [1, 64], strides = [1, 1]} : vector<16x576xf32> to vector<1x64xf32>
    %73 = arith.addf %71, %72 : vector<1x64xf32>
    %74 = vector.extract_strided_slice %35 {offsets = [11, 320], sizes = [1, 64], strides = [1, 1]} : vector<16x576xf32> to vector<1x64xf32>
    %75 = arith.addf %73, %74 : vector<1x64xf32>
    %76 = vector.extract_strided_slice %35 {offsets = [13, 384], sizes = [1, 64], strides = [1, 1]} : vector<16x576xf32> to vector<1x64xf32>
    %77 = arith.addf %75, %76 : vector<1x64xf32>
    %78 = vector.extract_strided_slice %35 {offsets = [14, 448], sizes = [1, 64], strides = [1, 1]} : vector<16x576xf32> to vector<1x64xf32>
    %79 = arith.addf %77, %78 : vector<1x64xf32>
    %80 = vector.extract_strided_slice %35 {offsets = [15, 512], sizes = [1, 64], strides = [1, 1]} : vector<16x576xf32> to vector<1x64xf32>
    %81 = arith.addf %79, %80 : vector<1x64xf32>
    %82 = tpu.concatenate %42, %53, %64, %81 in 1 : vector<1x64xf32>, vector<1x64xf32>, vector<1x64xf32>, vector<1x64xf32> -> vector<1x256xf32>
    %83 = arith.mulf %82, %2 : vector<1x256xf32>
    %84 = arith.addf %83, %3 : vector<1x256xf32>
    %c0_19 = arith.constant 0 : index
    %c0_20 = arith.constant 0 : index
    %c0_21 = arith.constant 0 : index
    %85 = vector.load %arg9[%c0_19, %c0_20, %c0_21] : memref<2x1x256xf32, #tpu.memory_space<vmem>>, vector<1x1x256xf32>
    %86 = vector.shape_cast %85 : vector<1x1x256xf32> to vector<1x256xf32>
    %87 = vector.shape_cast %84 : vector<1x256xf32> to vector<1x1x256xf32>
    tpu.vector_store %arg9[%c0_19, %c0_20, %c0_21], %87 {strides = array<i32>} : memref<2x1x256xf32, #tpu.memory_space<vmem>>, vector<1x1x256xf32>,
    %c0_22 = arith.constant 0 : index
    %c0_23 = arith.constant 0 : index
    %c0_24 = arith.constant 0 : index
    %88 = vector.load %arg2[%c0_22, %c0_23, %c0_24] : memref<2x3x256xf32, #tpu.memory_space<vmem>>, vector<1x3x256xf32>
    %89 = vector.shape_cast %88 : vector<1x3x256xf32> to vector<3x256xf32>
    %90 = vector.extract_strided_slice %4 {offsets = [0, 3], sizes = [5, 1], strides = [1, 1]} : vector<5x4xf32> to vector<5x1xf32>
    %91 = vector.extract_strided_slice %4 {offsets = [0, 0], sizes = [5, 1], strides = [1, 1]} : vector<5x4xf32> to vector<5x1xf32>
    %92 = vector.extract_strided_slice %89 {offsets = [0, 0], sizes = [1, 256], strides = [1, 1]} : vector<3x256xf32> to vector<1x256xf32>
    %93 = vector.broadcast %91 : vector<5x1xf32> to vector<5x256xf32>
    %94 = vector.broadcast %92 : vector<1x256xf32> to vector<5x256xf32>
    %95 = arith.mulf %93, %94 : vector<5x256xf32>
    %96 = vector.broadcast %90 : vector<5x1xf32> to vector<5x256xf32>
    %97 = arith.addf %96, %95 : vector<5x256xf32>
    %98 = vector.extract_strided_slice %4 {offsets = [0, 1], sizes = [5, 1], strides = [1, 1]} : vector<5x4xf32> to vector<5x1xf32>
    %99 = vector.extract_strided_slice %89 {offsets = [1, 0], sizes = [1, 256], strides = [1, 1]} : vector<3x256xf32> to vector<1x256xf32>
    %100 = vector.broadcast %98 : vector<5x1xf32> to vector<5x256xf32>
    %101 = vector.broadcast %99 : vector<1x256xf32> to vector<5x256xf32>
    %102 = arith.mulf %100, %101 : vector<5x256xf32>
    %103 = arith.addf %97, %102 : vector<5x256xf32>
    %104 = vector.extract_strided_slice %4 {offsets = [0, 2], sizes = [5, 1], strides = [1, 1]} : vector<5x4xf32> to vector<5x1xf32>
    %105 = vector.extract_strided_slice %89 {offsets = [2, 0], sizes = [1, 256], strides = [1, 1]} : vector<3x256xf32> to vector<1x256xf32>
    %106 = vector.broadcast %104 : vector<5x1xf32> to vector<5x256xf32>
    %107 = vector.broadcast %105 : vector<1x256xf32> to vector<5x256xf32>
    %108 = arith.mulf %106, %107 : vector<5x256xf32>
    %109 = arith.addf %103, %108 : vector<5x256xf32>
    %c0_25 = arith.constant 0 : index
    %c0_26 = arith.constant 0 : index
    %c0_27 = arith.constant 0 : index
    %110 = vector.load %arg10[%c0_25, %c0_26, %c0_27] : memref<2x5x256xf32, #tpu.memory_space<vmem>>, vector<1x5x256xf32>
    %111 = vector.shape_cast %110 : vector<1x5x256xf32> to vector<5x256xf32>
    %112 = vector.shape_cast %109 : vector<5x256xf32> to vector<1x5x256xf32>
    tpu.vector_store %arg10[%c0_25, %c0_26, %c0_27], %112 {strides = array<i32>} : memref<2x5x256xf32, #tpu.memory_space<vmem>>, vector<1x5x256xf32>,
    %113 = vector.extract_strided_slice %15 {offsets = [64, 0], sizes = [64, 32], strides = [1, 1]} : vector<128x32xf32> to vector<64x32xf32>
    %cst_28 = arith.constant dense<0.000000e+00> : vector<144x32xf32>
    %114 = tpu.matmul %0, %113, %cst_28 {dimension_numbers = #tpu.dot_dimension_numbers<[1], [0], [0], [1], [0, 0, 1, 1], [], []>, precision = #tpu.contract_precision<fp32>} : vector<144x64xf32>, vector<64x32xf32>, vector<144x32xf32> -> vector<144x32xf32>
    %115 = vector.extract_strided_slice %114 {offsets = [0, 0], sizes = [16, 32], strides = [1, 1]} : vector<144x32xf32> to vector<16x32xf32>
    %116 = vector.extract_strided_slice %114 {offsets = [16, 0], sizes = [16, 32], strides = [1, 1]} : vector<144x32xf32> to vector<16x32xf32>
    %117 = arith.maximumf %115, %116 : vector<16x32xf32>
    %118 = vector.extract_strided_slice %114 {offsets = [32, 0], sizes = [16, 32], strides = [1, 1]} : vector<144x32xf32> to vector<16x32xf32>
    %119 = arith.maximumf %117, %118 : vector<16x32xf32>
    %120 = vector.extract_strided_slice %114 {offsets = [48, 0], sizes = [16, 32], strides = [1, 1]} : vector<144x32xf32> to vector<16x32xf32>
    %121 = arith.maximumf %119, %120 : vector<16x32xf32>
    %122 = vector.extract_strided_slice %114 {offsets = [64, 0], sizes = [16, 32], strides = [1, 1]} : vector<144x32xf32> to vector<16x32xf32>
    %123 = arith.maximumf %121, %122 : vector<16x32xf32>
    %124 = vector.extract_strided_slice %114 {offsets = [80, 0], sizes = [16, 32], strides = [1, 1]} : vector<144x32xf32> to vector<16x32xf32>
    %125 = arith.maximumf %123, %124 : vector<16x32xf32>
    %126 = vector.extract_strided_slice %114 {offsets = [96, 0], sizes = [16, 32], strides = [1, 1]} : vector<144x32xf32> to vector<16x32xf32>
    %127 = arith.maximumf %125, %126 : vector<16x32xf32>
    %128 = vector.extract_strided_slice %114 {offsets = [112, 0], sizes = [16, 32], strides = [1, 1]} : vector<144x32xf32> to vector<16x32xf32>
    %129 = arith.maximumf %127, %128 : vector<16x32xf32>
    %130 = vector.extract_strided_slice %114 {offsets = [128, 0], sizes = [16, 32], strides = [1, 1]} : vector<144x32xf32> to vector<16x32xf32>
    %131 = arith.maximumf %129, %130 : vector<16x32xf32>
    %cst_29 = arith.constant dense<0.000000e+00> : vector<16x576xf32>
    %132 = tpu.matmul %131, %1, %cst_29 {dimension_numbers = #tpu.dot_dimension_numbers<[1], [0], [0], [1], [0, 0, 1, 1], [], []>, precision = #tpu.contract_precision<fp32>} : vector<16x32xf32>, vector<32x576xf32>, vector<16x576xf32> -> vector<16x576xf32>
    %133 = vector.extract_strided_slice %132 {offsets = [0, 256], sizes = [1, 64], strides = [1, 1]} : vector<16x576xf32> to vector<1x64xf32>
    %134 = vector.extract_strided_slice %132 {offsets = [1, 320], sizes = [1, 64], strides = [1, 1]} : vector<16x576xf32> to vector<1x64xf32>
    %135 = arith.addf %133, %134 : vector<1x64xf32>
    %136 = vector.extract_strided_slice %132 {offsets = [4, 448], sizes = [1, 64], strides = [1, 1]} : vector<16x576xf32> to vector<1x64xf32>
    %137 = arith.addf %135, %136 : vector<1x64xf32>
    %138 = vector.extract_strided_slice %132 {offsets = [5, 512], sizes = [1, 64], strides = [1, 1]} : vector<16x576xf32> to vector<1x64xf32>
    %139 = arith.addf %137, %138 : vector<1x64xf32>
    %140 = vector.extract_strided_slice %132 {offsets = [1, 192], sizes = [1, 64], strides = [1, 1]} : vector<16x576xf32> to vector<1x64xf32>
    %141 = vector.extract_strided_slice %132 {offsets = [2, 256], sizes = [1, 64], strides = [1, 1]} : vector<16x576xf32> to vector<1x64xf32>
    %142 = arith.addf %140, %141 : vector<1x64xf32>
    %143 = vector.extract_strided_slice %132 {offsets = [3, 320], sizes = [1, 64], strides = [1, 1]} : vector<16x576xf32> to vector<1x64xf32>
    %144 = arith.addf %142, %143 : vector<1x64xf32>
    %145 = vector.extract_strided_slice %132 {offsets = [5, 384], sizes = [1, 64], strides = [1, 1]} : vector<16x576xf32> to vector<1x64xf32>
    %146 = arith.addf %144, %145 : vector<1x64xf32>
    %147 = vector.extract_strided_slice %132 {offsets = [6, 448], sizes = [1, 64], strides = [1, 1]} : vector<16x576xf32> to vector<1x64xf32>
    %148 = arith.addf %146, %147 : vector<1x64xf32>
    %149 = vector.extract_strided_slice %132 {offsets = [7, 512], sizes = [1, 64], strides = [1, 1]} : vector<16x576xf32> to vector<1x64xf32>
    %150 = arith.addf %148, %149 : vector<1x64xf32>
    %151 = vector.extract_strided_slice %132 {offsets = [4, 64], sizes = [1, 64], strides = [1, 1]} : vector<16x576xf32> to vector<1x64xf32>
    %152 = vector.extract_strided_slice %132 {offsets = [5, 128], sizes = [1, 64], strides = [1, 1]} : vector<16x576xf32> to vector<1x64xf32>
    %153 = arith.addf %151, %152 : vector<1x64xf32>
    %154 = vector.extract_strided_slice %132 {offsets = [8, 256], sizes = [1, 64], strides = [1, 1]} : vector<16x576xf32> to vector<1x64xf32>
    %155 = arith.addf %153, %154 : vector<1x64xf32>
    %156 = vector.extract_strided_slice %132 {offsets = [9, 320], sizes = [1, 64], strides = [1, 1]} : vector<16x576xf32> to vector<1x64xf32>
    %157 = arith.addf %155, %156 : vector<1x64xf32>
    %158 = vector.extract_strided_slice %132 {offsets = [12, 448], sizes = [1, 64], strides = [1, 1]} : vector<16x576xf32> to vector<1x64xf32>
    %159 = arith.addf %157, %158 : vector<1x64xf32>
    %160 = vector.extract_strided_slice %132 {offsets = [13, 512], sizes = [1, 64], strides = [1, 1]} : vector<16x576xf32> to vector<1x64xf32>
    %161 = arith.addf %159, %160 : vector<1x64xf32>
    %162 = vector.extract_strided_slice %132 {offsets = [5, 0], sizes = [1, 64], strides = [1, 1]} : vector<16x576xf32> to vector<1x64xf32>
    %163 = vector.extract_strided_slice %132 {offsets = [6, 64], sizes = [1, 64], strides = [1, 1]} : vector<16x576xf32> to vector<1x64xf32>
    %164 = arith.addf %162, %163 : vector<1x64xf32>
    %165 = vector.extract_strided_slice %132 {offsets = [7, 128], sizes = [1, 64], strides = [1, 1]} : vector<16x576xf32> to vector<1x64xf32>
    %166 = arith.addf %164, %165 : vector<1x64xf32>
    %167 = vector.extract_strided_slice %132 {offsets = [9, 192], sizes = [1, 64], strides = [1, 1]} : vector<16x576xf32> to vector<1x64xf32>
    %168 = arith.addf %166, %167 : vector<1x64xf32>
    %169 = vector.extract_strided_slice %132 {offsets = [10, 256], sizes = [1, 64], strides = [1, 1]} : vector<16x576xf32> to vector<1x64xf32>
    %170 = arith.addf %168, %169 : vector<1x64xf32>
    %171 = vector.extract_strided_slice %132 {offsets = [11, 320], sizes = [1, 64], strides = [1, 1]} : vector<16x576xf32> to vector<1x64xf32>
    %172 = arith.addf %170, %171 : vector<1x64xf32>
    %173 = vector.extract_strided_slice %132 {offsets = [13, 384], sizes = [1, 64], strides = [1, 1]} : vector<16x576xf32> to vector<1x64xf32>
    %174 = arith.addf %172, %173 : vector<1x64xf32>
    %175 = vector.extract_strided_slice %132 {offsets = [14, 448], sizes = [1, 64], strides = [1, 1]} : vector<16x576xf32> to vector<1x64xf32>
    %176 = arith.addf %174, %175 : vector<1x64xf32>
    %177 = vector.extract_strided_slice %132 {offsets = [15, 512], sizes = [1, 64], strides = [1, 1]} : vector<16x576xf32> to vector<1x64xf32>
    %178 = arith.addf %176, %177 : vector<1x64xf32>
    %179 = tpu.concatenate %139, %150, %161, %178 in 1 : vector<1x64xf32>, vector<1x64xf32>, vector<1x64xf32>, vector<1x64xf32> -> vector<1x256xf32>
    %180 = arith.mulf %179, %2 : vector<1x256xf32>
    %181 = arith.addf %180, %3 : vector<1x256xf32>
    %c1_30 = arith.constant 1 : index
    %c0_31 = arith.constant 0 : index
    %c0_32 = arith.constant 0 : index
    %182 = vector.load %arg9[%c1_30, %c0_31, %c0_32] : memref<2x1x256xf32, #tpu.memory_space<vmem>>, vector<1x1x256xf32>
    %183 = vector.shape_cast %182 : vector<1x1x256xf32> to vector<1x256xf32>
    %184 = vector.shape_cast %181 : vector<1x256xf32> to vector<1x1x256xf32>
    tpu.vector_store %arg9[%c1_30, %c0_31, %c0_32], %184 {strides = array<i32>} : memref<2x1x256xf32, #tpu.memory_space<vmem>>, vector<1x1x256xf32>,
    %c1_33 = arith.constant 1 : index
    %c0_34 = arith.constant 0 : index
    %c0_35 = arith.constant 0 : index
    %185 = vector.load %arg2[%c1_33, %c0_34, %c0_35] : memref<2x3x256xf32, #tpu.memory_space<vmem>>, vector<1x3x256xf32>
    %186 = vector.shape_cast %185 : vector<1x3x256xf32> to vector<3x256xf32>
    %187 = vector.extract_strided_slice %4 {offsets = [0, 3], sizes = [5, 1], strides = [1, 1]} : vector<5x4xf32> to vector<5x1xf32>
    %188 = vector.extract_strided_slice %4 {offsets = [0, 0], sizes = [5, 1], strides = [1, 1]} : vector<5x4xf32> to vector<5x1xf32>
    %189 = vector.extract_strided_slice %186 {offsets = [0, 0], sizes = [1, 256], strides = [1, 1]} : vector<3x256xf32> to vector<1x256xf32>
    %190 = vector.broadcast %188 : vector<5x1xf32> to vector<5x256xf32>
    %191 = vector.broadcast %189 : vector<1x256xf32> to vector<5x256xf32>
    %192 = arith.mulf %190, %191 : vector<5x256xf32>
    %193 = vector.broadcast %187 : vector<5x1xf32> to vector<5x256xf32>
    %194 = arith.addf %193, %192 : vector<5x256xf32>
    %195 = vector.extract_strided_slice %4 {offsets = [0, 1], sizes = [5, 1], strides = [1, 1]} : vector<5x4xf32> to vector<5x1xf32>
    %196 = vector.extract_strided_slice %186 {offsets = [1, 0], sizes = [1, 256], strides = [1, 1]} : vector<3x256xf32> to vector<1x256xf32>
    %197 = vector.broadcast %195 : vector<5x1xf32> to vector<5x256xf32>
    %198 = vector.broadcast %196 : vector<1x256xf32> to vector<5x256xf32>
    %199 = arith.mulf %197, %198 : vector<5x256xf32>
    %200 = arith.addf %194, %199 : vector<5x256xf32>
    %201 = vector.extract_strided_slice %4 {offsets = [0, 2], sizes = [5, 1], strides = [1, 1]} : vector<5x4xf32> to vector<5x1xf32>
    %202 = vector.extract_strided_slice %186 {offsets = [2, 0], sizes = [1, 256], strides = [1, 1]} : vector<3x256xf32> to vector<1x256xf32>
    %203 = vector.broadcast %201 : vector<5x1xf32> to vector<5x256xf32>
    %204 = vector.broadcast %202 : vector<1x256xf32> to vector<5x256xf32>
    %205 = arith.mulf %203, %204 : vector<5x256xf32>
    %206 = arith.addf %200, %205 : vector<5x256xf32>
    %c1_36 = arith.constant 1 : index
    %c0_37 = arith.constant 0 : index
    %c0_38 = arith.constant 0 : index
    %207 = vector.load %arg10[%c1_36, %c0_37, %c0_38] : memref<2x5x256xf32, #tpu.memory_space<vmem>>, vector<1x5x256xf32>
    %208 = vector.shape_cast %207 : vector<1x5x256xf32> to vector<5x256xf32>
    %209 = vector.shape_cast %206 : vector<5x256xf32> to vector<1x5x256xf32>
    tpu.vector_store %arg10[%c1_36, %c0_37, %c0_38], %209 {strides = array<i32>} : memref<2x5x256xf32, #tpu.memory_space<vmem>>, vector<1x5x256xf32>,
    return
  }
  func.func @transform_0(%arg0: i32) -> (i32, i32) {
    %c0_i32 = arith.constant 0 : i32
    %c0_i32_0 = arith.constant 0 : i32
    return %arg0, %c0_i32 : i32, i32
  }
  func.func @transform_1(%arg0: i32) -> (i32, i32, i32) {
    %c0_i32 = arith.constant 0 : i32
    %c0_i32_0 = arith.constant 0 : i32
    %c0_i32_1 = arith.constant 0 : i32
    return %arg0, %c0_i32, %c0_i32_0 : i32, i32, i32
  }
  func.func @transform_2(%arg0: i32) -> (i32, i32) {
    %c0_i32 = arith.constant 0 : i32
    %c0_i32_0 = arith.constant 0 : i32
    %c0_i32_1 = arith.constant 0 : i32
    return %c0_i32, %c0_i32_0 : i32, i32
  }
  func.func @transform_3(%arg0: i32) -> (i32, i32) {
    %c0_i32 = arith.constant 0 : i32
    %c0_i32_0 = arith.constant 0 : i32
    %c0_i32_1 = arith.constant 0 : i32
    return %c0_i32, %c0_i32_0 : i32, i32
  }
  func.func @transform_4(%arg0: i32) -> (i32, i32) {
    %c0_i32 = arith.constant 0 : i32
    %c0_i32_0 = arith.constant 0 : i32
    %c0_i32_1 = arith.constant 0 : i32
    return %c0_i32, %c0_i32_0 : i32, i32
  }
  func.func @transform_5(%arg0: i32) -> (i32, i32) {
    %c0_i32 = arith.constant 0 : i32
    %c0_i32_0 = arith.constant 0 : i32
    %c0_i32_1 = arith.constant 0 : i32
    return %c0_i32, %c0_i32_0 : i32, i32
  }
  func.func @transform_6(%arg0: i32) -> (i32, i32) {
    %c0_i32 = arith.constant 0 : i32
    %c0_i32_0 = arith.constant 0 : i32
    %c0_i32_1 = arith.constant 0 : i32
    return %c0_i32, %c0_i32_0 : i32, i32
  }
  func.func @transform_7(%arg0: i32) -> (i32, i32) {
    %c0_i32 = arith.constant 0 : i32
    %c0_i32_0 = arith.constant 0 : i32
    %c0_i32_1 = arith.constant 0 : i32
    return %c0_i32, %c0_i32_0 : i32, i32
  }
  func.func @transform_8(%arg0: i32) -> (i32, i32, i32) {
    %c0_i32 = arith.constant 0 : i32
    %c0_i32_0 = arith.constant 0 : i32
    %c0_i32_1 = arith.constant 0 : i32
    return %arg0, %c0_i32, %c0_i32_0 : i32, i32, i32
  }
  func.func @transform_9(%arg0: i32) -> (i32, i32, i32) {
    %c0_i32 = arith.constant 0 : i32
    %c0_i32_0 = arith.constant 0 : i32
    %c0_i32_1 = arith.constant 0 : i32
    return %arg0, %c0_i32, %c0_i32_0 : i32, i32, i32
  }
}

</mosaic_0001>

<llo_original>
// kernel: tile.10
$region0: #{tile.10}
  #allocation0 [shape = 's32[1]{0}', space=sflag, size = 0x4, scoped, tag = 'scoped memory for tile.10']
  %s0 = inlined_call_operand.vmem [shape: f32[64], index: 0, kind: input, shape index: {}]
  %s1 = inlined_call_operand.vmem [shape: f32[4,64], index: 1, kind: output, shape index: {}]
  // Predicated region
  $region2: #{tile.10} parent=0 // pred_check
    _
  $region3: #{tile.10} parent=0 // pred_check_branch
    %3 = sbr.rel (0) target = $region5
  $region4: #{tile.10} parent=0 // pred_region
    _
  $region5: #{tile.10} parent=0 // pred_fallthru
    _
  %v4 = vld [vmem:[%s0] ss:$0 sm:$0xff]
  %5 = vst [vmem:[%s1] sm:$0xf] %v4

// kernel: tile.14
$region0: #{tile.14}
  %s0 = inlined_call_operand.vmem [shape: f32[4,64], index: 0, kind: input, shape index: {}]
  %s1 = inlined_call_operand.vmem [shape: f32[1,256], index: 1, kind: output, shape index: {}]
  $region1: #{tile.14} parent=0
    #allocation0 [shape = 'u8[8192]{0}', space=vmem, size = 0x2000, scoped, tag = 'scoped mem for output reshape']
    #allocation1 [shape = 'u8[4096]{0}', space=vmem, size = 0x1000, scoped, tag = 'scoped mem for input reshape']
    %s3 = sshllo.u32 0, 4
    %v4 = vld [vmem:[%s0] sm:%s3]
    %5 = vst [vmem:[#allocation1] sm:%s3] %v4
    %s6 = smov 3
    %v7 = vld [vmem:[#allocation1] ss:$2 sm:%s6]
    %vm8 = vcmask 523264
    %9 = vst.msk [vmem:[#allocation0] ss:$8 sm:$0x3] %vm8, %v7
    %s10 = scalar_lea.vmem [#allocation1], 1
    %s11 = smov 3
    %v12 = vld [vmem:[%s10] ss:$2 sm:%s11]
    %13 = vrot.lane.b32.xlu0 %v12, 64
    %v14 = vpop.permute.xlu0 %13
    %vm15 = vcmask 1048064
    %16 = vst.msk [vmem:[#allocation0] ss:$8 sm:$0x3] %vm15, %v14
    %s18 = sshllo.u32 0, 1
    %v20 = vld [vmem:[#allocation0] sm:%s18]
    %s21 = sshllo.u32 0, 1
    %22 = vst [vmem:[%s1] sm:%s21] %v20
    %s23 = scalar_lea.vmem [#allocation0], 8
    %v24 = vld [vmem:[%s23] sm:%s18]
    %s25 = sshllo.u32 0, 1
    %s26 = scalar_lea.vmem %s1, 1
    %27 = vst [vmem:[%s26] sm:%s25] %v24

// kernel: _lambda_.1
$region0: #{_lambda_.1}
  #allocation0 [shape = 'u32[]', space=smem, size = 0x4, offset = 0x4, fixed_abs, tag = 'smem constant byte address 0x4 - core index']
  #allocation1 [shape = 'u32[144,128]{1,0:T(1,128)}', space=vmem, size = 0x12000, scoped, tag = 'internal scratch']
  %s0 = inlined_call_operand.vmem [shape: f32[128,27], index: 0, kind: input, shape index: {}]
  %s1 = inlined_call_operand.vmem [shape: f32[2,3,256], index: 1, kind: input, shape index: {}]
  %s2 = inlined_call_operand.vmem [shape: f32[27,32], index: 2, kind: input, shape index: {}]
  %s3 = inlined_call_operand.vmem [shape: f32[2,32], index: 3, kind: input, shape index: {}]
  %s4 = inlined_call_operand.vmem [shape: f32[144,64], index: 4, kind: input, shape index: {}]
  %s5 = inlined_call_operand.vmem [shape: f32[32,576], index: 5, kind: input, shape index: {}]
  %s6 = inlined_call_operand.vmem [shape: f32[2,256], index: 6, kind: input, shape index: {}]
  %s7 = inlined_call_operand.vmem [shape: f32[5,4], index: 7, kind: input, shape index: {}]
  %s8 = inlined_call_operand.vmem [shape: f32[2,1,256], index: 8, kind: output, shape index: {0}]
  %s9 = inlined_call_operand.vmem [shape: f32[2,5,256], index: 9, kind: output, shape index: {1}]
  %10 = xla_tuple %s8, %s9
  %s11 = sld [smem:[#allocation0]]
  $region50: #{_lambda_.1} parent=0
    _
  %s13 = ssub.s32 1, %s11
  %s14 = scalar_select 0, %s13, %s11
  // Predicated region
  $region2: #{_lambda_.1} parent=0 // pred_check
    _
  $region3: #{_lambda_.1} parent=0 // pred_check_branch
    %16 = sbr.rel (0) target = $region5
  $region4: #{_lambda_.1} parent=0 // pred_region
    _
  $region5: #{_lambda_.1} parent=0 // pred_fallthru
    _
  // Predicated region
  $region6: #{_lambda_.1} parent=0 // pred_check
    _
  $region7: #{_lambda_.1} parent=0 // pred_check_branch
    %18 = sbr.rel (0) target = $region9
  $region8: #{_lambda_.1} parent=0 // pred_region
    _
  $region9: #{_lambda_.1} parent=0 // pred_fallthru
    _
  // Predicated region
  $region10: #{_lambda_.1} parent=0 // pred_check
    _
  $region11: #{_lambda_.1} parent=0 // pred_check_branch
    %20 = sbr.rel (0) target = $region13
  $region12: #{_lambda_.1} parent=0 // pred_region
    _
  $region13: #{_lambda_.1} parent=0 // pred_fallthru
    _
  // Predicated region
  $region14: #{_lambda_.1} parent=0 // pred_check
    _
  $region15: #{_lambda_.1} parent=0 // pred_check_branch
    %22 = sbr.rel (0) target = $region17
  $region16: #{_lambda_.1} parent=0 // pred_region
    _
  $region17: #{_lambda_.1} parent=0 // pred_fallthru
    _
  // Predicated region
  $region18: #{_lambda_.1} parent=0 // pred_check
    _
  $region19: #{_lambda_.1} parent=0 // pred_check_branch
    %24 = sbr.rel (0) target = $region21
  $region20: #{_lambda_.1} parent=0 // pred_region
    _
  $region21: #{_lambda_.1} parent=0 // pred_fallthru
    _
  // Predicated region
  $region22: #{_lambda_.1} parent=0 // pred_check
    _
  $region23: #{_lambda_.1} parent=0 // pred_check_branch
    %26 = sbr.rel (0) target = $region25
  $region24: #{_lambda_.1} parent=0 // pred_region
    _
  $region25: #{_lambda_.1} parent=0 // pred_fallthru
    _
  // Predicated region
  $region26: #{_lambda_.1} parent=0 // pred_check
    _
  $region27: #{_lambda_.1} parent=0 // pred_check_branch
    %28 = sbr.rel (0) target = $region29
  $region28: #{_lambda_.1} parent=0 // pred_region
    _
  $region29: #{_lambda_.1} parent=0 // pred_fallthru
    _
  // Predicated region
  $region30: #{_lambda_.1} parent=0 // pred_check
    _
  $region31: #{_lambda_.1} parent=0 // pred_check_branch
    %30 = sbr.rel (0) target = $region33
  $region32: #{_lambda_.1} parent=0 // pred_region
    _
  $region33: #{_lambda_.1} parent=0 // pred_fallthru
    _
  %v31 = vld [vmem:[%s4] sm:$0xff]
  %v32 = vld [vmem:[%s4 + $0x8] sm:$0xff]
  %v33 = vld [vmem:[%s4 + $0x10] sm:$0xff]
  %v34 = vld [vmem:[%s4 + $0x18] sm:$0xff]
  %v35 = vld [vmem:[%s4 + $0x20] sm:$0xff]
  %v36 = vld [vmem:[%s4 + $0x28] sm:$0xff]
  %v37 = vld [vmem:[%s4 + $0x30] sm:$0xff]
  %v38 = vld [vmem:[%s4 + $0x38] sm:$0xff]
  %v39 = vld [vmem:[%s4 + $0x40] sm:$0xff]
  %v40 = vld [vmem:[%s4 + $0x48] sm:$0xff]
  %v41 = vld [vmem:[%s4 + $0x50] sm:$0xff]
  %v42 = vld [vmem:[%s4 + $0x58] sm:$0xff]
  %v43 = vld [vmem:[%s4 + $0x60] sm:$0xff]
  %v44 = vld [vmem:[%s4 + $0x68] sm:$0xff]
  %v45 = vld [vmem:[%s4 + $0x70] sm:$0xff]
  %v46 = vld [vmem:[%s4 + $0x78] sm:$0xff]
  %v47 = vld [vmem:[%s4 + $0x80] sm:$0xff]
  %v48 = vld [vmem:[%s4 + $0x88] sm:$0xff]
  %v49 = vld [vmem:[%s5] sm:$0xff]
  %v50 = vld [vmem:[%s5 + $0x8] sm:$0xff]
  %v51 = vld [vmem:[%s5 + $0x10] sm:$0xff]
  %v52 = vld [vmem:[%s5 + $0x18] sm:$0xff]
  %v53 = vld [vmem:[%s5 + $0x20] sm:$0xff]
  %v54 = vld [vmem:[%s5 + $0x28] sm:$0xff]
  %v55 = vld [vmem:[%s5 + $0x30] sm:$0xff]
  %v56 = vld [vmem:[%s5 + $0x38] sm:$0xff]
  %v57 = vld [vmem:[%s5 + $0x40] sm:$0xff]
  %v58 = vld [vmem:[%s5 + $0x48] sm:$0xff]
  %v59 = vld [vmem:[%s5 + $0x50] sm:$0xff]
  %v60 = vld [vmem:[%s5 + $0x58] sm:$0xff]
  %v61 = vld [vmem:[%s5 + $0x60] sm:$0xff]
  %v62 = vld [vmem:[%s5 + $0x68] sm:$0xff]
  %v63 = vld [vmem:[%s5 + $0x70] sm:$0xff]
  %v64 = vld [vmem:[%s5 + $0x78] sm:$0xff]
  %v65 = vld [vmem:[%s5 + $0x80] sm:$0xff]
  %v66 = vld [vmem:[%s5 + $0x88] sm:$0xff]
  %v67 = vld [vmem:[%s5 + $0x90] sm:$0xff]
  %v68 = vld [vmem:[%s5 + $0x98] sm:$0xff]
  %v69 = vld [vmem:[%s6] ss:$2 sm:$0x3]
  %s70 = scalar_lea.vmem %s6, 1
  %v71 = vld [vmem:[%s70] ss:$2 sm:$0x3]
  %v72 = vld [vmem:[%s7] sm:$0x1f]
  %v73 = vld [vmem:[%s0] sm:$0xff]
  %v74 = vld [vmem:[%s0 + $0x8] sm:$0xff]
  %v75 = vld [vmem:[%s0 + $0x10] sm:$0xff]
  %v76 = vld [vmem:[%s0 + $0x18] sm:$0xff]
  %v77 = vld [vmem:[%s0 + $0x20] sm:$0xff]
  %v78 = vld [vmem:[%s0 + $0x28] sm:$0xff]
  %v79 = vld [vmem:[%s0 + $0x30] sm:$0xff]
  %v80 = vld [vmem:[%s0 + $0x38] sm:$0xff]
  %v81 = vld [vmem:[%s0 + $0x40] sm:$0xff]
  %v82 = vld [vmem:[%s0 + $0x48] sm:$0xff]
  %v83 = vld [vmem:[%s0 + $0x50] sm:$0xff]
  %v84 = vld [vmem:[%s0 + $0x58] sm:$0xff]
  %v85 = vld [vmem:[%s0 + $0x60] sm:$0xff]
  %v86 = vld [vmem:[%s0 + $0x68] sm:$0xff]
  %v87 = vld [vmem:[%s0 + $0x70] sm:$0xff]
  %v88 = vld [vmem:[%s0 + $0x78] sm:$0xff]
  %v89 = vld [vmem:[%s2] sm:$0xff]
  %v90 = vld [vmem:[%s2 + $0x8] sm:$0xff]
  %v91 = vld [vmem:[%s2 + $0x10] sm:$0xff]
  %v92 = vld [vmem:[%s2 + $0x18] sm:$0x7]
  %vm93 = vcmask 220160
  %v95 = vsel %vm93, %v73, 0
  %v98 = vsel %vm93, %v74, 0
  %v101 = vsel %vm93, %v75, 0
  %v104 = vsel %vm93, %v76, 0
  %v107 = vsel %vm93, %v77, 0
  %v110 = vsel %vm93, %v78, 0
  %v113 = vsel %vm93, %v79, 0
  %v116 = vsel %vm93, %v80, 0
  %v119 = vsel %vm93, %v81, 0
  %v122 = vsel %vm93, %v82, 0
  %v125 = vsel %vm93, %v83, 0
  %v128 = vsel %vm93, %v84, 0
  %v131 = vsel %vm93, %v85, 0
  %v134 = vsel %vm93, %v86, 0
  %v137 = vsel %vm93, %v87, 0
  %v140 = vsel %vm93, %v88, 0
  %vm142 = vcmask 1042432
  %v144 = vsel %vm142, %v92, 0
  %146 = vmatprep.subr.mxu0 0.0
  %v147 = vand.u32 %v89, 4294901760
  %148 = vmatpush1.msra.mxu0 %v147
  %149 = vmatprep.subr.mxu0 0.0
  %v150 = vand.u32 %v90, 4294901760
  %151 = vmatpush1.msra.mxu0 %v150
  %152 = vmatprep.subr.mxu0 0.0
  %v153 = vand.u32 %v91, 4294901760
  %154 = vmatpush1.msra.mxu0 %v153
  %155 = vmatprep.subr.mxu0 0.0
  %v156 = vand.u32 %v144, 4294901760
  %157 = vmatpush1.msra.mxu0 %v156
  %158 = vmatprep.subr.mxu0 0.0
  %159 = vmatpush1.msra.mxu0 0.0
  %160 = vmatprep.subr.mxu0 0.0
  %161 = vmatpush1.msra.mxu0 0.0
  %162 = vmatprep.subr.mxu0 0.0
  %163 = vmatpush1.msra.mxu0 0.0
  %164 = vmatprep.subr.mxu0 0.0
  %165 = vmatpush1.msra.mxu0 0.0
  %166 = vmatprep.subr.mxu0 0.0
  %167 = vmatpush1.msra.mxu0 0.0
  %168 = vmatprep.subr.mxu0 0.0
  %169 = vmatpush1.msra.mxu0 0.0
  %170 = vmatprep.subr.mxu0 0.0
  %171 = vmatpush1.msra.mxu0 0.0
  %172 = vmatprep.subr.mxu0 0.0
  %173 = vmatpush1.msra.mxu0 0.0
  %174 = vmatprep.subr.mxu0 0.0
  %175 = vmatpush1.msra.mxu0 0.0
  %176 = vmatprep.subr.mxu0 0.0
  %177 = vmatpush1.msra.mxu0 0.0
  %178 = vmatprep.subr.mxu0 0.0
  %179 = vmatpush1.msra.mxu0 0.0
  %180 = vmatprep.subr.mxu0 0.0
  %181 = vmatpush1.msra.mxu0 0.0
  %182 = vmatprep.subr.mxu0 0.0
  %183 = vmatpush1.msra.mxu0 0.0
  %184 = vmatprep.subr.mxu0 0.0
  %185 = vmatpush1.msra.mxu0 0.0
  %186 = vmatprep.subr.mxu0 0.0
  %187 = vmatpush1.msra.mxu0 0.0
  %188 = vmatprep.subr.mxu0 0.0
  %189 = vmatpush1.msra.mxu0 0.0
  %190 = vmatprep.subr.mxu0 0.0
  %191 = vmatpush1.msra.mxu0 0.0
  %192 = vmatprep.subr.mxu0 0.0
  %193 = vmatpush1.msra.mxu0 0.0
  %194 = vmatprep.subr.mxu0 0.0
  %195 = vmatpush1.msra.mxu0 0.0
  %196 = vmatprep.subr.mxu0 0.0
  %197 = vmatpush1.msra.mxu0 0.0
  %198 = vmatprep.subr.mxu0 0.0
  %199 = vmatpush1.msra.mxu0 0.0
  %200 = vmatprep.subr.mxu0 0.0
  %201 = vmatpush1.msra.mxu0 0.0
  %202 = vmatprep.subr.mxu0 0.0
  %203 = vmatpush1.msra.mxu0 0.0
  %204 = vmatprep.subr.mxu0 0.0
  %205 = vmatpush1.msra.mxu0 0.0
  %206 = vmatprep.subr.mxu0 0.0
  %207 = vmatpush1.msra.mxu0 0.0
  %208 = vmatprep.subr.mxu0 0.0
  %209 = vmatpush1.msra.mxu0 0.0
  %210 = vmatprep.subr.mxu0 0.0
  %211 = vmatpush1.msra.mxu0 0.0
  %212 = vmatprep.subr.mxu0 0.0
  %213 = vmatpush1.msra.mxu0 0.0
  %214 = vmatprep.mubr.f32.mxu0 0.0
  %v215 = vand.u32 %v95, 4294901760
  %v216 = vsub.f32 %v95, %v215
  %v217 = vand.u32 %v216, 4294901760
  %v218 = vsub.f32 %v216, %v217
  %v219 = vand.u32 %v218, 4294901760
  %220 = vmatmul.mubr.f32.gmra.mrb[0].mxu0 %v219
  %v221 = vpop.f32.mrb[0].mxu0
  %v222 = vadd.f32 0.0, %v221
  %v223 = vpop.f32.mrb[0].mxu0
  %224 = vmatprep.mubr.f32.mxu0 0.0
  %v225 = vand.u32 %v98, 4294901760
  %v226 = vsub.f32 %v98, %v225
  %v227 = vand.u32 %v226, 4294901760
  %v228 = vsub.f32 %v226, %v227
  %v229 = vand.u32 %v228, 4294901760
  %230 = vmatmul.mubr.f32.gmra.mrb[0].mxu0 %v229
  %v231 = vpop.f32.mrb[0].mxu0
  %v232 = vadd.f32 0.0, %v231
  %v233 = vpop.f32.mrb[0].mxu0
  %234 = vmatprep.mubr.f32.mxu0 0.0
  %v235 = vand.u32 %v101, 4294901760
  %v236 = vsub.f32 %v101, %v235
  %v237 = vand.u32 %v236, 4294901760
  %v238 = vsub.f32 %v236, %v237
  %v239 = vand.u32 %v238, 4294901760
  %240 = vmatmul.mubr.f32.gmra.mrb[0].mxu0 %v239
  %v241 = vpop.f32.mrb[0].mxu0
  %v242 = vadd.f32 0.0, %v241
  %v243 = vpop.f32.mrb[0].mxu0
  %244 = vmatprep.mubr.f32.mxu0 0.0
  %v245 = vand.u32 %v104, 4294901760
  %v246 = vsub.f32 %v104, %v245
  %v247 = vand.u32 %v246, 4294901760
  %v248 = vsub.f32 %v246, %v247
  %v249 = vand.u32 %v248, 4294901760
  %250 = vmatmul.mubr.f32.gmra.mrb[0].mxu0 %v249
  %v251 = vpop.f32.mrb[0].mxu0
  %v252 = vadd.f32 0.0, %v251
  %v253 = vpop.f32.mrb[0].mxu0
  %254 = vmatprep.mubr.f32.mxu0 0.0
  %v255 = vand.u32 %v107, 4294901760
  %v256 = vsub.f32 %v107, %v255
  %v257 = vand.u32 %v256, 4294901760
  %v258 = vsub.f32 %v256, %v257
  %v259 = vand.u32 %v258, 4294901760
  %260 = vmatmul.mubr.f32.gmra.mrb[0].mxu0 %v259
  %v261 = vpop.f32.mrb[0].mxu0
  %v262 = vadd.f32 0.0, %v261
  %v263 = vpop.f32.mrb[0].mxu0
  %264 = vmatprep.mubr.f32.mxu0 0.0
  %v265 = vand.u32 %v110, 4294901760
  %v266 = vsub.f32 %v110, %v265
  %v267 = vand.u32 %v266, 4294901760
  %v268 = vsub.f32 %v266, %v267
  %v269 = vand.u32 %v268, 4294901760
  %270 = vmatmul.mubr.f32.gmra.mrb[0].mxu0 %v269
  %v271 = vpop.f32.mrb[0].mxu0
  %v272 = vadd.f32 0.0, %v271
  %v273 = vpop.f32.mrb[0].mxu0
  %274 = vmatprep.mubr.f32.mxu0 0.0
  %v275 = vand.u32 %v113, 4294901760
  %v276 = vsub.f32 %v113, %v275
  %v277 = vand.u32 %v276, 4294901760
  %v278 = vsub.f32 %v276, %v277
  %v279 = vand.u32 %v278, 4294901760
  %280 = vmatmul.mubr.f32.gmra.mrb[0].mxu0 %v279
  %v281 = vpop.f32.mrb[0].mxu0
  %v282 = vadd.f32 0.0, %v281
  %v283 = vpop.f32.mrb[0].mxu0
  %284 = vmatprep.mubr.f32.mxu0 0.0
  %v285 = vand.u32 %v116, 4294901760
  %v286 = vsub.f32 %v116, %v285
  %v287 = vand.u32 %v286, 4294901760
  %v288 = vsub.f32 %v286, %v287
  %v289 = vand.u32 %v288, 4294901760
  %290 = vmatmul.mubr.f32.gmra.mrb[0].mxu0 %v289
  %v291 = vpop.f32.mrb[0].mxu0
  %v292 = vadd.f32 0.0, %v291
  %v293 = vpop.f32.mrb[0].mxu0
  %294 = vmatprep.mubr.f32.mxu0 0.0
  %v295 = vand.u32 %v119, 4294901760
  %v296 = vsub.f32 %v119, %v295
  %v297 = vand.u32 %v296, 4294901760
  %v298 = vsub.f32 %v296, %v297
  %v299 = vand.u32 %v298, 4294901760
  %300 = vmatmul.mubr.f32.gmra.mrb[0].mxu0 %v299
  %v301 = vpop.f32.mrb[0].mxu0
  %v302 = vadd.f32 0.0, %v301
  %v303 = vpop.f32.mrb[0].mxu0
  %304 = vmatprep.mubr.f32.mxu0 0.0
  %v305 = vand.u32 %v122, 4294901760
  %v306 = vsub.f32 %v122, %v305
  %v307 = vand.u32 %v306, 4294901760
  %v308 = vsub.f32 %v306, %v307
  %v309 = vand.u32 %v308, 4294901760
  %310 = vmatmul.mubr.f32.gmra.mrb[0].mxu0 %v309
  %v311 = vpop.f32.mrb[0].mxu0
  %v312 = vadd.f32 0.0, %v311
  %v313 = vpop.f32.mrb[0].mxu0
  %314 = vmatprep.mubr.f32.mxu0 0.0
  %v315 = vand.u32 %v125, 4294901760
  %v316 = vsub.f32 %v125, %v315
  %v317 = vand.u32 %v316, 4294901760
  %v318 = vsub.f32 %v316, %v317
  %v319 = vand.u32 %v318, 4294901760
  %320 = vmatmul.mubr.f32.gmra.mrb[0].mxu0 %v319
  %v321 = vpop.f32.mrb[0].mxu0
  %v322 = vadd.f32 0.0, %v321
  %v323 = vpop.f32.mrb[0].mxu0
  %324 = vmatprep.mubr.f32.mxu0 0.0
  %v325 = vand.u32 %v128, 4294901760
  %v326 = vsub.f32 %v128, %v325
  %v327 = vand.u32 %v326, 4294901760
  %v328 = vsub.f32 %v326, %v327
  %v329 = vand.u32 %v328, 4294901760
  %330 = vmatmul.mubr.f32.gmra.mrb[0].mxu0 %v329
  %v331 = vpop.f32.mrb[0].mxu0
  %v332 = vadd.f32 0.0, %v331
  %v333 = vpop.f32.mrb[0].mxu0
  %334 = vmatprep.mubr.f32.mxu0 0.0
  %v335 = vand.u32 %v131, 4294901760
  %v336 = vsub.f32 %v131, %v335
  %v337 = vand.u32 %v336, 4294901760
  %v338 = vsub.f32 %v336, %v337
  %v339 = vand.u32 %v338, 4294901760
  %340 = vmatmul.mubr.f32.gmra.mrb[0].mxu0 %v339
  %v341 = vpop.f32.mrb[0].mxu0
  %v342 = vadd.f32 0.0, %v341
  %v343 = vpop.f32.mrb[0].mxu0
  %344 = vmatprep.mubr.f32.mxu0 0.0
  %v345 = vand.u32 %v134, 4294901760
  %v346 = vsub.f32 %v134, %v345
  %v347 = vand.u32 %v346, 4294901760
  %v348 = vsub.f32 %v346, %v347
  %v349 = vand.u32 %v348, 4294901760
  %350 = vmatmul.mubr.f32.gmra.mrb[0].mxu0 %v349
  %v351 = vpop.f32.mrb[0].mxu0
  %v352 = vadd.f32 0.0, %v351
  %v353 = vpop.f32.mrb[0].mxu0
  %354 = vmatprep.mubr.f32.mxu0 0.0
  %v355 = vand.u32 %v137, 4294901760
  %v356 = vsub.f32 %v137, %v355
  %v357 = vand.u32 %v356, 4294901760
  %v358 = vsub.f32 %v356, %v357
  %v359 = vand.u32 %v358, 4294901760
  %360 = vmatmul.mubr.f32.gmra.mrb[0].mxu0 %v359
  %v361 = vpop.f32.mrb[0].mxu0
  %v362 = vadd.f32 0.0, %v361
  %v363 = vpop.f32.mrb[0].mxu0
  %364 = vmatprep.mubr.f32.mxu0 0.0
  %v365 = vand.u32 %v140, 4294901760
  %v366 = vsub.f32 %v140, %v365
  %v367 = vand.u32 %v366, 4294901760
  %v368 = vsub.f32 %v366, %v367
  %v369 = vand.u32 %v368, 4294901760
  %370 = vmatmul.mubr.f32.gmra.mrb[0].mxu0 %v369
  %v371 = vpop.f32.mrb[0].mxu0
  %v372 = vadd.f32 0.0, %v371
  %v373 = vpop.f32.mrb[0].mxu0
  %374 = vdwg.mxu0
  %375 = vmatprep.subr.mxu0 0.0
  %v376 = vand.u32 %v89, 4294901760
  %v377 = vsub.f32 %v89, %v376
  %v378 = vand.u32 %v377, 4294901760
  %v379 = vsub.f32 %v377, %v378
  %v380 = vand.u32 %v379, 4294901760
  %381 = vmatpush1.msra.mxu0 %v380
  %382 = vmatprep.subr.mxu0 0.0
  %v383 = vand.u32 %v90, 4294901760
  %v384 = vsub.f32 %v90, %v383
  %v385 = vand.u32 %v384, 4294901760
  %v386 = vsub.f32 %v384, %v385
  %v387 = vand.u32 %v386, 4294901760
  %388 = vmatpush1.msra.mxu0 %v387
  %389 = vmatprep.subr.mxu0 0.0
  %v390 = vand.u32 %v91, 4294901760
  %v391 = vsub.f32 %v91, %v390
  %v392 = vand.u32 %v391, 4294901760
  %v393 = vsub.f32 %v391, %v392
  %v394 = vand.u32 %v393, 4294901760
  %395 = vmatpush1.msra.mxu0 %v394
  %396 = vmatprep.subr.mxu0 0.0
  %v397 = vand.u32 %v144, 4294901760
  %v398 = vsub.f32 %v144, %v397
  %v399 = vand.u32 %v398, 4294901760
  %v400 = vsub.f32 %v398, %v399
  %v401 = vand.u32 %v400, 4294901760
  %402 = vmatpush1.msra.mxu0 %v401
  %403 = vmatprep.subr.mxu0 0.0
  %404 = vmatpush1.msra.mxu0 0.0
  %405 = vmatprep.subr.mxu0 0.0
  %406 = vmatpush1.msra.mxu0 0.0
  %407 = vmatprep.subr.mxu0 0.0
  %408 = vmatpush1.msra.mxu0 0.0
  %409 = vmatprep.subr.mxu0 0.0
  %410 = vmatpush1.msra.mxu0 0.0
  %411 = vmatprep.subr.mxu0 0.0
  %412 = vmatpush1.msra.mxu0 0.0
  %413 = vmatprep.subr.mxu0 0.0
  %414 = vmatpush1.msra.mxu0 0.0
  %415 = vmatprep.subr.mxu0 0.0
  %416 = vmatpush1.msra.mxu0 0.0
  %417 = vmatprep.subr.mxu0 0.0
  %418 = vmatpush1.msra.mxu0 0.0
  %419 = vmatprep.subr.mxu0 0.0
  %420 = vmatpush1.msra.mxu0 0.0
  %421 = vmatprep.subr.mxu0 0.0
  %422 = vmatpush1.msra.mxu0 0.0
  %423 = vmatprep.subr.mxu0 0.0
  %424 = vmatpush1.msra.mxu0 0.0
  %425 = vmatprep.subr.mxu0 0.0
  %426 = vmatpush1.msra.mxu0 0.0
  %427 = vmatprep.subr.mxu0 0.0
  %428 = vmatpush1.msra.mxu0 0.0
  %429 = vmatprep.subr.mxu0 0.0
  %430 = vmatpush1.msra.mxu0 0.0
  %431 = vmatprep.subr.mxu0 0.0
  %432 = vmatpush1.msra.mxu0 0.0
  %433 = vmatprep.subr.mxu0 0.0
  %434 = vmatpush1.msra.mxu0 0.0
  %435 = vmatprep.subr.mxu0 0.0
  %436 = vmatpush1.msra.mxu0 0.0
  %437 = vmatprep.subr.mxu0 0.0
  %438 = vmatpush1.msra.mxu0 0.0
  %439 = vmatprep.subr.mxu0 0.0
  %440 = vmatpush1.msra.mxu0 0.0
  %441 = vmatprep.subr.mxu0 0.0
  %442 = vmatpush1.msra.mxu0 0.0
  %443 = vmatprep.subr.mxu0 0.0
  %444 = vmatpush1.msra.mxu0 0.0
  %445 = vmatprep.subr.mxu0 0.0
  %446 = vmatpush1.msra.mxu0 0.0
  %447 = vmatprep.subr.mxu0 0.0
  %448 = vmatpush1.msra.mxu0 0.0
  %449 = vmatprep.subr.mxu0 0.0
  %450 = vmatpush1.msra.mxu0 0.0
  %451 = vmatprep.subr.mxu0 0.0
  %452 = vmatpush1.msra.mxu0 0.0
  %453 = vmatprep.subr.mxu0 0.0
  %454 = vmatpush1.msra.mxu0 0.0
  %455 = vmatprep.subr.mxu0 0.0
  %456 = vmatpush1.msra.mxu0 0.0
  %457 = vmatprep.subr.mxu0 0.0
  %458 = vmatpush1.msra.mxu0 0.0
  %459 = vmatprep.mubr.f32.mxu0 0.0
  %v460 = vand.u32 %v95, 4294901760
  %461 = vmatmul.mubr.f32.gmra.mrb[0].mxu0 %v460
  %v462 = vpop.f32.mrb[0].mxu0
  %v463 = vadd.f32 %v222, %v462
  %v464 = vpop.f32.mrb[0].mxu0
  %465 = vmatprep.mubr.f32.mxu0 0.0
  %v466 = vand.u32 %v98, 4294901760
  %467 = vmatmul.mubr.f32.gmra.mrb[0].mxu0 %v466
  %v468 = vpop.f32.mrb[0].mxu0
  %v469 = vadd.f32 %v232, %v468
  %v470 = vpop.f32.mrb[0].mxu0
  %471 = vmatprep.mubr.f32.mxu0 0.0
  %v472 = vand.u32 %v101, 4294901760
  %473 = vmatmul.mubr.f32.gmra.mrb[0].mxu0 %v472
  %v474 = vpop.f32.mrb[0].mxu0
  %v475 = vadd.f32 %v242, %v474
  %v476 = vpop.f32.mrb[0].mxu0
  %477 = vmatprep.mubr.f32.mxu0 0.0
  %v478 = vand.u32 %v104, 4294901760
  %479 = vmatmul.mubr.f32.gmra.mrb[0].mxu0 %v478
  %v480 = vpop.f32.mrb[0].mxu0
  %v481 = vadd.f32 %v252, %v480
  %v482 = vpop.f32.mrb[0].mxu0
  %483 = vmatprep.mubr.f32.mxu0 0.0
  %v484 = vand.u32 %v107, 4294901760
  %485 = vmatmul.mubr.f32.gmra.mrb[0].mxu0 %v484
  %v486 = vpop.f32.mrb[0].mxu0
  %v487 = vadd.f32 %v262, %v486
  %v488 = vpop.f32.mrb[0].mxu0
  %489 = vmatprep.mubr.f32.mxu0 0.0
  %v490 = vand.u32 %v110, 4294901760
  %491 = vmatmul.mubr.f32.gmra.mrb[0].mxu0 %v490
  %v492 = vpop.f32.mrb[0].mxu0
  %v493 = vadd.f32 %v272, %v492
  %v494 = vpop.f32.mrb[0].mxu0
  %495 = vmatprep.mubr.f32.mxu0 0.0
  %v496 = vand.u32 %v113, 4294901760
  %497 = vmatmul.mubr.f32.gmra.mrb[0].mxu0 %v496
  %v498 = vpop.f32.mrb[0].mxu0
  %v499 = vadd.f32 %v282, %v498
  %v500 = vpop.f32.mrb[0].mxu0
  %501 = vmatprep.mubr.f32.mxu0 0.0
  %v502 = vand.u32 %v116, 4294901760
  %503 = vmatmul.mubr.f32.gmra.mrb[0].mxu0 %v502
  %v504 = vpop.f32.mrb[0].mxu0
  %v505 = vadd.f32 %v292, %v504
  %v506 = vpop.f32.mrb[0].mxu0
  %507 = vmatprep.mubr.f32.mxu0 0.0
  %v508 = vand.u32 %v119, 4294901760
  %509 = vmatmul.mubr.f32.gmra.mrb[0].mxu0 %v508
  %v510 = vpop.f32.mrb[0].mxu0
  %v511 = vadd.f32 %v302, %v510
  %v512 = vpop.f32.mrb[0].mxu0
  %513 = vmatprep.mubr.f32.mxu0 0.0
  %v514 = vand.u32 %v122, 4294901760
  %515 = vmatmul.mubr.f32.gmra.mrb[0].mxu0 %v514
  %v516 = vpop.f32.mrb[0].mxu0
  %v517 = vadd.f32 %v312, %v516
  %v518 = vpop.f32.mrb[0].mxu0
  %519 = vmatprep.mubr.f32.mxu0 0.0
  %v520 = vand.u32 %v125, 4294901760
  %521 = vmatmul.mubr.f32.gmra.mrb[0].mxu0 %v520
  %v522 = vpop.f32.mrb[0].mxu0
  %v523 = vadd.f32 %v322, %v522
  %v524 = vpop.f32.mrb[0].mxu0
  %525 = vmatprep.mubr.f32.mxu0 0.0
  %v526 = vand.u32 %v128, 4294901760
  %527 = vmatmul.mubr.f32.gmra.mrb[0].mxu0 %v526
  %v528 = vpop.f32.mrb[0].mxu0
  %v529 = vadd.f32 %v332, %v528
  %v530 = vpop.f32.mrb[0].mxu0
  %531 = vmatprep.mubr.f32.mxu0 0.0
  %v532 = vand.u32 %v131, 4294901760
  %533 = vmatmul.mubr.f32.gmra.mrb[0].mxu0 %v532
  %v534 = vpop.f32.mrb[0].mxu0
  %v535 = vadd.f32 %v342, %v534
  %v536 = vpop.f32.mrb[0].mxu0
  %537 = vmatprep.mubr.f32.mxu0 0.0
  %v538 = vand.u32 %v134, 4294901760
  %539 = vmatmul.mubr.f32.gmra.mrb[0].mxu0 %v538
  %v540 = vpop.f32.mrb[0].mxu0
  %v541 = vadd.f32 %v352, %v540
  %v542 = vpop.f32.mrb[0].mxu0
  %543 = vmatprep.mubr.f32.mxu0 0.0
  %v544 = vand.u32 %v137, 4294901760
  %545 = vmatmul.mubr.f32.gmra.mrb[0].mxu0 %v544
  %v546 = vpop.f32.mrb[0].mxu0
  %v547 = vadd.f32 %v362, %v546
  %v548 = vpop.f32.mrb[0].mxu0
  %549 = vmatprep.mubr.f32.mxu0 0.0
  %v550 = vand.u32 %v140, 4294901760
  %551 = vmatmul.mubr.f32.gmra.mrb[0].mxu0 %v550
  %v552 = vpop.f32.mrb[0].mxu0
  %v553 = vadd.f32 %v372, %v552
  %v554 = vpop.f32.mrb[0].mxu0
  %555 = vdwg.mxu0
  %556 = vmatprep.subr.mxu0 0.0
  %v557 = vand.u32 %v89, 4294901760
  %v558 = vsub.f32 %v89, %v557
  %559 = vmatpush1.msra.mxu0 %v558
  %560 = vmatprep.subr.mxu0 0.0
  %v561 = vand.u32 %v90, 4294901760
  %v562 = vsub.f32 %v90, %v561
  %563 = vmatpush1.msra.mxu0 %v562
  %564 = vmatprep.subr.mxu0 0.0
  %v565 = vand.u32 %v91, 4294901760
  %v566 = vsub.f32 %v91, %v565
  %567 = vmatpush1.msra.mxu0 %v566
  %568 = vmatprep.subr.mxu0 0.0
  %v569 = vand.u32 %v144, 4294901760
  %v570 = vsub.f32 %v144, %v569
  %571 = vmatpush1.msra.mxu0 %v570
  %572 = vmatprep.subr.mxu0 0.0
  %573 = vmatpush1.msra.mxu0 0.0
  %574 = vmatprep.subr.mxu0 0.0
  %575 = vmatpush1.msra.mxu0 0.0
  %576 = vmatprep.subr.mxu0 0.0
  %577 = vmatpush1.msra.mxu0 0.0
  %578 = vmatprep.subr.mxu0 0.0
  %579 = vmatpush1.msra.mxu0 0.0
  %580 = vmatprep.subr.mxu0 0.0
  %581 = vmatpush1.msra.mxu0 0.0
  %582 = vmatprep.subr.mxu0 0.0
  %583 = vmatpush1.msra.mxu0 0.0
  %584 = vmatprep.subr.mxu0 0.0
  %585 = vmatpush1.msra.mxu0 0.0
  %586 = vmatprep.subr.mxu0 0.0
  %587 = vmatpush1.msra.mxu0 0.0
  %588 = vmatprep.subr.mxu0 0.0
  %589 = vmatpush1.msra.mxu0 0.0
  %590 = vmatprep.subr.mxu0 0.0
  %591 = vmatpush1.msra.mxu0 0.0
  %592 = vmatprep.subr.mxu0 0.0
  %593 = vmatpush1.msra.mxu0 0.0
  %594 = vmatprep.subr.mxu0 0.0
  %595 = vmatpush1.msra.mxu0 0.0
  %596 = vmatprep.subr.mxu0 0.0
  %597 = vmatpush1.msra.mxu0 0.0
  %598 = vmatprep.subr.mxu0 0.0
  %599 = vmatpush1.msra.mxu0 0.0
  %600 = vmatprep.subr.mxu0 0.0
  %601 = vmatpush1.msra.mxu0 0.0
  %602 = vmatprep.subr.mxu0 0.0
  %603 = vmatpush1.msra.mxu0 0.0
  %604 = vmatprep.subr.mxu0 0.0
  %605 = vmatpush1.msra.mxu0 0.0
  %606 = vmatprep.subr.mxu0 0.0
  %607 = vmatpush1.msra.mxu0 0.0
  %608 = vmatprep.subr.mxu0 0.0
  %609 = vmatpush1.msra.mxu0 0.0
  %610 = vmatprep.subr.mxu0 0.0
  %611 = vmatpush1.msra.mxu0 0.0
  %612 = vmatprep.subr.mxu0 0.0
  %613 = vmatpush1.msra.mxu0 0.0
  %614 = vmatprep.subr.mxu0 0.0
  %615 = vmatpush1.msra.mxu0 0.0
  %616 = vmatprep.subr.mxu0 0.0
  %617 = vmatpush1.msra.mxu0 0.0
  %618 = vmatprep.subr.mxu0 0.0
  %619 = vmatpush1.msra.mxu0 0.0
  %620 = vmatprep.subr.mxu0 0.0
  %621 = vmatpush1.msra.mxu0 0.0
  %622 = vmatprep.subr.mxu0 0.0
  %623 = vmatpush1.msra.mxu0 0.0
  %624 = vmatprep.subr.mxu0 0.0
  %625 = vmatpush1.msra.mxu0 0.0
  %626 = vmatprep.subr.mxu0 0.0
  %627 = vmatpush1.msra.mxu0 0.0
  %628 = vmatprep.mubr.f32.mxu0 0.0
  %v629 = vand.u32 %v95, 4294901760
  %v630 = vsub.f32 %v95, %v629
  %631 = vmatmul.mubr.f32.gmra.mrb[0].mxu0 %v630
  %v632 = vpop.f32.mrb[0].mxu0
  %v633 = vadd.f32 %v463, %v632
  %v634 = vpop.f32.mrb[0].mxu0
  %635 = vmatprep.mubr.f32.mxu0 0.0
  %v636 = vand.u32 %v98, 4294901760
  %v637 = vsub.f32 %v98, %v636
  %638 = vmatmul.mubr.f32.gmra.mrb[0].mxu0 %v637
  %v639 = vpop.f32.mrb[0].mxu0
  %v640 = vadd.f32 %v469, %v639
  %v641 = vpop.f32.mrb[0].mxu0
  %642 = vmatprep.mubr.f32.mxu0 0.0
  %v643 = vand.u32 %v101, 4294901760
  %v644 = vsub.f32 %v101, %v643
  %645 = vmatmul.mubr.f32.gmra.mrb[0].mxu0 %v644
  %v646 = vpop.f32.mrb[0].mxu0
  %v647 = vadd.f32 %v475, %v646
  %v648 = vpop.f32.mrb[0].mxu0
  %649 = vmatprep.mubr.f32.mxu0 0.0
  %v650 = vand.u32 %v104, 4294901760
  %v651 = vsub.f32 %v104, %v650
  %652 = vmatmul.mubr.f32.gmra.mrb[0].mxu0 %v651
  %v653 = vpop.f32.mrb[0].mxu0
  %v654 = vadd.f32 %v481, %v653
  %v655 = vpop.f32.mrb[0].mxu0
  %656 = vmatprep.mubr.f32.mxu0 0.0
  %v657 = vand.u32 %v107, 4294901760
  %v658 = vsub.f32 %v107, %v657
  %659 = vmatmul.mubr.f32.gmra.mrb[0].mxu0 %v658
  %v660 = vpop.f32.mrb[0].mxu0
  %v661 = vadd.f32 %v487, %v660
  %v662 = vpop.f32.mrb[0].mxu0
  %663 = vmatprep.mubr.f32.mxu0 0.0
  %v664 = vand.u32 %v110, 4294901760
  %v665 = vsub.f32 %v110, %v664
  %666 = vmatmul.mubr.f32.gmra.mrb[0].mxu0 %v665
  %v667 = vpop.f32.mrb[0].mxu0
  %v668 = vadd.f32 %v493, %v667
  %v669 = vpop.f32.mrb[0].mxu0
  %670 = vmatprep.mubr.f32.mxu0 0.0
  %v671 = vand.u32 %v113, 4294901760
  %v672 = vsub.f32 %v113, %v671
  %673 = vmatmul.mubr.f32.gmra.mrb[0].mxu0 %v672
  %v674 = vpop.f32.mrb[0].mxu0
  %v675 = vadd.f32 %v499, %v674
  %v676 = vpop.f32.mrb[0].mxu0
  %677 = vmatprep.mubr.f32.mxu0 0.0
  %v678 = vand.u32 %v116, 4294901760
  %v679 = vsub.f32 %v116, %v678
  %680 = vmatmul.mubr.f32.gmra.mrb[0].mxu0 %v679
  %v681 = vpop.f32.mrb[0].mxu0
  %v682 = vadd.f32 %v505, %v681
  %v683 = vpop.f32.mrb[0].mxu0
  %684 = vmatprep.mubr.f32.mxu0 0.0
  %v685 = vand.u32 %v119, 4294901760
  %v686 = vsub.f32 %v119, %v685
  %687 = vmatmul.mubr.f32.gmra.mrb[0].mxu0 %v686
  %v688 = vpop.f32.mrb[0].mxu0
  %v689 = vadd.f32 %v511, %v688
  %v690 = vpop.f32.mrb[0].mxu0
  %691 = vmatprep.mubr.f32.mxu0 0.0
  %v692 = vand.u32 %v122, 4294901760
  %v693 = vsub.f32 %v122, %v692
  %694 = vmatmul.mubr.f32.gmra.mrb[0].mxu0 %v693
  %v695 = vpop.f32.mrb[0].mxu0
  %v696 = vadd.f32 %v517, %v695
  %v697 = vpop.f32.mrb[0].mxu0
  %698 = vmatprep.mubr.f32.mxu0 0.0
  %v699 = vand.u32 %v125, 4294901760
  %v700 = vsub.f32 %v125, %v699
  %701 = vmatmul.mubr.f32.gmra.mrb[0].mxu0 %v700
  %v702 = vpop.f32.mrb[0].mxu0
  %v703 = vadd.f32 %v523, %v702
  %v704 = vpop.f32.mrb[0].mxu0
  %705 = vmatprep.mubr.f32.mxu0 0.0
  %v706 = vand.u32 %v128, 4294901760
  %v707 = vsub.f32 %v128, %v706
  %708 = vmatmul.mubr.f32.gmra.mrb[0].mxu0 %v707
  %v709 = vpop.f32.mrb[0].mxu0
  %v710 = vadd.f32 %v529, %v709
  %v711 = vpop.f32.mrb[0].mxu0
  %712 = vmatprep.mubr.f32.mxu0 0.0
  %v713 = vand.u32 %v131, 4294901760
  %v714 = vsub.f32 %v131, %v713
  %715 = vmatmul.mubr.f32.gmra.mrb[0].mxu0 %v714
  %v716 = vpop.f32.mrb[0].mxu0
  %v717 = vadd.f32 %v535, %v716
  %v718 = vpop.f32.mrb[0].mxu0
  %719 = vmatprep.mubr.f32.mxu0 0.0
  %v720 = vand.u32 %v134, 4294901760
  %v721 = vsub.f32 %v134, %v720
  %722 = vmatmul.mubr.f32.gmra.mrb[0].mxu0 %v721
  %v723 = vpop.f32.mrb[0].mxu0
  %v724 = vadd.f32 %v541, %v723
  %v725 = vpop.f32.mrb[0].mxu0
  %726 = vmatprep.mubr.f32.mxu0 0.0
  %v727 = vand.u32 %v137, 4294901760
  %v728 = vsub.f32 %v137, %v727
  %729 = vmatmul.mubr.f32.gmra.mrb[0].mxu0 %v728
  %v730 = vpop.f32.mrb[0].mxu0
  %v731 = vadd.f32 %v547, %v730
  %v732 = vpop.f32.mrb[0].mxu0
  %733 = vmatprep.mubr.f32.mxu0 0.0
  %v734 = vand.u32 %v140, 4294901760
  %v735 = vsub.f32 %v140, %v734
  %736 = vmatmul.mubr.f32.gmra.mrb[0].mxu0 %v735
  %v737 = vpop.f32.mrb[0].mxu0
  %v738 = vadd.f32 %v553, %v737
  %v739 = vpop.f32.mrb[0].mxu0
  %740 = vdwg.mxu0
  %741 = vmatprep.subr.mxu0 0.0
  %v742 = vand.u32 %v89, 4294901760
  %743 = vmatpush1.msra.mxu0 %v742
  %744 = vmatprep.subr.mxu0 0.0
  %v745 = vand.u32 %v90, 4294901760
  %746 = vmatpush1.msra.mxu0 %v745
  %747 = vmatprep.subr.mxu0 0.0
  %v748 = vand.u32 %v91, 4294901760
  %749 = vmatpush1.msra.mxu0 %v748
  %750 = vmatprep.subr.mxu0 0.0
  %v751 = vand.u32 %v144, 4294901760
  %752 = vmatpush1.msra.mxu0 %v751
  %753 = vmatprep.subr.mxu0 0.0
  %754 = vmatpush1.msra.mxu0 0.0
  %755 = vmatprep.subr.mxu0 0.0
  %756 = vmatpush1.msra.mxu0 0.0
  %757 = vmatprep.subr.mxu0 0.0
  %758 = vmatpush1.msra.mxu0 0.0
  %759 = vmatprep.subr.mxu0 0.0
  %760 = vmatpush1.msra.mxu0 0.0
  %761 = vmatprep.subr.mxu0 0.0
  %762 = vmatpush1.msra.mxu0 0.0
  %763 = vmatprep.subr.mxu0 0.0
  %764 = vmatpush1.msra.mxu0 0.0
  %765 = vmatprep.subr.mxu0 0.0
  %766 = vmatpush1.msra.mxu0 0.0
  %767 = vmatprep.subr.mxu0 0.0
  %768 = vmatpush1.msra.mxu0 0.0
  %769 = vmatprep.subr.mxu0 0.0
  %770 = vmatpush1.msra.mxu0 0.0
  %771 = vmatprep.subr.mxu0 0.0
  %772 = vmatpush1.msra.mxu0 0.0
  %773 = vmatprep.subr.mxu0 0.0
  %774 = vmatpush1.msra.mxu0 0.0
  %775 = vmatprep.subr.mxu0 0.0
  %776 = vmatpush1.msra.mxu0 0.0
  %777 = vmatprep.subr.mxu0 0.0
  %778 = vmatpush1.msra.mxu0 0.0
  %779 = vmatprep.subr.mxu0 0.0
  %780 = vmatpush1.msra.mxu0 0.0
  %781 = vmatprep.subr.mxu0 0.0
  %782 = vmatpush1.msra.mxu0 0.0
  %783 = vmatprep.subr.mxu0 0.0
  %784 = vmatpush1.msra.mxu0 0.0
  %785 = vmatprep.subr.mxu0 0.0
  %786 = vmatpush1.msra.mxu0 0.0
  %787 = vmatprep.subr.mxu0 0.0
  %788 = vmatpush1.msra.mxu0 0.0
  %789 = vmatprep.subr.mxu0 0.0
  %790 = vmatpush1.msra.mxu0 0.0
  %791 = vmatprep.subr.mxu0 0.0
  %792 = vmatpush1.msra.mxu0 0.0
  %793 = vmatprep.subr.mxu0 0.0
  %794 = vmatpush1.msra.mxu0 0.0
  %795 = vmatprep.subr.mxu0 0.0
  %796 = vmatpush1.msra.mxu0 0.0
  %797 = vmatprep.subr.mxu0 0.0
  %798 = vmatpush1.msra.mxu0 0.0
  %799 = vmatprep.subr.mxu0 0.0
  %800 = vmatpush1.msra.mxu0 0.0
  %801 = vmatprep.subr.mxu0 0.0
  %802 = vmatpush1.msra.mxu0 0.0
  %803 = vmatprep.subr.mxu0 0.0
  %804 = vmatpush1.msra.mxu0 0.0
  %805 = vmatprep.subr.mxu0 0.0
  %806 = vmatpush1.msra.mxu0 0.0
  %807 = vmatprep.subr.mxu0 0.0
  %808 = vmatpush1.msra.mxu0 0.0
  %809 = vmatprep.mubr.f32.mxu0 0.0
  %v810 = vand.u32 %v95, 4294901760
  %v811 = vsub.f32 %v95, %v810
  %v812 = vand.u32 %v811, 4294901760
  %813 = vmatmul.mubr.f32.gmra.mrb[0].mxu0 %v812
  %v814 = vpop.f32.mrb[0].mxu0
  %v815 = vadd.f32 %v633, %v814
  %v816 = vpop.f32.mrb[0].mxu0
  %817 = vmatprep.mubr.f32.mxu0 0.0
  %v818 = vand.u32 %v98, 4294901760
  %v819 = vsub.f32 %v98, %v818
  %v820 = vand.u32 %v819, 4294901760
  %821 = vmatmul.mubr.f32.gmra.mrb[0].mxu0 %v820
  %v822 = vpop.f32.mrb[0].mxu0
  %v823 = vadd.f32 %v640, %v822
  %v824 = vpop.f32.mrb[0].mxu0
  %825 = vmatprep.mubr.f32.mxu0 0.0
  %v826 = vand.u32 %v101, 4294901760
  %v827 = vsub.f32 %v101, %v826
  %v828 = vand.u32 %v827, 4294901760
  %829 = vmatmul.mubr.f32.gmra.mrb[0].mxu0 %v828
  %v830 = vpop.f32.mrb[0].mxu0
  %v831 = vadd.f32 %v647, %v830
  %v832 = vpop.f32.mrb[0].mxu0
  %833 = vmatprep.mubr.f32.mxu0 0.0
  %v834 = vand.u32 %v104, 4294901760
  %v835 = vsub.f32 %v104, %v834
  %v836 = vand.u32 %v835, 4294901760
  %837 = vmatmul.mubr.f32.gmra.mrb[0].mxu0 %v836
  %v838 = vpop.f32.mrb[0].mxu0
  %v839 = vadd.f32 %v654, %v838
  %v840 = vpop.f32.mrb[0].mxu0
  %841 = vmatprep.mubr.f32.mxu0 0.0
  %v842 = vand.u32 %v107, 4294901760
  %v843 = vsub.f32 %v107, %v842
  %v844 = vand.u32 %v843, 4294901760
  %845 = vmatmul.mubr.f32.gmra.mrb[0].mxu0 %v844
  %v846 = vpop.f32.mrb[0].mxu0
  %v847 = vadd.f32 %v661, %v846
  %v848 = vpop.f32.mrb[0].mxu0
  %849 = vmatprep.mubr.f32.mxu0 0.0
  %v850 = vand.u32 %v110, 4294901760
  %v851 = vsub.f32 %v110, %v850
  %v852 = vand.u32 %v851, 4294901760
  %853 = vmatmul.mubr.f32.gmra.mrb[0].mxu0 %v852
  %v854 = vpop.f32.mrb[0].mxu0
  %v855 = vadd.f32 %v668, %v854
  %v856 = vpop.f32.mrb[0].mxu0
  %857 = vmatprep.mubr.f32.mxu0 0.0
  %v858 = vand.u32 %v113, 4294901760
  %v859 = vsub.f32 %v113, %v858
  %v860 = vand.u32 %v859, 4294901760
  %861 = vmatmul.mubr.f32.gmra.mrb[0].mxu0 %v860
  %v862 = vpop.f32.mrb[0].mxu0
  %v863 = vadd.f32 %v675, %v862
  %v864 = vpop.f32.mrb[0].mxu0
  %865 = vmatprep.mubr.f32.mxu0 0.0
  %v866 = vand.u32 %v116, 4294901760
  %v867 = vsub.f32 %v116, %v866
  %v868 = vand.u32 %v867, 4294901760
  %869 = vmatmul.mubr.f32.gmra.mrb[0].mxu0 %v868
  %v870 = vpop.f32.mrb[0].mxu0
  %v871 = vadd.f32 %v682, %v870
  %v872 = vpop.f32.mrb[0].mxu0
  %873 = vmatprep.mubr.f32.mxu0 0.0
  %v874 = vand.u32 %v119, 4294901760
  %v875 = vsub.f32 %v119, %v874
  %v876 = vand.u32 %v875, 4294901760
  %877 = vmatmul.mubr.f32.gmra.mrb[0].mxu0 %v876
  %v878 = vpop.f32.mrb[0].mxu0
  %v879 = vadd.f32 %v689, %v878
  %v880 = vpop.f32.mrb[0].mxu0
  %881 = vmatprep.mubr.f32.mxu0 0.0
  %v882 = vand.u32 %v122, 4294901760
  %v883 = vsub.f32 %v122, %v882
  %v884 = vand.u32 %v883, 4294901760
  %885 = vmatmul.mubr.f32.gmra.mrb[0].mxu0 %v884
  %v886 = vpop.f32.mrb[0].mxu0
  %v887 = vadd.f32 %v696, %v886
  %v888 = vpop.f32.mrb[0].mxu0
  %889 = vmatprep.mubr.f32.mxu0 0.0
  %v890 = vand.u32 %v125, 4294901760
  %v891 = vsub.f32 %v125, %v890
  %v892 = vand.u32 %v891, 4294901760
  %893 = vmatmul.mubr.f32.gmra.mrb[0].mxu0 %v892
  %v894 = vpop.f32.mrb[0].mxu0
  %v895 = vadd.f32 %v703, %v894
  %v896 = vpop.f32.mrb[0].mxu0
  %897 = vmatprep.mubr.f32.mxu0 0.0
  %v898 = vand.u32 %v128, 4294901760
  %v899 = vsub.f32 %v128, %v898
  %v900 = vand.u32 %v899, 4294901760
  %901 = vmatmul.mubr.f32.gmra.mrb[0].mxu0 %v900
  %v902 = vpop.f32.mrb[0].mxu0
  %v903 = vadd.f32 %v710, %v902
  %v904 = vpop.f32.mrb[0].mxu0
  %905 = vmatprep.mubr.f32.mxu0 0.0
  %v906 = vand.u32 %v131, 4294901760
  %v907 = vsub.f32 %v131, %v906
  %v908 = vand.u32 %v907, 4294901760
  %909 = vmatmul.mubr.f32.gmra.mrb[0].mxu0 %v908
  %v910 = vpop.f32.mrb[0].mxu0
  %v911 = vadd.f32 %v717, %v910
  %v912 = vpop.f32.mrb[0].mxu0
  %913 = vmatprep.mubr.f32.mxu0 0.0
  %v914 = vand.u32 %v134, 4294901760
  %v915 = vsub.f32 %v134, %v914
  %v916 = vand.u32 %v915, 4294901760
  %917 = vmatmul.mubr.f32.gmra.mrb[0].mxu0 %v916
  %v918 = vpop.f32.mrb[0].mxu0
  %v919 = vadd.f32 %v724, %v918
  %v920 = vpop.f32.mrb[0].mxu0
  %921 = vmatprep.mubr.f32.mxu0 0.0
  %v922 = vand.u32 %v137, 4294901760
  %v923 = vsub.f32 %v137, %v922
  %v924 = vand.u32 %v923, 4294901760
  %925 = vmatmul.mubr.f32.gmra.mrb[0].mxu0 %v924
  %v926 = vpop.f32.mrb[0].mxu0
  %v927 = vadd.f32 %v731, %v926
  %v928 = vpop.f32.mrb[0].mxu0
  %929 = vmatprep.mubr.f32.mxu0 0.0
  %v930 = vand.u32 %v140, 4294901760
  %v931 = vsub.f32 %v140, %v930
  %v932 = vand.u32 %v931, 4294901760
  %933 = vmatmul.mubr.f32.gmra.mrb[0].mxu0 %v932
  %v934 = vpop.f32.mrb[0].mxu0
  %v935 = vadd.f32 %v738, %v934
  %v936 = vpop.f32.mrb[0].mxu0
  %937 = vdwg.mxu0
  %938 = vmatprep.subr.mxu0 0.0
  %v939 = vand.u32 %v89, 4294901760
  %v940 = vsub.f32 %v89, %v939
  %v941 = vand.u32 %v940, 4294901760
  %942 = vmatpush1.msra.mxu0 %v941
  %943 = vmatprep.subr.mxu0 0.0
  %v944 = vand.u32 %v90, 4294901760
  %v945 = vsub.f32 %v90, %v944
  %v946 = vand.u32 %v945, 4294901760
  %947 = vmatpush1.msra.mxu0 %v946
  %948 = vmatprep.subr.mxu0 0.0
  %v949 = vand.u32 %v91, 4294901760
  %v950 = vsub.f32 %v91, %v949
  %v951 = vand.u32 %v950, 4294901760
  %952 = vmatpush1.msra.mxu0 %v951
  %953 = vmatprep.subr.mxu0 0.0
  %v954 = vand.u32 %v144, 4294901760
  %v955 = vsub.f32 %v144, %v954
  %v956 = vand.u32 %v955, 4294901760
  %957 = vmatpush1.msra.mxu0 %v956
  %958 = vmatprep.subr.mxu0 0.0
  %959 = vmatpush1.msra.mxu0 0.0
  %960 = vmatprep.subr.mxu0 0.0
  %961 = vmatpush1.msra.mxu0 0.0
  %962 = vmatprep.subr.mxu0 0.0
  %963 = vmatpush1.msra.mxu0 0.0
  %964 = vmatprep.subr.mxu0 0.0
  %965 = vmatpush1.msra.mxu0 0.0
  %966 = vmatprep.subr.mxu0 0.0
  %967 = vmatpush1.msra.mxu0 0.0
  %968 = vmatprep.subr.mxu0 0.0
  %969 = vmatpush1.msra.mxu0 0.0
  %970 = vmatprep.subr.mxu0 0.0
  %971 = vmatpush1.msra.mxu0 0.0
  %972 = vmatprep.subr.mxu0 0.0
  %973 = vmatpush1.msra.mxu0 0.0
  %974 = vmatprep.subr.mxu0 0.0
  %975 = vmatpush1.msra.mxu0 0.0
  %976 = vmatprep.subr.mxu0 0.0
  %977 = vmatpush1.msra.mxu0 0.0
  %978 = vmatprep.subr.mxu0 0.0
  %979 = vmatpush1.msra.mxu0 0.0
  %980 = vmatprep.subr.mxu0 0.0
  %981 = vmatpush1.msra.mxu0 0.0
  %982 = vmatprep.subr.mxu0 0.0
  %983 = vmatpush1.msra.mxu0 0.0
  %984 = vmatprep.subr.mxu0 0.0
  %985 = vmatpush1.msra.mxu0 0.0
  %986 = vmatprep.subr.mxu0 0.0
  %987 = vmatpush1.msra.mxu0 0.0
  %988 = vmatprep.subr.mxu0 0.0
  %989 = vmatpush1.msra.mxu0 0.0
  %990 = vmatprep.subr.mxu0 0.0
  %991 = vmatpush1.msra.mxu0 0.0
  %992 = vmatprep.subr.mxu0 0.0
  %993 = vmatpush1.msra.mxu0 0.0
  %994 = vmatprep.subr.mxu0 0.0
  %995 = vmatpush1.msra.mxu0 0.0
  %996 = vmatprep.subr.mxu0 0.0
  %997 = vmatpush1.msra.mxu0 0.0
  %998 = vmatprep.subr.mxu0 0.0
  %999 = vmatpush1.msra.mxu0 0.0
  %1000 = vmatprep.subr.mxu0 0.0
  %1001 = vmatpush1.msra.mxu0 0.0
  %1002 = vmatprep.subr.mxu0 0.0
  %1003 = vmatpush1.msra.mxu0 0.0
  %1004 = vmatprep.subr.mxu0 0.0
  %1005 = vmatpush1.msra.mxu0 0.0
  %1006 = vmatprep.subr.mxu0 0.0
  %1007 = vmatpush1.msra.mxu0 0.0
  %1008 = vmatprep.subr.mxu0 0.0
  %1009 = vmatpush1.msra.mxu0 0.0
  %1010 = vmatprep.subr.mxu0 0.0
  %1011 = vmatpush1.msra.mxu0 0.0
  %1012 = vmatprep.subr.mxu0 0.0
  %1013 = vmatpush1.msra.mxu0 0.0
  %1014 = vmatprep.mubr.f32.mxu0 0.0
  %v1015 = vand.u32 %v95, 4294901760
  %1016 = vmatmul.mubr.f32.gmra.mrb[0].mxu0 %v1015
  %v1017 = vpop.f32.mrb[0].mxu0
  %v1018 = vadd.f32 %v815, %v1017
  %v1019 = vpop.f32.mrb[0].mxu0
  %1020 = vmatprep.mubr.f32.mxu0 0.0
  %v1021 = vand.u32 %v98, 4294901760
  %1022 = vmatmul.mubr.f32.gmra.mrb[0].mxu0 %v1021
  %v1023 = vpop.f32.mrb[0].mxu0
  %v1024 = vadd.f32 %v823, %v1023
  %v1025 = vpop.f32.mrb[0].mxu0
  %1026 = vmatprep.mubr.f32.mxu0 0.0
  %v1027 = vand.u32 %v101, 4294901760
  %1028 = vmatmul.mubr.f32.gmra.mrb[0].mxu0 %v1027
  %v1029 = vpop.f32.mrb[0].mxu0
  %v1030 = vadd.f32 %v831, %v1029
  %v1031 = vpop.f32.mrb[0].mxu0
  %1032 = vmatprep.mubr.f32.mxu0 0.0
  %v1033 = vand.u32 %v104, 4294901760
  %1034 = vmatmul.mubr.f32.gmra.mrb[0].mxu0 %v1033
  %v1035 = vpop.f32.mrb[0].mxu0
  %v1036 = vadd.f32 %v839, %v1035
  %v1037 = vpop.f32.mrb[0].mxu0
  %1038 = vmatprep.mubr.f32.mxu0 0.0
  %v1039 = vand.u32 %v107, 4294901760
  %1040 = vmatmul.mubr.f32.gmra.mrb[0].mxu0 %v1039
  %v1041 = vpop.f32.mrb[0].mxu0
  %v1042 = vadd.f32 %v847, %v1041
  %v1043 = vpop.f32.mrb[0].mxu0
  %1044 = vmatprep.mubr.f32.mxu0 0.0
  %v1045 = vand.u32 %v110, 4294901760
  %1046 = vmatmul.mubr.f32.gmra.mrb[0].mxu0 %v1045
  %v1047 = vpop.f32.mrb[0].mxu0
  %v1048 = vadd.f32 %v855, %v1047
  %v1049 = vpop.f32.mrb[0].mxu0
  %1050 = vmatprep.mubr.f32.mxu0 0.0
  %v1051 = vand.u32 %v113, 4294901760
  %1052 = vmatmul.mubr.f32.gmra.mrb[0].mxu0 %v1051
  %v1053 = vpop.f32.mrb[0].mxu0
  %v1054 = vadd.f32 %v863, %v1053
  %v1055 = vpop.f32.mrb[0].mxu0
  %1056 = vmatprep.mubr.f32.mxu0 0.0
  %v1057 = vand.u32 %v116, 4294901760
  %1058 = vmatmul.mubr.f32.gmra.mrb[0].mxu0 %v1057
  %v1059 = vpop.f32.mrb[0].mxu0
  %v1060 = vadd.f32 %v871, %v1059
  %v1061 = vpop.f32.mrb[0].mxu0
  %1062 = vmatprep.mubr.f32.mxu0 0.0
  %v1063 = vand.u32 %v119, 4294901760
  %1064 = vmatmul.mubr.f32.gmra.mrb[0].mxu0 %v1063
  %v1065 = vpop.f32.mrb[0].mxu0
  %v1066 = vadd.f32 %v879, %v1065
  %v1067 = vpop.f32.mrb[0].mxu0
  %1068 = vmatprep.mubr.f32.mxu0 0.0
  %v1069 = vand.u32 %v122, 4294901760
  %1070 = vmatmul.mubr.f32.gmra.mrb[0].mxu0 %v1069
  %v1071 = vpop.f32.mrb[0].mxu0
  %v1072 = vadd.f32 %v887, %v1071
  %v1073 = vpop.f32.mrb[0].mxu0
  %1074 = vmatprep.mubr.f32.mxu0 0.0
  %v1075 = vand.u32 %v125, 4294901760
  %1076 = vmatmul.mubr.f32.gmra.mrb[0].mxu0 %v1075
  %v1077 = vpop.f32.mrb[0].mxu0
  %v1078 = vadd.f32 %v895, %v1077
  %v1079 = vpop.f32.mrb[0].mxu0
  %1080 = vmatprep.mubr.f32.mxu0 0.0
  %v1081 = vand.u32 %v128, 4294901760
  %1082 = vmatmul.mubr.f32.gmra.mrb[0].mxu0 %v1081
  %v1083 = vpop.f32.mrb[0].mxu0
  %v1084 = vadd.f32 %v903, %v1083
  %v1085 = vpop.f32.mrb[0].mxu0
  %1086 = vmatprep.mubr.f32.mxu0 0.0
  %v1087 = vand.u32 %v131, 4294901760
  %1088 = vmatmul.mubr.f32.gmra.mrb[0].mxu0 %v1087
  %v1089 = vpop.f32.mrb[0].mxu0
  %v1090 = vadd.f32 %v911, %v1089
  %v1091 = vpop.f32.mrb[0].mxu0
  %1092 = vmatprep.mubr.f32.mxu0 0.0
  %v1093 = vand.u32 %v134, 4294901760
  %1094 = vmatmul.mubr.f32.gmra.mrb[0].mxu0 %v1093
  %v1095 = vpop.f32.mrb[0].mxu0
  %v1096 = vadd.f32 %v919, %v1095
  %v1097 = vpop.f32.mrb[0].mxu0
  %1098 = vmatprep.mubr.f32.mxu0 0.0
  %v1099 = vand.u32 %v137, 4294901760
  %1100 = vmatmul.mubr.f32.gmra.mrb[0].mxu0 %v1099
  %v1101 = vpop.f32.mrb[0].mxu0
  %v1102 = vadd.f32 %v927, %v1101
  %v1103 = vpop.f32.mrb[0].mxu0
  %1104 = vmatprep.mubr.f32.mxu0 0.0
  %v1105 = vand.u32 %v140, 4294901760
  %1106 = vmatmul.mubr.f32.gmra.mrb[0].mxu0 %v1105
  %v1107 = vpop.f32.mrb[0].mxu0
  %v1108 = vadd.f32 %v935, %v1107
  %v1109 = vpop.f32.mrb[0].mxu0
  %1110 = vdwg.mxu0
  %1111 = vmatprep.subr.mxu0 0.0
  %v1112 = vand.u32 %v89, 4294901760
  %1113 = vmatpush1.msra.mxu0 %v1112
  %1114 = vmatprep.subr.mxu0 0.0
  %v1115 = vand.u32 %v90, 4294901760
  %1116 = vmatpush1.msra.mxu0 %v1115
  %1117 = vmatprep.subr.mxu0 0.0
  %v1118 = vand.u32 %v91, 4294901760
  %1119 = vmatpush1.msra.mxu0 %v1118
  %1120 = vmatprep.subr.mxu0 0.0
  %v1121 = vand.u32 %v144, 4294901760
  %1122 = vmatpush1.msra.mxu0 %v1121
  %1123 = vmatprep.subr.mxu0 0.0
  %1124 = vmatpush1.msra.mxu0 0.0
  %1125 = vmatprep.subr.mxu0 0.0
  %1126 = vmatpush1.msra.mxu0 0.0
  %1127 = vmatprep.subr.mxu0 0.0
  %1128 = vmatpush1.msra.mxu0 0.0
  %1129 = vmatprep.subr.mxu0 0.0
  %1130 = vmatpush1.msra.mxu0 0.0
  %1131 = vmatprep.subr.mxu0 0.0
  %1132 = vmatpush1.msra.mxu0 0.0
  %1133 = vmatprep.subr.mxu0 0.0
  %1134 = vmatpush1.msra.mxu0 0.0
  %1135 = vmatprep.subr.mxu0 0.0
  %1136 = vmatpush1.msra.mxu0 0.0
  %1137 = vmatprep.subr.mxu0 0.0
  %1138 = vmatpush1.msra.mxu0 0.0
  %1139 = vmatprep.subr.mxu0 0.0
  %1140 = vmatpush1.msra.mxu0 0.0
  %1141 = vmatprep.subr.mxu0 0.0
  %1142 = vmatpush1.msra.mxu0 0.0
  %1143 = vmatprep.subr.mxu0 0.0
  %1144 = vmatpush1.msra.mxu0 0.0
  %1145 = vmatprep.subr.mxu0 0.0
  %1146 = vmatpush1.msra.mxu0 0.0
  %1147 = vmatprep.subr.mxu0 0.0
  %1148 = vmatpush1.msra.mxu0 0.0
  %1149 = vmatprep.subr.mxu0 0.0
  %1150 = vmatpush1.msra.mxu0 0.0
  %1151 = vmatprep.subr.mxu0 0.0
  %1152 = vmatpush1.msra.mxu0 0.0
  %1153 = vmatprep.subr.mxu0 0.0
  %1154 = vmatpush1.msra.mxu0 0.0
  %1155 = vmatprep.subr.mxu0 0.0
  %1156 = vmatpush1.msra.mxu0 0.0
  %1157 = vmatprep.subr.mxu0 0.0
  %1158 = vmatpush1.msra.mxu0 0.0
  %1159 = vmatprep.subr.mxu0 0.0
  %1160 = vmatpush1.msra.mxu0 0.0
  %1161 = vmatprep.subr.mxu0 0.0
  %1162 = vmatpush1.msra.mxu0 0.0
  %1163 = vmatprep.subr.mxu0 0.0
  %1164 = vmatpush1.msra.mxu0 0.0
  %1165 = vmatprep.subr.mxu0 0.0
  %1166 = vmatpush1.msra.mxu0 0.0
  %1167 = vmatprep.subr.mxu0 0.0
  %1168 = vmatpush1.msra.mxu0 0.0
  %1169 = vmatprep.subr.mxu0 0.0
  %1170 = vmatpush1.msra.mxu0 0.0
  %1171 = vmatprep.subr.mxu0 0.0
  %1172 = vmatpush1.msra.mxu0 0.0
  %1173 = vmatprep.subr.mxu0 0.0
  %1174 = vmatpush1.msra.mxu0 0.0
  %1175 = vmatprep.subr.mxu0 0.0
  %1176 = vmatpush1.msra.mxu0 0.0
  %1177 = vmatprep.subr.mxu0 0.0
  %1178 = vmatpush1.msra.mxu0 0.0
  %1179 = vmatprep.mubr.f32.mxu0 0.0
  %v1180 = vand.u32 %v95, 4294901760
  %1181 = vmatmul.mubr.f32.gmra.mrb[0].mxu0 %v1180
  %v1182 = vpop.f32.mrb[0].mxu0
  %v1183 = vadd.f32 %v1018, %v1182
  %v1184 = vpop.f32.mrb[0].mxu0
  %1185 = vmatprep.mubr.f32.mxu0 0.0
  %v1186 = vand.u32 %v98, 4294901760
  %1187 = vmatmul.mubr.f32.gmra.mrb[0].mxu0 %v1186
  %v1188 = vpop.f32.mrb[0].mxu0
  %v1189 = vadd.f32 %v1024, %v1188
  %v1190 = vpop.f32.mrb[0].mxu0
  %1191 = vmatprep.mubr.f32.mxu0 0.0
  %v1192 = vand.u32 %v101, 4294901760
  %1193 = vmatmul.mubr.f32.gmra.mrb[0].mxu0 %v1192
  %v1194 = vpop.f32.mrb[0].mxu0
  %v1195 = vadd.f32 %v1030, %v1194
  %v1196 = vpop.f32.mrb[0].mxu0
  %1197 = vmatprep.mubr.f32.mxu0 0.0
  %v1198 = vand.u32 %v104, 4294901760
  %1199 = vmatmul.mubr.f32.gmra.mrb[0].mxu0 %v1198
  %v1200 = vpop.f32.mrb[0].mxu0
  %v1201 = vadd.f32 %v1036, %v1200
  %v1202 = vpop.f32.mrb[0].mxu0
  %1203 = vmatprep.mubr.f32.mxu0 0.0
  %v1204 = vand.u32 %v107, 4294901760
  %1205 = vmatmul.mubr.f32.gmra.mrb[0].mxu0 %v1204
  %v1206 = vpop.f32.mrb[0].mxu0
  %v1207 = vadd.f32 %v1042, %v1206
  %v1208 = vpop.f32.mrb[0].mxu0
  %1209 = vmatprep.mubr.f32.mxu0 0.0
  %v1210 = vand.u32 %v110, 4294901760
  %1211 = vmatmul.mubr.f32.gmra.mrb[0].mxu0 %v1210
  %v1212 = vpop.f32.mrb[0].mxu0
  %v1213 = vadd.f32 %v1048, %v1212
  %v1214 = vpop.f32.mrb[0].mxu0
  %1215 = vmatprep.mubr.f32.mxu0 0.0
  %v1216 = vand.u32 %v113, 4294901760
  %1217 = vmatmul.mubr.f32.gmra.mrb[0].mxu0 %v1216
  %v1218 = vpop.f32.mrb[0].mxu0
  %v1219 = vadd.f32 %v1054, %v1218
  %v1220 = vpop.f32.mrb[0].mxu0
  %1221 = vmatprep.mubr.f32.mxu0 0.0
  %v1222 = vand.u32 %v116, 4294901760
  %1223 = vmatmul.mubr.f32.gmra.mrb[0].mxu0 %v1222
  %v1224 = vpop.f32.mrb[0].mxu0
  %v1225 = vadd.f32 %v1060, %v1224
  %v1226 = vpop.f32.mrb[0].mxu0
  %1227 = vmatprep.mubr.f32.mxu0 0.0
  %v1228 = vand.u32 %v119, 4294901760
  %1229 = vmatmul.mubr.f32.gmra.mrb[0].mxu0 %v1228
  %v1230 = vpop.f32.mrb[0].mxu0
  %v1231 = vadd.f32 %v1066, %v1230
  %v1232 = vpop.f32.mrb[0].mxu0
  %1233 = vmatprep.mubr.f32.mxu0 0.0
  %v1234 = vand.u32 %v122, 4294901760
  %1235 = vmatmul.mubr.f32.gmra.mrb[0].mxu0 %v1234
  %v1236 = vpop.f32.mrb[0].mxu0
  %v1237 = vadd.f32 %v1072, %v1236
  %v1238 = vpop.f32.mrb[0].mxu0
  %1239 = vmatprep.mubr.f32.mxu0 0.0
  %v1240 = vand.u32 %v125, 4294901760
  %1241 = vmatmul.mubr.f32.gmra.mrb[0].mxu0 %v1240
  %v1242 = vpop.f32.mrb[0].mxu0
  %v1243 = vadd.f32 %v1078, %v1242
  %v1244 = vpop.f32.mrb[0].mxu0
  %1245 = vmatprep.mubr.f32.mxu0 0.0
  %v1246 = vand.u32 %v128, 4294901760
  %1247 = vmatmul.mubr.f32.gmra.mrb[0].mxu0 %v1246
  %v1248 = vpop.f32.mrb[0].mxu0
  %v1249 = vadd.f32 %v1084, %v1248
  %v1250 = vpop.f32.mrb[0].mxu0
  %1251 = vmatprep.mubr.f32.mxu0 0.0
  %v1252 = vand.u32 %v131, 4294901760
  %1253 = vmatmul.mubr.f32.gmra.mrb[0].mxu0 %v1252
  %v1254 = vpop.f32.mrb[0].mxu0
  %v1255 = vadd.f32 %v1090, %v1254
  %v1256 = vpop.f32.mrb[0].mxu0
  %1257 = vmatprep.mubr.f32.mxu0 0.0
  %v1258 = vand.u32 %v134, 4294901760
  %1259 = vmatmul.mubr.f32.gmra.mrb[0].mxu0 %v1258
  %v1260 = vpop.f32.mrb[0].mxu0
  %v1261 = vadd.f32 %v1096, %v1260
  %v1262 = vpop.f32.mrb[0].mxu0
  %1263 = vmatprep.mubr.f32.mxu0 0.0
  %v1264 = vand.u32 %v137, 4294901760
  %1265 = vmatmul.mubr.f32.gmra.mrb[0].mxu0 %v1264
  %v1266 = vpop.f32.mrb[0].mxu0
  %v1267 = vadd.f32 %v1102, %v1266
  %v1268 = vpop.f32.mrb[0].mxu0
  %1269 = vmatprep.mubr.f32.mxu0 0.0
  %v1270 = vand.u32 %v140, 4294901760
  %1271 = vmatmul.mubr.f32.gmra.mrb[0].mxu0 %v1270
  %v1272 = vpop.f32.mrb[0].mxu0
  %v1273 = vadd.f32 %v1108, %v1272
  %v1274 = vpop.f32.mrb[0].mxu0
  %1275 = vdwg.mxu0
  %v1276 = vld [vmem:[%s3] sm:$0x1]
  %v1277 = vlaneseq
  %v1278 = vshrl.u32 %v1277, 7
  %v1279 = vsub.s32 0, %v1278
  %v1280 = vrot.slane %v1276, %v1279
  %v1281 = vmul.f32 %v1183, %v1280
  %v1282 = vmul.f32 %v1189, %v1280
  %v1283 = vmul.f32 %v1195, %v1280
  %v1284 = vmul.f32 %v1201, %v1280
  %v1285 = vmul.f32 %v1207, %v1280
  %v1286 = vmul.f32 %v1213, %v1280
  %v1287 = vmul.f32 %v1219, %v1280
  %v1288 = vmul.f32 %v1225, %v1280
  %v1289 = vmul.f32 %v1231, %v1280
  %v1290 = vmul.f32 %v1237, %v1280
  %v1291 = vmul.f32 %v1243, %v1280
  %v1292 = vmul.f32 %v1249, %v1280
  %v1293 = vmul.f32 %v1255, %v1280
  %v1294 = vmul.f32 %v1261, %v1280
  %v1295 = vmul.f32 %v1267, %v1280
  %v1296 = vmul.f32 %v1273, %v1280
  %v1297 = vld [vmem:[%s3 + $0x1] sm:$0x1]
  %v1298 = vlaneseq
  %v1299 = vshrl.u32 %v1298, 7
  %v1300 = vsub.s32 0, %v1299
  %v1301 = vrot.slane %v1297, %v1300
  %v1302 = vadd.f32 %v1281, %v1301
  %v1303 = vadd.f32 %v1282, %v1301
  %v1304 = vadd.f32 %v1283, %v1301
  %v1305 = vadd.f32 %v1284, %v1301
  %v1306 = vadd.f32 %v1285, %v1301
  %v1307 = vadd.f32 %v1286, %v1301
  %v1308 = vadd.f32 %v1287, %v1301
  %v1309 = vadd.f32 %v1288, %v1301
  %v1310 = vadd.f32 %v1289, %v1301
  %v1311 = vadd.f32 %v1290, %v1301
  %v1312 = vadd.f32 %v1291, %v1301
  %v1313 = vadd.f32 %v1292, %v1301
  %v1314 = vadd.f32 %v1293, %v1301
  %v1315 = vadd.f32 %v1294, %v1301
  %v1316 = vadd.f32 %v1295, %v1301
  %v1317 = vadd.f32 %v1296, %v1301
  %v1318 = vmax.f32 %v1302, 0.0
  %v1319 = vmax.f32 %v1303, 0.0
  %v1320 = vmax.f32 %v1304, 0.0
  %v1321 = vmax.f32 %v1305, 0.0
  %v1322 = vmax.f32 %v1306, 0.0
  %v1323 = vmax.f32 %v1307, 0.0
  %v1324 = vmax.f32 %v1308, 0.0
  %v1325 = vmax.f32 %v1309, 0.0
  %v1326 = vmax.f32 %v1310, 0.0
  %v1327 = vmax.f32 %v1311, 0.0
  %v1328 = vmax.f32 %v1312, 0.0
  %v1329 = vmax.f32 %v1313, 0.0
  %v1330 = vmax.f32 %v1314, 0.0
  %v1331 = vmax.f32 %v1315, 0.0
  %v1332 = vmax.f32 %v1316, 0.0
  %v1333 = vmax.f32 %v1317, 0.0
  %vm1334 = vcmask 523264
  %v1336 = vsel %vm1334, %v31, 0
  %v1339 = vsel %vm1334, %v32, 0
  %v1342 = vsel %vm1334, %v33, 0
  %v1345 = vsel %vm1334, %v34, 0
  %v1348 = vsel %vm1334, %v35, 0
  %v1351 = vsel %vm1334, %v36, 0
  %v1354 = vsel %vm1334, %v37, 0
  %v1357 = vsel %vm1334, %v38, 0
  %v1360 = vsel %vm1334, %v39, 0
  %v1363 = vsel %vm1334, %v40, 0
  %v1366 = vsel %vm1334, %v41, 0
  %v1369 = vsel %vm1334, %v42, 0
  %v1372 = vsel %vm1334, %v43, 0
  %v1375 = vsel %vm1334, %v44, 0
  %v1378 = vsel %vm1334, %v45, 0
  %v1381 = vsel %vm1334, %v46, 0
  %v1384 = vsel %vm1334, %v47, 0
  %v1387 = vsel %vm1334, %v48, 0
  %1389 = vmatprep.subr.mxu0 0.0
  %v1390 = vand.u32 %v1318, 4294901760
  %1391 = vmatpush1.msra.mxu0 %v1390
  %1392 = vmatprep.subr.mxu0 0.0
  %v1393 = vand.u32 %v1319, 4294901760
  %1394 = vmatpush1.msra.mxu0 %v1393
  %1395 = vmatprep.subr.mxu0 0.0
  %v1396 = vand.u32 %v1320, 4294901760
  %1397 = vmatpush1.msra.mxu0 %v1396
  %1398 = vmatprep.subr.mxu0 0.0
  %v1399 = vand.u32 %v1321, 4294901760
  %1400 = vmatpush1.msra.mxu0 %v1399
  %1401 = vmatprep.subr.mxu0 0.0
  %v1402 = vand.u32 %v1322, 4294901760
  %1403 = vmatpush1.msra.mxu0 %v1402
  %1404 = vmatprep.subr.mxu0 0.0
  %v1405 = vand.u32 %v1323, 4294901760
  %1406 = vmatpush1.msra.mxu0 %v1405
  %1407 = vmatprep.subr.mxu0 0.0
  %v1408 = vand.u32 %v1324, 4294901760
  %1409 = vmatpush1.msra.mxu0 %v1408
  %1410 = vmatprep.subr.mxu0 0.0
  %v1411 = vand.u32 %v1325, 4294901760
  %1412 = vmatpush1.msra.mxu0 %v1411
  %1413 = vmatprep.subr.mxu0 0.0
  %1414 = vmatpush1.msra.mxu0 0.0
  %1415 = vmatprep.subr.mxu0 0.0
  %1416 = vmatpush1.msra.mxu0 0.0
  %1417 = vmatprep.subr.mxu0 0.0
  %1418 = vmatpush1.msra.mxu0 0.0
  %1419 = vmatprep.subr.mxu0 0.0
  %1420 = vmatpush1.msra.mxu0 0.0
  %1421 = vmatprep.subr.mxu0 0.0
  %1422 = vmatpush1.msra.mxu0 0.0
  %1423 = vmatprep.subr.mxu0 0.0
  %1424 = vmatpush1.msra.mxu0 0.0
  %1425 = vmatprep.subr.mxu0 0.0
  %1426 = vmatpush1.msra.mxu0 0.0
  %1427 = vmatprep.subr.mxu0 0.0
  %1428 = vmatpush1.msra.mxu0 0.0
  %1429 = vmatprep.subr.mxu0 0.0
  %1430 = vmatpush1.msra.mxu0 0.0
  %1431 = vmatprep.subr.mxu0 0.0
  %1432 = vmatpush1.msra.mxu0 0.0
  %1433 = vmatprep.subr.mxu0 0.0
  %1434 = vmatpush1.msra.mxu0 0.0
  %1435 = vmatprep.subr.mxu0 0.0
  %1436 = vmatpush1.msra.mxu0 0.0
  %1437 = vmatprep.subr.mxu0 0.0
  %1438 = vmatpush1.msra.mxu0 0.0
  %1439 = vmatprep.subr.mxu0 0.0
  %1440 = vmatpush1.msra.mxu0 0.0
  %1441 = vmatprep.subr.mxu0 0.0
  %1442 = vmatpush1.msra.mxu0 0.0
  %1443 = vmatprep.subr.mxu0 0.0
  %1444 = vmatpush1.msra.mxu0 0.0
  %1445 = vmatprep.subr.mxu0 0.0
  %1446 = vmatpush1.msra.mxu0 0.0
  %1447 = vmatprep.subr.mxu0 0.0
  %1448 = vmatpush1.msra.mxu0 0.0
  %1449 = vmatprep.subr.mxu0 0.0
  %1450 = vmatpush1.msra.mxu0 0.0
  %1451 = vmatprep.subr.mxu0 0.0
  %1452 = vmatpush1.msra.mxu0 0.0
  %1453 = vmatprep.subr.mxu0 0.0
  %1454 = vmatpush1.msra.mxu0 0.0
  %1455 = vmatprep.subr.mxu0 0.0
  %1456 = vmatpush1.msra.mxu0 0.0
  %1457 = vmatprep.subr.mxu0 0.0
  %1458 = vmatpush1.msra.mxu0 0.0
  %1459 = vmatprep.subr.mxu0 0.0
  %1460 = vmatpush1.msra.mxu0 0.0
  %1461 = vmatprep.mubr.f32.mxu0 0.0
  %v1462 = vand.u32 %v1336, 4294901760
  %v1463 = vsub.f32 %v1336, %v1462
  %v1464 = vand.u32 %v1463, 4294901760
  %v1465 = vsub.f32 %v1463, %v1464
  %v1466 = vand.u32 %v1465, 4294901760
  %1467 = vmatmul.mubr.f32.gmra.mrb[0].mxu0 %v1466
  %v1468 = vpop.f32.mrb[0].mxu0
  %v1469 = vadd.f32 0.0, %v1468
  %v1470 = vpop.f32.mrb[0].mxu0
  %1471 = vmatprep.mubr.f32.mxu0 0.0
  %v1472 = vand.u32 %v1339, 4294901760
  %v1473 = vsub.f32 %v1339, %v1472
  %v1474 = vand.u32 %v1473, 4294901760
  %v1475 = vsub.f32 %v1473, %v1474
  %v1476 = vand.u32 %v1475, 4294901760
  %1477 = vmatmul.mubr.f32.gmra.mrb[0].mxu0 %v1476
  %v1478 = vpop.f32.mrb[0].mxu0
  %v1479 = vadd.f32 0.0, %v1478
  %v1480 = vpop.f32.mrb[0].mxu0
  %1481 = vmatprep.mubr.f32.mxu0 0.0
  %v1482 = vand.u32 %v1342, 4294901760
  %v1483 = vsub.f32 %v1342, %v1482
  %v1484 = vand.u32 %v1483, 4294901760
  %v1485 = vsub.f32 %v1483, %v1484
  %v1486 = vand.u32 %v1485, 4294901760
  %1487 = vmatmul.mubr.f32.gmra.mrb[0].mxu0 %v1486
  %v1488 = vpop.f32.mrb[0].mxu0
  %v1489 = vadd.f32 0.0, %v1488
  %v1490 = vpop.f32.mrb[0].mxu0
  %1491 = vmatprep.mubr.f32.mxu0 0.0
  %v1492 = vand.u32 %v1345, 4294901760
  %v1493 = vsub.f32 %v1345, %v1492
  %v1494 = vand.u32 %v1493, 4294901760
  %v1495 = vsub.f32 %v1493, %v1494
  %v1496 = vand.u32 %v1495, 4294901760
  %1497 = vmatmul.mubr.f32.gmra.mrb[0].mxu0 %v1496
  %v1498 = vpop.f32.mrb[0].mxu0
  %v1499 = vadd.f32 0.0, %v1498
  %v1500 = vpop.f32.mrb[0].mxu0
  %1501 = vmatprep.mubr.f32.mxu0 0.0
  %v1502 = vand.u32 %v1348, 4294901760
  %v1503 = vsub.f32 %v1348, %v1502
  %v1504 = vand.u32 %v1503, 4294901760
  %v1505 = vsub.f32 %v1503, %v1504
  %v1506 = vand.u32 %v1505, 4294901760
  %1507 = vmatmul.mubr.f32.gmra.mrb[0].mxu0 %v1506
  %v1508 = vpop.f32.mrb[0].mxu0
  %v1509 = vadd.f32 0.0, %v1508
  %v1510 = vpop.f32.mrb[0].mxu0
  %1511 = vmatprep.mubr.f32.mxu0 0.0
  %v1512 = vand.u32 %v1351, 4294901760
  %v1513 = vsub.f32 %v1351, %v1512
  %v1514 = vand.u32 %v1513, 4294901760
  %v1515 = vsub.f32 %v1513, %v1514
  %v1516 = vand.u32 %v1515, 4294901760
  %1517 = vmatmul.mubr.f32.gmra.mrb[0].mxu0 %v1516
  %v1518 = vpop.f32.mrb[0].mxu0
  %v1519 = vadd.f32 0.0, %v1518
  %v1520 = vpop.f32.mrb[0].mxu0
  %1521 = vmatprep.mubr.f32.mxu0 0.0
  %v1522 = vand.u32 %v1354, 4294901760
  %v1523 = vsub.f32 %v1354, %v1522
  %v1524 = vand.u32 %v1523, 4294901760
  %v1525 = vsub.f32 %v1523, %v1524
  %v1526 = vand.u32 %v1525, 4294901760
  %1527 = vmatmul.mubr.f32.gmra.mrb[0].mxu0 %v1526
  %v1528 = vpop.f32.mrb[0].mxu0
  %v1529 = vadd.f32 0.0, %v1528
  %v1530 = vpop.f32.mrb[0].mxu0
  %1531 = vmatprep.mubr.f32.mxu0 0.0
  %v1532 = vand.u32 %v1357, 4294901760
  %v1533 = vsub.f32 %v1357, %v1532
  %v1534 = vand.u32 %v1533, 4294901760
  %v1535 = vsub.f32 %v1533, %v1534
  %v1536 = vand.u32 %v1535, 4294901760
  %1537 = vmatmul.mubr.f32.gmra.mrb[0].mxu0 %v1536
  %v1538 = vpop.f32.mrb[0].mxu0
  %v1539 = vadd.f32 0.0, %v1538
  %v1540 = vpop.f32.mrb[0].mxu0
  %1541 = vmatprep.mubr.f32.mxu0 0.0
  %v1542 = vand.u32 %v1360, 4294901760
  %v1543 = vsub.f32 %v1360, %v1542
  %v1544 = vand.u32 %v1543, 4294901760
  %v1545 = vsub.f32 %v1543, %v1544
  %v1546 = vand.u32 %v1545, 4294901760
  %1547 = vmatmul.mubr.f32.gmra.mrb[0].mxu0 %v1546
  %v1548 = vpop.f32.mrb[0].mxu0
  %v1549 = vadd.f32 0.0, %v1548
  %v1550 = vpop.f32.mrb[0].mxu0
  %1551 = vmatprep.mubr.f32.mxu0 0.0
  %v1552 = vand.u32 %v1363, 4294901760
  %v1553 = vsub.f32 %v1363, %v1552
  %v1554 = vand.u32 %v1553, 4294901760
  %v1555 = vsub.f32 %v1553, %v1554
  %v1556 = vand.u32 %v1555, 4294901760
  %1557 = vmatmul.mubr.f32.gmra.mrb[0].mxu0 %v1556
  %v1558 = vpop.f32.mrb[0].mxu0
  %v1559 = vadd.f32 0.0, %v1558
  %v1560 = vpop.f32.mrb[0].mxu0
  %1561 = vmatprep.mubr.f32.mxu0 0.0
  %v1562 = vand.u32 %v1366, 4294901760
  %v1563 = vsub.f32 %v1366, %v1562
  %v1564 = vand.u32 %v1563, 4294901760
  %v1565 = vsub.f32 %v1563, %v1564
  %v1566 = vand.u32 %v1565, 4294901760
  %1567 = vmatmul.mubr.f32.gmra.mrb[0].mxu0 %v1566
  %v1568 = vpop.f32.mrb[0].mxu0
  %v1569 = vadd.f32 0.0, %v1568
  %v1570 = vpop.f32.mrb[0].mxu0
  %1571 = vmatprep.mubr.f32.mxu0 0.0
  %v1572 = vand.u32 %v1369, 4294901760
  %v1573 = vsub.f32 %v1369, %v1572
  %v1574 = vand.u32 %v1573, 4294901760
  %v1575 = vsub.f32 %v1573, %v1574
  %v1576 = vand.u32 %v1575, 4294901760
  %1577 = vmatmul.mubr.f32.gmra.mrb[0].mxu0 %v1576
  %v1578 = vpop.f32.mrb[0].mxu0
  %v1579 = vadd.f32 0.0, %v1578
  %v1580 = vpop.f32.mrb[0].mxu0
  %1581 = vmatprep.mubr.f32.mxu0 0.0
  %v1582 = vand.u32 %v1372, 4294901760
  %v1583 = vsub.f32 %v1372, %v1582
  %v1584 = vand.u32 %v1583, 4294901760
  %v1585 = vsub.f32 %v1583, %v1584
  %v1586 = vand.u32 %v1585, 4294901760
  %1587 = vmatmul.mubr.f32.gmra.mrb[0].mxu0 %v1586
  %v1588 = vpop.f32.mrb[0].mxu0
  %v1589 = vadd.f32 0.0, %v1588
  %v1590 = vpop.f32.mrb[0].mxu0
  %1591 = vmatprep.mubr.f32.mxu0 0.0
  %v1592 = vand.u32 %v1375, 4294901760
  %v1593 = vsub.f32 %v1375, %v1592
  %v1594 = vand.u32 %v1593, 4294901760
  %v1595 = vsub.f32 %v1593, %v1594
  %v1596 = vand.u32 %v1595, 4294901760
  %1597 = vmatmul.mubr.f32.gmra.mrb[0].mxu0 %v1596
  %v1598 = vpop.f32.mrb[0].mxu0
  %v1599 = vadd.f32 0.0, %v1598
  %v1600 = vpop.f32.mrb[0].mxu0
  %1601 = vmatprep.mubr.f32.mxu0 0.0
  %v1602 = vand.u32 %v1378, 4294901760
  %v1603 = vsub.f32 %v1378, %v1602
  %v1604 = vand.u32 %v1603, 4294901760
  %v1605 = vsub.f32 %v1603, %v1604
  %v1606 = vand.u32 %v1605, 4294901760
  %1607 = vmatmul.mubr.f32.gmra.mrb[0].mxu0 %v1606
  %v1608 = vpop.f32.mrb[0].mxu0
  %v1609 = vadd.f32 0.0, %v1608
  %v1610 = vpop.f32.mrb[0].mxu0
  %1611 = vmatprep.mubr.f32.mxu0 0.0
  %v1612 = vand.u32 %v1381, 4294901760
  %v1613 = vsub.f32 %v1381, %v1612
  %v1614 = vand.u32 %v1613, 4294901760
  %v1615 = vsub.f32 %v1613, %v1614
  %v1616 = vand.u32 %v1615, 4294901760
  %1617 = vmatmul.mubr.f32.gmra.mrb[0].mxu0 %v1616
  %v1618 = vpop.f32.mrb[0].mxu0
  %v1619 = vadd.f32 0.0, %v1618
  %v1620 = vpop.f32.mrb[0].mxu0
  %1621 = vmatprep.mubr.f32.mxu0 0.0
  %v1622 = vand.u32 %v1384, 4294901760
  %v1623 = vsub.f32 %v1384, %v1622
  %v1624 = vand.u32 %v1623, 4294901760
  %v1625 = vsub.f32 %v1623, %v1624
  %v1626 = vand.u32 %v1625, 4294901760
  %1627 = vmatmul.mubr.f32.gmra.mrb[0].mxu0 %v1626
  %v1628 = vpop.f32.mrb[0].mxu0
  %v1629 = vadd.f32 0.0, %v1628
  %v1630 = vpop.f32.mrb[0].mxu0
  %1631 = vmatprep.mubr.f32.mxu0 0.0
  %v1632 = vand.u32 %v1387, 4294901760
  %v1633 = vsub.f32 %v1387, %v1632
  %v1634 = vand.u32 %v1633, 4294901760
  %v1635 = vsub.f32 %v1633, %v1634
  %v1636 = vand.u32 %v1635, 4294901760
  %1637 = vmatmul.mubr.f32.gmra.mrb[0].mxu0 %v1636
  %v1638 = vpop.f32.mrb[0].mxu0
  %v1639 = vadd.f32 0.0, %v1638
  %v1640 = vpop.f32.mrb[0].mxu0
  %1641 = vdwg.mxu0
  %1642 = vmatprep.subr.mxu0 0.0
  %v1643 = vand.u32 %v1318, 4294901760
  %v1644 = vsub.f32 %v1318, %v1643
  %v1645 = vand.u32 %v1644, 4294901760
  %v1646 = vsub.f32 %v1644, %v1645
  %v1647 = vand.u32 %v1646, 4294901760
  %1648 = vmatpush1.msra.mxu0 %v1647
  %1649 = vmatprep.subr.mxu0 0.0
  %v1650 = vand.u32 %v1319, 4294901760
  %v1651 = vsub.f32 %v1319, %v1650
  %v1652 = vand.u32 %v1651, 4294901760
  %v1653 = vsub.f32 %v1651, %v1652
  %v1654 = vand.u32 %v1653, 4294901760
  %1655 = vmatpush1.msra.mxu0 %v1654
  %1656 = vmatprep.subr.mxu0 0.0
  %v1657 = vand.u32 %v1320, 4294901760
  %v1658 = vsub.f32 %v1320, %v1657
  %v1659 = vand.u32 %v1658, 4294901760
  %v1660 = vsub.f32 %v1658, %v1659
  %v1661 = vand.u32 %v1660, 4294901760
  %1662 = vmatpush1.msra.mxu0 %v1661
  %1663 = vmatprep.subr.mxu0 0.0
  %v1664 = vand.u32 %v1321, 4294901760
  %v1665 = vsub.f32 %v1321, %v1664
  %v1666 = vand.u32 %v1665, 4294901760
  %v1667 = vsub.f32 %v1665, %v1666
  %v1668 = vand.u32 %v1667, 4294901760
  %1669 = vmatpush1.msra.mxu0 %v1668
  %1670 = vmatprep.subr.mxu0 0.0
  %v1671 = vand.u32 %v1322, 4294901760
  %v1672 = vsub.f32 %v1322, %v1671
  %v1673 = vand.u32 %v1672, 4294901760
  %v1674 = vsub.f32 %v1672, %v1673
  %v1675 = vand.u32 %v1674, 4294901760
  %1676 = vmatpush1.msra.mxu0 %v1675
  %1677 = vmatprep.subr.mxu0 0.0
  %v1678 = vand.u32 %v1323, 4294901760
  %v1679 = vsub.f32 %v1323, %v1678
  %v1680 = vand.u32 %v1679, 4294901760
  %v1681 = vsub.f32 %v1679, %v1680
  %v1682 = vand.u32 %v1681, 4294901760
  %1683 = vmatpush1.msra.mxu0 %v1682
  %1684 = vmatprep.subr.mxu0 0.0
  %v1685 = vand.u32 %v1324, 4294901760
  %v1686 = vsub.f32 %v1324, %v1685
  %v1687 = vand.u32 %v1686, 4294901760
  %v1688 = vsub.f32 %v1686, %v1687
  %v1689 = vand.u32 %v1688, 4294901760
  %1690 = vmatpush1.msra.mxu0 %v1689
  %1691 = vmatprep.subr.mxu0 0.0
  %v1692 = vand.u32 %v1325, 4294901760
  %v1693 = vsub.f32 %v1325, %v1692
  %v1694 = vand.u32 %v1693, 4294901760
  %v1695 = vsub.f32 %v1693, %v1694
  %v1696 = vand.u32 %v1695, 4294901760
  %1697 = vmatpush1.msra.mxu0 %v1696
  %1698 = vmatprep.subr.mxu0 0.0
  %1699 = vmatpush1.msra.mxu0 0.0
  %1700 = vmatprep.subr.mxu0 0.0
  %1701 = vmatpush1.msra.mxu0 0.0
  %1702 = vmatprep.subr.mxu0 0.0
  %1703 = vmatpush1.msra.mxu0 0.0
  %1704 = vmatprep.subr.mxu0 0.0
  %1705 = vmatpush1.msra.mxu0 0.0
  %1706 = vmatprep.subr.mxu0 0.0
  %1707 = vmatpush1.msra.mxu0 0.0
  %1708 = vmatprep.subr.mxu0 0.0
  %1709 = vmatpush1.msra.mxu0 0.0
  %1710 = vmatprep.subr.mxu0 0.0
  %1711 = vmatpush1.msra.mxu0 0.0
  %1712 = vmatprep.subr.mxu0 0.0
  %1713 = vmatpush1.msra.mxu0 0.0
  %1714 = vmatprep.subr.mxu0 0.0
  %1715 = vmatpush1.msra.mxu0 0.0
  %1716 = vmatprep.subr.mxu0 0.0
  %1717 = vmatpush1.msra.mxu0 0.0
  %1718 = vmatprep.subr.mxu0 0.0
  %1719 = vmatpush1.msra.mxu0 0.0
  %1720 = vmatprep.subr.mxu0 0.0
  %1721 = vmatpush1.msra.mxu0 0.0
  %1722 = vmatprep.subr.mxu0 0.0
  %1723 = vmatpush1.msra.mxu0 0.0
  %1724 = vmatprep.subr.mxu0 0.0
  %1725 = vmatpush1.msra.mxu0 0.0
  %1726 = vmatprep.subr.mxu0 0.0
  %1727 = vmatpush1.msra.mxu0 0.0
  %1728 = vmatprep.subr.mxu0 0.0
  %1729 = vmatpush1.msra.mxu0 0.0
  %1730 = vmatprep.subr.mxu0 0.0
  %1731 = vmatpush1.msra.mxu0 0.0
  %1732 = vmatprep.subr.mxu0 0.0
  %1733 = vmatpush1.msra.mxu0 0.0
  %1734 = vmatprep.subr.mxu0 0.0
  %1735 = vmatpush1.msra.mxu0 0.0
  %1736 = vmatprep.subr.mxu0 0.0
  %1737 = vmatpush1.msra.mxu0 0.0
  %1738 = vmatprep.subr.mxu0 0.0
  %1739 = vmatpush1.msra.mxu0 0.0
  %1740 = vmatprep.subr.mxu0 0.0
  %1741 = vmatpush1.msra.mxu0 0.0
  %1742 = vmatprep.subr.mxu0 0.0
  %1743 = vmatpush1.msra.mxu0 0.0
  %1744 = vmatprep.subr.mxu0 0.0
  %1745 = vmatpush1.msra.mxu0 0.0
  %1746 = vmatprep.mubr.f32.mxu0 0.0
  %v1747 = vand.u32 %v1336, 4294901760
  %1748 = vmatmul.mubr.f32.gmra.mrb[0].mxu0 %v1747
  %v1749 = vpop.f32.mrb[0].mxu0
  %v1750 = vadd.f32 %v1469, %v1749
  %v1751 = vpop.f32.mrb[0].mxu0
  %1752 = vmatprep.mubr.f32.mxu0 0.0
  %v1753 = vand.u32 %v1339, 4294901760
  %1754 = vmatmul.mubr.f32.gmra.mrb[0].mxu0 %v1753
  %v1755 = vpop.f32.mrb[0].mxu0
  %v1756 = vadd.f32 %v1479, %v1755
  %v1757 = vpop.f32.mrb[0].mxu0
  %1758 = vmatprep.mubr.f32.mxu0 0.0
  %v1759 = vand.u32 %v1342, 4294901760
  %1760 = vmatmul.mubr.f32.gmra.mrb[0].mxu0 %v1759
  %v1761 = vpop.f32.mrb[0].mxu0
  %v1762 = vadd.f32 %v1489, %v1761
  %v1763 = vpop.f32.mrb[0].mxu0
  %1764 = vmatprep.mubr.f32.mxu0 0.0
  %v1765 = vand.u32 %v1345, 4294901760
  %1766 = vmatmul.mubr.f32.gmra.mrb[0].mxu0 %v1765
  %v1767 = vpop.f32.mrb[0].mxu0
  %v1768 = vadd.f32 %v1499, %v1767
  %v1769 = vpop.f32.mrb[0].mxu0
  %1770 = vmatprep.mubr.f32.mxu0 0.0
  %v1771 = vand.u32 %v1348, 4294901760
  %1772 = vmatmul.mubr.f32.gmra.mrb[0].mxu0 %v1771
  %v1773 = vpop.f32.mrb[0].mxu0
  %v1774 = vadd.f32 %v1509, %v1773
  %v1775 = vpop.f32.mrb[0].mxu0
  %1776 = vmatprep.mubr.f32.mxu0 0.0
  %v1777 = vand.u32 %v1351, 4294901760
  %1778 = vmatmul.mubr.f32.gmra.mrb[0].mxu0 %v1777
  %v1779 = vpop.f32.mrb[0].mxu0
  %v1780 = vadd.f32 %v1519, %v1779
  %v1781 = vpop.f32.mrb[0].mxu0
  %1782 = vmatprep.mubr.f32.mxu0 0.0
  %v1783 = vand.u32 %v1354, 4294901760
  %1784 = vmatmul.mubr.f32.gmra.mrb[0].mxu0 %v1783
  %v1785 = vpop.f32.mrb[0].mxu0
  %v1786 = vadd.f32 %v1529, %v1785
  %v1787 = vpop.f32.mrb[0].mxu0
  %1788 = vmatprep.mubr.f32.mxu0 0.0
  %v1789 = vand.u32 %v1357, 4294901760
  %1790 = vmatmul.mubr.f32.gmra.mrb[0].mxu0 %v1789
  %v1791 = vpop.f32.mrb[0].mxu0
  %v1792 = vadd.f32 %v1539, %v1791
  %v1793 = vpop.f32.mrb[0].mxu0
  %1794 = vmatprep.mubr.f32.mxu0 0.0
  %v1795 = vand.u32 %v1360, 4294901760
  %1796 = vmatmul.mubr.f32.gmra.mrb[0].mxu0 %v1795
  %v1797 = vpop.f32.mrb[0].mxu0
  %v1798 = vadd.f32 %v1549, %v1797
  %v1799 = vpop.f32.mrb[0].mxu0
  %1800 = vmatprep.mubr.f32.mxu0 0.0
  %v1801 = vand.u32 %v1363, 4294901760
  %1802 = vmatmul.mubr.f32.gmra.mrb[0].mxu0 %v1801
  %v1803 = vpop.f32.mrb[0].mxu0
  %v1804 = vadd.f32 %v1559, %v1803
  %v1805 = vpop.f32.mrb[0].mxu0
  %1806 = vmatprep.mubr.f32.mxu0 0.0
  %v1807 = vand.u32 %v1366, 4294901760
  %1808 = vmatmul.mubr.f32.gmra.mrb[0].mxu0 %v1807
  %v1809 = vpop.f32.mrb[0].mxu0
  %v1810 = vadd.f32 %v1569, %v1809
  %v1811 = vpop.f32.mrb[0].mxu0
  %1812 = vmatprep.mubr.f32.mxu0 0.0
  %v1813 = vand.u32 %v1369, 4294901760
  %1814 = vmatmul.mubr.f32.gmra.mrb[0].mxu0 %v1813
  %v1815 = vpop.f32.mrb[0].mxu0
  %v1816 = vadd.f32 %v1579, %v1815
  %v1817 = vpop.f32.mrb[0].mxu0
  %1818 = vmatprep.mubr.f32.mxu0 0.0
  %v1819 = vand.u32 %v1372, 4294901760
  %1820 = vmatmul.mubr.f32.gmra.mrb[0].mxu0 %v1819
  %v1821 = vpop.f32.mrb[0].mxu0
  %v1822 = vadd.f32 %v1589, %v1821
  %v1823 = vpop.f32.mrb[0].mxu0
  %1824 = vmatprep.mubr.f32.mxu0 0.0
  %v1825 = vand.u32 %v1375, 4294901760
  %1826 = vmatmul.mubr.f32.gmra.mrb[0].mxu0 %v1825
  %v1827 = vpop.f32.mrb[0].mxu0
  %v1828 = vadd.f32 %v1599, %v1827
  %v1829 = vpop.f32.mrb[0].mxu0
  %1830 = vmatprep.mubr.f32.mxu0 0.0
  %v1831 = vand.u32 %v1378, 4294901760
  %1832 = vmatmul.mubr.f32.gmra.mrb[0].mxu0 %v1831
  %v1833 = vpop.f32.mrb[0].mxu0
  %v1834 = vadd.f32 %v1609, %v1833
  %v1835 = vpop.f32.mrb[0].mxu0
  %1836 = vmatprep.mubr.f32.mxu0 0.0
  %v1837 = vand.u32 %v1381, 4294901760
  %1838 = vmatmul.mubr.f32.gmra.mrb[0].mxu0 %v1837
  %v1839 = vpop.f32.mrb[0].mxu0
  %v1840 = vadd.f32 %v1619, %v1839
  %v1841 = vpop.f32.mrb[0].mxu0
  %1842 = vmatprep.mubr.f32.mxu0 0.0
  %v1843 = vand.u32 %v1384, 4294901760
  %1844 = vmatmul.mubr.f32.gmra.mrb[0].mxu0 %v1843
  %v1845 = vpop.f32.mrb[0].mxu0
  %v1846 = vadd.f32 %v1629, %v1845
  %v1847 = vpop.f32.mrb[0].mxu0
  %1848 = vmatprep.mubr.f32.mxu0 0.0
  %v1849 = vand.u32 %v1387, 4294901760
  %1850 = vmatmul.mubr.f32.gmra.mrb[0].mxu0 %v1849
  %v1851 = vpop.f32.mrb[0].mxu0
  %v1852 = vadd.f32 %v1639, %v1851
  %v1853 = vpop.f32.mrb[0].mxu0
  %1854 = vdwg.mxu0
  %1855 = vmatprep.subr.mxu0 0.0
  %v1856 = vand.u32 %v1318, 4294901760
  %v1857 = vsub.f32 %v1318, %v1856
  %1858 = vmatpush1.msra.mxu0 %v1857
  %1859 = vmatprep.subr.mxu0 0.0
  %v1860 = vand.u32 %v1319, 4294901760
  %v1861 = vsub.f32 %v1319, %v1860
  %1862 = vmatpush1.msra.mxu0 %v1861
  %1863 = vmatprep.subr.mxu0 0.0
  %v1864 = vand.u32 %v1320, 4294901760
  %v1865 = vsub.f32 %v1320, %v1864
  %1866 = vmatpush1.msra.mxu0 %v1865
  %1867 = vmatprep.subr.mxu0 0.0
  %v1868 = vand.u32 %v1321, 4294901760
  %v1869 = vsub.f32 %v1321, %v1868
  %1870 = vmatpush1.msra.mxu0 %v1869
  %1871 = vmatprep.subr.mxu0 0.0
  %v1872 = vand.u32 %v1322, 4294901760
  %v1873 = vsub.f32 %v1322, %v1872
  %1874 = vmatpush1.msra.mxu0 %v1873
  %1875 = vmatprep.subr.mxu0 0.0
  %v1876 = vand.u32 %v1323, 4294901760
  %v1877 = vsub.f32 %v1323, %v1876
  %1878 = vmatpush1.msra.mxu0 %v1877
  %1879 = vmatprep.subr.mxu0 0.0
  %v1880 = vand.u32 %v1324, 4294901760
  %v1881 = vsub.f32 %v1324, %v1880
  %1882 = vmatpush1.msra.mxu0 %v1881
  %1883 = vmatprep.subr.mxu0 0.0
  %v1884 = vand.u32 %v1325, 4294901760
  %v1885 = vsub.f32 %v1325, %v1884
  %1886 = vmatpush1.msra.mxu0 %v1885
  %1887 = vmatprep.subr.mxu0 0.0
  %1888 = vmatpush1.msra.mxu0 0.0
  %1889 = vmatprep.subr.mxu0 0.0
  %1890 = vmatpush1.msra.mxu0 0.0
  %1891 = vmatprep.subr.mxu0 0.0
  %1892 = vmatpush1.msra.mxu0 0.0
  %1893 = vmatprep.subr.mxu0 0.0
  %1894 = vmatpush1.msra.mxu0 0.0
  %1895 = vmatprep.subr.mxu0 0.0
  %1896 = vmatpush1.msra.mxu0 0.0
  %1897 = vmatprep.subr.mxu0 0.0
  %1898 = vmatpush1.msra.mxu0 0.0
  %1899 = vmatprep.subr.mxu0 0.0
  %1900 = vmatpush1.msra.mxu0 0.0
  %1901 = vmatprep.subr.mxu0 0.0
  %1902 = vmatpush1.msra.mxu0 0.0
  %1903 = vmatprep.subr.mxu0 0.0
  %1904 = vmatpush1.msra.mxu0 0.0
  %1905 = vmatprep.subr.mxu0 0.0
  %1906 = vmatpush1.msra.mxu0 0.0
  %1907 = vmatprep.subr.mxu0 0.0
  %1908 = vmatpush1.msra.mxu0 0.0
  %1909 = vmatprep.subr.mxu0 0.0
  %1910 = vmatpush1.msra.mxu0 0.0
  %1911 = vmatprep.subr.mxu0 0.0
  %1912 = vmatpush1.msra.mxu0 0.0
  %1913 = vmatprep.subr.mxu0 0.0
  %1914 = vmatpush1.msra.mxu0 0.0
  %1915 = vmatprep.subr.mxu0 0.0
  %1916 = vmatpush1.msra.mxu0 0.0
  %1917 = vmatprep.subr.mxu0 0.0
  %1918 = vmatpush1.msra.mxu0 0.0
  %1919 = vmatprep.subr.mxu0 0.0
  %1920 = vmatpush1.msra.mxu0 0.0
  %1921 = vmatprep.subr.mxu0 0.0
  %1922 = vmatpush1.msra.mxu0 0.0
  %1923 = vmatprep.subr.mxu0 0.0
  %1924 = vmatpush1.msra.mxu0 0.0
  %1925 = vmatprep.subr.mxu0 0.0
  %1926 = vmatpush1.msra.mxu0 0.0
  %1927 = vmatprep.subr.mxu0 0.0
  %1928 = vmatpush1.msra.mxu0 0.0
  %1929 = vmatprep.subr.mxu0 0.0
  %1930 = vmatpush1.msra.mxu0 0.0
  %1931 = vmatprep.subr.mxu0 0.0
  %1932 = vmatpush1.msra.mxu0 0.0
  %1933 = vmatprep.subr.mxu0 0.0
  %1934 = vmatpush1.msra.mxu0 0.0
  %1935 = vmatprep.mubr.f32.mxu0 0.0
  %v1936 = vand.u32 %v1336, 4294901760
  %v1937 = vsub.f32 %v1336, %v1936
  %1938 = vmatmul.mubr.f32.gmra.mrb[0].mxu0 %v1937
  %v1939 = vpop.f32.mrb[0].mxu0
  %v1940 = vadd.f32 %v1750, %v1939
  %v1941 = vpop.f32.mrb[0].mxu0
  %1942 = vmatprep.mubr.f32.mxu0 0.0
  %v1943 = vand.u32 %v1339, 4294901760
  %v1944 = vsub.f32 %v1339, %v1943
  %1945 = vmatmul.mubr.f32.gmra.mrb[0].mxu0 %v1944
  %v1946 = vpop.f32.mrb[0].mxu0
  %v1947 = vadd.f32 %v1756, %v1946
  %v1948 = vpop.f32.mrb[0].mxu0
  %1949 = vmatprep.mubr.f32.mxu0 0.0
  %v1950 = vand.u32 %v1342, 4294901760
  %v1951 = vsub.f32 %v1342, %v1950
  %1952 = vmatmul.mubr.f32.gmra.mrb[0].mxu0 %v1951
  %v1953 = vpop.f32.mrb[0].mxu0
  %v1954 = vadd.f32 %v1762, %v1953
  %v1955 = vpop.f32.mrb[0].mxu0
  %1956 = vmatprep.mubr.f32.mxu0 0.0
  %v1957 = vand.u32 %v1345, 4294901760
  %v1958 = vsub.f32 %v1345, %v1957
  %1959 = vmatmul.mubr.f32.gmra.mrb[0].mxu0 %v1958
  %v1960 = vpop.f32.mrb[0].mxu0
  %v1961 = vadd.f32 %v1768, %v1960
  %v1962 = vpop.f32.mrb[0].mxu0
  %1963 = vmatprep.mubr.f32.mxu0 0.0
  %v1964 = vand.u32 %v1348, 4294901760
  %v1965 = vsub.f32 %v1348, %v1964
  %1966 = vmatmul.mubr.f32.gmra.mrb[0].mxu0 %v1965
  %v1967 = vpop.f32.mrb[0].mxu0
  %v1968 = vadd.f32 %v1774, %v1967
  %v1969 = vpop.f32.mrb[0].mxu0
  %1970 = vmatprep.mubr.f32.mxu0 0.0
  %v1971 = vand.u32 %v1351, 4294901760
  %v1972 = vsub.f32 %v1351, %v1971
  %1973 = vmatmul.mubr.f32.gmra.mrb[0].mxu0 %v1972
  %v1974 = vpop.f32.mrb[0].mxu0
  %v1975 = vadd.f32 %v1780, %v1974
  %v1976 = vpop.f32.mrb[0].mxu0
  %1977 = vmatprep.mubr.f32.mxu0 0.0
  %v1978 = vand.u32 %v1354, 4294901760
  %v1979 = vsub.f32 %v1354, %v1978
  %1980 = vmatmul.mubr.f32.gmra.mrb[0].mxu0 %v1979
  %v1981 = vpop.f32.mrb[0].mxu0
  %v1982 = vadd.f32 %v1786, %v1981
  %v1983 = vpop.f32.mrb[0].mxu0
  %1984 = vmatprep.mubr.f32.mxu0 0.0
  %v1985 = vand.u32 %v1357, 4294901760
  %v1986 = vsub.f32 %v1357, %v1985
  %1987 = vmatmul.mubr.f32.gmra.mrb[0].mxu0 %v1986
  %v1988 = vpop.f32.mrb[0].mxu0
  %v1989 = vadd.f32 %v1792, %v1988
  %v1990 = vpop.f32.mrb[0].mxu0
  %1991 = vmatprep.mubr.f32.mxu0 0.0
  %v1992 = vand.u32 %v1360, 4294901760
  %v1993 = vsub.f32 %v1360, %v1992
  %1994 = vmatmul.mubr.f32.gmra.mrb[0].mxu0 %v1993
  %v1995 = vpop.f32.mrb[0].mxu0
  %v1996 = vadd.f32 %v1798, %v1995
  %v1997 = vpop.f32.mrb[0].mxu0
  %1998 = vmatprep.mubr.f32.mxu0 0.0
  %v1999 = vand.u32 %v1363, 4294901760
  %v2000 = vsub.f32 %v1363, %v1999
  %2001 = vmatmul.mubr.f32.gmra.mrb[0].mxu0 %v2000
  %v2002 = vpop.f32.mrb[0].mxu0
  %v2003 = vadd.f32 %v1804, %v2002
  %v2004 = vpop.f32.mrb[0].mxu0
  %2005 = vmatprep.mubr.f32.mxu0 0.0
  %v2006 = vand.u32 %v1366, 4294901760
  %v2007 = vsub.f32 %v1366, %v2006
  %2008 = vmatmul.mubr.f32.gmra.mrb[0].mxu0 %v2007
  %v2009 = vpop.f32.mrb[0].mxu0
  %v2010 = vadd.f32 %v1810, %v2009
  %v2011 = vpop.f32.mrb[0].mxu0
  %2012 = vmatprep.mubr.f32.mxu0 0.0
  %v2013 = vand.u32 %v1369, 4294901760
  %v2014 = vsub.f32 %v1369, %v2013
  %2015 = vmatmul.mubr.f32.gmra.mrb[0].mxu0 %v2014
  %v2016 = vpop.f32.mrb[0].mxu0
  %v2017 = vadd.f32 %v1816, %v2016
  %v2018 = vpop.f32.mrb[0].mxu0
  %2019 = vmatprep.mubr.f32.mxu0 0.0
  %v2020 = vand.u32 %v1372, 4294901760
  %v2021 = vsub.f32 %v1372, %v2020
  %2022 = vmatmul.mubr.f32.gmra.mrb[0].mxu0 %v2021
  %v2023 = vpop.f32.mrb[0].mxu0
  %v2024 = vadd.f32 %v1822, %v2023
  %v2025 = vpop.f32.mrb[0].mxu0
  %2026 = vmatprep.mubr.f32.mxu0 0.0
  %v2027 = vand.u32 %v1375, 4294901760
  %v2028 = vsub.f32 %v1375, %v2027
  %2029 = vmatmul.mubr.f32.gmra.mrb[0].mxu0 %v2028
  %v2030 = vpop.f32.mrb[0].mxu0
  %v2031 = vadd.f32 %v1828, %v2030
  %v2032 = vpop.f32.mrb[0].mxu0
  %2033 = vmatprep.mubr.f32.mxu0 0.0
  %v2034 = vand.u32 %v1378, 4294901760
  %v2035 = vsub.f32 %v1378, %v2034
  %2036 = vmatmul.mubr.f32.gmra.mrb[0].mxu0 %v2035
  %v2037 = vpop.f32.mrb[0].mxu0
  %v2038 = vadd.f32 %v1834, %v2037
  %v2039 = vpop.f32.mrb[0].mxu0
  %2040 = vmatprep.mubr.f32.mxu0 0.0
  %v2041 = vand.u32 %v1381, 4294901760
  %v2042 = vsub.f32 %v1381, %v2041
  %2043 = vmatmul.mubr.f32.gmra.mrb[0].mxu0 %v2042
  %v2044 = vpop.f32.mrb[0].mxu0
  %v2045 = vadd.f32 %v1840, %v2044
  %v2046 = vpop.f32.mrb[0].mxu0
  %2047 = vmatprep.mubr.f32.mxu0 0.0
  %v2048 = vand.u32 %v1384, 4294901760
  %v2049 = vsub.f32 %v1384, %v2048
  %2050 = vmatmul.mubr.f32.gmra.mrb[0].mxu0 %v2049
  %v2051 = vpop.f32.mrb[0].mxu0
  %v2052 = vadd.f32 %v1846, %v2051
  %v2053 = vpop.f32.mrb[0].mxu0
  %2054 = vmatprep.mubr.f32.mxu0 0.0
  %v2055 = vand.u32 %v1387, 4294901760
  %v2056 = vsub.f32 %v1387, %v2055
  %2057 = vmatmul.mubr.f32.gmra.mrb[0].mxu0 %v2056
  %v2058 = vpop.f32.mrb[0].mxu0
  %v2059 = vadd.f32 %v1852, %v2058
  %v2060 = vpop.f32.mrb[0].mxu0
  %2061 = vdwg.mxu0
  %2062 = vmatprep.subr.mxu0 0.0
  %v2063 = vand.u32 %v1318, 4294901760
  %2064 = vmatpush1.msra.mxu0 %v2063
  %2065 = vmatprep.subr.mxu0 0.0
  %v2066 = vand.u32 %v1319, 4294901760
  %2067 = vmatpush1.msra.mxu0 %v2066
  %2068 = vmatprep.subr.mxu0 0.0
  %v2069 = vand.u32 %v1320, 4294901760
  %2070 = vmatpush1.msra.mxu0 %v2069
  %2071 = vmatprep.subr.mxu0 0.0
  %v2072 = vand.u32 %v1321, 4294901760
  %2073 = vmatpush1.msra.mxu0 %v2072
  %2074 = vmatprep.subr.mxu0 0.0
  %v2075 = vand.u32 %v1322, 4294901760
  %2076 = vmatpush1.msra.mxu0 %v2075
  %2077 = vmatprep.subr.mxu0 0.0
  %v2078 = vand.u32 %v1323, 4294901760
  %2079 = vmatpush1.msra.mxu0 %v2078
  %2080 = vmatprep.subr.mxu0 0.0
  %v2081 = vand.u32 %v1324, 4294901760
  %2082 = vmatpush1.msra.mxu0 %v2081
  %2083 = vmatprep.subr.mxu0 0.0
  %v2084 = vand.u32 %v1325, 4294901760
  %2085 = vmatpush1.msra.mxu0 %v2084
  %2086 = vmatprep.subr.mxu0 0.0
  %2087 = vmatpush1.msra.mxu0 0.0
  %2088 = vmatprep.subr.mxu0 0.0
  %2089 = vmatpush1.msra.mxu0 0.0
  %2090 = vmatprep.subr.mxu0 0.0
  %2091 = vmatpush1.msra.mxu0 0.0
  %2092 = vmatprep.subr.mxu0 0.0
  %2093 = vmatpush1.msra.mxu0 0.0
  %2094 = vmatprep.subr.mxu0 0.0
  %2095 = vmatpush1.msra.mxu0 0.0
  %2096 = vmatprep.subr.mxu0 0.0
  %2097 = vmatpush1.msra.mxu0 0.0
  %2098 = vmatprep.subr.mxu0 0.0
  %2099 = vmatpush1.msra.mxu0 0.0
  %2100 = vmatprep.subr.mxu0 0.0
  %2101 = vmatpush1.msra.mxu0 0.0
  %2102 = vmatprep.subr.mxu0 0.0
  %2103 = vmatpush1.msra.mxu0 0.0
  %2104 = vmatprep.subr.mxu0 0.0
  %2105 = vmatpush1.msra.mxu0 0.0
  %2106 = vmatprep.subr.mxu0 0.0
  %2107 = vmatpush1.msra.mxu0 0.0
  %2108 = vmatprep.subr.mxu0 0.0
  %2109 = vmatpush1.msra.mxu0 0.0
  %2110 = vmatprep.subr.mxu0 0.0
  %2111 = vmatpush1.msra.mxu0 0.0
  %2112 = vmatprep.subr.mxu0 0.0
  %2113 = vmatpush1.msra.mxu0 0.0
  %2114 = vmatprep.subr.mxu0 0.0
  %2115 = vmatpush1.msra.mxu0 0.0
  %2116 = vmatprep.subr.mxu0 0.0
  %2117 = vmatpush1.msra.mxu0 0.0
  %2118 = vmatprep.subr.mxu0 0.0
  %2119 = vmatpush1.msra.mxu0 0.0
  %2120 = vmatprep.subr.mxu0 0.0
  %2121 = vmatpush1.msra.mxu0 0.0
  %2122 = vmatprep.subr.mxu0 0.0
  %2123 = vmatpush1.msra.mxu0 0.0
  %2124 = vmatprep.subr.mxu0 0.0
  %2125 = vmatpush1.msra.mxu0 0.0
  %2126 = vmatprep.subr.mxu0 0.0
  %2127 = vmatpush1.msra.mxu0 0.0
  %2128 = vmatprep.subr.mxu0 0.0
  %2129 = vmatpush1.msra.mxu0 0.0
  %2130 = vmatprep.subr.mxu0 0.0
  %2131 = vmatpush1.msra.mxu0 0.0
  %2132 = vmatprep.subr.mxu0 0.0
  %2133 = vmatpush1.msra.mxu0 0.0
  %2134 = vmatprep.mubr.f32.mxu0 0.0
  %v2135 = vand.u32 %v1336, 4294901760
  %v2136 = vsub.f32 %v1336, %v2135
  %v2137 = vand.u32 %v2136, 4294901760
  %2138 = vmatmul.mubr.f32.gmra.mrb[0].mxu0 %v2137
  %v2139 = vpop.f32.mrb[0].mxu0
  %v2140 = vadd.f32 %v1940, %v2139
  %v2141 = vpop.f32.mrb[0].mxu0
  %2142 = vmatprep.mubr.f32.mxu0 0.0
  %v2143 = vand.u32 %v1339, 4294901760
  %v2144 = vsub.f32 %v1339, %v2143
  %v2145 = vand.u32 %v2144, 4294901760
  %2146 = vmatmul.mubr.f32.gmra.mrb[0].mxu0 %v2145
  %v2147 = vpop.f32.mrb[0].mxu0
  %v2148 = vadd.f32 %v1947, %v2147
  %v2149 = vpop.f32.mrb[0].mxu0
  %2150 = vmatprep.mubr.f32.mxu0 0.0
  %v2151 = vand.u32 %v1342, 4294901760
  %v2152 = vsub.f32 %v1342, %v2151
  %v2153 = vand.u32 %v2152, 4294901760
  %2154 = vmatmul.mubr.f32.gmra.mrb[0].mxu0 %v2153
  %v2155 = vpop.f32.mrb[0].mxu0
  %v2156 = vadd.f32 %v1954, %v2155
  %v2157 = vpop.f32.mrb[0].mxu0
  %2158 = vmatprep.mubr.f32.mxu0 0.0
  %v2159 = vand.u32 %v1345, 4294901760
  %v2160 = vsub.f32 %v1345, %v2159
  %v2161 = vand.u32 %v2160, 4294901760
  %2162 = vmatmul.mubr.f32.gmra.mrb[0].mxu0 %v2161
  %v2163 = vpop.f32.mrb[0].mxu0
  %v2164 = vadd.f32 %v1961, %v2163
  %v2165 = vpop.f32.mrb[0].mxu0
  %2166 = vmatprep.mubr.f32.mxu0 0.0
  %v2167 = vand.u32 %v1348, 4294901760
  %v2168 = vsub.f32 %v1348, %v2167
  %v2169 = vand.u32 %v2168, 4294901760
  %2170 = vmatmul.mubr.f32.gmra.mrb[0].mxu0 %v2169
  %v2171 = vpop.f32.mrb[0].mxu0
  %v2172 = vadd.f32 %v1968, %v2171
  %v2173 = vpop.f32.mrb[0].mxu0
  %2174 = vmatprep.mubr.f32.mxu0 0.0
  %v2175 = vand.u32 %v1351, 4294901760
  %v2176 = vsub.f32 %v1351, %v2175
  %v2177 = vand.u32 %v2176, 4294901760
  %2178 = vmatmul.mubr.f32.gmra.mrb[0].mxu0 %v2177
  %v2179 = vpop.f32.mrb[0].mxu0
  %v2180 = vadd.f32 %v1975, %v2179
  %v2181 = vpop.f32.mrb[0].mxu0
  %2182 = vmatprep.mubr.f32.mxu0 0.0
  %v2183 = vand.u32 %v1354, 4294901760
  %v2184 = vsub.f32 %v1354, %v2183
  %v2185 = vand.u32 %v2184, 4294901760
  %2186 = vmatmul.mubr.f32.gmra.mrb[0].mxu0 %v2185
  %v2187 = vpop.f32.mrb[0].mxu0
  %v2188 = vadd.f32 %v1982, %v2187
  %v2189 = vpop.f32.mrb[0].mxu0
  %2190 = vmatprep.mubr.f32.mxu0 0.0
  %v2191 = vand.u32 %v1357, 4294901760
  %v2192 = vsub.f32 %v1357, %v2191
  %v2193 = vand.u32 %v2192, 4294901760
  %2194 = vmatmul.mubr.f32.gmra.mrb[0].mxu0 %v2193
  %v2195 = vpop.f32.mrb[0].mxu0
  %v2196 = vadd.f32 %v1989, %v2195
  %v2197 = vpop.f32.mrb[0].mxu0
  %2198 = vmatprep.mubr.f32.mxu0 0.0
  %v2199 = vand.u32 %v1360, 4294901760
  %v2200 = vsub.f32 %v1360, %v2199
  %v2201 = vand.u32 %v2200, 4294901760
  %2202 = vmatmul.mubr.f32.gmra.mrb[0].mxu0 %v2201
  %v2203 = vpop.f32.mrb[0].mxu0
  %v2204 = vadd.f32 %v1996, %v2203
  %v2205 = vpop.f32.mrb[0].mxu0
  %2206 = vmatprep.mubr.f32.mxu0 0.0
  %v2207 = vand.u32 %v1363, 4294901760
  %v2208 = vsub.f32 %v1363, %v2207
  %v2209 = vand.u32 %v2208, 4294901760
  %2210 = vmatmul.mubr.f32.gmra.mrb[0].mxu0 %v2209
  %v2211 = vpop.f32.mrb[0].mxu0
  %v2212 = vadd.f32 %v2003, %v2211
  %v2213 = vpop.f32.mrb[0].mxu0
  %2214 = vmatprep.mubr.f32.mxu0 0.0
  %v2215 = vand.u32 %v1366, 4294901760
  %v2216 = vsub.f32 %v1366, %v2215
  %v2217 = vand.u32 %v2216, 4294901760
  %2218 = vmatmul.mubr.f32.gmra.mrb[0].mxu0 %v2217
  %v2219 = vpop.f32.mrb[0].mxu0
  %v2220 = vadd.f32 %v2010, %v2219
  %v2221 = vpop.f32.mrb[0].mxu0
  %2222 = vmatprep.mubr.f32.mxu0 0.0
  %v2223 = vand.u32 %v1369, 4294901760
  %v2224 = vsub.f32 %v1369, %v2223
  %v2225 = vand.u32 %v2224, 4294901760
  %2226 = vmatmul.mubr.f32.gmra.mrb[0].mxu0 %v2225
  %v2227 = vpop.f32.mrb[0].mxu0
  %v2228 = vadd.f32 %v2017, %v2227
  %v2229 = vpop.f32.mrb[0].mxu0
  %2230 = vmatprep.mubr.f32.mxu0 0.0
  %v2231 = vand.u32 %v1372, 4294901760
  %v2232 = vsub.f32 %v1372, %v2231
  %v2233 = vand.u32 %v2232, 4294901760
  %2234 = vmatmul.mubr.f32.gmra.mrb[0].mxu0 %v2233
  %v2235 = vpop.f32.mrb[0].mxu0
  %v2236 = vadd.f32 %v2024, %v2235
  %v2237 = vpop.f32.mrb[0].mxu0
  %2238 = vmatprep.mubr.f32.mxu0 0.0
  %v2239 = vand.u32 %v1375, 4294901760
  %v2240 = vsub.f32 %v1375, %v2239
  %v2241 = vand.u32 %v2240, 4294901760
  %2242 = vmatmul.mubr.f32.gmra.mrb[0].mxu0 %v2241
  %v2243 = vpop.f32.mrb[0].mxu0
  %v2244 = vadd.f32 %v2031, %v2243
  %v2245 = vpop.f32.mrb[0].mxu0
  %2246 = vmatprep.mubr.f32.mxu0 0.0
  %v2247 = vand.u32 %v1378, 4294901760
  %v2248 = vsub.f32 %v1378, %v2247
  %v2249 = vand.u32 %v2248, 4294901760
  %2250 = vmatmul.mubr.f32.gmra.mrb[0].mxu0 %v2249
  %v2251 = vpop.f32.mrb[0].mxu0
  %v2252 = vadd.f32 %v2038, %v2251
  %v2253 = vpop.f32.mrb[0].mxu0
  %2254 = vmatprep.mubr.f32.mxu0 0.0
  %v2255 = vand.u32 %v1381, 4294901760
  %v2256 = vsub.f32 %v1381, %v2255
  %v2257 = vand.u32 %v2256, 4294901760
  %2258 = vmatmul.mubr.f32.gmra.mrb[0].mxu0 %v2257
  %v2259 = vpop.f32.mrb[0].mxu0
  %v2260 = vadd.f32 %v2045, %v2259
  %v2261 = vpop.f32.mrb[0].mxu0
  %2262 = vmatprep.mubr.f32.mxu0 0.0
  %v2263 = vand.u32 %v1384, 4294901760
  %v2264 = vsub.f32 %v1384, %v2263
  %v2265 = vand.u32 %v2264, 4294901760
  %2266 = vmatmul.mubr.f32.gmra.mrb[0].mxu0 %v2265
  %v2267 = vpop.f32.mrb[0].mxu0
  %v2268 = vadd.f32 %v2052, %v2267
  %v2269 = vpop.f32.mrb[0].mxu0
  %2270 = vmatprep.mubr.f32.mxu0 0.0
  %v2271 = vand.u32 %v1387, 4294901760
  %v2272 = vsub.f32 %v1387, %v2271
  %v2273 = vand.u32 %v2272, 4294901760
  %2274 = vmatmul.mubr.f32.gmra.mrb[0].mxu0 %v2273
  %v2275 = vpop.f32.mrb[0].mxu0
  %v2276 = vadd.f32 %v2059, %v2275
  %v2277 = vpop.f32.mrb[0].mxu0
  %2278 = vdwg.mxu0
  %2279 = vmatprep.subr.mxu0 0.0
  %v2280 = vand.u32 %v1318, 4294901760
  %v2281 = vsub.f32 %v1318, %v2280
  %v2282 = vand.u32 %v2281, 4294901760
  %2283 = vmatpush1.msra.mxu0 %v2282
  %2284 = vmatprep.subr.mxu0 0.0
  %v2285 = vand.u32 %v1319, 4294901760
  %v2286 = vsub.f32 %v1319, %v2285
  %v2287 = vand.u32 %v2286, 4294901760
  %2288 = vmatpush1.msra.mxu0 %v2287
  %2289 = vmatprep.subr.mxu0 0.0
  %v2290 = vand.u32 %v1320, 4294901760
  %v2291 = vsub.f32 %v1320, %v2290
  %v2292 = vand.u32 %v2291, 4294901760
  %2293 = vmatpush1.msra.mxu0 %v2292
  %2294 = vmatprep.subr.mxu0 0.0
  %v2295 = vand.u32 %v1321, 4294901760
  %v2296 = vsub.f32 %v1321, %v2295
  %v2297 = vand.u32 %v2296, 4294901760
  %2298 = vmatpush1.msra.mxu0 %v2297
  %2299 = vmatprep.subr.mxu0 0.0
  %v2300 = vand.u32 %v1322, 4294901760
  %v2301 = vsub.f32 %v1322, %v2300
  %v2302 = vand.u32 %v2301, 4294901760
  %2303 = vmatpush1.msra.mxu0 %v2302
  %2304 = vmatprep.subr.mxu0 0.0
  %v2305 = vand.u32 %v1323, 4294901760
  %v2306 = vsub.f32 %v1323, %v2305
  %v2307 = vand.u32 %v2306, 4294901760
  %2308 = vmatpush1.msra.mxu0 %v2307
  %2309 = vmatprep.subr.mxu0 0.0
  %v2310 = vand.u32 %v1324, 4294901760
  %v2311 = vsub.f32 %v1324, %v2310
  %v2312 = vand.u32 %v2311, 4294901760
  %2313 = vmatpush1.msra.mxu0 %v2312
  %2314 = vmatprep.subr.mxu0 0.0
  %v2315 = vand.u32 %v1325, 4294901760
  %v2316 = vsub.f32 %v1325, %v2315
  %v2317 = vand.u32 %v2316, 4294901760
  %2318 = vmatpush1.msra.mxu0 %v2317
  %2319 = vmatprep.subr.mxu0 0.0
  %2320 = vmatpush1.msra.mxu0 0.0
  %2321 = vmatprep.subr.mxu0 0.0
  %2322 = vmatpush1.msra.mxu0 0.0
  %2323 = vmatprep.subr.mxu0 0.0
  %2324 = vmatpush1.msra.mxu0 0.0
  %2325 = vmatprep.subr.mxu0 0.0
  %2326 = vmatpush1.msra.mxu0 0.0
  %2327 = vmatprep.subr.mxu0 0.0
  %2328 = vmatpush1.msra.mxu0 0.0
  %2329 = vmatprep.subr.mxu0 0.0
  %2330 = vmatpush1.msra.mxu0 0.0
  %2331 = vmatprep.subr.mxu0 0.0
  %2332 = vmatpush1.msra.mxu0 0.0
  %2333 = vmatprep.subr.mxu0 0.0
  %2334 = vmatpush1.msra.mxu0 0.0
  %2335 = vmatprep.subr.mxu0 0.0
  %2336 = vmatpush1.msra.mxu0 0.0
  %2337 = vmatprep.subr.mxu0 0.0
  %2338 = vmatpush1.msra.mxu0 0.0
  %2339 = vmatprep.subr.mxu0 0.0
  %2340 = vmatpush1.msra.mxu0 0.0
  %2341 = vmatprep.subr.mxu0 0.0
  %2342 = vmatpush1.msra.mxu0 0.0
  %2343 = vmatprep.subr.mxu0 0.0
  %2344 = vmatpush1.msra.mxu0 0.0
  %2345 = vmatprep.subr.mxu0 0.0
  %2346 = vmatpush1.msra.mxu0 0.0
  %2347 = vmatprep.subr.mxu0 0.0
  %2348 = vmatpush1.msra.mxu0 0.0
  %2349 = vmatprep.subr.mxu0 0.0
  %2350 = vmatpush1.msra.mxu0 0.0
  %2351 = vmatprep.subr.mxu0 0.0
  %2352 = vmatpush1.msra.mxu0 0.0
  %2353 = vmatprep.subr.mxu0 0.0
  %2354 = vmatpush1.msra.mxu0 0.0
  %2355 = vmatprep.subr.mxu0 0.0
  %2356 = vmatpush1.msra.mxu0 0.0
  %2357 = vmatprep.subr.mxu0 0.0
  %2358 = vmatpush1.msra.mxu0 0.0
  %2359 = vmatprep.subr.mxu0 0.0
  %2360 = vmatpush1.msra.mxu0 0.0
  %2361 = vmatprep.subr.mxu0 0.0
  %2362 = vmatpush1.msra.mxu0 0.0
  %2363 = vmatprep.subr.mxu0 0.0
  %2364 = vmatpush1.msra.mxu0 0.0
  %2365 = vmatprep.subr.mxu0 0.0
  %2366 = vmatpush1.msra.mxu0 0.0
  %2367 = vmatprep.mubr.f32.mxu0 0.0
  %v2368 = vand.u32 %v1336, 4294901760
  %2369 = vmatmul.mubr.f32.gmra.mrb[0].mxu0 %v2368
  %v2370 = vpop.f32.mrb[0].mxu0
  %v2371 = vadd.f32 %v2140, %v2370
  %v2372 = vpop.f32.mrb[0].mxu0
  %2373 = vmatprep.mubr.f32.mxu0 0.0
  %v2374 = vand.u32 %v1339, 4294901760
  %2375 = vmatmul.mubr.f32.gmra.mrb[0].mxu0 %v2374
  %v2376 = vpop.f32.mrb[0].mxu0
  %v2377 = vadd.f32 %v2148, %v2376
  %v2378 = vpop.f32.mrb[0].mxu0
  %2379 = vmatprep.mubr.f32.mxu0 0.0
  %v2380 = vand.u32 %v1342, 4294901760
  %2381 = vmatmul.mubr.f32.gmra.mrb[0].mxu0 %v2380
  %v2382 = vpop.f32.mrb[0].mxu0
  %v2383 = vadd.f32 %v2156, %v2382
  %v2384 = vpop.f32.mrb[0].mxu0
  %2385 = vmatprep.mubr.f32.mxu0 0.0
  %v2386 = vand.u32 %v1345, 4294901760
  %2387 = vmatmul.mubr.f32.gmra.mrb[0].mxu0 %v2386
  %v2388 = vpop.f32.mrb[0].mxu0
  %v2389 = vadd.f32 %v2164, %v2388
  %v2390 = vpop.f32.mrb[0].mxu0
  %2391 = vmatprep.mubr.f32.mxu0 0.0
  %v2392 = vand.u32 %v1348, 4294901760
  %2393 = vmatmul.mubr.f32.gmra.mrb[0].mxu0 %v2392
  %v2394 = vpop.f32.mrb[0].mxu0
  %v2395 = vadd.f32 %v2172, %v2394
  %v2396 = vpop.f32.mrb[0].mxu0
  %2397 = vmatprep.mubr.f32.mxu0 0.0
  %v2398 = vand.u32 %v1351, 4294901760
  %2399 = vmatmul.mubr.f32.gmra.mrb[0].mxu0 %v2398
  %v2400 = vpop.f32.mrb[0].mxu0
  %v2401 = vadd.f32 %v2180, %v2400
  %v2402 = vpop.f32.mrb[0].mxu0
  %2403 = vmatprep.mubr.f32.mxu0 0.0
  %v2404 = vand.u32 %v1354, 4294901760
  %2405 = vmatmul.mubr.f32.gmra.mrb[0].mxu0 %v2404
  %v2406 = vpop.f32.mrb[0].mxu0
  %v2407 = vadd.f32 %v2188, %v2406
  %v2408 = vpop.f32.mrb[0].mxu0
  %2409 = vmatprep.mubr.f32.mxu0 0.0
  %v2410 = vand.u32 %v1357, 4294901760
  %2411 = vmatmul.mubr.f32.gmra.mrb[0].mxu0 %v2410
  %v2412 = vpop.f32.mrb[0].mxu0
  %v2413 = vadd.f32 %v2196, %v2412
  %v2414 = vpop.f32.mrb[0].mxu0
  %2415 = vmatprep.mubr.f32.mxu0 0.0
  %v2416 = vand.u32 %v1360, 4294901760
  %2417 = vmatmul.mubr.f32.gmra.mrb[0].mxu0 %v2416
  %v2418 = vpop.f32.mrb[0].mxu0
  %v2419 = vadd.f32 %v2204, %v2418
  %v2420 = vpop.f32.mrb[0].mxu0
  %2421 = vmatprep.mubr.f32.mxu0 0.0
  %v2422 = vand.u32 %v1363, 4294901760
  %2423 = vmatmul.mubr.f32.gmra.mrb[0].mxu0 %v2422
  %v2424 = vpop.f32.mrb[0].mxu0
  %v2425 = vadd.f32 %v2212, %v2424
  %v2426 = vpop.f32.mrb[0].mxu0
  %2427 = vmatprep.mubr.f32.mxu0 0.0
  %v2428 = vand.u32 %v1366, 4294901760
  %2429 = vmatmul.mubr.f32.gmra.mrb[0].mxu0 %v2428
  %v2430 = vpop.f32.mrb[0].mxu0
  %v2431 = vadd.f32 %v2220, %v2430
  %v2432 = vpop.f32.mrb[0].mxu0
  %2433 = vmatprep.mubr.f32.mxu0 0.0
  %v2434 = vand.u32 %v1369, 4294901760
  %2435 = vmatmul.mubr.f32.gmra.mrb[0].mxu0 %v2434
  %v2436 = vpop.f32.mrb[0].mxu0
  %v2437 = vadd.f32 %v2228, %v2436
  %v2438 = vpop.f32.mrb[0].mxu0
  %2439 = vmatprep.mubr.f32.mxu0 0.0
  %v2440 = vand.u32 %v1372, 4294901760
  %2441 = vmatmul.mubr.f32.gmra.mrb[0].mxu0 %v2440
  %v2442 = vpop.f32.mrb[0].mxu0
  %v2443 = vadd.f32 %v2236, %v2442
  %v2444 = vpop.f32.mrb[0].mxu0
  %2445 = vmatprep.mubr.f32.mxu0 0.0
  %v2446 = vand.u32 %v1375, 4294901760
  %2447 = vmatmul.mubr.f32.gmra.mrb[0].mxu0 %v2446
  %v2448 = vpop.f32.mrb[0].mxu0
  %v2449 = vadd.f32 %v2244, %v2448
  %v2450 = vpop.f32.mrb[0].mxu0
  %2451 = vmatprep.mubr.f32.mxu0 0.0
  %v2452 = vand.u32 %v1378, 4294901760
  %2453 = vmatmul.mubr.f32.gmra.mrb[0].mxu0 %v2452
  %v2454 = vpop.f32.mrb[0].mxu0
  %v2455 = vadd.f32 %v2252, %v2454
  %v2456 = vpop.f32.mrb[0].mxu0
  %2457 = vmatprep.mubr.f32.mxu0 0.0
  %v2458 = vand.u32 %v1381, 4294901760
  %2459 = vmatmul.mubr.f32.gmra.mrb[0].mxu0 %v2458
  %v2460 = vpop.f32.mrb[0].mxu0
  %v2461 = vadd.f32 %v2260, %v2460
  %v2462 = vpop.f32.mrb[0].mxu0
  %2463 = vmatprep.mubr.f32.mxu0 0.0
  %v2464 = vand.u32 %v1384, 4294901760
  %2465 = vmatmul.mubr.f32.gmra.mrb[0].mxu0 %v2464
  %v2466 = vpop.f32.mrb[0].mxu0
  %v2467 = vadd.f32 %v2268, %v2466
  %v2468 = vpop.f32.mrb[0].mxu0
  %2469 = vmatprep.mubr.f32.mxu0 0.0
  %v2470 = vand.u32 %v1387, 4294901760
  %2471 = vmatmul.mubr.f32.gmra.mrb[0].mxu0 %v2470
  %v2472 = vpop.f32.mrb[0].mxu0
  %v2473 = vadd.f32 %v2276, %v2472
  %v2474 = vpop.f32.mrb[0].mxu0
  %2475 = vdwg.mxu0
  %2476 = vmatprep.subr.mxu0 0.0
  %v2477 = vand.u32 %v1318, 4294901760
  %2478 = vmatpush1.msra.mxu0 %v2477
  %2479 = vmatprep.subr.mxu0 0.0
  %v2480 = vand.u32 %v1319, 4294901760
  %2481 = vmatpush1.msra.mxu0 %v2480
  %2482 = vmatprep.subr.mxu0 0.0
  %v2483 = vand.u32 %v1320, 4294901760
  %2484 = vmatpush1.msra.mxu0 %v2483
  %2485 = vmatprep.subr.mxu0 0.0
  %v2486 = vand.u32 %v1321, 4294901760
  %2487 = vmatpush1.msra.mxu0 %v2486
  %2488 = vmatprep.subr.mxu0 0.0
  %v2489 = vand.u32 %v1322, 4294901760
  %2490 = vmatpush1.msra.mxu0 %v2489
  %2491 = vmatprep.subr.mxu0 0.0
  %v2492 = vand.u32 %v1323, 4294901760
  %2493 = vmatpush1.msra.mxu0 %v2492
  %2494 = vmatprep.subr.mxu0 0.0
  %v2495 = vand.u32 %v1324, 4294901760
  %2496 = vmatpush1.msra.mxu0 %v2495
  %2497 = vmatprep.subr.mxu0 0.0
  %v2498 = vand.u32 %v1325, 4294901760
  %2499 = vmatpush1.msra.mxu0 %v2498
  %2500 = vmatprep.subr.mxu0 0.0
  %2501 = vmatpush1.msra.mxu0 0.0
  %2502 = vmatprep.subr.mxu0 0.0
  %2503 = vmatpush1.msra.mxu0 0.0
  %2504 = vmatprep.subr.mxu0 0.0
  %2505 = vmatpush1.msra.mxu0 0.0
  %2506 = vmatprep.subr.mxu0 0.0
  %2507 = vmatpush1.msra.mxu0 0.0
  %2508 = vmatprep.subr.mxu0 0.0
  %2509 = vmatpush1.msra.mxu0 0.0
  %2510 = vmatprep.subr.mxu0 0.0
  %2511 = vmatpush1.msra.mxu0 0.0
  %2512 = vmatprep.subr.mxu0 0.0
  %2513 = vmatpush1.msra.mxu0 0.0
  %2514 = vmatprep.subr.mxu0 0.0
  %2515 = vmatpush1.msra.mxu0 0.0
  %2516 = vmatprep.subr.mxu0 0.0
  %2517 = vmatpush1.msra.mxu0 0.0
  %2518 = vmatprep.subr.mxu0 0.0
  %2519 = vmatpush1.msra.mxu0 0.0
  %2520 = vmatprep.subr.mxu0 0.0
  %2521 = vmatpush1.msra.mxu0 0.0
  %2522 = vmatprep.subr.mxu0 0.0
  %2523 = vmatpush1.msra.mxu0 0.0
  %2524 = vmatprep.subr.mxu0 0.0
  %2525 = vmatpush1.msra.mxu0 0.0
  %2526 = vmatprep.subr.mxu0 0.0
  %2527 = vmatpush1.msra.mxu0 0.0
  %2528 = vmatprep.subr.mxu0 0.0
  %2529 = vmatpush1.msra.mxu0 0.0
  %2530 = vmatprep.subr.mxu0 0.0
  %2531 = vmatpush1.msra.mxu0 0.0
  %2532 = vmatprep.subr.mxu0 0.0
  %2533 = vmatpush1.msra.mxu0 0.0
  %2534 = vmatprep.subr.mxu0 0.0
  %2535 = vmatpush1.msra.mxu0 0.0
  %2536 = vmatprep.subr.mxu0 0.0
  %2537 = vmatpush1.msra.mxu0 0.0
  %2538 = vmatprep.subr.mxu0 0.0
  %2539 = vmatpush1.msra.mxu0 0.0
  %2540 = vmatprep.subr.mxu0 0.0
  %2541 = vmatpush1.msra.mxu0 0.0
  %2542 = vmatprep.subr.mxu0 0.0
  %2543 = vmatpush1.msra.mxu0 0.0
  %2544 = vmatprep.subr.mxu0 0.0
  %2545 = vmatpush1.msra.mxu0 0.0
  %2546 = vmatprep.subr.mxu0 0.0
  %2547 = vmatpush1.msra.mxu0 0.0
  %2548 = vmatprep.mubr.f32.mxu0 0.0
  %v2549 = vand.u32 %v1336, 4294901760
  %2550 = vmatmul.mubr.f32.gmra.mrb[0].mxu0 %v2549
  %v2551 = vpop.f32.mrb[0].mxu0
  %v2552 = vadd.f32 %v2371, %v2551
  %v2553 = vpop.f32.mrb[0].mxu0
  %2554 = vmatprep.mubr.f32.mxu0 0.0
  %v2555 = vand.u32 %v1339, 4294901760
  %2556 = vmatmul.mubr.f32.gmra.mrb[0].mxu0 %v2555
  %v2557 = vpop.f32.mrb[0].mxu0
  %v2558 = vadd.f32 %v2377, %v2557
  %v2559 = vpop.f32.mrb[0].mxu0
  %2560 = vmatprep.mubr.f32.mxu0 0.0
  %v2561 = vand.u32 %v1342, 4294901760
  %2562 = vmatmul.mubr.f32.gmra.mrb[0].mxu0 %v2561
  %v2563 = vpop.f32.mrb[0].mxu0
  %v2564 = vadd.f32 %v2383, %v2563
  %v2565 = vpop.f32.mrb[0].mxu0
  %2566 = vmatprep.mubr.f32.mxu0 0.0
  %v2567 = vand.u32 %v1345, 4294901760
  %2568 = vmatmul.mubr.f32.gmra.mrb[0].mxu0 %v2567
  %v2569 = vpop.f32.mrb[0].mxu0
  %v2570 = vadd.f32 %v2389, %v2569
  %v2571 = vpop.f32.mrb[0].mxu0
  %2572 = vmatprep.mubr.f32.mxu0 0.0
  %v2573 = vand.u32 %v1348, 4294901760
  %2574 = vmatmul.mubr.f32.gmra.mrb[0].mxu0 %v2573
  %v2575 = vpop.f32.mrb[0].mxu0
  %v2576 = vadd.f32 %v2395, %v2575
  %v2577 = vpop.f32.mrb[0].mxu0
  %2578 = vmatprep.mubr.f32.mxu0 0.0
  %v2579 = vand.u32 %v1351, 4294901760
  %2580 = vmatmul.mubr.f32.gmra.mrb[0].mxu0 %v2579
  %v2581 = vpop.f32.mrb[0].mxu0
  %v2582 = vadd.f32 %v2401, %v2581
  %v2583 = vpop.f32.mrb[0].mxu0
  %2584 = vmatprep.mubr.f32.mxu0 0.0
  %v2585 = vand.u32 %v1354, 4294901760
  %2586 = vmatmul.mubr.f32.gmra.mrb[0].mxu0 %v2585
  %v2587 = vpop.f32.mrb[0].mxu0
  %v2588 = vadd.f32 %v2407, %v2587
  %v2589 = vpop.f32.mrb[0].mxu0
  %2590 = vmatprep.mubr.f32.mxu0 0.0
  %v2591 = vand.u32 %v1357, 4294901760
  %2592 = vmatmul.mubr.f32.gmra.mrb[0].mxu0 %v2591
  %v2593 = vpop.f32.mrb[0].mxu0
  %v2594 = vadd.f32 %v2413, %v2593
  %v2595 = vpop.f32.mrb[0].mxu0
  %2596 = vmatprep.mubr.f32.mxu0 0.0
  %v2597 = vand.u32 %v1360, 4294901760
  %2598 = vmatmul.mubr.f32.gmra.mrb[0].mxu0 %v2597
  %v2599 = vpop.f32.mrb[0].mxu0
  %v2600 = vadd.f32 %v2419, %v2599
  %v2601 = vpop.f32.mrb[0].mxu0
  %2602 = vmatprep.mubr.f32.mxu0 0.0
  %v2603 = vand.u32 %v1363, 4294901760
  %2604 = vmatmul.mubr.f32.gmra.mrb[0].mxu0 %v2603
  %v2605 = vpop.f32.mrb[0].mxu0
  %v2606 = vadd.f32 %v2425, %v2605
  %v2607 = vpop.f32.mrb[0].mxu0
  %2608 = vmatprep.mubr.f32.mxu0 0.0
  %v2609 = vand.u32 %v1366, 4294901760
  %2610 = vmatmul.mubr.f32.gmra.mrb[0].mxu0 %v2609
  %v2611 = vpop.f32.mrb[0].mxu0
  %v2612 = vadd.f32 %v2431, %v2611
  %v2613 = vpop.f32.mrb[0].mxu0
  %2614 = vmatprep.mubr.f32.mxu0 0.0
  %v2615 = vand.u32 %v1369, 4294901760
  %2616 = vmatmul.mubr.f32.gmra.mrb[0].mxu0 %v2615
  %v2617 = vpop.f32.mrb[0].mxu0
  %v2618 = vadd.f32 %v2437, %v2617
  %v2619 = vpop.f32.mrb[0].mxu0
  %2620 = vmatprep.mubr.f32.mxu0 0.0
  %v2621 = vand.u32 %v1372, 4294901760
  %2622 = vmatmul.mubr.f32.gmra.mrb[0].mxu0 %v2621
  %v2623 = vpop.f32.mrb[0].mxu0
  %v2624 = vadd.f32 %v2443, %v2623
  %v2625 = vpop.f32.mrb[0].mxu0
  %2626 = vmatprep.mubr.f32.mxu0 0.0
  %v2627 = vand.u32 %v1375, 4294901760
  %2628 = vmatmul.mubr.f32.gmra.mrb[0].mxu0 %v2627
  %v2629 = vpop.f32.mrb[0].mxu0
  %v2630 = vadd.f32 %v2449, %v2629
  %v2631 = vpop.f32.mrb[0].mxu0
  %2632 = vmatprep.mubr.f32.mxu0 0.0
  %v2633 = vand.u32 %v1378, 4294901760
  %2634 = vmatmul.mubr.f32.gmra.mrb[0].mxu0 %v2633
  %v2635 = vpop.f32.mrb[0].mxu0
  %v2636 = vadd.f32 %v2455, %v2635
  %v2637 = vpop.f32.mrb[0].mxu0
  %2638 = vmatprep.mubr.f32.mxu0 0.0
  %v2639 = vand.u32 %v1381, 4294901760
  %2640 = vmatmul.mubr.f32.gmra.mrb[0].mxu0 %v2639
  %v2641 = vpop.f32.mrb[0].mxu0
  %v2642 = vadd.f32 %v2461, %v2641
  %v2643 = vpop.f32.mrb[0].mxu0
  %2644 = vmatprep.mubr.f32.mxu0 0.0
  %v2645 = vand.u32 %v1384, 4294901760
  %2646 = vmatmul.mubr.f32.gmra.mrb[0].mxu0 %v2645
  %v2647 = vpop.f32.mrb[0].mxu0
  %v2648 = vadd.f32 %v2467, %v2647
  %v2649 = vpop.f32.mrb[0].mxu0
  %2650 = vmatprep.mubr.f32.mxu0 0.0
  %v2651 = vand.u32 %v1387, 4294901760
  %2652 = vmatmul.mubr.f32.gmra.mrb[0].mxu0 %v2651
  %v2653 = vpop.f32.mrb[0].mxu0
  %v2654 = vadd.f32 %v2473, %v2653
  %v2655 = vpop.f32.mrb[0].mxu0
  %2656 = vdwg.mxu0
  %v2657 = vmax.f32 %v2552, %v2564
  %v2658 = vmax.f32 %v2558, %v2570
  %v2659 = vmax.f32 %v2657, %v2576
  %v2660 = vmax.f32 %v2658, %v2582
  %v2661 = vmax.f32 %v2659, %v2588
  %v2662 = vmax.f32 %v2660, %v2594
  %v2663 = vmax.f32 %v2661, %v2600
  %v2664 = vmax.f32 %v2662, %v2606
  %v2665 = vmax.f32 %v2663, %v2612
  %v2666 = vmax.f32 %v2664, %v2618
  %v2667 = vmax.f32 %v2665, %v2624
  %v2668 = vmax.f32 %v2666, %v2630
  %v2669 = vmax.f32 %v2667, %v2636
  %v2670 = vmax.f32 %v2668, %v2642
  %v2671 = vmax.f32 %v2669, %v2648
  %v2672 = vmax.f32 %v2670, %v2654
  %vm2673 = vcmask 261120
  %v2675 = vsel %vm2673, %v2671, 0
  %v2678 = vsel %vm2673, %v2672, 0
  %v2680 = vand.u32 %v50, 4294901760
  %2681 = vmatprep.subr.mxu0 %v2680
  %v2682 = vand.u32 %v49, 4294901760
  %2683 = vmatpush1.msra.mxu0 %v2682
  %v2684 = vand.u32 %v55, 4294901760
  %2685 = vmatprep.subr.mxu0 %v2684
  %v2686 = vand.u32 %v54, 4294901760
  %2687 = vmatpush1.msra.mxu0 %v2686
  %v2688 = vand.u32 %v60, 4294901760
  %2689 = vmatprep.subr.mxu0 %v2688
  %v2690 = vand.u32 %v59, 4294901760
  %2691 = vmatpush1.msra.mxu0 %v2690
  %v2692 = vand.u32 %v65, 4294901760
  %2693 = vmatprep.subr.mxu0 %v2692
  %v2694 = vand.u32 %v64, 4294901760
  %2695 = vmatpush1.msra.mxu0 %v2694
  %2696 = vmatprep.subr.mxu0 0.0
  %2697 = vmatpush1.msra.mxu0 0.0
  %2698 = vmatprep.subr.mxu0 0.0
  %2699 = vmatpush1.msra.mxu0 0.0
  %2700 = vmatprep.subr.mxu0 0.0
  %2701 = vmatpush1.msra.mxu0 0.0
  %2702 = vmatprep.subr.mxu0 0.0
  %2703 = vmatpush1.msra.mxu0 0.0
  %2704 = vmatprep.subr.mxu0 0.0
  %2705 = vmatpush1.msra.mxu0 0.0
  %2706 = vmatprep.subr.mxu0 0.0
  %2707 = vmatpush1.msra.mxu0 0.0
  %2708 = vmatprep.subr.mxu0 0.0
  %2709 = vmatpush1.msra.mxu0 0.0
  %2710 = vmatprep.subr.mxu0 0.0
  %2711 = vmatpush1.msra.mxu0 0.0
  %2712 = vmatprep.subr.mxu0 0.0
  %2713 = vmatpush1.msra.mxu0 0.0
  %2714 = vmatprep.subr.mxu0 0.0
  %2715 = vmatpush1.msra.mxu0 0.0
  %2716 = vmatprep.subr.mxu0 0.0
  %2717 = vmatpush1.msra.mxu0 0.0
  %2718 = vmatprep.subr.mxu0 0.0
  %2719 = vmatpush1.msra.mxu0 0.0
  %2720 = vmatprep.subr.mxu0 0.0
  %2721 = vmatpush1.msra.mxu0 0.0
  %2722 = vmatprep.subr.mxu0 0.0
  %2723 = vmatpush1.msra.mxu0 0.0
  %2724 = vmatprep.subr.mxu0 0.0
  %2725 = vmatpush1.msra.mxu0 0.0
  %2726 = vmatprep.subr.mxu0 0.0
  %2727 = vmatpush1.msra.mxu0 0.0
  %2728 = vmatprep.subr.mxu0 0.0
  %2729 = vmatpush1.msra.mxu0 0.0
  %2730 = vmatprep.subr.mxu0 0.0
  %2731 = vmatpush1.msra.mxu0 0.0
  %2732 = vmatprep.subr.mxu0 0.0
  %2733 = vmatpush1.msra.mxu0 0.0
  %2734 = vmatprep.subr.mxu0 0.0
  %2735 = vmatpush1.msra.mxu0 0.0
  %2736 = vmatprep.subr.mxu0 0.0
  %2737 = vmatpush1.msra.mxu0 0.0
  %2738 = vmatprep.subr.mxu0 0.0
  %2739 = vmatpush1.msra.mxu0 0.0
  %2740 = vmatprep.subr.mxu0 0.0
  %2741 = vmatpush1.msra.mxu0 0.0
  %2742 = vmatprep.subr.mxu0 0.0
  %2743 = vmatpush1.msra.mxu0 0.0
  %2744 = vmatprep.subr.mxu0 0.0
  %2745 = vmatpush1.msra.mxu0 0.0
  %2746 = vmatprep.subr.mxu0 0.0
  %2747 = vmatpush1.msra.mxu0 0.0
  %2748 = vmatprep.subr.mxu0 0.0
  %2749 = vmatpush1.msra.mxu0 0.0
  %2750 = vmatprep.subr.mxu0 0.0
  %2751 = vmatpush1.msra.mxu0 0.0
  %2752 = vmatprep.mubr.f32.mxu0 0.0
  %v2753 = vand.u32 %v2675, 4294901760
  %v2754 = vsub.f32 %v2675, %v2753
  %v2755 = vand.u32 %v2754, 4294901760
  %v2756 = vsub.f32 %v2754, %v2755
  %v2757 = vand.u32 %v2756, 4294901760
  %2758 = vmatmul.mubr.f32.gmra.mrb[0].mxu0 %v2757
  %v2759 = vpop.f32.mrb[0].mxu0
  %v2760 = vadd.f32 0.0, %v2759
  %v2761 = vpop.f32.mrb[0].mxu0
  %v2762 = vadd.f32 0.0, %v2761
  %2763 = vmatprep.mubr.f32.mxu0 0.0
  %v2764 = vand.u32 %v2678, 4294901760
  %v2765 = vsub.f32 %v2678, %v2764
  %v2766 = vand.u32 %v2765, 4294901760
  %v2767 = vsub.f32 %v2765, %v2766
  %v2768 = vand.u32 %v2767, 4294901760
  %2769 = vmatmul.mubr.f32.gmra.mrb[0].mxu0 %v2768
  %v2770 = vpop.f32.mrb[0].mxu0
  %v2771 = vpop.f32.mrb[0].mxu0
  %v2772 = vadd.f32 0.0, %v2771
  %2773 = vdwg.mxu0
  %v2774 = vand.u32 %v50, 4294901760
  %v2775 = vsub.f32 %v50, %v2774
  %v2776 = vand.u32 %v2775, 4294901760
  %v2777 = vsub.f32 %v2775, %v2776
  %v2778 = vand.u32 %v2777, 4294901760
  %2779 = vmatprep.subr.mxu0 %v2778
  %v2780 = vand.u32 %v49, 4294901760
  %v2781 = vsub.f32 %v49, %v2780
  %v2782 = vand.u32 %v2781, 4294901760
  %v2783 = vsub.f32 %v2781, %v2782
  %v2784 = vand.u32 %v2783, 4294901760
  %2785 = vmatpush1.msra.mxu0 %v2784
  %v2786 = vand.u32 %v55, 4294901760
  %v2787 = vsub.f32 %v55, %v2786
  %v2788 = vand.u32 %v2787, 4294901760
  %v2789 = vsub.f32 %v2787, %v2788
  %v2790 = vand.u32 %v2789, 4294901760
  %2791 = vmatprep.subr.mxu0 %v2790
  %v2792 = vand.u32 %v54, 4294901760
  %v2793 = vsub.f32 %v54, %v2792
  %v2794 = vand.u32 %v2793, 4294901760
  %v2795 = vsub.f32 %v2793, %v2794
  %v2796 = vand.u32 %v2795, 4294901760
  %2797 = vmatpush1.msra.mxu0 %v2796
  %v2798 = vand.u32 %v60, 4294901760
  %v2799 = vsub.f32 %v60, %v2798
  %v2800 = vand.u32 %v2799, 4294901760
  %v2801 = vsub.f32 %v2799, %v2800
  %v2802 = vand.u32 %v2801, 4294901760
  %2803 = vmatprep.subr.mxu0 %v2802
  %v2804 = vand.u32 %v59, 4294901760
  %v2805 = vsub.f32 %v59, %v2804
  %v2806 = vand.u32 %v2805, 4294901760
  %v2807 = vsub.f32 %v2805, %v2806
  %v2808 = vand.u32 %v2807, 4294901760
  %2809 = vmatpush1.msra.mxu0 %v2808
  %v2810 = vand.u32 %v65, 4294901760
  %v2811 = vsub.f32 %v65, %v2810
  %v2812 = vand.u32 %v2811, 4294901760
  %v2813 = vsub.f32 %v2811, %v2812
  %v2814 = vand.u32 %v2813, 4294901760
  %2815 = vmatprep.subr.mxu0 %v2814
  %v2816 = vand.u32 %v64, 4294901760
  %v2817 = vsub.f32 %v64, %v2816
  %v2818 = vand.u32 %v2817, 4294901760
  %v2819 = vsub.f32 %v2817, %v2818
  %v2820 = vand.u32 %v2819, 4294901760
  %2821 = vmatpush1.msra.mxu0 %v2820
  %2822 = vmatprep.subr.mxu0 0.0
  %2823 = vmatpush1.msra.mxu0 0.0
  %2824 = vmatprep.subr.mxu0 0.0
  %2825 = vmatpush1.msra.mxu0 0.0
  %2826 = vmatprep.subr.mxu0 0.0
  %2827 = vmatpush1.msra.mxu0 0.0
  %2828 = vmatprep.subr.mxu0 0.0
  %2829 = vmatpush1.msra.mxu0 0.0
  %2830 = vmatprep.subr.mxu0 0.0
  %2831 = vmatpush1.msra.mxu0 0.0
  %2832 = vmatprep.subr.mxu0 0.0
  %2833 = vmatpush1.msra.mxu0 0.0
  %2834 = vmatprep.subr.mxu0 0.0
  %2835 = vmatpush1.msra.mxu0 0.0
  %2836 = vmatprep.subr.mxu0 0.0
  %2837 = vmatpush1.msra.mxu0 0.0
  %2838 = vmatprep.subr.mxu0 0.0
  %2839 = vmatpush1.msra.mxu0 0.0
  %2840 = vmatprep.subr.mxu0 0.0
  %2841 = vmatpush1.msra.mxu0 0.0
  %2842 = vmatprep.subr.mxu0 0.0
  %2843 = vmatpush1.msra.mxu0 0.0
  %2844 = vmatprep.subr.mxu0 0.0
  %2845 = vmatpush1.msra.mxu0 0.0
  %2846 = vmatprep.subr.mxu0 0.0
  %2847 = vmatpush1.msra.mxu0 0.0
  %2848 = vmatprep.subr.mxu0 0.0
  %2849 = vmatpush1.msra.mxu0 0.0
  %2850 = vmatprep.subr.mxu0 0.0
  %2851 = vmatpush1.msra.mxu0 0.0
  %2852 = vmatprep.subr.mxu0 0.0
  %2853 = vmatpush1.msra.mxu0 0.0
  %2854 = vmatprep.subr.mxu0 0.0
  %2855 = vmatpush1.msra.mxu0 0.0
  %2856 = vmatprep.subr.mxu0 0.0
  %2857 = vmatpush1.msra.mxu0 0.0
  %2858 = vmatprep.subr.mxu0 0.0
  %2859 = vmatpush1.msra.mxu0 0.0
  %2860 = vmatprep.subr.mxu0 0.0
  %2861 = vmatpush1.msra.mxu0 0.0
  %2862 = vmatprep.subr.mxu0 0.0
  %2863 = vmatpush1.msra.mxu0 0.0
  %2864 = vmatprep.subr.mxu0 0.0
  %2865 = vmatpush1.msra.mxu0 0.0
  %2866 = vmatprep.subr.mxu0 0.0
  %2867 = vmatpush1.msra.mxu0 0.0
  %2868 = vmatprep.subr.mxu0 0.0
  %2869 = vmatpush1.msra.mxu0 0.0
  %2870 = vmatprep.subr.mxu0 0.0
  %2871 = vmatpush1.msra.mxu0 0.0
  %2872 = vmatprep.subr.mxu0 0.0
  %2873 = vmatpush1.msra.mxu0 0.0
  %2874 = vmatprep.subr.mxu0 0.0
  %2875 = vmatpush1.msra.mxu0 0.0
  %2876 = vmatprep.subr.mxu0 0.0
  %2877 = vmatpush1.msra.mxu0 0.0
  %2878 = vmatprep.mubr.f32.mxu0 0.0
  %v2879 = vand.u32 %v2675, 4294901760
  %2880 = vmatmul.mubr.f32.gmra.mrb[0].mxu0 %v2879
  %v2881 = vpop.f32.mrb[0].mxu0
  %v2882 = vadd.f32 %v2760, %v2881
  %v2883 = vpop.f32.mrb[0].mxu0
  %v2884 = vadd.f32 %v2762, %v2883
  %2885 = vmatprep.mubr.f32.mxu0 0.0
  %v2886 = vand.u32 %v2678, 4294901760
  %2887 = vmatmul.mubr.f32.gmra.mrb[0].mxu0 %v2886
  %v2888 = vpop.f32.mrb[0].mxu0
  %v2889 = vpop.f32.mrb[0].mxu0
  %v2890 = vadd.f32 %v2772, %v2889
  %2891 = vdwg.mxu0
  %v2892 = vand.u32 %v50, 4294901760
  %v2893 = vsub.f32 %v50, %v2892
  %2894 = vmatprep.subr.mxu0 %v2893
  %v2895 = vand.u32 %v49, 4294901760
  %v2896 = vsub.f32 %v49, %v2895
  %2897 = vmatpush1.msra.mxu0 %v2896
  %v2898 = vand.u32 %v55, 4294901760
  %v2899 = vsub.f32 %v55, %v2898
  %2900 = vmatprep.subr.mxu0 %v2899
  %v2901 = vand.u32 %v54, 4294901760
  %v2902 = vsub.f32 %v54, %v2901
  %2903 = vmatpush1.msra.mxu0 %v2902
  %v2904 = vand.u32 %v60, 4294901760
  %v2905 = vsub.f32 %v60, %v2904
  %2906 = vmatprep.subr.mxu0 %v2905
  %v2907 = vand.u32 %v59, 4294901760
  %v2908 = vsub.f32 %v59, %v2907
  %2909 = vmatpush1.msra.mxu0 %v2908
  %v2910 = vand.u32 %v65, 4294901760
  %v2911 = vsub.f32 %v65, %v2910
  %2912 = vmatprep.subr.mxu0 %v2911
  %v2913 = vand.u32 %v64, 4294901760
  %v2914 = vsub.f32 %v64, %v2913
  %2915 = vmatpush1.msra.mxu0 %v2914
  %2916 = vmatprep.subr.mxu0 0.0
  %2917 = vmatpush1.msra.mxu0 0.0
  %2918 = vmatprep.subr.mxu0 0.0
  %2919 = vmatpush1.msra.mxu0 0.0
  %2920 = vmatprep.subr.mxu0 0.0
  %2921 = vmatpush1.msra.mxu0 0.0
  %2922 = vmatprep.subr.mxu0 0.0
  %2923 = vmatpush1.msra.mxu0 0.0
  %2924 = vmatprep.subr.mxu0 0.0
  %2925 = vmatpush1.msra.mxu0 0.0
  %2926 = vmatprep.subr.mxu0 0.0
  %2927 = vmatpush1.msra.mxu0 0.0
  %2928 = vmatprep.subr.mxu0 0.0
  %2929 = vmatpush1.msra.mxu0 0.0
  %2930 = vmatprep.subr.mxu0 0.0
  %2931 = vmatpush1.msra.mxu0 0.0
  %2932 = vmatprep.subr.mxu0 0.0
  %2933 = vmatpush1.msra.mxu0 0.0
  %2934 = vmatprep.subr.mxu0 0.0
  %2935 = vmatpush1.msra.mxu0 0.0
  %2936 = vmatprep.subr.mxu0 0.0
  %2937 = vmatpush1.msra.mxu0 0.0
  %2938 = vmatprep.subr.mxu0 0.0
  %2939 = vmatpush1.msra.mxu0 0.0
  %2940 = vmatprep.subr.mxu0 0.0
  %2941 = vmatpush1.msra.mxu0 0.0
  %2942 = vmatprep.subr.mxu0 0.0
  %2943 = vmatpush1.msra.mxu0 0.0
  %2944 = vmatprep.subr.mxu0 0.0
  %2945 = vmatpush1.msra.mxu0 0.0
  %2946 = vmatprep.subr.mxu0 0.0
  %2947 = vmatpush1.msra.mxu0 0.0
  %2948 = vmatprep.subr.mxu0 0.0
  %2949 = vmatpush1.msra.mxu0 0.0
  %2950 = vmatprep.subr.mxu0 0.0
  %2951 = vmatpush1.msra.mxu0 0.0
  %2952 = vmatprep.subr.mxu0 0.0
  %2953 = vmatpush1.msra.mxu0 0.0
  %2954 = vmatprep.subr.mxu0 0.0
  %2955 = vmatpush1.msra.mxu0 0.0
  %2956 = vmatprep.subr.mxu0 0.0
  %2957 = vmatpush1.msra.mxu0 0.0
  %2958 = vmatprep.subr.mxu0 0.0
  %2959 = vmatpush1.msra.mxu0 0.0
  %2960 = vmatprep.subr.mxu0 0.0
  %2961 = vmatpush1.msra.mxu0 0.0
  %2962 = vmatprep.subr.mxu0 0.0
  %2963 = vmatpush1.msra.mxu0 0.0
  %2964 = vmatprep.subr.mxu0 0.0
  %2965 = vmatpush1.msra.mxu0 0.0
  %2966 = vmatprep.subr.mxu0 0.0
  %2967 = vmatpush1.msra.mxu0 0.0
  %2968 = vmatprep.subr.mxu0 0.0
  %2969 = vmatpush1.msra.mxu0 0.0
  %2970 = vmatprep.subr.mxu0 0.0
  %2971 = vmatpush1.msra.mxu0 0.0
  %2972 = vmatprep.mubr.f32.mxu0 0.0
  %v2973 = vand.u32 %v2675, 4294901760
  %v2974 = vsub.f32 %v2675, %v2973
  %2975 = vmatmul.mubr.f32.gmra.mrb[0].mxu0 %v2974
  %v2976 = vpop.f32.mrb[0].mxu0
  %v2977 = vadd.f32 %v2882, %v2976
  %v2978 = vpop.f32.mrb[0].mxu0
  %v2979 = vadd.f32 %v2884, %v2978
  %2980 = vmatprep.mubr.f32.mxu0 0.0
  %v2981 = vand.u32 %v2678, 4294901760
  %v2982 = vsub.f32 %v2678, %v2981
  %2983 = vmatmul.mubr.f32.gmra.mrb[0].mxu0 %v2982
  %v2984 = vpop.f32.mrb[0].mxu0
  %v2985 = vpop.f32.mrb[0].mxu0
  %v2986 = vadd.f32 %v2890, %v2985
  %2987 = vdwg.mxu0
  %v2988 = vand.u32 %v50, 4294901760
  %2989 = vmatprep.subr.mxu0 %v2988
  %v2990 = vand.u32 %v49, 4294901760
  %2991 = vmatpush1.msra.mxu0 %v2990
  %v2992 = vand.u32 %v55, 4294901760
  %2993 = vmatprep.subr.mxu0 %v2992
  %v2994 = vand.u32 %v54, 4294901760
  %2995 = vmatpush1.msra.mxu0 %v2994
  %v2996 = vand.u32 %v60, 4294901760
  %2997 = vmatprep.subr.mxu0 %v2996
  %v2998 = vand.u32 %v59, 4294901760
  %2999 = vmatpush1.msra.mxu0 %v2998
  %v3000 = vand.u32 %v65, 4294901760
  %3001 = vmatprep.subr.mxu0 %v3000
  %v3002 = vand.u32 %v64, 4294901760
  %3003 = vmatpush1.msra.mxu0 %v3002
  %3004 = vmatprep.subr.mxu0 0.0
  %3005 = vmatpush1.msra.mxu0 0.0
  %3006 = vmatprep.subr.mxu0 0.0
  %3007 = vmatpush1.msra.mxu0 0.0
  %3008 = vmatprep.subr.mxu0 0.0
  %3009 = vmatpush1.msra.mxu0 0.0
  %3010 = vmatprep.subr.mxu0 0.0
  %3011 = vmatpush1.msra.mxu0 0.0
  %3012 = vmatprep.subr.mxu0 0.0
  %3013 = vmatpush1.msra.mxu0 0.0
  %3014 = vmatprep.subr.mxu0 0.0
  %3015 = vmatpush1.msra.mxu0 0.0
  %3016 = vmatprep.subr.mxu0 0.0
  %3017 = vmatpush1.msra.mxu0 0.0
  %3018 = vmatprep.subr.mxu0 0.0
  %3019 = vmatpush1.msra.mxu0 0.0
  %3020 = vmatprep.subr.mxu0 0.0
  %3021 = vmatpush1.msra.mxu0 0.0
  %3022 = vmatprep.subr.mxu0 0.0
  %3023 = vmatpush1.msra.mxu0 0.0
  %3024 = vmatprep.subr.mxu0 0.0
  %3025 = vmatpush1.msra.mxu0 0.0
  %3026 = vmatprep.subr.mxu0 0.0
  %3027 = vmatpush1.msra.mxu0 0.0
  %3028 = vmatprep.subr.mxu0 0.0
  %3029 = vmatpush1.msra.mxu0 0.0
  %3030 = vmatprep.subr.mxu0 0.0
  %3031 = vmatpush1.msra.mxu0 0.0
  %3032 = vmatprep.subr.mxu0 0.0
  %3033 = vmatpush1.msra.mxu0 0.0
  %3034 = vmatprep.subr.mxu0 0.0
  %3035 = vmatpush1.msra.mxu0 0.0
  %3036 = vmatprep.subr.mxu0 0.0
  %3037 = vmatpush1.msra.mxu0 0.0
  %3038 = vmatprep.subr.mxu0 0.0
  %3039 = vmatpush1.msra.mxu0 0.0
  %3040 = vmatprep.subr.mxu0 0.0
  %3041 = vmatpush1.msra.mxu0 0.0
  %3042 = vmatprep.subr.mxu0 0.0
  %3043 = vmatpush1.msra.mxu0 0.0
  %3044 = vmatprep.subr.mxu0 0.0
  %3045 = vmatpush1.msra.mxu0 0.0
  %3046 = vmatprep.subr.mxu0 0.0
  %3047 = vmatpush1.msra.mxu0 0.0
  %3048 = vmatprep.subr.mxu0 0.0
  %3049 = vmatpush1.msra.mxu0 0.0
  %3050 = vmatprep.subr.mxu0 0.0
  %3051 = vmatpush1.msra.mxu0 0.0
  %3052 = vmatprep.subr.mxu0 0.0
  %3053 = vmatpush1.msra.mxu0 0.0
  %3054 = vmatprep.subr.mxu0 0.0
  %3055 = vmatpush1.msra.mxu0 0.0
  %3056 = vmatprep.subr.mxu0 0.0
  %3057 = vmatpush1.msra.mxu0 0.0
  %3058 = vmatprep.subr.mxu0 0.0
  %3059 = vmatpush1.msra.mxu0 0.0
  %3060 = vmatprep.mubr.f32.mxu0 0.0
  %v3061 = vand.u32 %v2675, 4294901760
  %v3062 = vsub.f32 %v2675, %v3061
  %v3063 = vand.u32 %v3062, 4294901760
  %3064 = vmatmul.mubr.f32.gmra.mrb[0].mxu0 %v3063
  %v3065 = vpop.f32.mrb[0].mxu0
  %v3066 = vadd.f32 %v2977, %v3065
  %v3067 = vpop.f32.mrb[0].mxu0
  %v3068 = vadd.f32 %v2979, %v3067
  %3069 = vmatprep.mubr.f32.mxu0 0.0
  %v3070 = vand.u32 %v2678, 4294901760
  %v3071 = vsub.f32 %v2678, %v3070
  %v3072 = vand.u32 %v3071, 4294901760
  %3073 = vmatmul.mubr.f32.gmra.mrb[0].mxu0 %v3072
  %v3074 = vpop.f32.mrb[0].mxu0
  %v3075 = vpop.f32.mrb[0].mxu0
  %v3076 = vadd.f32 %v2986, %v3075
  %3077 = vdwg.mxu0
  %v3078 = vand.u32 %v50, 4294901760
  %v3079 = vsub.f32 %v50, %v3078
  %v3080 = vand.u32 %v3079, 4294901760
  %3081 = vmatprep.subr.mxu0 %v3080
  %v3082 = vand.u32 %v49, 4294901760
  %v3083 = vsub.f32 %v49, %v3082
  %v3084 = vand.u32 %v3083, 4294901760
  %3085 = vmatpush1.msra.mxu0 %v3084
  %v3086 = vand.u32 %v55, 4294901760
  %v3087 = vsub.f32 %v55, %v3086
  %v3088 = vand.u32 %v3087, 4294901760
  %3089 = vmatprep.subr.mxu0 %v3088
  %v3090 = vand.u32 %v54, 4294901760
  %v3091 = vsub.f32 %v54, %v3090
  %v3092 = vand.u32 %v3091, 4294901760
  %3093 = vmatpush1.msra.mxu0 %v3092
  %v3094 = vand.u32 %v60, 4294901760
  %v3095 = vsub.f32 %v60, %v3094
  %v3096 = vand.u32 %v3095, 4294901760
  %3097 = vmatprep.subr.mxu0 %v3096
  %v3098 = vand.u32 %v59, 4294901760
  %v3099 = vsub.f32 %v59, %v3098
  %v3100 = vand.u32 %v3099, 4294901760
  %3101 = vmatpush1.msra.mxu0 %v3100
  %v3102 = vand.u32 %v65, 4294901760
  %v3103 = vsub.f32 %v65, %v3102
  %v3104 = vand.u32 %v3103, 4294901760
  %3105 = vmatprep.subr.mxu0 %v3104
  %v3106 = vand.u32 %v64, 4294901760
  %v3107 = vsub.f32 %v64, %v3106
  %v3108 = vand.u32 %v3107, 4294901760
  %3109 = vmatpush1.msra.mxu0 %v3108
  %3110 = vmatprep.subr.mxu0 0.0
  %3111 = vmatpush1.msra.mxu0 0.0
  %3112 = vmatprep.subr.mxu0 0.0
  %3113 = vmatpush1.msra.mxu0 0.0
  %3114 = vmatprep.subr.mxu0 0.0
  %3115 = vmatpush1.msra.mxu0 0.0
  %3116 = vmatprep.subr.mxu0 0.0
  %3117 = vmatpush1.msra.mxu0 0.0
  %3118 = vmatprep.subr.mxu0 0.0
  %3119 = vmatpush1.msra.mxu0 0.0
  %3120 = vmatprep.subr.mxu0 0.0
  %3121 = vmatpush1.msra.mxu0 0.0
  %3122 = vmatprep.subr.mxu0 0.0
  %3123 = vmatpush1.msra.mxu0 0.0
  %3124 = vmatprep.subr.mxu0 0.0
  %3125 = vmatpush1.msra.mxu0 0.0
  %3126 = vmatprep.subr.mxu0 0.0
  %3127 = vmatpush1.msra.mxu0 0.0
  %3128 = vmatprep.subr.mxu0 0.0
  %3129 = vmatpush1.msra.mxu0 0.0
  %3130 = vmatprep.subr.mxu0 0.0
  %3131 = vmatpush1.msra.mxu0 0.0
  %3132 = vmatprep.subr.mxu0 0.0
  %3133 = vmatpush1.msra.mxu0 0.0
  %3134 = vmatprep.subr.mxu0 0.0
  %3135 = vmatpush1.msra.mxu0 0.0
  %3136 = vmatprep.subr.mxu0 0.0
  %3137 = vmatpush1.msra.mxu0 0.0
  %3138 = vmatprep.subr.mxu0 0.0
  %3139 = vmatpush1.msra.mxu0 0.0
  %3140 = vmatprep.subr.mxu0 0.0
  %3141 = vmatpush1.msra.mxu0 0.0
  %3142 = vmatprep.subr.mxu0 0.0
  %3143 = vmatpush1.msra.mxu0 0.0
  %3144 = vmatprep.subr.mxu0 0.0
  %3145 = vmatpush1.msra.mxu0 0.0
  %3146 = vmatprep.subr.mxu0 0.0
  %3147 = vmatpush1.msra.mxu0 0.0
  %3148 = vmatprep.subr.mxu0 0.0
  %3149 = vmatpush1.msra.mxu0 0.0
  %3150 = vmatprep.subr.mxu0 0.0
  %3151 = vmatpush1.msra.mxu0 0.0
  %3152 = vmatprep.subr.mxu0 0.0
  %3153 = vmatpush1.msra.mxu0 0.0
  %3154 = vmatprep.subr.mxu0 0.0
  %3155 = vmatpush1.msra.mxu0 0.0
  %3156 = vmatprep.subr.mxu0 0.0
  %3157 = vmatpush1.msra.mxu0 0.0
  %3158 = vmatprep.subr.mxu0 0.0
  %3159 = vmatpush1.msra.mxu0 0.0
  %3160 = vmatprep.subr.mxu0 0.0
  %3161 = vmatpush1.msra.mxu0 0.0
  %3162 = vmatprep.subr.mxu0 0.0
  %3163 = vmatpush1.msra.mxu0 0.0
  %3164 = vmatprep.subr.mxu0 0.0
  %3165 = vmatpush1.msra.mxu0 0.0
  %3166 = vmatprep.mubr.f32.mxu0 0.0
  %v3167 = vand.u32 %v2675, 4294901760
  %3168 = vmatmul.mubr.f32.gmra.mrb[0].mxu0 %v3167
  %v3169 = vpop.f32.mrb[0].mxu0
  %v3170 = vadd.f32 %v3066, %v3169
  %v3171 = vpop.f32.mrb[0].mxu0
  %v3172 = vadd.f32 %v3068, %v3171
  %3173 = vmatprep.mubr.f32.mxu0 0.0
  %v3174 = vand.u32 %v2678, 4294901760
  %3175 = vmatmul.mubr.f32.gmra.mrb[0].mxu0 %v3174
  %v3176 = vpop.f32.mrb[0].mxu0
  %v3177 = vpop.f32.mrb[0].mxu0
  %v3178 = vadd.f32 %v3076, %v3177
  %3179 = vdwg.mxu0
  %v3180 = vand.u32 %v50, 4294901760
  %3181 = vmatprep.subr.mxu0 %v3180
  %v3182 = vand.u32 %v49, 4294901760
  %3183 = vmatpush1.msra.mxu0 %v3182
  %v3184 = vand.u32 %v55, 4294901760
  %3185 = vmatprep.subr.mxu0 %v3184
  %v3186 = vand.u32 %v54, 4294901760
  %3187 = vmatpush1.msra.mxu0 %v3186
  %v3188 = vand.u32 %v60, 4294901760
  %3189 = vmatprep.subr.mxu0 %v3188
  %v3190 = vand.u32 %v59, 4294901760
  %3191 = vmatpush1.msra.mxu0 %v3190
  %v3192 = vand.u32 %v65, 4294901760
  %3193 = vmatprep.subr.mxu0 %v3192
  %v3194 = vand.u32 %v64, 4294901760
  %3195 = vmatpush1.msra.mxu0 %v3194
  %3196 = vmatprep.subr.mxu0 0.0
  %3197 = vmatpush1.msra.mxu0 0.0
  %3198 = vmatprep.subr.mxu0 0.0
  %3199 = vmatpush1.msra.mxu0 0.0
  %3200 = vmatprep.subr.mxu0 0.0
  %3201 = vmatpush1.msra.mxu0 0.0
  %3202 = vmatprep.subr.mxu0 0.0
  %3203 = vmatpush1.msra.mxu0 0.0
  %3204 = vmatprep.subr.mxu0 0.0
  %3205 = vmatpush1.msra.mxu0 0.0
  %3206 = vmatprep.subr.mxu0 0.0
  %3207 = vmatpush1.msra.mxu0 0.0
  %3208 = vmatprep.subr.mxu0 0.0
  %3209 = vmatpush1.msra.mxu0 0.0
  %3210 = vmatprep.subr.mxu0 0.0
  %3211 = vmatpush1.msra.mxu0 0.0
  %3212 = vmatprep.subr.mxu0 0.0
  %3213 = vmatpush1.msra.mxu0 0.0
  %3214 = vmatprep.subr.mxu0 0.0
  %3215 = vmatpush1.msra.mxu0 0.0
  %3216 = vmatprep.subr.mxu0 0.0
  %3217 = vmatpush1.msra.mxu0 0.0
  %3218 = vmatprep.subr.mxu0 0.0
  %3219 = vmatpush1.msra.mxu0 0.0
  %3220 = vmatprep.subr.mxu0 0.0
  %3221 = vmatpush1.msra.mxu0 0.0
  %3222 = vmatprep.subr.mxu0 0.0
  %3223 = vmatpush1.msra.mxu0 0.0
  %3224 = vmatprep.subr.mxu0 0.0
  %3225 = vmatpush1.msra.mxu0 0.0
  %3226 = vmatprep.subr.mxu0 0.0
  %3227 = vmatpush1.msra.mxu0 0.0
  %3228 = vmatprep.subr.mxu0 0.0
  %3229 = vmatpush1.msra.mxu0 0.0
  %3230 = vmatprep.subr.mxu0 0.0
  %3231 = vmatpush1.msra.mxu0 0.0
  %3232 = vmatprep.subr.mxu0 0.0
  %3233 = vmatpush1.msra.mxu0 0.0
  %3234 = vmatprep.subr.mxu0 0.0
  %3235 = vmatpush1.msra.mxu0 0.0
  %3236 = vmatprep.subr.mxu0 0.0
  %3237 = vmatpush1.msra.mxu0 0.0
  %3238 = vmatprep.subr.mxu0 0.0
  %3239 = vmatpush1.msra.mxu0 0.0
  %3240 = vmatprep.subr.mxu0 0.0
  %3241 = vmatpush1.msra.mxu0 0.0
  %3242 = vmatprep.subr.mxu0 0.0
  %3243 = vmatpush1.msra.mxu0 0.0
  %3244 = vmatprep.subr.mxu0 0.0
  %3245 = vmatpush1.msra.mxu0 0.0
  %3246 = vmatprep.subr.mxu0 0.0
  %3247 = vmatpush1.msra.mxu0 0.0
  %3248 = vmatprep.subr.mxu0 0.0
  %3249 = vmatpush1.msra.mxu0 0.0
  %3250 = vmatprep.subr.mxu0 0.0
  %3251 = vmatpush1.msra.mxu0 0.0
  %3252 = vmatprep.mubr.f32.mxu0 0.0
  %v3253 = vand.u32 %v2675, 4294901760
  %3254 = vmatmul.mubr.f32.gmra.mrb[0].mxu0 %v3253
  %v3255 = vpop.f32.mrb[0].mxu0
  %v3256 = vadd.f32 %v3170, %v3255
  %v3257 = vpop.f32.mrb[0].mxu0
  %v3258 = vadd.f32 %v3172, %v3257
  %3259 = vmatprep.mubr.f32.mxu0 0.0
  %v3260 = vand.u32 %v2678, 4294901760
  %3261 = vmatmul.mubr.f32.gmra.mrb[0].mxu0 %v3260
  %v3262 = vpop.f32.mrb[0].mxu0
  %v3263 = vpop.f32.mrb[0].mxu0
  %v3264 = vadd.f32 %v3178, %v3263
  %3265 = vdwg.mxu0
  %v3266 = vand.u32 %v52, 4294901760
  %3267 = vmatprep.subr.mxu0 %v3266
  %v3268 = vand.u32 %v51, 4294901760
  %3269 = vmatpush1.msra.mxu0 %v3268
  %v3270 = vand.u32 %v57, 4294901760
  %3271 = vmatprep.subr.mxu0 %v3270
  %v3272 = vand.u32 %v56, 4294901760
  %3273 = vmatpush1.msra.mxu0 %v3272
  %v3274 = vand.u32 %v62, 4294901760
  %3275 = vmatprep.subr.mxu0 %v3274
  %v3276 = vand.u32 %v61, 4294901760
  %3277 = vmatpush1.msra.mxu0 %v3276
  %v3278 = vand.u32 %v67, 4294901760
  %3279 = vmatprep.subr.mxu0 %v3278
  %v3280 = vand.u32 %v66, 4294901760
  %3281 = vmatpush1.msra.mxu0 %v3280
  %3282 = vmatprep.subr.mxu0 0.0
  %3283 = vmatpush1.msra.mxu0 0.0
  %3284 = vmatprep.subr.mxu0 0.0
  %3285 = vmatpush1.msra.mxu0 0.0
  %3286 = vmatprep.subr.mxu0 0.0
  %3287 = vmatpush1.msra.mxu0 0.0
  %3288 = vmatprep.subr.mxu0 0.0
  %3289 = vmatpush1.msra.mxu0 0.0
  %3290 = vmatprep.subr.mxu0 0.0
  %3291 = vmatpush1.msra.mxu0 0.0
  %3292 = vmatprep.subr.mxu0 0.0
  %3293 = vmatpush1.msra.mxu0 0.0
  %3294 = vmatprep.subr.mxu0 0.0
  %3295 = vmatpush1.msra.mxu0 0.0
  %3296 = vmatprep.subr.mxu0 0.0
  %3297 = vmatpush1.msra.mxu0 0.0
  %3298 = vmatprep.subr.mxu0 0.0
  %3299 = vmatpush1.msra.mxu0 0.0
  %3300 = vmatprep.subr.mxu0 0.0
  %3301 = vmatpush1.msra.mxu0 0.0
  %3302 = vmatprep.subr.mxu0 0.0
  %3303 = vmatpush1.msra.mxu0 0.0
  %3304 = vmatprep.subr.mxu0 0.0
  %3305 = vmatpush1.msra.mxu0 0.0
  %3306 = vmatprep.subr.mxu0 0.0
  %3307 = vmatpush1.msra.mxu0 0.0
  %3308 = vmatprep.subr.mxu0 0.0
  %3309 = vmatpush1.msra.mxu0 0.0
  %3310 = vmatprep.subr.mxu0 0.0
  %3311 = vmatpush1.msra.mxu0 0.0
  %3312 = vmatprep.subr.mxu0 0.0
  %3313 = vmatpush1.msra.mxu0 0.0
  %3314 = vmatprep.subr.mxu0 0.0
  %3315 = vmatpush1.msra.mxu0 0.0
  %3316 = vmatprep.subr.mxu0 0.0
  %3317 = vmatpush1.msra.mxu0 0.0
  %3318 = vmatprep.subr.mxu0 0.0
  %3319 = vmatpush1.msra.mxu0 0.0
  %3320 = vmatprep.subr.mxu0 0.0
  %3321 = vmatpush1.msra.mxu0 0.0
  %3322 = vmatprep.subr.mxu0 0.0
  %3323 = vmatpush1.msra.mxu0 0.0
  %3324 = vmatprep.subr.mxu0 0.0
  %3325 = vmatpush1.msra.mxu0 0.0
  %3326 = vmatprep.subr.mxu0 0.0
  %3327 = vmatpush1.msra.mxu0 0.0
  %3328 = vmatprep.subr.mxu0 0.0
  %3329 = vmatpush1.msra.mxu0 0.0
  %3330 = vmatprep.subr.mxu0 0.0
  %3331 = vmatpush1.msra.mxu0 0.0
  %3332 = vmatprep.subr.mxu0 0.0
  %3333 = vmatpush1.msra.mxu0 0.0
  %3334 = vmatprep.subr.mxu0 0.0
  %3335 = vmatpush1.msra.mxu0 0.0
  %3336 = vmatprep.subr.mxu0 0.0
  %3337 = vmatpush1.msra.mxu0 0.0
  %3338 = vmatprep.mubr.f32.mxu0 0.0
  %v3339 = vand.u32 %v2675, 4294901760
  %v3340 = vsub.f32 %v2675, %v3339
  %v3341 = vand.u32 %v3340, 4294901760
  %v3342 = vsub.f32 %v3340, %v3341
  %v3343 = vand.u32 %v3342, 4294901760
  %3344 = vmatmul.mubr.f32.gmra.mrb[0].mxu0 %v3343
  %v3345 = vpop.f32.mrb[0].mxu0
  %v3346 = vadd.f32 0.0, %v3345
  %v3347 = vpop.f32.mrb[0].mxu0
  %v3348 = vadd.f32 0.0, %v3347
  %3349 = vmatprep.mubr.f32.mxu0 0.0
  %v3350 = vand.u32 %v2678, 4294901760
  %v3351 = vsub.f32 %v2678, %v3350
  %v3352 = vand.u32 %v3351, 4294901760
  %v3353 = vsub.f32 %v3351, %v3352
  %v3354 = vand.u32 %v3353, 4294901760
  %3355 = vmatmul.mubr.f32.gmra.mrb[0].mxu0 %v3354
  %v3356 = vpop.f32.mrb[0].mxu0
  %v3357 = vadd.f32 0.0, %v3356
  %v3358 = vpop.f32.mrb[0].mxu0
  %v3359 = vadd.f32 0.0, %v3358
  %3360 = vdwg.mxu0
  %v3361 = vand.u32 %v52, 4294901760
  %v3362 = vsub.f32 %v52, %v3361
  %v3363 = vand.u32 %v3362, 4294901760
  %v3364 = vsub.f32 %v3362, %v3363
  %v3365 = vand.u32 %v3364, 4294901760
  %3366 = vmatprep.subr.mxu0 %v3365
  %v3367 = vand.u32 %v51, 4294901760
  %v3368 = vsub.f32 %v51, %v3367
  %v3369 = vand.u32 %v3368, 4294901760
  %v3370 = vsub.f32 %v3368, %v3369
  %v3371 = vand.u32 %v3370, 4294901760
  %3372 = vmatpush1.msra.mxu0 %v3371
  %v3373 = vand.u32 %v57, 4294901760
  %v3374 = vsub.f32 %v57, %v3373
  %v3375 = vand.u32 %v3374, 4294901760
  %v3376 = vsub.f32 %v3374, %v3375
  %v3377 = vand.u32 %v3376, 4294901760
  %3378 = vmatprep.subr.mxu0 %v3377
  %v3379 = vand.u32 %v56, 4294901760
  %v3380 = vsub.f32 %v56, %v3379
  %v3381 = vand.u32 %v3380, 4294901760
  %v3382 = vsub.f32 %v3380, %v3381
  %v3383 = vand.u32 %v3382, 4294901760
  %3384 = vmatpush1.msra.mxu0 %v3383
  %v3385 = vand.u32 %v62, 4294901760
  %v3386 = vsub.f32 %v62, %v3385
  %v3387 = vand.u32 %v3386, 4294901760
  %v3388 = vsub.f32 %v3386, %v3387
  %v3389 = vand.u32 %v3388, 4294901760
  %3390 = vmatprep.subr.mxu0 %v3389
  %v3391 = vand.u32 %v61, 4294901760
  %v3392 = vsub.f32 %v61, %v3391
  %v3393 = vand.u32 %v3392, 4294901760
  %v3394 = vsub.f32 %v3392, %v3393
  %v3395 = vand.u32 %v3394, 4294901760
  %3396 = vmatpush1.msra.mxu0 %v3395
  %v3397 = vand.u32 %v67, 4294901760
  %v3398 = vsub.f32 %v67, %v3397
  %v3399 = vand.u32 %v3398, 4294901760
  %v3400 = vsub.f32 %v3398, %v3399
  %v3401 = vand.u32 %v3400, 4294901760
  %3402 = vmatprep.subr.mxu0 %v3401
  %v3403 = vand.u32 %v66, 4294901760
  %v3404 = vsub.f32 %v66, %v3403
  %v3405 = vand.u32 %v3404, 4294901760
  %v3406 = vsub.f32 %v3404, %v3405
  %v3407 = vand.u32 %v3406, 4294901760
  %3408 = vmatpush1.msra.mxu0 %v3407
  %3409 = vmatprep.subr.mxu0 0.0
  %3410 = vmatpush1.msra.mxu0 0.0
  %3411 = vmatprep.subr.mxu0 0.0
  %3412 = vmatpush1.msra.mxu0 0.0
  %3413 = vmatprep.subr.mxu0 0.0
  %3414 = vmatpush1.msra.mxu0 0.0
  %3415 = vmatprep.subr.mxu0 0.0
  %3416 = vmatpush1.msra.mxu0 0.0
  %3417 = vmatprep.subr.mxu0 0.0
  %3418 = vmatpush1.msra.mxu0 0.0
  %3419 = vmatprep.subr.mxu0 0.0
  %3420 = vmatpush1.msra.mxu0 0.0
  %3421 = vmatprep.subr.mxu0 0.0
  %3422 = vmatpush1.msra.mxu0 0.0
  %3423 = vmatprep.subr.mxu0 0.0
  %3424 = vmatpush1.msra.mxu0 0.0
  %3425 = vmatprep.subr.mxu0 0.0
  %3426 = vmatpush1.msra.mxu0 0.0
  %3427 = vmatprep.subr.mxu0 0.0
  %3428 = vmatpush1.msra.mxu0 0.0
  %3429 = vmatprep.subr.mxu0 0.0
  %3430 = vmatpush1.msra.mxu0 0.0
  %3431 = vmatprep.subr.mxu0 0.0
  %3432 = vmatpush1.msra.mxu0 0.0
  %3433 = vmatprep.subr.mxu0 0.0
  %3434 = vmatpush1.msra.mxu0 0.0
  %3435 = vmatprep.subr.mxu0 0.0
  %3436 = vmatpush1.msra.mxu0 0.0
  %3437 = vmatprep.subr.mxu0 0.0
  %3438 = vmatpush1.msra.mxu0 0.0
  %3439 = vmatprep.subr.mxu0 0.0
  %3440 = vmatpush1.msra.mxu0 0.0
  %3441 = vmatprep.subr.mxu0 0.0
  %3442 = vmatpush1.msra.mxu0 0.0
  %3443 = vmatprep.subr.mxu0 0.0
  %3444 = vmatpush1.msra.mxu0 0.0
  %3445 = vmatprep.subr.mxu0 0.0
  %3446 = vmatpush1.msra.mxu0 0.0
  %3447 = vmatprep.subr.mxu0 0.0
  %3448 = vmatpush1.msra.mxu0 0.0
  %3449 = vmatprep.subr.mxu0 0.0
  %3450 = vmatpush1.msra.mxu0 0.0
  %3451 = vmatprep.subr.mxu0 0.0
  %3452 = vmatpush1.msra.mxu0 0.0
  %3453 = vmatprep.subr.mxu0 0.0
  %3454 = vmatpush1.msra.mxu0 0.0
  %3455 = vmatprep.subr.mxu0 0.0
  %3456 = vmatpush1.msra.mxu0 0.0
  %3457 = vmatprep.subr.mxu0 0.0
  %3458 = vmatpush1.msra.mxu0 0.0
  %3459 = vmatprep.subr.mxu0 0.0
  %3460 = vmatpush1.msra.mxu0 0.0
  %3461 = vmatprep.subr.mxu0 0.0
  %3462 = vmatpush1.msra.mxu0 0.0
  %3463 = vmatprep.subr.mxu0 0.0
  %3464 = vmatpush1.msra.mxu0 0.0
  %3465 = vmatprep.mubr.f32.mxu0 0.0
  %v3466 = vand.u32 %v2675, 4294901760
  %3467 = vmatmul.mubr.f32.gmra.mrb[0].mxu0 %v3466
  %v3468 = vpop.f32.mrb[0].mxu0
  %v3469 = vadd.f32 %v3346, %v3468
  %v3470 = vpop.f32.mrb[0].mxu0
  %v3471 = vadd.f32 %v3348, %v3470
  %3472 = vmatprep.mubr.f32.mxu0 0.0
  %v3473 = vand.u32 %v2678, 4294901760
  %3474 = vmatmul.mubr.f32.gmra.mrb[0].mxu0 %v3473
  %v3475 = vpop.f32.mrb[0].mxu0
  %v3476 = vadd.f32 %v3357, %v3475
  %v3477 = vpop.f32.mrb[0].mxu0
  %v3478 = vadd.f32 %v3359, %v3477
  %3479 = vdwg.mxu0
  %v3480 = vand.u32 %v52, 4294901760
  %v3481 = vsub.f32 %v52, %v3480
  %3482 = vmatprep.subr.mxu0 %v3481
  %v3483 = vand.u32 %v51, 4294901760
  %v3484 = vsub.f32 %v51, %v3483
  %3485 = vmatpush1.msra.mxu0 %v3484
  %v3486 = vand.u32 %v57, 4294901760
  %v3487 = vsub.f32 %v57, %v3486
  %3488 = vmatprep.subr.mxu0 %v3487
  %v3489 = vand.u32 %v56, 4294901760
  %v3490 = vsub.f32 %v56, %v3489
  %3491 = vmatpush1.msra.mxu0 %v3490
  %v3492 = vand.u32 %v62, 4294901760
  %v3493 = vsub.f32 %v62, %v3492
  %3494 = vmatprep.subr.mxu0 %v3493
  %v3495 = vand.u32 %v61, 4294901760
  %v3496 = vsub.f32 %v61, %v3495
  %3497 = vmatpush1.msra.mxu0 %v3496
  %v3498 = vand.u32 %v67, 4294901760
  %v3499 = vsub.f32 %v67, %v3498
  %3500 = vmatprep.subr.mxu0 %v3499
  %v3501 = vand.u32 %v66, 4294901760
  %v3502 = vsub.f32 %v66, %v3501
  %3503 = vmatpush1.msra.mxu0 %v3502
  %3504 = vmatprep.subr.mxu0 0.0
  %3505 = vmatpush1.msra.mxu0 0.0
  %3506 = vmatprep.subr.mxu0 0.0
  %3507 = vmatpush1.msra.mxu0 0.0
  %3508 = vmatprep.subr.mxu0 0.0
  %3509 = vmatpush1.msra.mxu0 0.0
  %3510 = vmatprep.subr.mxu0 0.0
  %3511 = vmatpush1.msra.mxu0 0.0
  %3512 = vmatprep.subr.mxu0 0.0
  %3513 = vmatpush1.msra.mxu0 0.0
  %3514 = vmatprep.subr.mxu0 0.0
  %3515 = vmatpush1.msra.mxu0 0.0
  %3516 = vmatprep.subr.mxu0 0.0
  %3517 = vmatpush1.msra.mxu0 0.0
  %3518 = vmatprep.subr.mxu0 0.0
  %3519 = vmatpush1.msra.mxu0 0.0
  %3520 = vmatprep.subr.mxu0 0.0
  %3521 = vmatpush1.msra.mxu0 0.0
  %3522 = vmatprep.subr.mxu0 0.0
  %3523 = vmatpush1.msra.mxu0 0.0
  %3524 = vmatprep.subr.mxu0 0.0
  %3525 = vmatpush1.msra.mxu0 0.0
  %3526 = vmatprep.subr.mxu0 0.0
  %3527 = vmatpush1.msra.mxu0 0.0
  %3528 = vmatprep.subr.mxu0 0.0
  %3529 = vmatpush1.msra.mxu0 0.0
  %3530 = vmatprep.subr.mxu0 0.0
  %3531 = vmatpush1.msra.mxu0 0.0
  %3532 = vmatprep.subr.mxu0 0.0
  %3533 = vmatpush1.msra.mxu0 0.0
  %3534 = vmatprep.subr.mxu0 0.0
  %3535 = vmatpush1.msra.mxu0 0.0
  %3536 = vmatprep.subr.mxu0 0.0
  %3537 = vmatpush1.msra.mxu0 0.0
  %3538 = vmatprep.subr.mxu0 0.0
  %3539 = vmatpush1.msra.mxu0 0.0
  %3540 = vmatprep.subr.mxu0 0.0
  %3541 = vmatpush1.msra.mxu0 0.0
  %3542 = vmatprep.subr.mxu0 0.0
  %3543 = vmatpush1.msra.mxu0 0.0
  %3544 = vmatprep.subr.mxu0 0.0
  %3545 = vmatpush1.msra.mxu0 0.0
  %3546 = vmatprep.subr.mxu0 0.0
  %3547 = vmatpush1.msra.mxu0 0.0
  %3548 = vmatprep.subr.mxu0 0.0
  %3549 = vmatpush1.msra.mxu0 0.0
  %3550 = vmatprep.subr.mxu0 0.0
  %3551 = vmatpush1.msra.mxu0 0.0
  %3552 = vmatprep.subr.mxu0 0.0
  %3553 = vmatpush1.msra.mxu0 0.0
  %3554 = vmatprep.subr.mxu0 0.0
  %3555 = vmatpush1.msra.mxu0 0.0
  %3556 = vmatprep.subr.mxu0 0.0
  %3557 = vmatpush1.msra.mxu0 0.0
  %3558 = vmatprep.subr.mxu0 0.0
  %3559 = vmatpush1.msra.mxu0 0.0
  %3560 = vmatprep.mubr.f32.mxu0 0.0
  %v3561 = vand.u32 %v2675, 4294901760
  %v3562 = vsub.f32 %v2675, %v3561
  %3563 = vmatmul.mubr.f32.gmra.mrb[0].mxu0 %v3562
  %v3564 = vpop.f32.mrb[0].mxu0
  %v3565 = vadd.f32 %v3469, %v3564
  %v3566 = vpop.f32.mrb[0].mxu0
  %v3567 = vadd.f32 %v3471, %v3566
  %3568 = vmatprep.mubr.f32.mxu0 0.0
  %v3569 = vand.u32 %v2678, 4294901760
  %v3570 = vsub.f32 %v2678, %v3569
  %3571 = vmatmul.mubr.f32.gmra.mrb[0].mxu0 %v3570
  %v3572 = vpop.f32.mrb[0].mxu0
  %v3573 = vadd.f32 %v3476, %v3572
  %v3574 = vpop.f32.mrb[0].mxu0
  %v3575 = vadd.f32 %v3478, %v3574
  %3576 = vdwg.mxu0
  %v3577 = vand.u32 %v52, 4294901760
  %3578 = vmatprep.subr.mxu0 %v3577
  %v3579 = vand.u32 %v51, 4294901760
  %3580 = vmatpush1.msra.mxu0 %v3579
  %v3581 = vand.u32 %v57, 4294901760
  %3582 = vmatprep.subr.mxu0 %v3581
  %v3583 = vand.u32 %v56, 4294901760
  %3584 = vmatpush1.msra.mxu0 %v3583
  %v3585 = vand.u32 %v62, 4294901760
  %3586 = vmatprep.subr.mxu0 %v3585
  %v3587 = vand.u32 %v61, 4294901760
  %3588 = vmatpush1.msra.mxu0 %v3587
  %v3589 = vand.u32 %v67, 4294901760
  %3590 = vmatprep.subr.mxu0 %v3589
  %v3591 = vand.u32 %v66, 4294901760
  %3592 = vmatpush1.msra.mxu0 %v3591
  %3593 = vmatprep.subr.mxu0 0.0
  %3594 = vmatpush1.msra.mxu0 0.0
  %3595 = vmatprep.subr.mxu0 0.0
  %3596 = vmatpush1.msra.mxu0 0.0
  %3597 = vmatprep.subr.mxu0 0.0
  %3598 = vmatpush1.msra.mxu0 0.0
  %3599 = vmatprep.subr.mxu0 0.0
  %3600 = vmatpush1.msra.mxu0 0.0
  %3601 = vmatprep.subr.mxu0 0.0
  %3602 = vmatpush1.msra.mxu0 0.0
  %3603 = vmatprep.subr.mxu0 0.0
  %3604 = vmatpush1.msra.mxu0 0.0
  %3605 = vmatprep.subr.mxu0 0.0
  %3606 = vmatpush1.msra.mxu0 0.0
  %3607 = vmatprep.subr.mxu0 0.0
  %3608 = vmatpush1.msra.mxu0 0.0
  %3609 = vmatprep.subr.mxu0 0.0
  %3610 = vmatpush1.msra.mxu0 0.0
  %3611 = vmatprep.subr.mxu0 0.0
  %3612 = vmatpush1.msra.mxu0 0.0
  %3613 = vmatprep.subr.mxu0 0.0
  %3614 = vmatpush1.msra.mxu0 0.0
  %3615 = vmatprep.subr.mxu0 0.0
  %3616 = vmatpush1.msra.mxu0 0.0
  %3617 = vmatprep.subr.mxu0 0.0
  %3618 = vmatpush1.msra.mxu0 0.0
  %3619 = vmatprep.subr.mxu0 0.0
  %3620 = vmatpush1.msra.mxu0 0.0
  %3621 = vmatprep.subr.mxu0 0.0
  %3622 = vmatpush1.msra.mxu0 0.0
  %3623 = vmatprep.subr.mxu0 0.0
  %3624 = vmatpush1.msra.mxu0 0.0
  %3625 = vmatprep.subr.mxu0 0.0
  %3626 = vmatpush1.msra.mxu0 0.0
  %3627 = vmatprep.subr.mxu0 0.0
  %3628 = vmatpush1.msra.mxu0 0.0
  %3629 = vmatprep.subr.mxu0 0.0
  %3630 = vmatpush1.msra.mxu0 0.0
  %3631 = vmatprep.subr.mxu0 0.0
  %3632 = vmatpush1.msra.mxu0 0.0
  %3633 = vmatprep.subr.mxu0 0.0
  %3634 = vmatpush1.msra.mxu0 0.0
  %3635 = vmatprep.subr.mxu0 0.0
  %3636 = vmatpush1.msra.mxu0 0.0
  %3637 = vmatprep.subr.mxu0 0.0
  %3638 = vmatpush1.msra.mxu0 0.0
  %3639 = vmatprep.subr.mxu0 0.0
  %3640 = vmatpush1.msra.mxu0 0.0
  %3641 = vmatprep.subr.mxu0 0.0
  %3642 = vmatpush1.msra.mxu0 0.0
  %3643 = vmatprep.subr.mxu0 0.0
  %3644 = vmatpush1.msra.mxu0 0.0
  %3645 = vmatprep.subr.mxu0 0.0
  %3646 = vmatpush1.msra.mxu0 0.0
  %3647 = vmatprep.subr.mxu0 0.0
  %3648 = vmatpush1.msra.mxu0 0.0
  %3649 = vmatprep.mubr.f32.mxu0 0.0
  %v3650 = vand.u32 %v2675, 4294901760
  %v3651 = vsub.f32 %v2675, %v3650
  %v3652 = vand.u32 %v3651, 4294901760
  %3653 = vmatmul.mubr.f32.gmra.mrb[0].mxu0 %v3652
  %v3654 = vpop.f32.mrb[0].mxu0
  %v3655 = vadd.f32 %v3565, %v3654
  %v3656 = vpop.f32.mrb[0].mxu0
  %v3657 = vadd.f32 %v3567, %v3656
  %3658 = vmatprep.mubr.f32.mxu0 0.0
  %v3659 = vand.u32 %v2678, 4294901760
  %v3660 = vsub.f32 %v2678, %v3659
  %v3661 = vand.u32 %v3660, 4294901760
  %3662 = vmatmul.mubr.f32.gmra.mrb[0].mxu0 %v3661
  %v3663 = vpop.f32.mrb[0].mxu0
  %v3664 = vadd.f32 %v3573, %v3663
  %v3665 = vpop.f32.mrb[0].mxu0
  %v3666 = vadd.f32 %v3575, %v3665
  %3667 = vdwg.mxu0
  %v3668 = vand.u32 %v52, 4294901760
  %v3669 = vsub.f32 %v52, %v3668
  %v3670 = vand.u32 %v3669, 4294901760
  %3671 = vmatprep.subr.mxu0 %v3670
  %v3672 = vand.u32 %v51, 4294901760
  %v3673 = vsub.f32 %v51, %v3672
  %v3674 = vand.u32 %v3673, 4294901760
  %3675 = vmatpush1.msra.mxu0 %v3674
  %v3676 = vand.u32 %v57, 4294901760
  %v3677 = vsub.f32 %v57, %v3676
  %v3678 = vand.u32 %v3677, 4294901760
  %3679 = vmatprep.subr.mxu0 %v3678
  %v3680 = vand.u32 %v56, 4294901760
  %v3681 = vsub.f32 %v56, %v3680
  %v3682 = vand.u32 %v3681, 4294901760
  %3683 = vmatpush1.msra.mxu0 %v3682
  %v3684 = vand.u32 %v62, 4294901760
  %v3685 = vsub.f32 %v62, %v3684
  %v3686 = vand.u32 %v3685, 4294901760
  %3687 = vmatprep.subr.mxu0 %v3686
  %v3688 = vand.u32 %v61, 4294901760
  %v3689 = vsub.f32 %v61, %v3688
  %v3690 = vand.u32 %v3689, 4294901760
  %3691 = vmatpush1.msra.mxu0 %v3690
  %v3692 = vand.u32 %v67, 4294901760
  %v3693 = vsub.f32 %v67, %v3692
  %v3694 = vand.u32 %v3693, 4294901760
  %3695 = vmatprep.subr.mxu0 %v3694
  %v3696 = vand.u32 %v66, 4294901760
  %v3697 = vsub.f32 %v66, %v3696
  %v3698 = vand.u32 %v3697, 4294901760
  %3699 = vmatpush1.msra.mxu0 %v3698
  %3700 = vmatprep.subr.mxu0 0.0
  %3701 = vmatpush1.msra.mxu0 0.0
  %3702 = vmatprep.subr.mxu0 0.0
  %3703 = vmatpush1.msra.mxu0 0.0
  %3704 = vmatprep.subr.mxu0 0.0
  %3705 = vmatpush1.msra.mxu0 0.0
  %3706 = vmatprep.subr.mxu0 0.0
  %3707 = vmatpush1.msra.mxu0 0.0
  %3708 = vmatprep.subr.mxu0 0.0
  %3709 = vmatpush1.msra.mxu0 0.0
  %3710 = vmatprep.subr.mxu0 0.0
  %3711 = vmatpush1.msra.mxu0 0.0
  %3712 = vmatprep.subr.mxu0 0.0
  %3713 = vmatpush1.msra.mxu0 0.0
  %3714 = vmatprep.subr.mxu0 0.0
  %3715 = vmatpush1.msra.mxu0 0.0
  %3716 = vmatprep.subr.mxu0 0.0
  %3717 = vmatpush1.msra.mxu0 0.0
  %3718 = vmatprep.subr.mxu0 0.0
  %3719 = vmatpush1.msra.mxu0 0.0
  %3720 = vmatprep.subr.mxu0 0.0
  %3721 = vmatpush1.msra.mxu0 0.0
  %3722 = vmatprep.subr.mxu0 0.0
  %3723 = vmatpush1.msra.mxu0 0.0
  %3724 = vmatprep.subr.mxu0 0.0
  %3725 = vmatpush1.msra.mxu0 0.0
  %3726 = vmatprep.subr.mxu0 0.0
  %3727 = vmatpush1.msra.mxu0 0.0
  %3728 = vmatprep.subr.mxu0 0.0
  %3729 = vmatpush1.msra.mxu0 0.0
  %3730 = vmatprep.subr.mxu0 0.0
  %3731 = vmatpush1.msra.mxu0 0.0
  %3732 = vmatprep.subr.mxu0 0.0
  %3733 = vmatpush1.msra.mxu0 0.0
  %3734 = vmatprep.subr.mxu0 0.0
  %3735 = vmatpush1.msra.mxu0 0.0
  %3736 = vmatprep.subr.mxu0 0.0
  %3737 = vmatpush1.msra.mxu0 0.0
  %3738 = vmatprep.subr.mxu0 0.0
  %3739 = vmatpush1.msra.mxu0 0.0
  %3740 = vmatprep.subr.mxu0 0.0
  %3741 = vmatpush1.msra.mxu0 0.0
  %3742 = vmatprep.subr.mxu0 0.0
  %3743 = vmatpush1.msra.mxu0 0.0
  %3744 = vmatprep.subr.mxu0 0.0
  %3745 = vmatpush1.msra.mxu0 0.0
  %3746 = vmatprep.subr.mxu0 0.0
  %3747 = vmatpush1.msra.mxu0 0.0
  %3748 = vmatprep.subr.mxu0 0.0
  %3749 = vmatpush1.msra.mxu0 0.0
  %3750 = vmatprep.subr.mxu0 0.0
  %3751 = vmatpush1.msra.mxu0 0.0
  %3752 = vmatprep.subr.mxu0 0.0
  %3753 = vmatpush1.msra.mxu0 0.0
  %3754 = vmatprep.subr.mxu0 0.0
  %3755 = vmatpush1.msra.mxu0 0.0
  %3756 = vmatprep.mubr.f32.mxu0 0.0
  %v3757 = vand.u32 %v2675, 4294901760
  %3758 = vmatmul.mubr.f32.gmra.mrb[0].mxu0 %v3757
  %v3759 = vpop.f32.mrb[0].mxu0
  %v3760 = vadd.f32 %v3655, %v3759
  %v3761 = vpop.f32.mrb[0].mxu0
  %v3762 = vadd.f32 %v3657, %v3761
  %3763 = vmatprep.mubr.f32.mxu0 0.0
  %v3764 = vand.u32 %v2678, 4294901760
  %3765 = vmatmul.mubr.f32.gmra.mrb[0].mxu0 %v3764
  %v3766 = vpop.f32.mrb[0].mxu0
  %v3767 = vadd.f32 %v3664, %v3766
  %v3768 = vpop.f32.mrb[0].mxu0
  %v3769 = vadd.f32 %v3666, %v3768
  %3770 = vdwg.mxu0
  %v3771 = vand.u32 %v52, 4294901760
  %3772 = vmatprep.subr.mxu0 %v3771
  %v3773 = vand.u32 %v51, 4294901760
  %3774 = vmatpush1.msra.mxu0 %v3773
  %v3775 = vand.u32 %v57, 4294901760
  %3776 = vmatprep.subr.mxu0 %v3775
  %v3777 = vand.u32 %v56, 4294901760
  %3778 = vmatpush1.msra.mxu0 %v3777
  %v3779 = vand.u32 %v62, 4294901760
  %3780 = vmatprep.subr.mxu0 %v3779
  %v3781 = vand.u32 %v61, 4294901760
  %3782 = vmatpush1.msra.mxu0 %v3781
  %v3783 = vand.u32 %v67, 4294901760
  %3784 = vmatprep.subr.mxu0 %v3783
  %v3785 = vand.u32 %v66, 4294901760
  %3786 = vmatpush1.msra.mxu0 %v3785
  %3787 = vmatprep.subr.mxu0 0.0
  %3788 = vmatpush1.msra.mxu0 0.0
  %3789 = vmatprep.subr.mxu0 0.0
  %3790 = vmatpush1.msra.mxu0 0.0
  %3791 = vmatprep.subr.mxu0 0.0
  %3792 = vmatpush1.msra.mxu0 0.0
  %3793 = vmatprep.subr.mxu0 0.0
  %3794 = vmatpush1.msra.mxu0 0.0
  %3795 = vmatprep.subr.mxu0 0.0
  %3796 = vmatpush1.msra.mxu0 0.0
  %3797 = vmatprep.subr.mxu0 0.0
  %3798 = vmatpush1.msra.mxu0 0.0
  %3799 = vmatprep.subr.mxu0 0.0
  %3800 = vmatpush1.msra.mxu0 0.0
  %3801 = vmatprep.subr.mxu0 0.0
  %3802 = vmatpush1.msra.mxu0 0.0
  %3803 = vmatprep.subr.mxu0 0.0
  %3804 = vmatpush1.msra.mxu0 0.0
  %3805 = vmatprep.subr.mxu0 0.0
  %3806 = vmatpush1.msra.mxu0 0.0
  %3807 = vmatprep.subr.mxu0 0.0
  %3808 = vmatpush1.msra.mxu0 0.0
  %3809 = vmatprep.subr.mxu0 0.0
  %3810 = vmatpush1.msra.mxu0 0.0
  %3811 = vmatprep.subr.mxu0 0.0
  %3812 = vmatpush1.msra.mxu0 0.0
  %3813 = vmatprep.subr.mxu0 0.0
  %3814 = vmatpush1.msra.mxu0 0.0
  %3815 = vmatprep.subr.mxu0 0.0
  %3816 = vmatpush1.msra.mxu0 0.0
  %3817 = vmatprep.subr.mxu0 0.0
  %3818 = vmatpush1.msra.mxu0 0.0
  %3819 = vmatprep.subr.mxu0 0.0
  %3820 = vmatpush1.msra.mxu0 0.0
  %3821 = vmatprep.subr.mxu0 0.0
  %3822 = vmatpush1.msra.mxu0 0.0
  %3823 = vmatprep.subr.mxu0 0.0
  %3824 = vmatpush1.msra.mxu0 0.0
  %3825 = vmatprep.subr.mxu0 0.0
  %3826 = vmatpush1.msra.mxu0 0.0
  %3827 = vmatprep.subr.mxu0 0.0
  %3828 = vmatpush1.msra.mxu0 0.0
  %3829 = vmatprep.subr.mxu0 0.0
  %3830 = vmatpush1.msra.mxu0 0.0
  %3831 = vmatprep.subr.mxu0 0.0
  %3832 = vmatpush1.msra.mxu0 0.0
  %3833 = vmatprep.subr.mxu0 0.0
  %3834 = vmatpush1.msra.mxu0 0.0
  %3835 = vmatprep.subr.mxu0 0.0
  %3836 = vmatpush1.msra.mxu0 0.0
  %3837 = vmatprep.subr.mxu0 0.0
  %3838 = vmatpush1.msra.mxu0 0.0
  %3839 = vmatprep.subr.mxu0 0.0
  %3840 = vmatpush1.msra.mxu0 0.0
  %3841 = vmatprep.subr.mxu0 0.0
  %3842 = vmatpush1.msra.mxu0 0.0
  %3843 = vmatprep.mubr.f32.mxu0 0.0
  %v3844 = vand.u32 %v2675, 4294901760
  %3845 = vmatmul.mubr.f32.gmra.mrb[0].mxu0 %v3844
  %v3846 = vpop.f32.mrb[0].mxu0
  %v3847 = vadd.f32 %v3760, %v3846
  %v3848 = vpop.f32.mrb[0].mxu0
  %v3849 = vadd.f32 %v3762, %v3848
  %3850 = vmatprep.mubr.f32.mxu0 0.0
  %v3851 = vand.u32 %v2678, 4294901760
  %3852 = vmatmul.mubr.f32.gmra.mrb[0].mxu0 %v3851
  %v3853 = vpop.f32.mrb[0].mxu0
  %v3854 = vadd.f32 %v3767, %v3853
  %v3855 = vpop.f32.mrb[0].mxu0
  %v3856 = vadd.f32 %v3769, %v3855
  %3857 = vdwg.mxu0
  %3858 = vmatprep.subr.mxu0 0.0
  %v3859 = vand.u32 %v53, 4294901760
  %3860 = vmatpush1.msra.mxu0 %v3859
  %3861 = vmatprep.subr.mxu0 0.0
  %v3862 = vand.u32 %v58, 4294901760
  %3863 = vmatpush1.msra.mxu0 %v3862
  %3864 = vmatprep.subr.mxu0 0.0
  %v3865 = vand.u32 %v63, 4294901760
  %3866 = vmatpush1.msra.mxu0 %v3865
  %3867 = vmatprep.subr.mxu0 0.0
  %v3868 = vand.u32 %v68, 4294901760
  %3869 = vmatpush1.msra.mxu0 %v3868
  %3870 = vmatprep.subr.mxu0 0.0
  %3871 = vmatpush1.msra.mxu0 0.0
  %3872 = vmatprep.subr.mxu0 0.0
  %3873 = vmatpush1.msra.mxu0 0.0
  %3874 = vmatprep.subr.mxu0 0.0
  %3875 = vmatpush1.msra.mxu0 0.0
  %3876 = vmatprep.subr.mxu0 0.0
  %3877 = vmatpush1.msra.mxu0 0.0
  %3878 = vmatprep.subr.mxu0 0.0
  %3879 = vmatpush1.msra.mxu0 0.0
  %3880 = vmatprep.subr.mxu0 0.0
  %3881 = vmatpush1.msra.mxu0 0.0
  %3882 = vmatprep.subr.mxu0 0.0
  %3883 = vmatpush1.msra.mxu0 0.0
  %3884 = vmatprep.subr.mxu0 0.0
  %3885 = vmatpush1.msra.mxu0 0.0
  %3886 = vmatprep.subr.mxu0 0.0
  %3887 = vmatpush1.msra.mxu0 0.0
  %3888 = vmatprep.subr.mxu0 0.0
  %3889 = vmatpush1.msra.mxu0 0.0
  %3890 = vmatprep.subr.mxu0 0.0
  %3891 = vmatpush1.msra.mxu0 0.0
  %3892 = vmatprep.subr.mxu0 0.0
  %3893 = vmatpush1.msra.mxu0 0.0
  %3894 = vmatprep.subr.mxu0 0.0
  %3895 = vmatpush1.msra.mxu0 0.0
  %3896 = vmatprep.subr.mxu0 0.0
  %3897 = vmatpush1.msra.mxu0 0.0
  %3898 = vmatprep.subr.mxu0 0.0
  %3899 = vmatpush1.msra.mxu0 0.0
  %3900 = vmatprep.subr.mxu0 0.0
  %3901 = vmatpush1.msra.mxu0 0.0
  %3902 = vmatprep.subr.mxu0 0.0
  %3903 = vmatpush1.msra.mxu0 0.0
  %3904 = vmatprep.subr.mxu0 0.0
  %3905 = vmatpush1.msra.mxu0 0.0
  %3906 = vmatprep.subr.mxu0 0.0
  %3907 = vmatpush1.msra.mxu0 0.0
  %3908 = vmatprep.subr.mxu0 0.0
  %3909 = vmatpush1.msra.mxu0 0.0
  %3910 = vmatprep.subr.mxu0 0.0
  %3911 = vmatpush1.msra.mxu0 0.0
  %3912 = vmatprep.subr.mxu0 0.0
  %3913 = vmatpush1.msra.mxu0 0.0
  %3914 = vmatprep.subr.mxu0 0.0
  %3915 = vmatpush1.msra.mxu0 0.0
  %3916 = vmatprep.subr.mxu0 0.0
  %3917 = vmatpush1.msra.mxu0 0.0
  %3918 = vmatprep.subr.mxu0 0.0
  %3919 = vmatpush1.msra.mxu0 0.0
  %3920 = vmatprep.subr.mxu0 0.0
  %3921 = vmatpush1.msra.mxu0 0.0
  %3922 = vmatprep.subr.mxu0 0.0
  %3923 = vmatpush1.msra.mxu0 0.0
  %3924 = vmatprep.subr.mxu0 0.0
  %3925 = vmatpush1.msra.mxu0 0.0
  %3926 = vmatprep.mubr.f32.mxu0 0.0
  %v3927 = vand.u32 %v2675, 4294901760
  %v3928 = vsub.f32 %v2675, %v3927
  %v3929 = vand.u32 %v3928, 4294901760
  %v3930 = vsub.f32 %v3928, %v3929
  %v3931 = vand.u32 %v3930, 4294901760
  %3932 = vmatmul.mubr.f32.gmra.mrb[0].mxu0 %v3931
  %v3933 = vpop.f32.mrb[0].mxu0
  %v3934 = vadd.f32 0.0, %v3933
  %v3935 = vpop.f32.mrb[0].mxu0
  %3936 = vmatprep.mubr.f32.mxu0 0.0
  %v3937 = vand.u32 %v2678, 4294901760
  %v3938 = vsub.f32 %v2678, %v3937
  %v3939 = vand.u32 %v3938, 4294901760
  %v3940 = vsub.f32 %v3938, %v3939
  %v3941 = vand.u32 %v3940, 4294901760
  %3942 = vmatmul.mubr.f32.gmra.mrb[0].mxu0 %v3941
  %v3943 = vpop.f32.mrb[0].mxu0
  %v3944 = vadd.f32 0.0, %v3943
  %v3945 = vpop.f32.mrb[0].mxu0
  %3946 = vdwg.mxu0
  %3947 = vmatprep.subr.mxu0 0.0
  %v3948 = vand.u32 %v53, 4294901760
  %v3949 = vsub.f32 %v53, %v3948
  %v3950 = vand.u32 %v3949, 4294901760
  %v3951 = vsub.f32 %v3949, %v3950
  %v3952 = vand.u32 %v3951, 4294901760
  %3953 = vmatpush1.msra.mxu0 %v3952
  %3954 = vmatprep.subr.mxu0 0.0
  %v3955 = vand.u32 %v58, 4294901760
  %v3956 = vsub.f32 %v58, %v3955
  %v3957 = vand.u32 %v3956, 4294901760
  %v3958 = vsub.f32 %v3956, %v3957
  %v3959 = vand.u32 %v3958, 4294901760
  %3960 = vmatpush1.msra.mxu0 %v3959
  %3961 = vmatprep.subr.mxu0 0.0
  %v3962 = vand.u32 %v63, 4294901760
  %v3963 = vsub.f32 %v63, %v3962
  %v3964 = vand.u32 %v3963, 4294901760
  %v3965 = vsub.f32 %v3963, %v3964
  %v3966 = vand.u32 %v3965, 4294901760
  %3967 = vmatpush1.msra.mxu0 %v3966
  %3968 = vmatprep.subr.mxu0 0.0
  %v3969 = vand.u32 %v68, 4294901760
  %v3970 = vsub.f32 %v68, %v3969
  %v3971 = vand.u32 %v3970, 4294901760
  %v3972 = vsub.f32 %v3970, %v3971
  %v3973 = vand.u32 %v3972, 4294901760
  %3974 = vmatpush1.msra.mxu0 %v3973
  %3975 = vmatprep.subr.mxu0 0.0
  %3976 = vmatpush1.msra.mxu0 0.0
  %3977 = vmatprep.subr.mxu0 0.0
  %3978 = vmatpush1.msra.mxu0 0.0
  %3979 = vmatprep.subr.mxu0 0.0
  %3980 = vmatpush1.msra.mxu0 0.0
  %3981 = vmatprep.subr.mxu0 0.0
  %3982 = vmatpush1.msra.mxu0 0.0
  %3983 = vmatprep.subr.mxu0 0.0
  %3984 = vmatpush1.msra.mxu0 0.0
  %3985 = vmatprep.subr.mxu0 0.0
  %3986 = vmatpush1.msra.mxu0 0.0
  %3987 = vmatprep.subr.mxu0 0.0
  %3988 = vmatpush1.msra.mxu0 0.0
  %3989 = vmatprep.subr.mxu0 0.0
  %3990 = vmatpush1.msra.mxu0 0.0
  %3991 = vmatprep.subr.mxu0 0.0
  %3992 = vmatpush1.msra.mxu0 0.0
  %3993 = vmatprep.subr.mxu0 0.0
  %3994 = vmatpush1.msra.mxu0 0.0
  %3995 = vmatprep.subr.mxu0 0.0
  %3996 = vmatpush1.msra.mxu0 0.0
  %3997 = vmatprep.subr.mxu0 0.0
  %3998 = vmatpush1.msra.mxu0 0.0
  %3999 = vmatprep.subr.mxu0 0.0
  %4000 = vmatpush1.msra.mxu0 0.0
  %4001 = vmatprep.subr.mxu0 0.0
  %4002 = vmatpush1.msra.mxu0 0.0
  %4003 = vmatprep.subr.mxu0 0.0
  %4004 = vmatpush1.msra.mxu0 0.0
  %4005 = vmatprep.subr.mxu0 0.0
  %4006 = vmatpush1.msra.mxu0 0.0
  %4007 = vmatprep.subr.mxu0 0.0
  %4008 = vmatpush1.msra.mxu0 0.0
  %4009 = vmatprep.subr.mxu0 0.0
  %4010 = vmatpush1.msra.mxu0 0.0
  %4011 = vmatprep.subr.mxu0 0.0
  %4012 = vmatpush1.msra.mxu0 0.0
  %4013 = vmatprep.subr.mxu0 0.0
  %4014 = vmatpush1.msra.mxu0 0.0
  %4015 = vmatprep.subr.mxu0 0.0
  %4016 = vmatpush1.msra.mxu0 0.0
  %4017 = vmatprep.subr.mxu0 0.0
  %4018 = vmatpush1.msra.mxu0 0.0
  %4019 = vmatprep.subr.mxu0 0.0
  %4020 = vmatpush1.msra.mxu0 0.0
  %4021 = vmatprep.subr.mxu0 0.0
  %4022 = vmatpush1.msra.mxu0 0.0
  %4023 = vmatprep.subr.mxu0 0.0
  %4024 = vmatpush1.msra.mxu0 0.0
  %4025 = vmatprep.subr.mxu0 0.0
  %4026 = vmatpush1.msra.mxu0 0.0
  %4027 = vmatprep.subr.mxu0 0.0
  %4028 = vmatpush1.msra.mxu0 0.0
  %4029 = vmatprep.subr.mxu0 0.0
  %4030 = vmatpush1.msra.mxu0 0.0
  %4031 = vmatprep.mubr.f32.mxu0 0.0
  %v4032 = vand.u32 %v2675, 4294901760
  %4033 = vmatmul.mubr.f32.gmra.mrb[0].mxu0 %v4032
  %v4034 = vpop.f32.mrb[0].mxu0
  %v4035 = vadd.f32 %v3934, %v4034
  %v4036 = vpop.f32.mrb[0].mxu0
  %4037 = vmatprep.mubr.f32.mxu0 0.0
  %v4038 = vand.u32 %v2678, 4294901760
  %4039 = vmatmul.mubr.f32.gmra.mrb[0].mxu0 %v4038
  %v4040 = vpop.f32.mrb[0].mxu0
  %v4041 = vadd.f32 %v3944, %v4040
  %v4042 = vpop.f32.mrb[0].mxu0
  %4043 = vdwg.mxu0
  %4044 = vmatprep.subr.mxu0 0.0
  %v4045 = vand.u32 %v53, 4294901760
  %v4046 = vsub.f32 %v53, %v4045
  %4047 = vmatpush1.msra.mxu0 %v4046
  %4048 = vmatprep.subr.mxu0 0.0
  %v4049 = vand.u32 %v58, 4294901760
  %v4050 = vsub.f32 %v58, %v4049
  %4051 = vmatpush1.msra.mxu0 %v4050
  %4052 = vmatprep.subr.mxu0 0.0
  %v4053 = vand.u32 %v63, 4294901760
  %v4054 = vsub.f32 %v63, %v4053
  %4055 = vmatpush1.msra.mxu0 %v4054
  %4056 = vmatprep.subr.mxu0 0.0
  %v4057 = vand.u32 %v68, 4294901760
  %v4058 = vsub.f32 %v68, %v4057
  %4059 = vmatpush1.msra.mxu0 %v4058
  %4060 = vmatprep.subr.mxu0 0.0
  %4061 = vmatpush1.msra.mxu0 0.0
  %4062 = vmatprep.subr.mxu0 0.0
  %4063 = vmatpush1.msra.mxu0 0.0
  %4064 = vmatprep.subr.mxu0 0.0
  %4065 = vmatpush1.msra.mxu0 0.0
  %4066 = vmatprep.subr.mxu0 0.0
  %4067 = vmatpush1.msra.mxu0 0.0
  %4068 = vmatprep.subr.mxu0 0.0
  %4069 = vmatpush1.msra.mxu0 0.0
  %4070 = vmatprep.subr.mxu0 0.0
  %4071 = vmatpush1.msra.mxu0 0.0
  %4072 = vmatprep.subr.mxu0 0.0
  %4073 = vmatpush1.msra.mxu0 0.0
  %4074 = vmatprep.subr.mxu0 0.0
  %4075 = vmatpush1.msra.mxu0 0.0
  %4076 = vmatprep.subr.mxu0 0.0
  %4077 = vmatpush1.msra.mxu0 0.0
  %4078 = vmatprep.subr.mxu0 0.0
  %4079 = vmatpush1.msra.mxu0 0.0
  %4080 = vmatprep.subr.mxu0 0.0
  %4081 = vmatpush1.msra.mxu0 0.0
  %4082 = vmatprep.subr.mxu0 0.0
  %4083 = vmatpush1.msra.mxu0 0.0
  %4084 = vmatprep.subr.mxu0 0.0
  %4085 = vmatpush1.msra.mxu0 0.0
  %4086 = vmatprep.subr.mxu0 0.0
  %4087 = vmatpush1.msra.mxu0 0.0
  %4088 = vmatprep.subr.mxu0 0.0
  %4089 = vmatpush1.msra.mxu0 0.0
  %4090 = vmatprep.subr.mxu0 0.0
  %4091 = vmatpush1.msra.mxu0 0.0
  %4092 = vmatprep.subr.mxu0 0.0
  %4093 = vmatpush1.msra.mxu0 0.0
  %4094 = vmatprep.subr.mxu0 0.0
  %4095 = vmatpush1.msra.mxu0 0.0
  %4096 = vmatprep.subr.mxu0 0.0
  %4097 = vmatpush1.msra.mxu0 0.0
  %4098 = vmatprep.subr.mxu0 0.0
  %4099 = vmatpush1.msra.mxu0 0.0
  %4100 = vmatprep.subr.mxu0 0.0
  %4101 = vmatpush1.msra.mxu0 0.0
  %4102 = vmatprep.subr.mxu0 0.0
  %4103 = vmatpush1.msra.mxu0 0.0
  %4104 = vmatprep.subr.mxu0 0.0
  %4105 = vmatpush1.msra.mxu0 0.0
  %4106 = vmatprep.subr.mxu0 0.0
  %4107 = vmatpush1.msra.mxu0 0.0
  %4108 = vmatprep.subr.mxu0 0.0
  %4109 = vmatpush1.msra.mxu0 0.0
  %4110 = vmatprep.subr.mxu0 0.0
  %4111 = vmatpush1.msra.mxu0 0.0
  %4112 = vmatprep.subr.mxu0 0.0
  %4113 = vmatpush1.msra.mxu0 0.0
  %4114 = vmatprep.subr.mxu0 0.0
  %4115 = vmatpush1.msra.mxu0 0.0
  %4116 = vmatprep.mubr.f32.mxu0 0.0
  %v4117 = vand.u32 %v2675, 4294901760
  %v4118 = vsub.f32 %v2675, %v4117
  %4119 = vmatmul.mubr.f32.gmra.mrb[0].mxu0 %v4118
  %v4120 = vpop.f32.mrb[0].mxu0
  %v4121 = vadd.f32 %v4035, %v4120
  %v4122 = vpop.f32.mrb[0].mxu0
  %4123 = vmatprep.mubr.f32.mxu0 0.0
  %v4124 = vand.u32 %v2678, 4294901760
  %v4125 = vsub.f32 %v2678, %v4124
  %4126 = vmatmul.mubr.f32.gmra.mrb[0].mxu0 %v4125
  %v4127 = vpop.f32.mrb[0].mxu0
  %v4128 = vadd.f32 %v4041, %v4127
  %v4129 = vpop.f32.mrb[0].mxu0
  %4130 = vdwg.mxu0
  %4131 = vmatprep.subr.mxu0 0.0
  %v4132 = vand.u32 %v53, 4294901760
  %4133 = vmatpush1.msra.mxu0 %v4132
  %4134 = vmatprep.subr.mxu0 0.0
  %v4135 = vand.u32 %v58, 4294901760
  %4136 = vmatpush1.msra.mxu0 %v4135
  %4137 = vmatprep.subr.mxu0 0.0
  %v4138 = vand.u32 %v63, 4294901760
  %4139 = vmatpush1.msra.mxu0 %v4138
  %4140 = vmatprep.subr.mxu0 0.0
  %v4141 = vand.u32 %v68, 4294901760
  %4142 = vmatpush1.msra.mxu0 %v4141
  %4143 = vmatprep.subr.mxu0 0.0
  %4144 = vmatpush1.msra.mxu0 0.0
  %4145 = vmatprep.subr.mxu0 0.0
  %4146 = vmatpush1.msra.mxu0 0.0
  %4147 = vmatprep.subr.mxu0 0.0
  %4148 = vmatpush1.msra.mxu0 0.0
  %4149 = vmatprep.subr.mxu0 0.0
  %4150 = vmatpush1.msra.mxu0 0.0
  %4151 = vmatprep.subr.mxu0 0.0
  %4152 = vmatpush1.msra.mxu0 0.0
  %4153 = vmatprep.subr.mxu0 0.0
  %4154 = vmatpush1.msra.mxu0 0.0
  %4155 = vmatprep.subr.mxu0 0.0
  %4156 = vmatpush1.msra.mxu0 0.0
  %4157 = vmatprep.subr.mxu0 0.0
  %4158 = vmatpush1.msra.mxu0 0.0
  %4159 = vmatprep.subr.mxu0 0.0
  %4160 = vmatpush1.msra.mxu0 0.0
  %4161 = vmatprep.subr.mxu0 0.0
  %4162 = vmatpush1.msra.mxu0 0.0
  %4163 = vmatprep.subr.mxu0 0.0
  %4164 = vmatpush1.msra.mxu0 0.0
  %4165 = vmatprep.subr.mxu0 0.0
  %4166 = vmatpush1.msra.mxu0 0.0
  %4167 = vmatprep.subr.mxu0 0.0
  %4168 = vmatpush1.msra.mxu0 0.0
  %4169 = vmatprep.subr.mxu0 0.0
  %4170 = vmatpush1.msra.mxu0 0.0
  %4171 = vmatprep.subr.mxu0 0.0
  %4172 = vmatpush1.msra.mxu0 0.0
  %4173 = vmatprep.subr.mxu0 0.0
  %4174 = vmatpush1.msra.mxu0 0.0
  %4175 = vmatprep.subr.mxu0 0.0
  %4176 = vmatpush1.msra.mxu0 0.0
  %4177 = vmatprep.subr.mxu0 0.0
  %4178 = vmatpush1.msra.mxu0 0.0
  %4179 = vmatprep.subr.mxu0 0.0
  %4180 = vmatpush1.msra.mxu0 0.0
  %4181 = vmatprep.subr.mxu0 0.0
  %4182 = vmatpush1.msra.mxu0 0.0
  %4183 = vmatprep.subr.mxu0 0.0
  %4184 = vmatpush1.msra.mxu0 0.0
  %4185 = vmatprep.subr.mxu0 0.0
  %4186 = vmatpush1.msra.mxu0 0.0
  %4187 = vmatprep.subr.mxu0 0.0
  %4188 = vmatpush1.msra.mxu0 0.0
  %4189 = vmatprep.subr.mxu0 0.0
  %4190 = vmatpush1.msra.mxu0 0.0
  %4191 = vmatprep.subr.mxu0 0.0
  %4192 = vmatpush1.msra.mxu0 0.0
  %4193 = vmatprep.subr.mxu0 0.0
  %4194 = vmatpush1.msra.mxu0 0.0
  %4195 = vmatprep.subr.mxu0 0.0
  %4196 = vmatpush1.msra.mxu0 0.0
  %4197 = vmatprep.subr.mxu0 0.0
  %4198 = vmatpush1.msra.mxu0 0.0
  %4199 = vmatprep.mubr.f32.mxu0 0.0
  %v4200 = vand.u32 %v2675, 4294901760
  %v4201 = vsub.f32 %v2675, %v4200
  %v4202 = vand.u32 %v4201, 4294901760
  %4203 = vmatmul.mubr.f32.gmra.mrb[0].mxu0 %v4202
  %v4204 = vpop.f32.mrb[0].mxu0
  %v4205 = vadd.f32 %v4121, %v4204
  %v4206 = vpop.f32.mrb[0].mxu0
  %4207 = vmatprep.mubr.f32.mxu0 0.0
  %v4208 = vand.u32 %v2678, 4294901760
  %v4209 = vsub.f32 %v2678, %v4208
  %v4210 = vand.u32 %v4209, 4294901760
  %4211 = vmatmul.mubr.f32.gmra.mrb[0].mxu0 %v4210
  %v4212 = vpop.f32.mrb[0].mxu0
  %v4213 = vadd.f32 %v4128, %v4212
  %v4214 = vpop.f32.mrb[0].mxu0
  %4215 = vdwg.mxu0
  %4216 = vmatprep.subr.mxu0 0.0
  %v4217 = vand.u32 %v53, 4294901760
  %v4218 = vsub.f32 %v53, %v4217
  %v4219 = vand.u32 %v4218, 4294901760
  %4220 = vmatpush1.msra.mxu0 %v4219
  %4221 = vmatprep.subr.mxu0 0.0
  %v4222 = vand.u32 %v58, 4294901760
  %v4223 = vsub.f32 %v58, %v4222
  %v4224 = vand.u32 %v4223, 4294901760
  %4225 = vmatpush1.msra.mxu0 %v4224
  %4226 = vmatprep.subr.mxu0 0.0
  %v4227 = vand.u32 %v63, 4294901760
  %v4228 = vsub.f32 %v63, %v4227
  %v4229 = vand.u32 %v4228, 4294901760
  %4230 = vmatpush1.msra.mxu0 %v4229
  %4231 = vmatprep.subr.mxu0 0.0
  %v4232 = vand.u32 %v68, 4294901760
  %v4233 = vsub.f32 %v68, %v4232
  %v4234 = vand.u32 %v4233, 4294901760
  %4235 = vmatpush1.msra.mxu0 %v4234
  %4236 = vmatprep.subr.mxu0 0.0
  %4237 = vmatpush1.msra.mxu0 0.0
  %4238 = vmatprep.subr.mxu0 0.0
  %4239 = vmatpush1.msra.mxu0 0.0
  %4240 = vmatprep.subr.mxu0 0.0
  %4241 = vmatpush1.msra.mxu0 0.0
  %4242 = vmatprep.subr.mxu0 0.0
  %4243 = vmatpush1.msra.mxu0 0.0
  %4244 = vmatprep.subr.mxu0 0.0
  %4245 = vmatpush1.msra.mxu0 0.0
  %4246 = vmatprep.subr.mxu0 0.0
  %4247 = vmatpush1.msra.mxu0 0.0
  %4248 = vmatprep.subr.mxu0 0.0
  %4249 = vmatpush1.msra.mxu0 0.0
  %4250 = vmatprep.subr.mxu0 0.0
  %4251 = vmatpush1.msra.mxu0 0.0
  %4252 = vmatprep.subr.mxu0 0.0
  %4253 = vmatpush1.msra.mxu0 0.0
  %4254 = vmatprep.subr.mxu0 0.0
  %4255 = vmatpush1.msra.mxu0 0.0
  %4256 = vmatprep.subr.mxu0 0.0
  %4257 = vmatpush1.msra.mxu0 0.0
  %4258 = vmatprep.subr.mxu0 0.0
  %4259 = vmatpush1.msra.mxu0 0.0
  %4260 = vmatprep.subr.mxu0 0.0
  %4261 = vmatpush1.msra.mxu0 0.0
  %4262 = vmatprep.subr.mxu0 0.0
  %4263 = vmatpush1.msra.mxu0 0.0
  %4264 = vmatprep.subr.mxu0 0.0
  %4265 = vmatpush1.msra.mxu0 0.0
  %4266 = vmatprep.subr.mxu0 0.0
  %4267 = vmatpush1.msra.mxu0 0.0
  %4268 = vmatprep.subr.mxu0 0.0
  %4269 = vmatpush1.msra.mxu0 0.0
  %4270 = vmatprep.subr.mxu0 0.0
  %4271 = vmatpush1.msra.mxu0 0.0
  %4272 = vmatprep.subr.mxu0 0.0
  %4273 = vmatpush1.msra.mxu0 0.0
  %4274 = vmatprep.subr.mxu0 0.0
  %4275 = vmatpush1.msra.mxu0 0.0
  %4276 = vmatprep.subr.mxu0 0.0
  %4277 = vmatpush1.msra.mxu0 0.0
  %4278 = vmatprep.subr.mxu0 0.0
  %4279 = vmatpush1.msra.mxu0 0.0
  %4280 = vmatprep.subr.mxu0 0.0
  %4281 = vmatpush1.msra.mxu0 0.0
  %4282 = vmatprep.subr.mxu0 0.0
  %4283 = vmatpush1.msra.mxu0 0.0
  %4284 = vmatprep.subr.mxu0 0.0
  %4285 = vmatpush1.msra.mxu0 0.0
  %4286 = vmatprep.subr.mxu0 0.0
  %4287 = vmatpush1.msra.mxu0 0.0
  %4288 = vmatprep.subr.mxu0 0.0
  %4289 = vmatpush1.msra.mxu0 0.0
  %4290 = vmatprep.subr.mxu0 0.0
  %4291 = vmatpush1.msra.mxu0 0.0
  %4292 = vmatprep.mubr.f32.mxu0 0.0
  %v4293 = vand.u32 %v2675, 4294901760
  %4294 = vmatmul.mubr.f32.gmra.mrb[0].mxu0 %v4293
  %v4295 = vpop.f32.mrb[0].mxu0
  %v4296 = vadd.f32 %v4205, %v4295
  %v4297 = vpop.f32.mrb[0].mxu0
  %4298 = vmatprep.mubr.f32.mxu0 0.0
  %v4299 = vand.u32 %v2678, 4294901760
  %4300 = vmatmul.mubr.f32.gmra.mrb[0].mxu0 %v4299
  %v4301 = vpop.f32.mrb[0].mxu0
  %v4302 = vadd.f32 %v4213, %v4301
  %v4303 = vpop.f32.mrb[0].mxu0
  %4304 = vdwg.mxu0
  %4305 = vmatprep.subr.mxu0 0.0
  %v4306 = vand.u32 %v53, 4294901760
  %4307 = vmatpush1.msra.mxu0 %v4306
  %4308 = vmatprep.subr.mxu0 0.0
  %v4309 = vand.u32 %v58, 4294901760
  %4310 = vmatpush1.msra.mxu0 %v4309
  %4311 = vmatprep.subr.mxu0 0.0
  %v4312 = vand.u32 %v63, 4294901760
  %4313 = vmatpush1.msra.mxu0 %v4312
  %4314 = vmatprep.subr.mxu0 0.0
  %v4315 = vand.u32 %v68, 4294901760
  %4316 = vmatpush1.msra.mxu0 %v4315
  %4317 = vmatprep.subr.mxu0 0.0
  %4318 = vmatpush1.msra.mxu0 0.0
  %4319 = vmatprep.subr.mxu0 0.0
  %4320 = vmatpush1.msra.mxu0 0.0
  %4321 = vmatprep.subr.mxu0 0.0
  %4322 = vmatpush1.msra.mxu0 0.0
  %4323 = vmatprep.subr.mxu0 0.0
  %4324 = vmatpush1.msra.mxu0 0.0
  %4325 = vmatprep.subr.mxu0 0.0
  %4326 = vmatpush1.msra.mxu0 0.0
  %4327 = vmatprep.subr.mxu0 0.0
  %4328 = vmatpush1.msra.mxu0 0.0
  %4329 = vmatprep.subr.mxu0 0.0
  %4330 = vmatpush1.msra.mxu0 0.0
  %4331 = vmatprep.subr.mxu0 0.0
  %4332 = vmatpush1.msra.mxu0 0.0
  %4333 = vmatprep.subr.mxu0 0.0
  %4334 = vmatpush1.msra.mxu0 0.0
  %4335 = vmatprep.subr.mxu0 0.0
  %4336 = vmatpush1.msra.mxu0 0.0
  %4337 = vmatprep.subr.mxu0 0.0
  %4338 = vmatpush1.msra.mxu0 0.0
  %4339 = vmatprep.subr.mxu0 0.0
  %4340 = vmatpush1.msra.mxu0 0.0
  %4341 = vmatprep.subr.mxu0 0.0
  %4342 = vmatpush1.msra.mxu0 0.0
  %4343 = vmatprep.subr.mxu0 0.0
  %4344 = vmatpush1.msra.mxu0 0.0
  %4345 = vmatprep.subr.mxu0 0.0
  %4346 = vmatpush1.msra.mxu0 0.0
  %4347 = vmatprep.subr.mxu0 0.0
  %4348 = vmatpush1.msra.mxu0 0.0
  %4349 = vmatprep.subr.mxu0 0.0
  %4350 = vmatpush1.msra.mxu0 0.0
  %4351 = vmatprep.subr.mxu0 0.0
  %4352 = vmatpush1.msra.mxu0 0.0
  %4353 = vmatprep.subr.mxu0 0.0
  %4354 = vmatpush1.msra.mxu0 0.0
  %4355 = vmatprep.subr.mxu0 0.0
  %4356 = vmatpush1.msra.mxu0 0.0
  %4357 = vmatprep.subr.mxu0 0.0
  %4358 = vmatpush1.msra.mxu0 0.0
  %4359 = vmatprep.subr.mxu0 0.0
  %4360 = vmatpush1.msra.mxu0 0.0
  %4361 = vmatprep.subr.mxu0 0.0
  %4362 = vmatpush1.msra.mxu0 0.0
  %4363 = vmatprep.subr.mxu0 0.0
  %4364 = vmatpush1.msra.mxu0 0.0
  %4365 = vmatprep.subr.mxu0 0.0
  %4366 = vmatpush1.msra.mxu0 0.0
  %4367 = vmatprep.subr.mxu0 0.0
  %4368 = vmatpush1.msra.mxu0 0.0
  %4369 = vmatprep.subr.mxu0 0.0
  %4370 = vmatpush1.msra.mxu0 0.0
  %4371 = vmatprep.subr.mxu0 0.0
  %4372 = vmatpush1.msra.mxu0 0.0
  %4373 = vmatprep.mubr.f32.mxu0 0.0
  %v4374 = vand.u32 %v2675, 4294901760
  %4375 = vmatmul.mubr.f32.gmra.mrb[0].mxu0 %v4374
  %v4376 = vpop.f32.mrb[0].mxu0
  %v4377 = vadd.f32 %v4296, %v4376
  %v4378 = vpop.f32.mrb[0].mxu0
  %4379 = vmatprep.mubr.f32.mxu0 0.0
  %v4380 = vand.u32 %v2678, 4294901760
  %4381 = vmatmul.mubr.f32.gmra.mrb[0].mxu0 %v4380
  %v4382 = vpop.f32.mrb[0].mxu0
  %v4383 = vadd.f32 %v4302, %v4382
  %v4384 = vpop.f32.mrb[0].mxu0
  %4385 = vdwg.mxu0
  %v4387 = vrot.slane %v3847, 1
  %4388 = vrot.lane.b32.xlu0 %v4387, 64
  %v4389 = vpop.permute.xlu0 %4388
  %v4391 = vadd.f32 %v3847, %v4389
  %v4393 = vrot.slane %v3849, 4
  %4394 = vrot.lane.b32.xlu0 %v4393, 64
  %v4395 = vpop.permute.xlu0 %4394
  %v4397 = vadd.f32 %v4391, %v4395
  %v4399 = vrot.slane %v4377, 5
  %v4401 = vadd.f32 %v4397, %v4399
  %v4402 = vadd.f32 %v3258, %v4389
  %v4403 = vrot.slane %v3847, 2
  %v4405 = vadd.f32 %v4402, %v4403
  %v4406 = vadd.f32 %v4405, %v4395
  %v4407 = vrot.slane %v3849, 5
  %v4409 = vadd.f32 %v4406, %v4407
  %v4410 = vrot.slane %v4377, 6
  %4411 = vrot.lane.b32.xlu0 %v4410, 64
  %v4412 = vpop.permute.xlu0 %4411
  %v4414 = vadd.f32 %v4409, %v4412
  %v4416 = vrot.slane %v3258, 1
  %4417 = vrot.lane.b32.xlu0 %v4416, 64
  %v4418 = vpop.permute.xlu0 %4417
  %v4420 = vadd.f32 %v3256, %v4418
  %v4422 = vrot.slane %v3854, 4
  %4423 = vrot.lane.b32.xlu0 %v4422, 64
  %v4424 = vpop.permute.xlu0 %4423
  %v4426 = vadd.f32 %v4420, %v4424
  %v4427 = vrot.slane %v3854, 5
  %v4429 = vadd.f32 %v4426, %v4427
  %v4430 = vadd.f32 %v4429, %v3856
  %v4432 = vrot.slane %v4383, 1
  %4433 = vrot.lane.b32.xlu0 %v4432, 64
  %v4434 = vpop.permute.xlu0 %4433
  %v4436 = vadd.f32 %v4430, %v4434
  %v4438 = vrot.slane %v3256, 1
  %4439 = vrot.lane.b32.xlu0 %v4438, 64
  %v4440 = vpop.permute.xlu0 %4439
  %v4442 = vadd.f32 %v3256, %v4440
  %v4443 = vrot.slane %v3258, 2
  %v4445 = vadd.f32 %v4442, %v4443
  %v4447 = vrot.slane %v3264, 4
  %4448 = vrot.lane.b32.xlu0 %v4447, 64
  %v4449 = vpop.permute.xlu0 %4448
  %v4451 = vadd.f32 %v4445, %v4449
  %v4452 = vadd.f32 %v4451, %v4427
  %v4453 = vrot.slane %v3854, 6
  %4454 = vrot.lane.b32.xlu0 %v4453, 64
  %v4455 = vpop.permute.xlu0 %4454
  %v4457 = vadd.f32 %v4452, %v4455
  %v4458 = vadd.f32 %v4457, %v3856
  %v4460 = vrot.slane %v3856, 1
  %4461 = vrot.lane.b32.xlu0 %v4460, 64
  %v4462 = vpop.permute.xlu0 %4461
  %v4464 = vadd.f32 %v4458, %v4462
  %v4465 = vrot.slane %v4383, 2
  %v4467 = vadd.f32 %v4464, %v4465
  %v4469 = vrot.slane %v4414, 1
  %v4472 = vrot.slane %v4436, 4
  %4473 = vrot.lane.b32.xlu0 %v4472, 64
  %v4474 = vpop.permute.xlu0 %4473
  %v4477 = vrot.slane %v4467, 5
  %4478 = vrot.lane.b32.xlu0 %v4477, 64
  %v4479 = vpop.permute.xlu0 %4478
  %v4481 = vsel %vm1334, %v4401, %v4469
  %v4482 = vsel %vm1334, %v4474, %v4479
  %v4484 = vlaneseq
  %v4485 = vshrl.u32 %v4484, 7
  %v4486 = vsub.s32 0, %v4485
  %v4487 = vrot.slane %v69, %v4486
  %v4488 = vlaneseq
  %v4489 = vshrl.u32 %v4488, 7
  %v4490 = vsub.s32 1, %v4489
  %v4491 = vrot.slane %v69, %v4490
  %v4494 = vmul.f32 %v4481, %v4487
  %v4495 = vmul.f32 %v4482, %v4491
  %v4497 = vlaneseq
  %v4498 = vshrl.u32 %v4497, 7
  %v4499 = vsub.s32 0, %v4498
  %v4500 = vrot.slane %v71, %v4499
  %v4501 = vlaneseq
  %v4502 = vshrl.u32 %v4501, 7
  %v4503 = vsub.s32 1, %v4502
  %v4504 = vrot.slane %v71, %v4503
  %v4507 = vadd.f32 %v4494, %v4500
  %v4508 = vadd.f32 %v4495, %v4504
  %v4511 = vcombine.low %v4507, %v4508
  %v4513 = vunpack.c.l.s4 1966171168
  %v4514 = vunpack.c.0.s8 %v4513
  %v4515 = vlaneseq
  %v4516 = vshrl.u32 %v4515, 7
  %v4517 = vsub.s32 %v4514, %v4516
  %v4518 = vrot.slane %v4511, %v4517
  %v4520 = vunpack.c.l.s4 1966171168
  %v4521 = vunpack.c.0.s8 %v4520
  %v4522 = vlaneseq
  %v4523 = vshrl.u32 %v4522, 7
  %v4524 = vsub.s32 %v4521, %v4523
  %v4525 = vrot.slane %v4518, %v4524
  %v4527 = vlaneseq
  %vm4528 = vcmp.ge.s32.totalorder %v4527, 0
  %vm4529 = vcmp.lt.s32.totalorder %v4527, 256
  %vm4530 = vmand %vm4528, %vm4529
  %4531 = vst.msk [vmem:[%s8] sm:$0x3] %vm4530, %v4525
  %v4532 = vld [vmem:[%s1] sm:$0x77]
  %4534 = vset.pattern.permute.xlu0 0
  %4535 = vperm.xlu0 %4534, %v72
  %v4536 = vpop.permute.xlu0 %4535
  %v4539 = vlaneseq
  %v4540 = vshrl.u32 %v4539, 7
  %v4541 = vsub.s32 0, %v4540
  %v4542 = vrot.slane %v4532, %v4541
  %v4543 = vlaneseq
  %v4544 = vshrl.u32 %v4543, 7
  %v4545 = vsub.s32 4, %v4544
  %v4546 = vrot.slane %v4532, %v4545
  %v4549 = vlaneseq
  %v4550 = vshrl.u32 %v4549, 7
  %v4551 = vsub.s32 0, %v4550
  %v4552 = vrot.slane %v4542, %v4551
  %v4553 = vlaneseq
  %v4554 = vshrl.u32 %v4553, 7
  %v4555 = vsub.s32 0, %v4554
  %v4556 = vrot.slane %v4546, %v4555
  %v4557 = vmul.f32 %v4536, %v4552
  %v4558 = vmul.f32 %v4536, %v4556
  %4559 = vset.pattern.permute.xlu0 3
  %4560 = vperm.xlu0 %4559, %v72
  %v4561 = vpop.permute.xlu0 %4560
  %v4563 = vadd.f32 %v4561, %v4557
  %v4564 = vadd.f32 %v4561, %v4558
  %4565 = vset.pattern.permute.xlu0 1
  %4566 = vperm.xlu0 %4565, %v72
  %v4567 = vpop.permute.xlu0 %4566
  %v4569 = vlaneseq
  %v4570 = vshrl.u32 %v4569, 7
  %v4571 = vsub.s32 1, %v4570
  %v4572 = vrot.slane %v4532, %v4571
  %v4573 = vlaneseq
  %v4574 = vshrl.u32 %v4573, 7
  %v4575 = vsub.s32 5, %v4574
  %v4576 = vrot.slane %v4532, %v4575
  %v4579 = vlaneseq
  %v4580 = vshrl.u32 %v4579, 7
  %v4581 = vsub.s32 1, %v4580
  %v4582 = vrot.slane %v4572, %v4581
  %v4583 = vlaneseq
  %v4584 = vshrl.u32 %v4583, 7
  %v4585 = vsub.s32 1, %v4584
  %v4586 = vrot.slane %v4576, %v4585
  %v4587 = vmul.f32 %v4567, %v4582
  %v4588 = vmul.f32 %v4567, %v4586
  %v4589 = vadd.f32 %v4563, %v4587
  %v4590 = vadd.f32 %v4564, %v4588
  %4591 = vset.pattern.permute.xlu0 2
  %4592 = vperm.xlu0 %4591, %v72
  %v4593 = vpop.permute.xlu0 %4592
  %v4595 = vlaneseq
  %v4596 = vshrl.u32 %v4595, 7
  %v4597 = vsub.s32 2, %v4596
  %v4598 = vrot.slane %v4532, %v4597
  %v4599 = vlaneseq
  %v4600 = vshrl.u32 %v4599, 7
  %v4601 = vsub.s32 6, %v4600
  %v4602 = vrot.slane %v4532, %v4601
  %v4605 = vlaneseq
  %v4606 = vshrl.u32 %v4605, 7
  %v4607 = vsub.s32 2, %v4606
  %v4608 = vrot.slane %v4598, %v4607
  %v4609 = vlaneseq
  %v4610 = vshrl.u32 %v4609, 7
  %v4611 = vsub.s32 2, %v4610
  %v4612 = vrot.slane %v4602, %v4611
  %v4613 = vmul.f32 %v4593, %v4608
  %v4614 = vmul.f32 %v4593, %v4612
  %v4615 = vadd.f32 %v4589, %v4613
  %v4616 = vadd.f32 %v4590, %v4614
  %4617 = vst [vmem:[%s9] sm:$0x1f] %v4615
  %4618 = vst [vmem:[%s9 + $0x8] sm:$0x1f] %v4616
  %4619 = vmatprep.subr.mxu0 0.0
  %v4620 = vand.u32 %v1326, 4294901760
  %4621 = vmatpush1.msra.mxu0 %v4620
  %4622 = vmatprep.subr.mxu0 0.0
  %v4623 = vand.u32 %v1327, 4294901760
  %4624 = vmatpush1.msra.mxu0 %v4623
  %4625 = vmatprep.subr.mxu0 0.0
  %v4626 = vand.u32 %v1328, 4294901760
  %4627 = vmatpush1.msra.mxu0 %v4626
  %4628 = vmatprep.subr.mxu0 0.0
  %v4629 = vand.u32 %v1329, 4294901760
  %4630 = vmatpush1.msra.mxu0 %v4629
  %4631 = vmatprep.subr.mxu0 0.0
  %v4632 = vand.u32 %v1330, 4294901760
  %4633 = vmatpush1.msra.mxu0 %v4632
  %4634 = vmatprep.subr.mxu0 0.0
  %v4635 = vand.u32 %v1331, 4294901760
  %4636 = vmatpush1.msra.mxu0 %v4635
  %4637 = vmatprep.subr.mxu0 0.0
  %v4638 = vand.u32 %v1332, 4294901760
  %4639 = vmatpush1.msra.mxu0 %v4638
  %4640 = vmatprep.subr.mxu0 0.0
  %v4641 = vand.u32 %v1333, 4294901760
  %4642 = vmatpush1.msra.mxu0 %v4641
  %4643 = vmatprep.subr.mxu0 0.0
  %4644 = vmatpush1.msra.mxu0 0.0
  %4645 = vmatprep.subr.mxu0 0.0
  %4646 = vmatpush1.msra.mxu0 0.0
  %4647 = vmatprep.subr.mxu0 0.0
  %4648 = vmatpush1.msra.mxu0 0.0
  %4649 = vmatprep.subr.mxu0 0.0
  %4650 = vmatpush1.msra.mxu0 0.0
  %4651 = vmatprep.subr.mxu0 0.0
  %4652 = vmatpush1.msra.mxu0 0.0
  %4653 = vmatprep.subr.mxu0 0.0
  %4654 = vmatpush1.msra.mxu0 0.0
  %4655 = vmatprep.subr.mxu0 0.0
  %4656 = vmatpush1.msra.mxu0 0.0
  %4657 = vmatprep.subr.mxu0 0.0
  %4658 = vmatpush1.msra.mxu0 0.0
  %4659 = vmatprep.subr.mxu0 0.0
  %4660 = vmatpush1.msra.mxu0 0.0
  %4661 = vmatprep.subr.mxu0 0.0
  %4662 = vmatpush1.msra.mxu0 0.0
  %4663 = vmatprep.subr.mxu0 0.0
  %4664 = vmatpush1.msra.mxu0 0.0
  %4665 = vmatprep.subr.mxu0 0.0
  %4666 = vmatpush1.msra.mxu0 0.0
  %4667 = vmatprep.subr.mxu0 0.0
  %4668 = vmatpush1.msra.mxu0 0.0
  %4669 = vmatprep.subr.mxu0 0.0
  %4670 = vmatpush1.msra.mxu0 0.0
  %4671 = vmatprep.subr.mxu0 0.0
  %4672 = vmatpush1.msra.mxu0 0.0
  %4673 = vmatprep.subr.mxu0 0.0
  %4674 = vmatpush1.msra.mxu0 0.0
  %4675 = vmatprep.subr.mxu0 0.0
  %4676 = vmatpush1.msra.mxu0 0.0
  %4677 = vmatprep.subr.mxu0 0.0
  %4678 = vmatpush1.msra.mxu0 0.0
  %4679 = vmatprep.subr.mxu0 0.0
  %4680 = vmatpush1.msra.mxu0 0.0
  %4681 = vmatprep.subr.mxu0 0.0
  %4682 = vmatpush1.msra.mxu0 0.0
  %4683 = vmatprep.subr.mxu0 0.0
  %4684 = vmatpush1.msra.mxu0 0.0
  %4685 = vmatprep.subr.mxu0 0.0
  %4686 = vmatpush1.msra.mxu0 0.0
  %4687 = vmatprep.subr.mxu0 0.0
  %4688 = vmatpush1.msra.mxu0 0.0
  %4689 = vmatprep.subr.mxu0 0.0
  %4690 = vmatpush1.msra.mxu0 0.0
  %4691 = vmatprep.mubr.f32.mxu0 0.0
  %v4692 = vand.u32 %v1336, 4294901760
  %v4693 = vsub.f32 %v1336, %v4692
  %v4694 = vand.u32 %v4693, 4294901760
  %v4695 = vsub.f32 %v4693, %v4694
  %v4696 = vand.u32 %v4695, 4294901760
  %4697 = vmatmul.mubr.f32.gmra.mrb[0].mxu0 %v4696
  %v4698 = vpop.f32.mrb[0].mxu0
  %v4699 = vadd.f32 0.0, %v4698
  %v4700 = vpop.f32.mrb[0].mxu0
  %4701 = vmatprep.mubr.f32.mxu0 0.0
  %v4702 = vand.u32 %v1339, 4294901760
  %v4703 = vsub.f32 %v1339, %v4702
  %v4704 = vand.u32 %v4703, 4294901760
  %v4705 = vsub.f32 %v4703, %v4704
  %v4706 = vand.u32 %v4705, 4294901760
  %4707 = vmatmul.mubr.f32.gmra.mrb[0].mxu0 %v4706
  %v4708 = vpop.f32.mrb[0].mxu0
  %v4709 = vadd.f32 0.0, %v4708
  %v4710 = vpop.f32.mrb[0].mxu0
  %4711 = vmatprep.mubr.f32.mxu0 0.0
  %v4712 = vand.u32 %v1342, 4294901760
  %v4713 = vsub.f32 %v1342, %v4712
  %v4714 = vand.u32 %v4713, 4294901760
  %v4715 = vsub.f32 %v4713, %v4714
  %v4716 = vand.u32 %v4715, 4294901760
  %4717 = vmatmul.mubr.f32.gmra.mrb[0].mxu0 %v4716
  %v4718 = vpop.f32.mrb[0].mxu0
  %v4719 = vadd.f32 0.0, %v4718
  %v4720 = vpop.f32.mrb[0].mxu0
  %4721 = vmatprep.mubr.f32.mxu0 0.0
  %v4722 = vand.u32 %v1345, 4294901760
  %v4723 = vsub.f32 %v1345, %v4722
  %v4724 = vand.u32 %v4723, 4294901760
  %v4725 = vsub.f32 %v4723, %v4724
  %v4726 = vand.u32 %v4725, 4294901760
  %4727 = vmatmul.mubr.f32.gmra.mrb[0].mxu0 %v4726
  %v4728 = vpop.f32.mrb[0].mxu0
  %v4729 = vadd.f32 0.0, %v4728
  %v4730 = vpop.f32.mrb[0].mxu0
  %4731 = vmatprep.mubr.f32.mxu0 0.0
  %v4732 = vand.u32 %v1348, 4294901760
  %v4733 = vsub.f32 %v1348, %v4732
  %v4734 = vand.u32 %v4733, 4294901760
  %v4735 = vsub.f32 %v4733, %v4734
  %v4736 = vand.u32 %v4735, 4294901760
  %4737 = vmatmul.mubr.f32.gmra.mrb[0].mxu0 %v4736
  %v4738 = vpop.f32.mrb[0].mxu0
  %v4739 = vadd.f32 0.0, %v4738
  %v4740 = vpop.f32.mrb[0].mxu0
  %4741 = vmatprep.mubr.f32.mxu0 0.0
  %v4742 = vand.u32 %v1351, 4294901760
  %v4743 = vsub.f32 %v1351, %v4742
  %v4744 = vand.u32 %v4743, 4294901760
  %v4745 = vsub.f32 %v4743, %v4744
  %v4746 = vand.u32 %v4745, 4294901760
  %4747 = vmatmul.mubr.f32.gmra.mrb[0].mxu0 %v4746
  %v4748 = vpop.f32.mrb[0].mxu0
  %v4749 = vadd.f32 0.0, %v4748
  %v4750 = vpop.f32.mrb[0].mxu0
  %4751 = vmatprep.mubr.f32.mxu0 0.0
  %v4752 = vand.u32 %v1354, 4294901760
  %v4753 = vsub.f32 %v1354, %v4752
  %v4754 = vand.u32 %v4753, 4294901760
  %v4755 = vsub.f32 %v4753, %v4754
  %v4756 = vand.u32 %v4755, 4294901760
  %4757 = vmatmul.mubr.f32.gmra.mrb[0].mxu0 %v4756
  %v4758 = vpop.f32.mrb[0].mxu0
  %v4759 = vadd.f32 0.0, %v4758
  %v4760 = vpop.f32.mrb[0].mxu0
  %4761 = vmatprep.mubr.f32.mxu0 0.0
  %v4762 = vand.u32 %v1357, 4294901760
  %v4763 = vsub.f32 %v1357, %v4762
  %v4764 = vand.u32 %v4763, 4294901760
  %v4765 = vsub.f32 %v4763, %v4764
  %v4766 = vand.u32 %v4765, 4294901760
  %4767 = vmatmul.mubr.f32.gmra.mrb[0].mxu0 %v4766
  %v4768 = vpop.f32.mrb[0].mxu0
  %v4769 = vadd.f32 0.0, %v4768
  %v4770 = vpop.f32.mrb[0].mxu0
  %4771 = vmatprep.mubr.f32.mxu0 0.0
  %v4772 = vand.u32 %v1360, 4294901760
  %v4773 = vsub.f32 %v1360, %v4772
  %v4774 = vand.u32 %v4773, 4294901760
  %v4775 = vsub.f32 %v4773, %v4774
  %v4776 = vand.u32 %v4775, 4294901760
  %4777 = vmatmul.mubr.f32.gmra.mrb[0].mxu0 %v4776
  %v4778 = vpop.f32.mrb[0].mxu0
  %v4779 = vadd.f32 0.0, %v4778
  %v4780 = vpop.f32.mrb[0].mxu0
  %4781 = vmatprep.mubr.f32.mxu0 0.0
  %v4782 = vand.u32 %v1363, 4294901760
  %v4783 = vsub.f32 %v1363, %v4782
  %v4784 = vand.u32 %v4783, 4294901760
  %v4785 = vsub.f32 %v4783, %v4784
  %v4786 = vand.u32 %v4785, 4294901760
  %4787 = vmatmul.mubr.f32.gmra.mrb[0].mxu0 %v4786
  %v4788 = vpop.f32.mrb[0].mxu0
  %v4789 = vadd.f32 0.0, %v4788
  %v4790 = vpop.f32.mrb[0].mxu0
  %4791 = vmatprep.mubr.f32.mxu0 0.0
  %v4792 = vand.u32 %v1366, 4294901760
  %v4793 = vsub.f32 %v1366, %v4792
  %v4794 = vand.u32 %v4793, 4294901760
  %v4795 = vsub.f32 %v4793, %v4794
  %v4796 = vand.u32 %v4795, 4294901760
  %4797 = vmatmul.mubr.f32.gmra.mrb[0].mxu0 %v4796
  %v4798 = vpop.f32.mrb[0].mxu0
  %v4799 = vadd.f32 0.0, %v4798
  %v4800 = vpop.f32.mrb[0].mxu0
  %4801 = vmatprep.mubr.f32.mxu0 0.0
  %v4802 = vand.u32 %v1369, 4294901760
  %v4803 = vsub.f32 %v1369, %v4802
  %v4804 = vand.u32 %v4803, 4294901760
  %v4805 = vsub.f32 %v4803, %v4804
  %v4806 = vand.u32 %v4805, 4294901760
  %4807 = vmatmul.mubr.f32.gmra.mrb[0].mxu0 %v4806
  %v4808 = vpop.f32.mrb[0].mxu0
  %v4809 = vadd.f32 0.0, %v4808
  %v4810 = vpop.f32.mrb[0].mxu0
  %4811 = vmatprep.mubr.f32.mxu0 0.0
  %v4812 = vand.u32 %v1372, 4294901760
  %v4813 = vsub.f32 %v1372, %v4812
  %v4814 = vand.u32 %v4813, 4294901760
  %v4815 = vsub.f32 %v4813, %v4814
  %v4816 = vand.u32 %v4815, 4294901760
  %4817 = vmatmul.mubr.f32.gmra.mrb[0].mxu0 %v4816
  %v4818 = vpop.f32.mrb[0].mxu0
  %v4819 = vadd.f32 0.0, %v4818
  %v4820 = vpop.f32.mrb[0].mxu0
  %4821 = vmatprep.mubr.f32.mxu0 0.0
  %v4822 = vand.u32 %v1375, 4294901760
  %v4823 = vsub.f32 %v1375, %v4822
  %v4824 = vand.u32 %v4823, 4294901760
  %v4825 = vsub.f32 %v4823, %v4824
  %v4826 = vand.u32 %v4825, 4294901760
  %4827 = vmatmul.mubr.f32.gmra.mrb[0].mxu0 %v4826
  %v4828 = vpop.f32.mrb[0].mxu0
  %v4829 = vadd.f32 0.0, %v4828
  %v4830 = vpop.f32.mrb[0].mxu0
  %4831 = vmatprep.mubr.f32.mxu0 0.0
  %v4832 = vand.u32 %v1378, 4294901760
  %v4833 = vsub.f32 %v1378, %v4832
  %v4834 = vand.u32 %v4833, 4294901760
  %v4835 = vsub.f32 %v4833, %v4834
  %v4836 = vand.u32 %v4835, 4294901760
  %4837 = vmatmul.mubr.f32.gmra.mrb[0].mxu0 %v4836
  %v4838 = vpop.f32.mrb[0].mxu0
  %v4839 = vadd.f32 0.0, %v4838
  %v4840 = vpop.f32.mrb[0].mxu0
  %4841 = vmatprep.mubr.f32.mxu0 0.0
  %v4842 = vand.u32 %v1381, 4294901760
  %v4843 = vsub.f32 %v1381, %v4842
  %v4844 = vand.u32 %v4843, 4294901760
  %v4845 = vsub.f32 %v4843, %v4844
  %v4846 = vand.u32 %v4845, 4294901760
  %4847 = vmatmul.mubr.f32.gmra.mrb[0].mxu0 %v4846
  %v4848 = vpop.f32.mrb[0].mxu0
  %v4849 = vadd.f32 0.0, %v4848
  %v4850 = vpop.f32.mrb[0].mxu0
  %4851 = vmatprep.mubr.f32.mxu0 0.0
  %v4852 = vand.u32 %v1384, 4294901760
  %v4853 = vsub.f32 %v1384, %v4852
  %v4854 = vand.u32 %v4853, 4294901760
  %v4855 = vsub.f32 %v4853, %v4854
  %v4856 = vand.u32 %v4855, 4294901760
  %4857 = vmatmul.mubr.f32.gmra.mrb[0].mxu0 %v4856
  %v4858 = vpop.f32.mrb[0].mxu0
  %v4859 = vadd.f32 0.0, %v4858
  %v4860 = vpop.f32.mrb[0].mxu0
  %4861 = vmatprep.mubr.f32.mxu0 0.0
  %v4862 = vand.u32 %v1387, 4294901760
  %v4863 = vsub.f32 %v1387, %v4862
  %v4864 = vand.u32 %v4863, 4294901760
  %v4865 = vsub.f32 %v4863, %v4864
  %v4866 = vand.u32 %v4865, 4294901760
  %4867 = vmatmul.mubr.f32.gmra.mrb[0].mxu0 %v4866
  %v4868 = vpop.f32.mrb[0].mxu0
  %v4869 = vadd.f32 0.0, %v4868
  %v4870 = vpop.f32.mrb[0].mxu0
  %4871 = vdwg.mxu0
  %4872 = vmatprep.subr.mxu0 0.0
  %v4873 = vand.u32 %v1326, 4294901760
  %v4874 = vsub.f32 %v1326, %v4873
  %v4875 = vand.u32 %v4874, 4294901760
  %v4876 = vsub.f32 %v4874, %v4875
  %v4877 = vand.u32 %v4876, 4294901760
  %4878 = vmatpush1.msra.mxu0 %v4877
  %4879 = vmatprep.subr.mxu0 0.0
  %v4880 = vand.u32 %v1327, 4294901760
  %v4881 = vsub.f32 %v1327, %v4880
  %v4882 = vand.u32 %v4881, 4294901760
  %v4883 = vsub.f32 %v4881, %v4882
  %v4884 = vand.u32 %v4883, 4294901760
  %4885 = vmatpush1.msra.mxu0 %v4884
  %4886 = vmatprep.subr.mxu0 0.0
  %v4887 = vand.u32 %v1328, 4294901760
  %v4888 = vsub.f32 %v1328, %v4887
  %v4889 = vand.u32 %v4888, 4294901760
  %v4890 = vsub.f32 %v4888, %v4889
  %v4891 = vand.u32 %v4890, 4294901760
  %4892 = vmatpush1.msra.mxu0 %v4891
  %4893 = vmatprep.subr.mxu0 0.0
  %v4894 = vand.u32 %v1329, 4294901760
  %v4895 = vsub.f32 %v1329, %v4894
  %v4896 = vand.u32 %v4895, 4294901760
  %v4897 = vsub.f32 %v4895, %v4896
  %v4898 = vand.u32 %v4897, 4294901760
  %4899 = vmatpush1.msra.mxu0 %v4898
  %4900 = vmatprep.subr.mxu0 0.0
  %v4901 = vand.u32 %v1330, 4294901760
  %v4902 = vsub.f32 %v1330, %v4901
  %v4903 = vand.u32 %v4902, 4294901760
  %v4904 = vsub.f32 %v4902, %v4903
  %v4905 = vand.u32 %v4904, 4294901760
  %4906 = vmatpush1.msra.mxu0 %v4905
  %4907 = vmatprep.subr.mxu0 0.0
  %v4908 = vand.u32 %v1331, 4294901760
  %v4909 = vsub.f32 %v1331, %v4908
  %v4910 = vand.u32 %v4909, 4294901760
  %v4911 = vsub.f32 %v4909, %v4910
  %v4912 = vand.u32 %v4911, 4294901760
  %4913 = vmatpush1.msra.mxu0 %v4912
  %4914 = vmatprep.subr.mxu0 0.0
  %v4915 = vand.u32 %v1332, 4294901760
  %v4916 = vsub.f32 %v1332, %v4915
  %v4917 = vand.u32 %v4916, 4294901760
  %v4918 = vsub.f32 %v4916, %v4917
  %v4919 = vand.u32 %v4918, 4294901760
  %4920 = vmatpush1.msra.mxu0 %v4919
  %4921 = vmatprep.subr.mxu0 0.0
  %v4922 = vand.u32 %v1333, 4294901760
  %v4923 = vsub.f32 %v1333, %v4922
  %v4924 = vand.u32 %v4923, 4294901760
  %v4925 = vsub.f32 %v4923, %v4924
  %v4926 = vand.u32 %v4925, 4294901760
  %4927 = vmatpush1.msra.mxu0 %v4926
  %4928 = vmatprep.subr.mxu0 0.0
  %4929 = vmatpush1.msra.mxu0 0.0
  %4930 = vmatprep.subr.mxu0 0.0
  %4931 = vmatpush1.msra.mxu0 0.0
  %4932 = vmatprep.subr.mxu0 0.0
  %4933 = vmatpush1.msra.mxu0 0.0
  %4934 = vmatprep.subr.mxu0 0.0
  %4935 = vmatpush1.msra.mxu0 0.0
  %4936 = vmatprep.subr.mxu0 0.0
  %4937 = vmatpush1.msra.mxu0 0.0
  %4938 = vmatprep.subr.mxu0 0.0
  %4939 = vmatpush1.msra.mxu0 0.0
  %4940 = vmatprep.subr.mxu0 0.0
  %4941 = vmatpush1.msra.mxu0 0.0
  %4942 = vmatprep.subr.mxu0 0.0
  %4943 = vmatpush1.msra.mxu0 0.0
  %4944 = vmatprep.subr.mxu0 0.0
  %4945 = vmatpush1.msra.mxu0 0.0
  %4946 = vmatprep.subr.mxu0 0.0
  %4947 = vmatpush1.msra.mxu0 0.0
  %4948 = vmatprep.subr.mxu0 0.0
  %4949 = vmatpush1.msra.mxu0 0.0
  %4950 = vmatprep.subr.mxu0 0.0
  %4951 = vmatpush1.msra.mxu0 0.0
  %4952 = vmatprep.subr.mxu0 0.0
  %4953 = vmatpush1.msra.mxu0 0.0
  %4954 = vmatprep.subr.mxu0 0.0
  %4955 = vmatpush1.msra.mxu0 0.0
  %4956 = vmatprep.subr.mxu0 0.0
  %4957 = vmatpush1.msra.mxu0 0.0
  %4958 = vmatprep.subr.mxu0 0.0
  %4959 = vmatpush1.msra.mxu0 0.0
  %4960 = vmatprep.subr.mxu0 0.0
  %4961 = vmatpush1.msra.mxu0 0.0
  %4962 = vmatprep.subr.mxu0 0.0
  %4963 = vmatpush1.msra.mxu0 0.0
  %4964 = vmatprep.subr.mxu0 0.0
  %4965 = vmatpush1.msra.mxu0 0.0
  %4966 = vmatprep.subr.mxu0 0.0
  %4967 = vmatpush1.msra.mxu0 0.0
  %4968 = vmatprep.subr.mxu0 0.0
  %4969 = vmatpush1.msra.mxu0 0.0
  %4970 = vmatprep.subr.mxu0 0.0
  %4971 = vmatpush1.msra.mxu0 0.0
  %4972 = vmatprep.subr.mxu0 0.0
  %4973 = vmatpush1.msra.mxu0 0.0
  %4974 = vmatprep.subr.mxu0 0.0
  %4975 = vmatpush1.msra.mxu0 0.0
  %4976 = vmatprep.mubr.f32.mxu0 0.0
  %v4977 = vand.u32 %v1336, 4294901760
  %4978 = vmatmul.mubr.f32.gmra.mrb[0].mxu0 %v4977
  %v4979 = vpop.f32.mrb[0].mxu0
  %v4980 = vadd.f32 %v4699, %v4979
  %v4981 = vpop.f32.mrb[0].mxu0
  %4982 = vmatprep.mubr.f32.mxu0 0.0
  %v4983 = vand.u32 %v1339, 4294901760
  %4984 = vmatmul.mubr.f32.gmra.mrb[0].mxu0 %v4983
  %v4985 = vpop.f32.mrb[0].mxu0
  %v4986 = vadd.f32 %v4709, %v4985
  %v4987 = vpop.f32.mrb[0].mxu0
  %4988 = vmatprep.mubr.f32.mxu0 0.0
  %v4989 = vand.u32 %v1342, 4294901760
  %4990 = vmatmul.mubr.f32.gmra.mrb[0].mxu0 %v4989
  %v4991 = vpop.f32.mrb[0].mxu0
  %v4992 = vadd.f32 %v4719, %v4991
  %v4993 = vpop.f32.mrb[0].mxu0
  %4994 = vmatprep.mubr.f32.mxu0 0.0
  %v4995 = vand.u32 %v1345, 4294901760
  %4996 = vmatmul.mubr.f32.gmra.mrb[0].mxu0 %v4995
  %v4997 = vpop.f32.mrb[0].mxu0
  %v4998 = vadd.f32 %v4729, %v4997
  %v4999 = vpop.f32.mrb[0].mxu0
  %5000 = vmatprep.mubr.f32.mxu0 0.0
  %v5001 = vand.u32 %v1348, 4294901760
  %5002 = vmatmul.mubr.f32.gmra.mrb[0].mxu0 %v5001
  %v5003 = vpop.f32.mrb[0].mxu0
  %v5004 = vadd.f32 %v4739, %v5003
  %v5005 = vpop.f32.mrb[0].mxu0
  %5006 = vmatprep.mubr.f32.mxu0 0.0
  %v5007 = vand.u32 %v1351, 4294901760
  %5008 = vmatmul.mubr.f32.gmra.mrb[0].mxu0 %v5007
  %v5009 = vpop.f32.mrb[0].mxu0
  %v5010 = vadd.f32 %v4749, %v5009
  %v5011 = vpop.f32.mrb[0].mxu0
  %5012 = vmatprep.mubr.f32.mxu0 0.0
  %v5013 = vand.u32 %v1354, 4294901760
  %5014 = vmatmul.mubr.f32.gmra.mrb[0].mxu0 %v5013
  %v5015 = vpop.f32.mrb[0].mxu0
  %v5016 = vadd.f32 %v4759, %v5015
  %v5017 = vpop.f32.mrb[0].mxu0
  %5018 = vmatprep.mubr.f32.mxu0 0.0
  %v5019 = vand.u32 %v1357, 4294901760
  %5020 = vmatmul.mubr.f32.gmra.mrb[0].mxu0 %v5019
  %v5021 = vpop.f32.mrb[0].mxu0
  %v5022 = vadd.f32 %v4769, %v5021
  %v5023 = vpop.f32.mrb[0].mxu0
  %5024 = vmatprep.mubr.f32.mxu0 0.0
  %v5025 = vand.u32 %v1360, 4294901760
  %5026 = vmatmul.mubr.f32.gmra.mrb[0].mxu0 %v5025
  %v5027 = vpop.f32.mrb[0].mxu0
  %v5028 = vadd.f32 %v4779, %v5027
  %v5029 = vpop.f32.mrb[0].mxu0
  %5030 = vmatprep.mubr.f32.mxu0 0.0
  %v5031 = vand.u32 %v1363, 4294901760
  %5032 = vmatmul.mubr.f32.gmra.mrb[0].mxu0 %v5031
  %v5033 = vpop.f32.mrb[0].mxu0
  %v5034 = vadd.f32 %v4789, %v5033
  %v5035 = vpop.f32.mrb[0].mxu0
  %5036 = vmatprep.mubr.f32.mxu0 0.0
  %v5037 = vand.u32 %v1366, 4294901760
  %5038 = vmatmul.mubr.f32.gmra.mrb[0].mxu0 %v5037
  %v5039 = vpop.f32.mrb[0].mxu0
  %v5040 = vadd.f32 %v4799, %v5039
  %v5041 = vpop.f32.mrb[0].mxu0
  %5042 = vmatprep.mubr.f32.mxu0 0.0
  %v5043 = vand.u32 %v1369, 4294901760
  %5044 = vmatmul.mubr.f32.gmra.mrb[0].mxu0 %v5043
  %v5045 = vpop.f32.mrb[0].mxu0
  %v5046 = vadd.f32 %v4809, %v5045
  %v5047 = vpop.f32.mrb[0].mxu0
  %5048 = vmatprep.mubr.f32.mxu0 0.0
  %v5049 = vand.u32 %v1372, 4294901760
  %5050 = vmatmul.mubr.f32.gmra.mrb[0].mxu0 %v5049
  %v5051 = vpop.f32.mrb[0].mxu0
  %v5052 = vadd.f32 %v4819, %v5051
  %v5053 = vpop.f32.mrb[0].mxu0
  %5054 = vmatprep.mubr.f32.mxu0 0.0
  %v5055 = vand.u32 %v1375, 4294901760
  %5056 = vmatmul.mubr.f32.gmra.mrb[0].mxu0 %v5055
  %v5057 = vpop.f32.mrb[0].mxu0
  %v5058 = vadd.f32 %v4829, %v5057
  %v5059 = vpop.f32.mrb[0].mxu0
  %5060 = vmatprep.mubr.f32.mxu0 0.0
  %v5061 = vand.u32 %v1378, 4294901760
  %5062 = vmatmul.mubr.f32.gmra.mrb[0].mxu0 %v5061
  %v5063 = vpop.f32.mrb[0].mxu0
  %v5064 = vadd.f32 %v4839, %v5063
  %v5065 = vpop.f32.mrb[0].mxu0
  %5066 = vmatprep.mubr.f32.mxu0 0.0
  %v5067 = vand.u32 %v1381, 4294901760
  %5068 = vmatmul.mubr.f32.gmra.mrb[0].mxu0 %v5067
  %v5069 = vpop.f32.mrb[0].mxu0
  %v5070 = vadd.f32 %v4849, %v5069
  %v5071 = vpop.f32.mrb[0].mxu0
  %5072 = vmatprep.mubr.f32.mxu0 0.0
  %v5073 = vand.u32 %v1384, 4294901760
  %5074 = vmatmul.mubr.f32.gmra.mrb[0].mxu0 %v5073
  %v5075 = vpop.f32.mrb[0].mxu0
  %v5076 = vadd.f32 %v4859, %v5075
  %v5077 = vpop.f32.mrb[0].mxu0
  %5078 = vmatprep.mubr.f32.mxu0 0.0
  %v5079 = vand.u32 %v1387, 4294901760
  %5080 = vmatmul.mubr.f32.gmra.mrb[0].mxu0 %v5079
  %v5081 = vpop.f32.mrb[0].mxu0
  %v5082 = vadd.f32 %v4869, %v5081
  %v5083 = vpop.f32.mrb[0].mxu0
  %5084 = vdwg.mxu0
  %5085 = vmatprep.subr.mxu0 0.0
  %v5086 = vand.u32 %v1326, 4294901760
  %v5087 = vsub.f32 %v1326, %v5086
  %5088 = vmatpush1.msra.mxu0 %v5087
  %5089 = vmatprep.subr.mxu0 0.0
  %v5090 = vand.u32 %v1327, 4294901760
  %v5091 = vsub.f32 %v1327, %v5090
  %5092 = vmatpush1.msra.mxu0 %v5091
  %5093 = vmatprep.subr.mxu0 0.0
  %v5094 = vand.u32 %v1328, 4294901760
  %v5095 = vsub.f32 %v1328, %v5094
  %5096 = vmatpush1.msra.mxu0 %v5095
  %5097 = vmatprep.subr.mxu0 0.0
  %v5098 = vand.u32 %v1329, 4294901760
  %v5099 = vsub.f32 %v1329, %v5098
  %5100 = vmatpush1.msra.mxu0 %v5099
  %5101 = vmatprep.subr.mxu0 0.0
  %v5102 = vand.u32 %v1330, 4294901760
  %v5103 = vsub.f32 %v1330, %v5102
  %5104 = vmatpush1.msra.mxu0 %v5103
  %5105 = vmatprep.subr.mxu0 0.0
  %v5106 = vand.u32 %v1331, 4294901760
  %v5107 = vsub.f32 %v1331, %v5106
  %5108 = vmatpush1.msra.mxu0 %v5107
  %5109 = vmatprep.subr.mxu0 0.0
  %v5110 = vand.u32 %v1332, 4294901760
  %v5111 = vsub.f32 %v1332, %v5110
  %5112 = vmatpush1.msra.mxu0 %v5111
  %5113 = vmatprep.subr.mxu0 0.0
  %v5114 = vand.u32 %v1333, 4294901760
  %v5115 = vsub.f32 %v1333, %v5114
  %5116 = vmatpush1.msra.mxu0 %v5115
  %5117 = vmatprep.subr.mxu0 0.0
  %5118 = vmatpush1.msra.mxu0 0.0
  %5119 = vmatprep.subr.mxu0 0.0
  %5120 = vmatpush1.msra.mxu0 0.0
  %5121 = vmatprep.subr.mxu0 0.0
  %5122 = vmatpush1.msra.mxu0 0.0
  %5123 = vmatprep.subr.mxu0 0.0
  %5124 = vmatpush1.msra.mxu0 0.0
  %5125 = vmatprep.subr.mxu0 0.0
  %5126 = vmatpush1.msra.mxu0 0.0
  %5127 = vmatprep.subr.mxu0 0.0
  %5128 = vmatpush1.msra.mxu0 0.0
  %5129 = vmatprep.subr.mxu0 0.0
  %5130 = vmatpush1.msra.mxu0 0.0
  %5131 = vmatprep.subr.mxu0 0.0
  %5132 = vmatpush1.msra.mxu0 0.0
  %5133 = vmatprep.subr.mxu0 0.0
  %5134 = vmatpush1.msra.mxu0 0.0
  %5135 = vmatprep.subr.mxu0 0.0
  %5136 = vmatpush1.msra.mxu0 0.0
  %5137 = vmatprep.subr.mxu0 0.0
  %5138 = vmatpush1.msra.mxu0 0.0
  %5139 = vmatprep.subr.mxu0 0.0
  %5140 = vmatpush1.msra.mxu0 0.0
  %5141 = vmatprep.subr.mxu0 0.0
  %5142 = vmatpush1.msra.mxu0 0.0
  %5143 = vmatprep.subr.mxu0 0.0
  %5144 = vmatpush1.msra.mxu0 0.0
  %5145 = vmatprep.subr.mxu0 0.0
  %5146 = vmatpush1.msra.mxu0 0.0
  %5147 = vmatprep.subr.mxu0 0.0
  %5148 = vmatpush1.msra.mxu0 0.0
  %5149 = vmatprep.subr.mxu0 0.0
  %5150 = vmatpush1.msra.mxu0 0.0
  %5151 = vmatprep.subr.mxu0 0.0
  %5152 = vmatpush1.msra.mxu0 0.0
  %5153 = vmatprep.subr.mxu0 0.0
  %5154 = vmatpush1.msra.mxu0 0.0
  %5155 = vmatprep.subr.mxu0 0.0
  %5156 = vmatpush1.msra.mxu0 0.0
  %5157 = vmatprep.subr.mxu0 0.0
  %5158 = vmatpush1.msra.mxu0 0.0
  %5159 = vmatprep.subr.mxu0 0.0
  %5160 = vmatpush1.msra.mxu0 0.0
  %5161 = vmatprep.subr.mxu0 0.0
  %5162 = vmatpush1.msra.mxu0 0.0
  %5163 = vmatprep.subr.mxu0 0.0
  %5164 = vmatpush1.msra.mxu0 0.0
  %5165 = vmatprep.mubr.f32.mxu0 0.0
  %v5166 = vand.u32 %v1336, 4294901760
  %v5167 = vsub.f32 %v1336, %v5166
  %5168 = vmatmul.mubr.f32.gmra.mrb[0].mxu0 %v5167
  %v5169 = vpop.f32.mrb[0].mxu0
  %v5170 = vadd.f32 %v4980, %v5169
  %v5171 = vpop.f32.mrb[0].mxu0
  %5172 = vmatprep.mubr.f32.mxu0 0.0
  %v5173 = vand.u32 %v1339, 4294901760
  %v5174 = vsub.f32 %v1339, %v5173
  %5175 = vmatmul.mubr.f32.gmra.mrb[0].mxu0 %v5174
  %v5176 = vpop.f32.mrb[0].mxu0
  %v5177 = vadd.f32 %v4986, %v5176
  %v5178 = vpop.f32.mrb[0].mxu0
  %5179 = vmatprep.mubr.f32.mxu0 0.0
  %v5180 = vand.u32 %v1342, 4294901760
  %v5181 = vsub.f32 %v1342, %v5180
  %5182 = vmatmul.mubr.f32.gmra.mrb[0].mxu0 %v5181
  %v5183 = vpop.f32.mrb[0].mxu0
  %v5184 = vadd.f32 %v4992, %v5183
  %v5185 = vpop.f32.mrb[0].mxu0
  %5186 = vmatprep.mubr.f32.mxu0 0.0
  %v5187 = vand.u32 %v1345, 4294901760
  %v5188 = vsub.f32 %v1345, %v5187
  %5189 = vmatmul.mubr.f32.gmra.mrb[0].mxu0 %v5188
  %v5190 = vpop.f32.mrb[0].mxu0
  %v5191 = vadd.f32 %v4998, %v5190
  %v5192 = vpop.f32.mrb[0].mxu0
  %5193 = vmatprep.mubr.f32.mxu0 0.0
  %v5194 = vand.u32 %v1348, 4294901760
  %v5195 = vsub.f32 %v1348, %v5194
  %5196 = vmatmul.mubr.f32.gmra.mrb[0].mxu0 %v5195
  %v5197 = vpop.f32.mrb[0].mxu0
  %v5198 = vadd.f32 %v5004, %v5197
  %v5199 = vpop.f32.mrb[0].mxu0
  %5200 = vmatprep.mubr.f32.mxu0 0.0
  %v5201 = vand.u32 %v1351, 4294901760
  %v5202 = vsub.f32 %v1351, %v5201
  %5203 = vmatmul.mubr.f32.gmra.mrb[0].mxu0 %v5202
  %v5204 = vpop.f32.mrb[0].mxu0
  %v5205 = vadd.f32 %v5010, %v5204
  %v5206 = vpop.f32.mrb[0].mxu0
  %5207 = vmatprep.mubr.f32.mxu0 0.0
  %v5208 = vand.u32 %v1354, 4294901760
  %v5209 = vsub.f32 %v1354, %v5208
  %5210 = vmatmul.mubr.f32.gmra.mrb[0].mxu0 %v5209
  %v5211 = vpop.f32.mrb[0].mxu0
  %v5212 = vadd.f32 %v5016, %v5211
  %v5213 = vpop.f32.mrb[0].mxu0
  %5214 = vmatprep.mubr.f32.mxu0 0.0
  %v5215 = vand.u32 %v1357, 4294901760
  %v5216 = vsub.f32 %v1357, %v5215
  %5217 = vmatmul.mubr.f32.gmra.mrb[0].mxu0 %v5216
  %v5218 = vpop.f32.mrb[0].mxu0
  %v5219 = vadd.f32 %v5022, %v5218
  %v5220 = vpop.f32.mrb[0].mxu0
  %5221 = vmatprep.mubr.f32.mxu0 0.0
  %v5222 = vand.u32 %v1360, 4294901760
  %v5223 = vsub.f32 %v1360, %v5222
  %5224 = vmatmul.mubr.f32.gmra.mrb[0].mxu0 %v5223
  %v5225 = vpop.f32.mrb[0].mxu0
  %v5226 = vadd.f32 %v5028, %v5225
  %v5227 = vpop.f32.mrb[0].mxu0
  %5228 = vmatprep.mubr.f32.mxu0 0.0
  %v5229 = vand.u32 %v1363, 4294901760
  %v5230 = vsub.f32 %v1363, %v5229
  %5231 = vmatmul.mubr.f32.gmra.mrb[0].mxu0 %v5230
  %v5232 = vpop.f32.mrb[0].mxu0
  %v5233 = vadd.f32 %v5034, %v5232
  %v5234 = vpop.f32.mrb[0].mxu0
  %5235 = vmatprep.mubr.f32.mxu0 0.0
  %v5236 = vand.u32 %v1366, 4294901760
  %v5237 = vsub.f32 %v1366, %v5236
  %5238 = vmatmul.mubr.f32.gmra.mrb[0].mxu0 %v5237
  %v5239 = vpop.f32.mrb[0].mxu0
  %v5240 = vadd.f32 %v5040, %v5239
  %v5241 = vpop.f32.mrb[0].mxu0
  %5242 = vmatprep.mubr.f32.mxu0 0.0
  %v5243 = vand.u32 %v1369, 4294901760
  %v5244 = vsub.f32 %v1369, %v5243
  %5245 = vmatmul.mubr.f32.gmra.mrb[0].mxu0 %v5244
  %v5246 = vpop.f32.mrb[0].mxu0
  %v5247 = vadd.f32 %v5046, %v5246
  %v5248 = vpop.f32.mrb[0].mxu0
  %5249 = vmatprep.mubr.f32.mxu0 0.0
  %v5250 = vand.u32 %v1372, 4294901760
  %v5251 = vsub.f32 %v1372, %v5250
  %5252 = vmatmul.mubr.f32.gmra.mrb[0].mxu0 %v5251
  %v5253 = vpop.f32.mrb[0].mxu0
  %v5254 = vadd.f32 %v5052, %v5253
  %v5255 = vpop.f32.mrb[0].mxu0
  %5256 = vmatprep.mubr.f32.mxu0 0.0
  %v5257 = vand.u32 %v1375, 4294901760
  %v5258 = vsub.f32 %v1375, %v5257
  %5259 = vmatmul.mubr.f32.gmra.mrb[0].mxu0 %v5258
  %v5260 = vpop.f32.mrb[0].mxu0
  %v5261 = vadd.f32 %v5058, %v5260
  %v5262 = vpop.f32.mrb[0].mxu0
  %5263 = vmatprep.mubr.f32.mxu0 0.0
  %v5264 = vand.u32 %v1378, 4294901760
  %v5265 = vsub.f32 %v1378, %v5264
  %5266 = vmatmul.mubr.f32.gmra.mrb[0].mxu0 %v5265
  %v5267 = vpop.f32.mrb[0].mxu0
  %v5268 = vadd.f32 %v5064, %v5267
  %v5269 = vpop.f32.mrb[0].mxu0
  %5270 = vmatprep.mubr.f32.mxu0 0.0
  %v5271 = vand.u32 %v1381, 4294901760
  %v5272 = vsub.f32 %v1381, %v5271
  %5273 = vmatmul.mubr.f32.gmra.mrb[0].mxu0 %v5272
  %v5274 = vpop.f32.mrb[0].mxu0
  %v5275 = vadd.f32 %v5070, %v5274
  %v5276 = vpop.f32.mrb[0].mxu0
  %5277 = vmatprep.mubr.f32.mxu0 0.0
  %v5278 = vand.u32 %v1384, 4294901760
  %v5279 = vsub.f32 %v1384, %v5278
  %5280 = vmatmul.mubr.f32.gmra.mrb[0].mxu0 %v5279
  %v5281 = vpop.f32.mrb[0].mxu0
  %v5282 = vadd.f32 %v5076, %v5281
  %v5283 = vpop.f32.mrb[0].mxu0
  %5284 = vmatprep.mubr.f32.mxu0 0.0
  %v5285 = vand.u32 %v1387, 4294901760
  %v5286 = vsub.f32 %v1387, %v5285
  %5287 = vmatmul.mubr.f32.gmra.mrb[0].mxu0 %v5286
  %v5288 = vpop.f32.mrb[0].mxu0
  %v5289 = vadd.f32 %v5082, %v5288
  %v5290 = vpop.f32.mrb[0].mxu0
  %5291 = vdwg.mxu0
  %5292 = vmatprep.subr.mxu0 0.0
  %v5293 = vand.u32 %v1326, 4294901760
  %5294 = vmatpush1.msra.mxu0 %v5293
  %5295 = vmatprep.subr.mxu0 0.0
  %v5296 = vand.u32 %v1327, 4294901760
  %5297 = vmatpush1.msra.mxu0 %v5296
  %5298 = vmatprep.subr.mxu0 0.0
  %v5299 = vand.u32 %v1328, 4294901760
  %5300 = vmatpush1.msra.mxu0 %v5299
  %5301 = vmatprep.subr.mxu0 0.0
  %v5302 = vand.u32 %v1329, 4294901760
  %5303 = vmatpush1.msra.mxu0 %v5302
  %5304 = vmatprep.subr.mxu0 0.0
  %v5305 = vand.u32 %v1330, 4294901760
  %5306 = vmatpush1.msra.mxu0 %v5305
  %5307 = vmatprep.subr.mxu0 0.0
  %v5308 = vand.u32 %v1331, 4294901760
  %5309 = vmatpush1.msra.mxu0 %v5308
  %5310 = vmatprep.subr.mxu0 0.0
  %v5311 = vand.u32 %v1332, 4294901760
  %5312 = vmatpush1.msra.mxu0 %v5311
  %5313 = vmatprep.subr.mxu0 0.0
  %v5314 = vand.u32 %v1333, 4294901760
  %5315 = vmatpush1.msra.mxu0 %v5314
  %5316 = vmatprep.subr.mxu0 0.0
  %5317 = vmatpush1.msra.mxu0 0.0
  %5318 = vmatprep.subr.mxu0 0.0
  %5319 = vmatpush1.msra.mxu0 0.0
  %5320 = vmatprep.subr.mxu0 0.0
  %5321 = vmatpush1.msra.mxu0 0.0
  %5322 = vmatprep.subr.mxu0 0.0
  %5323 = vmatpush1.msra.mxu0 0.0
  %5324 = vmatprep.subr.mxu0 0.0
  %5325 = vmatpush1.msra.mxu0 0.0
  %5326 = vmatprep.subr.mxu0 0.0
  %5327 = vmatpush1.msra.mxu0 0.0
  %5328 = vmatprep.subr.mxu0 0.0
  %5329 = vmatpush1.msra.mxu0 0.0
  %5330 = vmatprep.subr.mxu0 0.0
  %5331 = vmatpush1.msra.mxu0 0.0
  %5332 = vmatprep.subr.mxu0 0.0
  %5333 = vmatpush1.msra.mxu0 0.0
  %5334 = vmatprep.subr.mxu0 0.0
  %5335 = vmatpush1.msra.mxu0 0.0
  %5336 = vmatprep.subr.mxu0 0.0
  %5337 = vmatpush1.msra.mxu0 0.0
  %5338 = vmatprep.subr.mxu0 0.0
  %5339 = vmatpush1.msra.mxu0 0.0
  %5340 = vmatprep.subr.mxu0 0.0
  %5341 = vmatpush1.msra.mxu0 0.0
  %5342 = vmatprep.subr.mxu0 0.0
  %5343 = vmatpush1.msra.mxu0 0.0
  %5344 = vmatprep.subr.mxu0 0.0
  %5345 = vmatpush1.msra.mxu0 0.0
  %5346 = vmatprep.subr.mxu0 0.0
  %5347 = vmatpush1.msra.mxu0 0.0
  %5348 = vmatprep.subr.mxu0 0.0
  %5349 = vmatpush1.msra.mxu0 0.0
  %5350 = vmatprep.subr.mxu0 0.0
  %5351 = vmatpush1.msra.mxu0 0.0
  %5352 = vmatprep.subr.mxu0 0.0
  %5353 = vmatpush1.msra.mxu0 0.0
  %5354 = vmatprep.subr.mxu0 0.0
  %5355 = vmatpush1.msra.mxu0 0.0
  %5356 = vmatprep.subr.mxu0 0.0
  %5357 = vmatpush1.msra.mxu0 0.0
  %5358 = vmatprep.subr.mxu0 0.0
  %5359 = vmatpush1.msra.mxu0 0.0
  %5360 = vmatprep.subr.mxu0 0.0
  %5361 = vmatpush1.msra.mxu0 0.0
  %5362 = vmatprep.subr.mxu0 0.0
  %5363 = vmatpush1.msra.mxu0 0.0
  %5364 = vmatprep.mubr.f32.mxu0 0.0
  %v5365 = vand.u32 %v1336, 4294901760
  %v5366 = vsub.f32 %v1336, %v5365
  %v5367 = vand.u32 %v5366, 4294901760
  %5368 = vmatmul.mubr.f32.gmra.mrb[0].mxu0 %v5367
  %v5369 = vpop.f32.mrb[0].mxu0
  %v5370 = vadd.f32 %v5170, %v5369
  %v5371 = vpop.f32.mrb[0].mxu0
  %5372 = vmatprep.mubr.f32.mxu0 0.0
  %v5373 = vand.u32 %v1339, 4294901760
  %v5374 = vsub.f32 %v1339, %v5373
  %v5375 = vand.u32 %v5374, 4294901760
  %5376 = vmatmul.mubr.f32.gmra.mrb[0].mxu0 %v5375
  %v5377 = vpop.f32.mrb[0].mxu0
  %v5378 = vadd.f32 %v5177, %v5377
  %v5379 = vpop.f32.mrb[0].mxu0
  %5380 = vmatprep.mubr.f32.mxu0 0.0
  %v5381 = vand.u32 %v1342, 4294901760
  %v5382 = vsub.f32 %v1342, %v5381
  %v5383 = vand.u32 %v5382, 4294901760
  %5384 = vmatmul.mubr.f32.gmra.mrb[0].mxu0 %v5383
  %v5385 = vpop.f32.mrb[0].mxu0
  %v5386 = vadd.f32 %v5184, %v5385
  %v5387 = vpop.f32.mrb[0].mxu0
  %5388 = vmatprep.mubr.f32.mxu0 0.0
  %v5389 = vand.u32 %v1345, 4294901760
  %v5390 = vsub.f32 %v1345, %v5389
  %v5391 = vand.u32 %v5390, 4294901760
  %5392 = vmatmul.mubr.f32.gmra.mrb[0].mxu0 %v5391
  %v5393 = vpop.f32.mrb[0].mxu0
  %v5394 = vadd.f32 %v5191, %v5393
  %v5395 = vpop.f32.mrb[0].mxu0
  %5396 = vmatprep.mubr.f32.mxu0 0.0
  %v5397 = vand.u32 %v1348, 4294901760
  %v5398 = vsub.f32 %v1348, %v5397
  %v5399 = vand.u32 %v5398, 4294901760
  %5400 = vmatmul.mubr.f32.gmra.mrb[0].mxu0 %v5399
  %v5401 = vpop.f32.mrb[0].mxu0
  %v5402 = vadd.f32 %v5198, %v5401
  %v5403 = vpop.f32.mrb[0].mxu0
  %5404 = vmatprep.mubr.f32.mxu0 0.0
  %v5405 = vand.u32 %v1351, 4294901760
  %v5406 = vsub.f32 %v1351, %v5405
  %v5407 = vand.u32 %v5406, 4294901760
  %5408 = vmatmul.mubr.f32.gmra.mrb[0].mxu0 %v5407
  %v5409 = vpop.f32.mrb[0].mxu0
  %v5410 = vadd.f32 %v5205, %v5409
  %v5411 = vpop.f32.mrb[0].mxu0
  %5412 = vmatprep.mubr.f32.mxu0 0.0
  %v5413 = vand.u32 %v1354, 4294901760
  %v5414 = vsub.f32 %v1354, %v5413
  %v5415 = vand.u32 %v5414, 4294901760
  %5416 = vmatmul.mubr.f32.gmra.mrb[0].mxu0 %v5415
  %v5417 = vpop.f32.mrb[0].mxu0
  %v5418 = vadd.f32 %v5212, %v5417
  %v5419 = vpop.f32.mrb[0].mxu0
  %5420 = vmatprep.mubr.f32.mxu0 0.0
  %v5421 = vand.u32 %v1357, 4294901760
  %v5422 = vsub.f32 %v1357, %v5421
  %v5423 = vand.u32 %v5422, 4294901760
  %5424 = vmatmul.mubr.f32.gmra.mrb[0].mxu0 %v5423
  %v5425 = vpop.f32.mrb[0].mxu0
  %v5426 = vadd.f32 %v5219, %v5425
  %v5427 = vpop.f32.mrb[0].mxu0
  %5428 = vmatprep.mubr.f32.mxu0 0.0
  %v5429 = vand.u32 %v1360, 4294901760
  %v5430 = vsub.f32 %v1360, %v5429
  %v5431 = vand.u32 %v5430, 4294901760
  %5432 = vmatmul.mubr.f32.gmra.mrb[0].mxu0 %v5431
  %v5433 = vpop.f32.mrb[0].mxu0
  %v5434 = vadd.f32 %v5226, %v5433
  %v5435 = vpop.f32.mrb[0].mxu0
  %5436 = vmatprep.mubr.f32.mxu0 0.0
  %v5437 = vand.u32 %v1363, 4294901760
  %v5438 = vsub.f32 %v1363, %v5437
  %v5439 = vand.u32 %v5438, 4294901760
  %5440 = vmatmul.mubr.f32.gmra.mrb[0].mxu0 %v5439
  %v5441 = vpop.f32.mrb[0].mxu0
  %v5442 = vadd.f32 %v5233, %v5441
  %v5443 = vpop.f32.mrb[0].mxu0
  %5444 = vmatprep.mubr.f32.mxu0 0.0
  %v5445 = vand.u32 %v1366, 4294901760
  %v5446 = vsub.f32 %v1366, %v5445
  %v5447 = vand.u32 %v5446, 4294901760
  %5448 = vmatmul.mubr.f32.gmra.mrb[0].mxu0 %v5447
  %v5449 = vpop.f32.mrb[0].mxu0
  %v5450 = vadd.f32 %v5240, %v5449
  %v5451 = vpop.f32.mrb[0].mxu0
  %5452 = vmatprep.mubr.f32.mxu0 0.0
  %v5453 = vand.u32 %v1369, 4294901760
  %v5454 = vsub.f32 %v1369, %v5453
  %v5455 = vand.u32 %v5454, 4294901760
  %5456 = vmatmul.mubr.f32.gmra.mrb[0].mxu0 %v5455
  %v5457 = vpop.f32.mrb[0].mxu0
  %v5458 = vadd.f32 %v5247, %v5457
  %v5459 = vpop.f32.mrb[0].mxu0
  %5460 = vmatprep.mubr.f32.mxu0 0.0
  %v5461 = vand.u32 %v1372, 4294901760
  %v5462 = vsub.f32 %v1372, %v5461
  %v5463 = vand.u32 %v5462, 4294901760
  %5464 = vmatmul.mubr.f32.gmra.mrb[0].mxu0 %v5463
  %v5465 = vpop.f32.mrb[0].mxu0
  %v5466 = vadd.f32 %v5254, %v5465
  %v5467 = vpop.f32.mrb[0].mxu0
  %5468 = vmatprep.mubr.f32.mxu0 0.0
  %v5469 = vand.u32 %v1375, 4294901760
  %v5470 = vsub.f32 %v1375, %v5469
  %v5471 = vand.u32 %v5470, 4294901760
  %5472 = vmatmul.mubr.f32.gmra.mrb[0].mxu0 %v5471
  %v5473 = vpop.f32.mrb[0].mxu0
  %v5474 = vadd.f32 %v5261, %v5473
  %v5475 = vpop.f32.mrb[0].mxu0
  %5476 = vmatprep.mubr.f32.mxu0 0.0
  %v5477 = vand.u32 %v1378, 4294901760
  %v5478 = vsub.f32 %v1378, %v5477
  %v5479 = vand.u32 %v5478, 4294901760
  %5480 = vmatmul.mubr.f32.gmra.mrb[0].mxu0 %v5479
  %v5481 = vpop.f32.mrb[0].mxu0
  %v5482 = vadd.f32 %v5268, %v5481
  %v5483 = vpop.f32.mrb[0].mxu0
  %5484 = vmatprep.mubr.f32.mxu0 0.0
  %v5485 = vand.u32 %v1381, 4294901760
  %v5486 = vsub.f32 %v1381, %v5485
  %v5487 = vand.u32 %v5486, 4294901760
  %5488 = vmatmul.mubr.f32.gmra.mrb[0].mxu0 %v5487
  %v5489 = vpop.f32.mrb[0].mxu0
  %v5490 = vadd.f32 %v5275, %v5489
  %v5491 = vpop.f32.mrb[0].mxu0
  %5492 = vmatprep.mubr.f32.mxu0 0.0
  %v5493 = vand.u32 %v1384, 4294901760
  %v5494 = vsub.f32 %v1384, %v5493
  %v5495 = vand.u32 %v5494, 4294901760
  %5496 = vmatmul.mubr.f32.gmra.mrb[0].mxu0 %v5495
  %v5497 = vpop.f32.mrb[0].mxu0
  %v5498 = vadd.f32 %v5282, %v5497
  %v5499 = vpop.f32.mrb[0].mxu0
  %5500 = vmatprep.mubr.f32.mxu0 0.0
  %v5501 = vand.u32 %v1387, 4294901760
  %v5502 = vsub.f32 %v1387, %v5501
  %v5503 = vand.u32 %v5502, 4294901760
  %5504 = vmatmul.mubr.f32.gmra.mrb[0].mxu0 %v5503
  %v5505 = vpop.f32.mrb[0].mxu0
  %v5506 = vadd.f32 %v5289, %v5505
  %v5507 = vpop.f32.mrb[0].mxu0
  %5508 = vdwg.mxu0
  %5509 = vmatprep.subr.mxu0 0.0
  %v5510 = vand.u32 %v1326, 4294901760
  %v5511 = vsub.f32 %v1326, %v5510
  %v5512 = vand.u32 %v5511, 4294901760
  %5513 = vmatpush1.msra.mxu0 %v5512
  %5514 = vmatprep.subr.mxu0 0.0
  %v5515 = vand.u32 %v1327, 4294901760
  %v5516 = vsub.f32 %v1327, %v5515
  %v5517 = vand.u32 %v5516, 4294901760
  %5518 = vmatpush1.msra.mxu0 %v5517
  %5519 = vmatprep.subr.mxu0 0.0
  %v5520 = vand.u32 %v1328, 4294901760
  %v5521 = vsub.f32 %v1328, %v5520
  %v5522 = vand.u32 %v5521, 4294901760
  %5523 = vmatpush1.msra.mxu0 %v5522
  %5524 = vmatprep.subr.mxu0 0.0
  %v5525 = vand.u32 %v1329, 4294901760
  %v5526 = vsub.f32 %v1329, %v5525
  %v5527 = vand.u32 %v5526, 4294901760
  %5528 = vmatpush1.msra.mxu0 %v5527
  %5529 = vmatprep.subr.mxu0 0.0
  %v5530 = vand.u32 %v1330, 4294901760
  %v5531 = vsub.f32 %v1330, %v5530
  %v5532 = vand.u32 %v5531, 4294901760
  %5533 = vmatpush1.msra.mxu0 %v5532
  %5534 = vmatprep.subr.mxu0 0.0
  %v5535 = vand.u32 %v1331, 4294901760
  %v5536 = vsub.f32 %v1331, %v5535
  %v5537 = vand.u32 %v5536, 4294901760
  %5538 = vmatpush1.msra.mxu0 %v5537
  %5539 = vmatprep.subr.mxu0 0.0
  %v5540 = vand.u32 %v1332, 4294901760
  %v5541 = vsub.f32 %v1332, %v5540
  %v5542 = vand.u32 %v5541, 4294901760
  %5543 = vmatpush1.msra.mxu0 %v5542
  %5544 = vmatprep.subr.mxu0 0.0
  %v5545 = vand.u32 %v1333, 4294901760
  %v5546 = vsub.f32 %v1333, %v5545
  %v5547 = vand.u32 %v5546, 4294901760
  %5548 = vmatpush1.msra.mxu0 %v5547
  %5549 = vmatprep.subr.mxu0 0.0
  %5550 = vmatpush1.msra.mxu0 0.0
  %5551 = vmatprep.subr.mxu0 0.0
  %5552 = vmatpush1.msra.mxu0 0.0
  %5553 = vmatprep.subr.mxu0 0.0
  %5554 = vmatpush1.msra.mxu0 0.0
  %5555 = vmatprep.subr.mxu0 0.0
  %5556 = vmatpush1.msra.mxu0 0.0
  %5557 = vmatprep.subr.mxu0 0.0
  %5558 = vmatpush1.msra.mxu0 0.0
  %5559 = vmatprep.subr.mxu0 0.0
  %5560 = vmatpush1.msra.mxu0 0.0
  %5561 = vmatprep.subr.mxu0 0.0
  %5562 = vmatpush1.msra.mxu0 0.0
  %5563 = vmatprep.subr.mxu0 0.0
  %5564 = vmatpush1.msra.mxu0 0.0
  %5565 = vmatprep.subr.mxu0 0.0
  %5566 = vmatpush1.msra.mxu0 0.0
  %5567 = vmatprep.subr.mxu0 0.0
  %5568 = vmatpush1.msra.mxu0 0.0
  %5569 = vmatprep.subr.mxu0 0.0
  %5570 = vmatpush1.msra.mxu0 0.0
  %5571 = vmatprep.subr.mxu0 0.0
  %5572 = vmatpush1.msra.mxu0 0.0
  %5573 = vmatprep.subr.mxu0 0.0
  %5574 = vmatpush1.msra.mxu0 0.0
  %5575 = vmatprep.subr.mxu0 0.0
  %5576 = vmatpush1.msra.mxu0 0.0
  %5577 = vmatprep.subr.mxu0 0.0
  %5578 = vmatpush1.msra.mxu0 0.0
  %5579 = vmatprep.subr.mxu0 0.0
  %5580 = vmatpush1.msra.mxu0 0.0
  %5581 = vmatprep.subr.mxu0 0.0
  %5582 = vmatpush1.msra.mxu0 0.0
  %5583 = vmatprep.subr.mxu0 0.0
  %5584 = vmatpush1.msra.mxu0 0.0
  %5585 = vmatprep.subr.mxu0 0.0
  %5586 = vmatpush1.msra.mxu0 0.0
  %5587 = vmatprep.subr.mxu0 0.0
  %5588 = vmatpush1.msra.mxu0 0.0
  %5589 = vmatprep.subr.mxu0 0.0
  %5590 = vmatpush1.msra.mxu0 0.0
  %5591 = vmatprep.subr.mxu0 0.0
  %5592 = vmatpush1.msra.mxu0 0.0
  %5593 = vmatprep.subr.mxu0 0.0
  %5594 = vmatpush1.msra.mxu0 0.0
  %5595 = vmatprep.subr.mxu0 0.0
  %5596 = vmatpush1.msra.mxu0 0.0
  %5597 = vmatprep.mubr.f32.mxu0 0.0
  %v5598 = vand.u32 %v1336, 4294901760
  %5599 = vmatmul.mubr.f32.gmra.mrb[0].mxu0 %v5598
  %v5600 = vpop.f32.mrb[0].mxu0
  %v5601 = vadd.f32 %v5370, %v5600
  %v5602 = vpop.f32.mrb[0].mxu0
  %5603 = vmatprep.mubr.f32.mxu0 0.0
  %v5604 = vand.u32 %v1339, 4294901760
  %5605 = vmatmul.mubr.f32.gmra.mrb[0].mxu0 %v5604
  %v5606 = vpop.f32.mrb[0].mxu0
  %v5607 = vadd.f32 %v5378, %v5606
  %v5608 = vpop.f32.mrb[0].mxu0
  %5609 = vmatprep.mubr.f32.mxu0 0.0
  %v5610 = vand.u32 %v1342, 4294901760
  %5611 = vmatmul.mubr.f32.gmra.mrb[0].mxu0 %v5610
  %v5612 = vpop.f32.mrb[0].mxu0
  %v5613 = vadd.f32 %v5386, %v5612
  %v5614 = vpop.f32.mrb[0].mxu0
  %5615 = vmatprep.mubr.f32.mxu0 0.0
  %v5616 = vand.u32 %v1345, 4294901760
  %5617 = vmatmul.mubr.f32.gmra.mrb[0].mxu0 %v5616
  %v5618 = vpop.f32.mrb[0].mxu0
  %v5619 = vadd.f32 %v5394, %v5618
  %v5620 = vpop.f32.mrb[0].mxu0
  %5621 = vmatprep.mubr.f32.mxu0 0.0
  %v5622 = vand.u32 %v1348, 4294901760
  %5623 = vmatmul.mubr.f32.gmra.mrb[0].mxu0 %v5622
  %v5624 = vpop.f32.mrb[0].mxu0
  %v5625 = vadd.f32 %v5402, %v5624
  %v5626 = vpop.f32.mrb[0].mxu0
  %5627 = vmatprep.mubr.f32.mxu0 0.0
  %v5628 = vand.u32 %v1351, 4294901760
  %5629 = vmatmul.mubr.f32.gmra.mrb[0].mxu0 %v5628
  %v5630 = vpop.f32.mrb[0].mxu0
  %v5631 = vadd.f32 %v5410, %v5630
  %v5632 = vpop.f32.mrb[0].mxu0
  %5633 = vmatprep.mubr.f32.mxu0 0.0
  %v5634 = vand.u32 %v1354, 4294901760
  %5635 = vmatmul.mubr.f32.gmra.mrb[0].mxu0 %v5634
  %v5636 = vpop.f32.mrb[0].mxu0
  %v5637 = vadd.f32 %v5418, %v5636
  %v5638 = vpop.f32.mrb[0].mxu0
  %5639 = vmatprep.mubr.f32.mxu0 0.0
  %v5640 = vand.u32 %v1357, 4294901760
  %5641 = vmatmul.mubr.f32.gmra.mrb[0].mxu0 %v5640
  %v5642 = vpop.f32.mrb[0].mxu0
  %v5643 = vadd.f32 %v5426, %v5642
  %v5644 = vpop.f32.mrb[0].mxu0
  %5645 = vmatprep.mubr.f32.mxu0 0.0
  %v5646 = vand.u32 %v1360, 4294901760
  %5647 = vmatmul.mubr.f32.gmra.mrb[0].mxu0 %v5646
  %v5648 = vpop.f32.mrb[0].mxu0
  %v5649 = vadd.f32 %v5434, %v5648
  %v5650 = vpop.f32.mrb[0].mxu0
  %5651 = vmatprep.mubr.f32.mxu0 0.0
  %v5652 = vand.u32 %v1363, 4294901760
  %5653 = vmatmul.mubr.f32.gmra.mrb[0].mxu0 %v5652
  %v5654 = vpop.f32.mrb[0].mxu0
  %v5655 = vadd.f32 %v5442, %v5654
  %v5656 = vpop.f32.mrb[0].mxu0
  %5657 = vmatprep.mubr.f32.mxu0 0.0
  %v5658 = vand.u32 %v1366, 4294901760
  %5659 = vmatmul.mubr.f32.gmra.mrb[0].mxu0 %v5658
  %v5660 = vpop.f32.mrb[0].mxu0
  %v5661 = vadd.f32 %v5450, %v5660
  %v5662 = vpop.f32.mrb[0].mxu0
  %5663 = vmatprep.mubr.f32.mxu0 0.0
  %v5664 = vand.u32 %v1369, 4294901760
  %5665 = vmatmul.mubr.f32.gmra.mrb[0].mxu0 %v5664
  %v5666 = vpop.f32.mrb[0].mxu0
  %v5667 = vadd.f32 %v5458, %v5666
  %v5668 = vpop.f32.mrb[0].mxu0
  %5669 = vmatprep.mubr.f32.mxu0 0.0
  %v5670 = vand.u32 %v1372, 4294901760
  %5671 = vmatmul.mubr.f32.gmra.mrb[0].mxu0 %v5670
  %v5672 = vpop.f32.mrb[0].mxu0
  %v5673 = vadd.f32 %v5466, %v5672
  %v5674 = vpop.f32.mrb[0].mxu0
  %5675 = vmatprep.mubr.f32.mxu0 0.0
  %v5676 = vand.u32 %v1375, 4294901760
  %5677 = vmatmul.mubr.f32.gmra.mrb[0].mxu0 %v5676
  %v5678 = vpop.f32.mrb[0].mxu0
  %v5679 = vadd.f32 %v5474, %v5678
  %v5680 = vpop.f32.mrb[0].mxu0
  %5681 = vmatprep.mubr.f32.mxu0 0.0
  %v5682 = vand.u32 %v1378, 4294901760
  %5683 = vmatmul.mubr.f32.gmra.mrb[0].mxu0 %v5682
  %v5684 = vpop.f32.mrb[0].mxu0
  %v5685 = vadd.f32 %v5482, %v5684
  %v5686 = vpop.f32.mrb[0].mxu0
  %5687 = vmatprep.mubr.f32.mxu0 0.0
  %v5688 = vand.u32 %v1381, 4294901760
  %5689 = vmatmul.mubr.f32.gmra.mrb[0].mxu0 %v5688
  %v5690 = vpop.f32.mrb[0].mxu0
  %v5691 = vadd.f32 %v5490, %v5690
  %v5692 = vpop.f32.mrb[0].mxu0
  %5693 = vmatprep.mubr.f32.mxu0 0.0
  %v5694 = vand.u32 %v1384, 4294901760
  %5695 = vmatmul.mubr.f32.gmra.mrb[0].mxu0 %v5694
  %v5696 = vpop.f32.mrb[0].mxu0
  %v5697 = vadd.f32 %v5498, %v5696
  %v5698 = vpop.f32.mrb[0].mxu0
  %5699 = vmatprep.mubr.f32.mxu0 0.0
  %v5700 = vand.u32 %v1387, 4294901760
  %5701 = vmatmul.mubr.f32.gmra.mrb[0].mxu0 %v5700
  %v5702 = vpop.f32.mrb[0].mxu0
  %v5703 = vadd.f32 %v5506, %v5702
  %v5704 = vpop.f32.mrb[0].mxu0
  %5705 = vdwg.mxu0
  %5706 = vmatprep.subr.mxu0 0.0
  %v5707 = vand.u32 %v1326, 4294901760
  %5708 = vmatpush1.msra.mxu0 %v5707
  %5709 = vmatprep.subr.mxu0 0.0
  %v5710 = vand.u32 %v1327, 4294901760
  %5711 = vmatpush1.msra.mxu0 %v5710
  %5712 = vmatprep.subr.mxu0 0.0
  %v5713 = vand.u32 %v1328, 4294901760
  %5714 = vmatpush1.msra.mxu0 %v5713
  %5715 = vmatprep.subr.mxu0 0.0
  %v5716 = vand.u32 %v1329, 4294901760
  %5717 = vmatpush1.msra.mxu0 %v5716
  %5718 = vmatprep.subr.mxu0 0.0
  %v5719 = vand.u32 %v1330, 4294901760
  %5720 = vmatpush1.msra.mxu0 %v5719
  %5721 = vmatprep.subr.mxu0 0.0
  %v5722 = vand.u32 %v1331, 4294901760
  %5723 = vmatpush1.msra.mxu0 %v5722
  %5724 = vmatprep.subr.mxu0 0.0
  %v5725 = vand.u32 %v1332, 4294901760
  %5726 = vmatpush1.msra.mxu0 %v5725
  %5727 = vmatprep.subr.mxu0 0.0
  %v5728 = vand.u32 %v1333, 4294901760
  %5729 = vmatpush1.msra.mxu0 %v5728
  %5730 = vmatprep.subr.mxu0 0.0
  %5731 = vmatpush1.msra.mxu0 0.0
  %5732 = vmatprep.subr.mxu0 0.0
  %5733 = vmatpush1.msra.mxu0 0.0
  %5734 = vmatprep.subr.mxu0 0.0
  %5735 = vmatpush1.msra.mxu0 0.0
  %5736 = vmatprep.subr.mxu0 0.0
  %5737 = vmatpush1.msra.mxu0 0.0
  %5738 = vmatprep.subr.mxu0 0.0
  %5739 = vmatpush1.msra.mxu0 0.0
  %5740 = vmatprep.subr.mxu0 0.0
  %5741 = vmatpush1.msra.mxu0 0.0
  %5742 = vmatprep.subr.mxu0 0.0
  %5743 = vmatpush1.msra.mxu0 0.0
  %5744 = vmatprep.subr.mxu0 0.0
  %5745 = vmatpush1.msra.mxu0 0.0
  %5746 = vmatprep.subr.mxu0 0.0
  %5747 = vmatpush1.msra.mxu0 0.0
  %5748 = vmatprep.subr.mxu0 0.0
  %5749 = vmatpush1.msra.mxu0 0.0
  %5750 = vmatprep.subr.mxu0 0.0
  %5751 = vmatpush1.msra.mxu0 0.0
  %5752 = vmatprep.subr.mxu0 0.0
  %5753 = vmatpush1.msra.mxu0 0.0
  %5754 = vmatprep.subr.mxu0 0.0
  %5755 = vmatpush1.msra.mxu0 0.0
  %5756 = vmatprep.subr.mxu0 0.0
  %5757 = vmatpush1.msra.mxu0 0.0
  %5758 = vmatprep.subr.mxu0 0.0
  %5759 = vmatpush1.msra.mxu0 0.0
  %5760 = vmatprep.subr.mxu0 0.0
  %5761 = vmatpush1.msra.mxu0 0.0
  %5762 = vmatprep.subr.mxu0 0.0
  %5763 = vmatpush1.msra.mxu0 0.0
  %5764 = vmatprep.subr.mxu0 0.0
  %5765 = vmatpush1.msra.mxu0 0.0
  %5766 = vmatprep.subr.mxu0 0.0
  %5767 = vmatpush1.msra.mxu0 0.0
  %5768 = vmatprep.subr.mxu0 0.0
  %5769 = vmatpush1.msra.mxu0 0.0
  %5770 = vmatprep.subr.mxu0 0.0
  %5771 = vmatpush1.msra.mxu0 0.0
  %5772 = vmatprep.subr.mxu0 0.0
  %5773 = vmatpush1.msra.mxu0 0.0
  %5774 = vmatprep.subr.mxu0 0.0
  %5775 = vmatpush1.msra.mxu0 0.0
  %5776 = vmatprep.subr.mxu0 0.0
  %5777 = vmatpush1.msra.mxu0 0.0
  %5778 = vmatprep.mubr.f32.mxu0 0.0
  %v5779 = vand.u32 %v1336, 4294901760
  %5780 = vmatmul.mubr.f32.gmra.mrb[0].mxu0 %v5779
  %v5781 = vpop.f32.mrb[0].mxu0
  %v5782 = vadd.f32 %v5601, %v5781
  %v5783 = vpop.f32.mrb[0].mxu0
  %5784 = vmatprep.mubr.f32.mxu0 0.0
  %v5785 = vand.u32 %v1339, 4294901760
  %5786 = vmatmul.mubr.f32.gmra.mrb[0].mxu0 %v5785
  %v5787 = vpop.f32.mrb[0].mxu0
  %v5788 = vadd.f32 %v5607, %v5787
  %v5789 = vpop.f32.mrb[0].mxu0
  %5790 = vmatprep.mubr.f32.mxu0 0.0
  %v5791 = vand.u32 %v1342, 4294901760
  %5792 = vmatmul.mubr.f32.gmra.mrb[0].mxu0 %v5791
  %v5793 = vpop.f32.mrb[0].mxu0
  %v5794 = vadd.f32 %v5613, %v5793
  %v5795 = vpop.f32.mrb[0].mxu0
  %5796 = vmatprep.mubr.f32.mxu0 0.0
  %v5797 = vand.u32 %v1345, 4294901760
  %5798 = vmatmul.mubr.f32.gmra.mrb[0].mxu0 %v5797
  %v5799 = vpop.f32.mrb[0].mxu0
  %v5800 = vadd.f32 %v5619, %v5799
  %v5801 = vpop.f32.mrb[0].mxu0
  %5802 = vmatprep.mubr.f32.mxu0 0.0
  %v5803 = vand.u32 %v1348, 4294901760
  %5804 = vmatmul.mubr.f32.gmra.mrb[0].mxu0 %v5803
  %v5805 = vpop.f32.mrb[0].mxu0
  %v5806 = vadd.f32 %v5625, %v5805
  %v5807 = vpop.f32.mrb[0].mxu0
  %5808 = vmatprep.mubr.f32.mxu0 0.0
  %v5809 = vand.u32 %v1351, 4294901760
  %5810 = vmatmul.mubr.f32.gmra.mrb[0].mxu0 %v5809
  %v5811 = vpop.f32.mrb[0].mxu0
  %v5812 = vadd.f32 %v5631, %v5811
  %v5813 = vpop.f32.mrb[0].mxu0
  %5814 = vmatprep.mubr.f32.mxu0 0.0
  %v5815 = vand.u32 %v1354, 4294901760
  %5816 = vmatmul.mubr.f32.gmra.mrb[0].mxu0 %v5815
  %v5817 = vpop.f32.mrb[0].mxu0
  %v5818 = vadd.f32 %v5637, %v5817
  %v5819 = vpop.f32.mrb[0].mxu0
  %5820 = vmatprep.mubr.f32.mxu0 0.0
  %v5821 = vand.u32 %v1357, 4294901760
  %5822 = vmatmul.mubr.f32.gmra.mrb[0].mxu0 %v5821
  %v5823 = vpop.f32.mrb[0].mxu0
  %v5824 = vadd.f32 %v5643, %v5823
  %v5825 = vpop.f32.mrb[0].mxu0
  %5826 = vmatprep.mubr.f32.mxu0 0.0
  %v5827 = vand.u32 %v1360, 4294901760
  %5828 = vmatmul.mubr.f32.gmra.mrb[0].mxu0 %v5827
  %v5829 = vpop.f32.mrb[0].mxu0
  %v5830 = vadd.f32 %v5649, %v5829
  %v5831 = vpop.f32.mrb[0].mxu0
  %5832 = vmatprep.mubr.f32.mxu0 0.0
  %v5833 = vand.u32 %v1363, 4294901760
  %5834 = vmatmul.mubr.f32.gmra.mrb[0].mxu0 %v5833
  %v5835 = vpop.f32.mrb[0].mxu0
  %v5836 = vadd.f32 %v5655, %v5835
  %v5837 = vpop.f32.mrb[0].mxu0
  %5838 = vmatprep.mubr.f32.mxu0 0.0
  %v5839 = vand.u32 %v1366, 4294901760
  %5840 = vmatmul.mubr.f32.gmra.mrb[0].mxu0 %v5839
  %v5841 = vpop.f32.mrb[0].mxu0
  %v5842 = vadd.f32 %v5661, %v5841
  %v5843 = vpop.f32.mrb[0].mxu0
  %5844 = vmatprep.mubr.f32.mxu0 0.0
  %v5845 = vand.u32 %v1369, 4294901760
  %5846 = vmatmul.mubr.f32.gmra.mrb[0].mxu0 %v5845
  %v5847 = vpop.f32.mrb[0].mxu0
  %v5848 = vadd.f32 %v5667, %v5847
  %v5849 = vpop.f32.mrb[0].mxu0
  %5850 = vmatprep.mubr.f32.mxu0 0.0
  %v5851 = vand.u32 %v1372, 4294901760
  %5852 = vmatmul.mubr.f32.gmra.mrb[0].mxu0 %v5851
  %v5853 = vpop.f32.mrb[0].mxu0
  %v5854 = vadd.f32 %v5673, %v5853
  %v5855 = vpop.f32.mrb[0].mxu0
  %5856 = vmatprep.mubr.f32.mxu0 0.0
  %v5857 = vand.u32 %v1375, 4294901760
  %5858 = vmatmul.mubr.f32.gmra.mrb[0].mxu0 %v5857
  %v5859 = vpop.f32.mrb[0].mxu0
  %v5860 = vadd.f32 %v5679, %v5859
  %v5861 = vpop.f32.mrb[0].mxu0
  %5862 = vmatprep.mubr.f32.mxu0 0.0
  %v5863 = vand.u32 %v1378, 4294901760
  %5864 = vmatmul.mubr.f32.gmra.mrb[0].mxu0 %v5863
  %v5865 = vpop.f32.mrb[0].mxu0
  %v5866 = vadd.f32 %v5685, %v5865
  %v5867 = vpop.f32.mrb[0].mxu0
  %5868 = vmatprep.mubr.f32.mxu0 0.0
  %v5869 = vand.u32 %v1381, 4294901760
  %5870 = vmatmul.mubr.f32.gmra.mrb[0].mxu0 %v5869
  %v5871 = vpop.f32.mrb[0].mxu0
  %v5872 = vadd.f32 %v5691, %v5871
  %v5873 = vpop.f32.mrb[0].mxu0
  %5874 = vmatprep.mubr.f32.mxu0 0.0
  %v5875 = vand.u32 %v1384, 4294901760
  %5876 = vmatmul.mubr.f32.gmra.mrb[0].mxu0 %v5875
  %v5877 = vpop.f32.mrb[0].mxu0
  %v5878 = vadd.f32 %v5697, %v5877
  %v5879 = vpop.f32.mrb[0].mxu0
  %5880 = vmatprep.mubr.f32.mxu0 0.0
  %v5881 = vand.u32 %v1387, 4294901760
  %5882 = vmatmul.mubr.f32.gmra.mrb[0].mxu0 %v5881
  %v5883 = vpop.f32.mrb[0].mxu0
  %v5884 = vadd.f32 %v5703, %v5883
  %v5885 = vpop.f32.mrb[0].mxu0
  %5886 = vdwg.mxu0
  %v5887 = vmax.f32 %v5782, %v5794
  %v5888 = vmax.f32 %v5788, %v5800
  %v5889 = vmax.f32 %v5887, %v5806
  %v5890 = vmax.f32 %v5888, %v5812
  %v5891 = vmax.f32 %v5889, %v5818
  %v5892 = vmax.f32 %v5890, %v5824
  %v5893 = vmax.f32 %v5891, %v5830
  %v5894 = vmax.f32 %v5892, %v5836
  %v5895 = vmax.f32 %v5893, %v5842
  %v5896 = vmax.f32 %v5894, %v5848
  %v5897 = vmax.f32 %v5895, %v5854
  %v5898 = vmax.f32 %v5896, %v5860
  %v5899 = vmax.f32 %v5897, %v5866
  %v5900 = vmax.f32 %v5898, %v5872
  %v5901 = vmax.f32 %v5899, %v5878
  %v5902 = vmax.f32 %v5900, %v5884
  %v5904 = vsel %vm2673, %v5901, 0
  %v5907 = vsel %vm2673, %v5902, 0
  %v5909 = vand.u32 %v50, 4294901760
  %5910 = vmatprep.subr.mxu0 %v5909
  %v5911 = vand.u32 %v49, 4294901760
  %5912 = vmatpush1.msra.mxu0 %v5911
  %v5913 = vand.u32 %v55, 4294901760
  %5914 = vmatprep.subr.mxu0 %v5913
  %v5915 = vand.u32 %v54, 4294901760
  %5916 = vmatpush1.msra.mxu0 %v5915
  %v5917 = vand.u32 %v60, 4294901760
  %5918 = vmatprep.subr.mxu0 %v5917
  %v5919 = vand.u32 %v59, 4294901760
  %5920 = vmatpush1.msra.mxu0 %v5919
  %v5921 = vand.u32 %v65, 4294901760
  %5922 = vmatprep.subr.mxu0 %v5921
  %v5923 = vand.u32 %v64, 4294901760
  %5924 = vmatpush1.msra.mxu0 %v5923
  %5925 = vmatprep.subr.mxu0 0.0
  %5926 = vmatpush1.msra.mxu0 0.0
  %5927 = vmatprep.subr.mxu0 0.0
  %5928 = vmatpush1.msra.mxu0 0.0
  %5929 = vmatprep.subr.mxu0 0.0
  %5930 = vmatpush1.msra.mxu0 0.0
  %5931 = vmatprep.subr.mxu0 0.0
  %5932 = vmatpush1.msra.mxu0 0.0
  %5933 = vmatprep.subr.mxu0 0.0
  %5934 = vmatpush1.msra.mxu0 0.0
  %5935 = vmatprep.subr.mxu0 0.0
  %5936 = vmatpush1.msra.mxu0 0.0
  %5937 = vmatprep.subr.mxu0 0.0
  %5938 = vmatpush1.msra.mxu0 0.0
  %5939 = vmatprep.subr.mxu0 0.0
  %5940 = vmatpush1.msra.mxu0 0.0
  %5941 = vmatprep.subr.mxu0 0.0
  %5942 = vmatpush1.msra.mxu0 0.0
  %5943 = vmatprep.subr.mxu0 0.0
  %5944 = vmatpush1.msra.mxu0 0.0
  %5945 = vmatprep.subr.mxu0 0.0
  %5946 = vmatpush1.msra.mxu0 0.0
  %5947 = vmatprep.subr.mxu0 0.0
  %5948 = vmatpush1.msra.mxu0 0.0
  %5949 = vmatprep.subr.mxu0 0.0
  %5950 = vmatpush1.msra.mxu0 0.0
  %5951 = vmatprep.subr.mxu0 0.0
  %5952 = vmatpush1.msra.mxu0 0.0
  %5953 = vmatprep.subr.mxu0 0.0
  %5954 = vmatpush1.msra.mxu0 0.0
  %5955 = vmatprep.subr.mxu0 0.0
  %5956 = vmatpush1.msra.mxu0 0.0
  %5957 = vmatprep.subr.mxu0 0.0
  %5958 = vmatpush1.msra.mxu0 0.0
  %5959 = vmatprep.subr.mxu0 0.0
  %5960 = vmatpush1.msra.mxu0 0.0
  %5961 = vmatprep.subr.mxu0 0.0
  %5962 = vmatpush1.msra.mxu0 0.0
  %5963 = vmatprep.subr.mxu0 0.0
  %5964 = vmatpush1.msra.mxu0 0.0
  %5965 = vmatprep.subr.mxu0 0.0
  %5966 = vmatpush1.msra.mxu0 0.0
  %5967 = vmatprep.subr.mxu0 0.0
  %5968 = vmatpush1.msra.mxu0 0.0
  %5969 = vmatprep.subr.mxu0 0.0
  %5970 = vmatpush1.msra.mxu0 0.0
  %5971 = vmatprep.subr.mxu0 0.0
  %5972 = vmatpush1.msra.mxu0 0.0
  %5973 = vmatprep.subr.mxu0 0.0
  %5974 = vmatpush1.msra.mxu0 0.0
  %5975 = vmatprep.subr.mxu0 0.0
  %5976 = vmatpush1.msra.mxu0 0.0
  %5977 = vmatprep.subr.mxu0 0.0
  %5978 = vmatpush1.msra.mxu0 0.0
  %5979 = vmatprep.subr.mxu0 0.0
  %5980 = vmatpush1.msra.mxu0 0.0
  %5981 = vmatprep.mubr.f32.mxu0 0.0
  %v5982 = vand.u32 %v5904, 4294901760
  %v5983 = vsub.f32 %v5904, %v5982
  %v5984 = vand.u32 %v5983, 4294901760
  %v5985 = vsub.f32 %v5983, %v5984
  %v5986 = vand.u32 %v5985, 4294901760
  %5987 = vmatmul.mubr.f32.gmra.mrb[0].mxu0 %v5986
  %v5988 = vpop.f32.mrb[0].mxu0
  %v5989 = vadd.f32 0.0, %v5988
  %v5990 = vpop.f32.mrb[0].mxu0
  %v5991 = vadd.f32 0.0, %v5990
  %5992 = vmatprep.mubr.f32.mxu0 0.0
  %v5993 = vand.u32 %v5907, 4294901760
  %v5994 = vsub.f32 %v5907, %v5993
  %v5995 = vand.u32 %v5994, 4294901760
  %v5996 = vsub.f32 %v5994, %v5995
  %v5997 = vand.u32 %v5996, 4294901760
  %5998 = vmatmul.mubr.f32.gmra.mrb[0].mxu0 %v5997
  %v5999 = vpop.f32.mrb[0].mxu0
  %v6000 = vpop.f32.mrb[0].mxu0
  %v6001 = vadd.f32 0.0, %v6000
  %6002 = vdwg.mxu0
  %v6003 = vand.u32 %v50, 4294901760
  %v6004 = vsub.f32 %v50, %v6003
  %v6005 = vand.u32 %v6004, 4294901760
  %v6006 = vsub.f32 %v6004, %v6005
  %v6007 = vand.u32 %v6006, 4294901760
  %6008 = vmatprep.subr.mxu0 %v6007
  %v6009 = vand.u32 %v49, 4294901760
  %v6010 = vsub.f32 %v49, %v6009
  %v6011 = vand.u32 %v6010, 4294901760
  %v6012 = vsub.f32 %v6010, %v6011
  %v6013 = vand.u32 %v6012, 4294901760
  %6014 = vmatpush1.msra.mxu0 %v6013
  %v6015 = vand.u32 %v55, 4294901760
  %v6016 = vsub.f32 %v55, %v6015
  %v6017 = vand.u32 %v6016, 4294901760
  %v6018 = vsub.f32 %v6016, %v6017
  %v6019 = vand.u32 %v6018, 4294901760
  %6020 = vmatprep.subr.mxu0 %v6019
  %v6021 = vand.u32 %v54, 4294901760
  %v6022 = vsub.f32 %v54, %v6021
  %v6023 = vand.u32 %v6022, 4294901760
  %v6024 = vsub.f32 %v6022, %v6023
  %v6025 = vand.u32 %v6024, 4294901760
  %6026 = vmatpush1.msra.mxu0 %v6025
  %v6027 = vand.u32 %v60, 4294901760
  %v6028 = vsub.f32 %v60, %v6027
  %v6029 = vand.u32 %v6028, 4294901760
  %v6030 = vsub.f32 %v6028, %v6029
  %v6031 = vand.u32 %v6030, 4294901760
  %6032 = vmatprep.subr.mxu0 %v6031
  %v6033 = vand.u32 %v59, 4294901760
  %v6034 = vsub.f32 %v59, %v6033
  %v6035 = vand.u32 %v6034, 4294901760
  %v6036 = vsub.f32 %v6034, %v6035
  %v6037 = vand.u32 %v6036, 4294901760
  %6038 = vmatpush1.msra.mxu0 %v6037
  %v6039 = vand.u32 %v65, 4294901760
  %v6040 = vsub.f32 %v65, %v6039
  %v6041 = vand.u32 %v6040, 4294901760
  %v6042 = vsub.f32 %v6040, %v6041
  %v6043 = vand.u32 %v6042, 4294901760
  %6044 = vmatprep.subr.mxu0 %v6043
  %v6045 = vand.u32 %v64, 4294901760
  %v6046 = vsub.f32 %v64, %v6045
  %v6047 = vand.u32 %v6046, 4294901760
  %v6048 = vsub.f32 %v6046, %v6047
  %v6049 = vand.u32 %v6048, 4294901760
  %6050 = vmatpush1.msra.mxu0 %v6049
  %6051 = vmatprep.subr.mxu0 0.0
  %6052 = vmatpush1.msra.mxu0 0.0
  %6053 = vmatprep.subr.mxu0 0.0
  %6054 = vmatpush1.msra.mxu0 0.0
  %6055 = vmatprep.subr.mxu0 0.0
  %6056 = vmatpush1.msra.mxu0 0.0
  %6057 = vmatprep.subr.mxu0 0.0
  %6058 = vmatpush1.msra.mxu0 0.0
  %6059 = vmatprep.subr.mxu0 0.0
  %6060 = vmatpush1.msra.mxu0 0.0
  %6061 = vmatprep.subr.mxu0 0.0
  %6062 = vmatpush1.msra.mxu0 0.0
  %6063 = vmatprep.subr.mxu0 0.0
  %6064 = vmatpush1.msra.mxu0 0.0
  %6065 = vmatprep.subr.mxu0 0.0
  %6066 = vmatpush1.msra.mxu0 0.0
  %6067 = vmatprep.subr.mxu0 0.0
  %6068 = vmatpush1.msra.mxu0 0.0
  %6069 = vmatprep.subr.mxu0 0.0
  %6070 = vmatpush1.msra.mxu0 0.0
  %6071 = vmatprep.subr.mxu0 0.0
  %6072 = vmatpush1.msra.mxu0 0.0
  %6073 = vmatprep.subr.mxu0 0.0
  %6074 = vmatpush1.msra.mxu0 0.0
  %6075 = vmatprep.subr.mxu0 0.0
  %6076 = vmatpush1.msra.mxu0 0.0
  %6077 = vmatprep.subr.mxu0 0.0
  %6078 = vmatpush1.msra.mxu0 0.0
  %6079 = vmatprep.subr.mxu0 0.0
  %6080 = vmatpush1.msra.mxu0 0.0
  %6081 = vmatprep.subr.mxu0 0.0
  %6082 = vmatpush1.msra.mxu0 0.0
  %6083 = vmatprep.subr.mxu0 0.0
  %6084 = vmatpush1.msra.mxu0 0.0
  %6085 = vmatprep.subr.mxu0 0.0
  %6086 = vmatpush1.msra.mxu0 0.0
  %6087 = vmatprep.subr.mxu0 0.0
  %6088 = vmatpush1.msra.mxu0 0.0
  %6089 = vmatprep.subr.mxu0 0.0
  %6090 = vmatpush1.msra.mxu0 0.0
  %6091 = vmatprep.subr.mxu0 0.0
  %6092 = vmatpush1.msra.mxu0 0.0
  %6093 = vmatprep.subr.mxu0 0.0
  %6094 = vmatpush1.msra.mxu0 0.0
  %6095 = vmatprep.subr.mxu0 0.0
  %6096 = vmatpush1.msra.mxu0 0.0
  %6097 = vmatprep.subr.mxu0 0.0
  %6098 = vmatpush1.msra.mxu0 0.0
  %6099 = vmatprep.subr.mxu0 0.0
  %6100 = vmatpush1.msra.mxu0 0.0
  %6101 = vmatprep.subr.mxu0 0.0
  %6102 = vmatpush1.msra.mxu0 0.0
  %6103 = vmatprep.subr.mxu0 0.0
  %6104 = vmatpush1.msra.mxu0 0.0
  %6105 = vmatprep.subr.mxu0 0.0
  %6106 = vmatpush1.msra.mxu0 0.0
  %6107 = vmatprep.mubr.f32.mxu0 0.0
  %v6108 = vand.u32 %v5904, 4294901760
  %6109 = vmatmul.mubr.f32.gmra.mrb[0].mxu0 %v6108
  %v6110 = vpop.f32.mrb[0].mxu0
  %v6111 = vadd.f32 %v5989, %v6110
  %v6112 = vpop.f32.mrb[0].mxu0
  %v6113 = vadd.f32 %v5991, %v6112
  %6114 = vmatprep.mubr.f32.mxu0 0.0
  %v6115 = vand.u32 %v5907, 4294901760
  %6116 = vmatmul.mubr.f32.gmra.mrb[0].mxu0 %v6115
  %v6117 = vpop.f32.mrb[0].mxu0
  %v6118 = vpop.f32.mrb[0].mxu0
  %v6119 = vadd.f32 %v6001, %v6118
  %6120 = vdwg.mxu0
  %v6121 = vand.u32 %v50, 4294901760
  %v6122 = vsub.f32 %v50, %v6121
  %6123 = vmatprep.subr.mxu0 %v6122
  %v6124 = vand.u32 %v49, 4294901760
  %v6125 = vsub.f32 %v49, %v6124
  %6126 = vmatpush1.msra.mxu0 %v6125
  %v6127 = vand.u32 %v55, 4294901760
  %v6128 = vsub.f32 %v55, %v6127
  %6129 = vmatprep.subr.mxu0 %v6128
  %v6130 = vand.u32 %v54, 4294901760
  %v6131 = vsub.f32 %v54, %v6130
  %6132 = vmatpush1.msra.mxu0 %v6131
  %v6133 = vand.u32 %v60, 4294901760
  %v6134 = vsub.f32 %v60, %v6133
  %6135 = vmatprep.subr.mxu0 %v6134
  %v6136 = vand.u32 %v59, 4294901760
  %v6137 = vsub.f32 %v59, %v6136
  %6138 = vmatpush1.msra.mxu0 %v6137
  %v6139 = vand.u32 %v65, 4294901760
  %v6140 = vsub.f32 %v65, %v6139
  %6141 = vmatprep.subr.mxu0 %v6140
  %v6142 = vand.u32 %v64, 4294901760
  %v6143 = vsub.f32 %v64, %v6142
  %6144 = vmatpush1.msra.mxu0 %v6143
  %6145 = vmatprep.subr.mxu0 0.0
  %6146 = vmatpush1.msra.mxu0 0.0
  %6147 = vmatprep.subr.mxu0 0.0
  %6148 = vmatpush1.msra.mxu0 0.0
  %6149 = vmatprep.subr.mxu0 0.0
  %6150 = vmatpush1.msra.mxu0 0.0
  %6151 = vmatprep.subr.mxu0 0.0
  %6152 = vmatpush1.msra.mxu0 0.0
  %6153 = vmatprep.subr.mxu0 0.0
  %6154 = vmatpush1.msra.mxu0 0.0
  %6155 = vmatprep.subr.mxu0 0.0
  %6156 = vmatpush1.msra.mxu0 0.0
  %6157 = vmatprep.subr.mxu0 0.0
  %6158 = vmatpush1.msra.mxu0 0.0
  %6159 = vmatprep.subr.mxu0 0.0
  %6160 = vmatpush1.msra.mxu0 0.0
  %6161 = vmatprep.subr.mxu0 0.0
  %6162 = vmatpush1.msra.mxu0 0.0
  %6163 = vmatprep.subr.mxu0 0.0
  %6164 = vmatpush1.msra.mxu0 0.0
  %6165 = vmatprep.subr.mxu0 0.0
  %6166 = vmatpush1.msra.mxu0 0.0
  %6167 = vmatprep.subr.mxu0 0.0
  %6168 = vmatpush1.msra.mxu0 0.0
  %6169 = vmatprep.subr.mxu0 0.0
  %6170 = vmatpush1.msra.mxu0 0.0
  %6171 = vmatprep.subr.mxu0 0.0
  %6172 = vmatpush1.msra.mxu0 0.0
  %6173 = vmatprep.subr.mxu0 0.0
  %6174 = vmatpush1.msra.mxu0 0.0
  %6175 = vmatprep.subr.mxu0 0.0
  %6176 = vmatpush1.msra.mxu0 0.0
  %6177 = vmatprep.subr.mxu0 0.0
  %6178 = vmatpush1.msra.mxu0 0.0
  %6179 = vmatprep.subr.mxu0 0.0
  %6180 = vmatpush1.msra.mxu0 0.0
  %6181 = vmatprep.subr.mxu0 0.0
  %6182 = vmatpush1.msra.mxu0 0.0
  %6183 = vmatprep.subr.mxu0 0.0
  %6184 = vmatpush1.msra.mxu0 0.0
  %6185 = vmatprep.subr.mxu0 0.0
  %6186 = vmatpush1.msra.mxu0 0.0
  %6187 = vmatprep.subr.mxu0 0.0
  %6188 = vmatpush1.msra.mxu0 0.0
  %6189 = vmatprep.subr.mxu0 0.0
  %6190 = vmatpush1.msra.mxu0 0.0
  %6191 = vmatprep.subr.mxu0 0.0
  %6192 = vmatpush1.msra.mxu0 0.0
  %6193 = vmatprep.subr.mxu0 0.0
  %6194 = vmatpush1.msra.mxu0 0.0
  %6195 = vmatprep.subr.mxu0 0.0
  %6196 = vmatpush1.msra.mxu0 0.0
  %6197 = vmatprep.subr.mxu0 0.0
  %6198 = vmatpush1.msra.mxu0 0.0
  %6199 = vmatprep.subr.mxu0 0.0
  %6200 = vmatpush1.msra.mxu0 0.0
  %6201 = vmatprep.mubr.f32.mxu0 0.0
  %v6202 = vand.u32 %v5904, 4294901760
  %v6203 = vsub.f32 %v5904, %v6202
  %6204 = vmatmul.mubr.f32.gmra.mrb[0].mxu0 %v6203
  %v6205 = vpop.f32.mrb[0].mxu0
  %v6206 = vadd.f32 %v6111, %v6205
  %v6207 = vpop.f32.mrb[0].mxu0
  %v6208 = vadd.f32 %v6113, %v6207
  %6209 = vmatprep.mubr.f32.mxu0 0.0
  %v6210 = vand.u32 %v5907, 4294901760
  %v6211 = vsub.f32 %v5907, %v6210
  %6212 = vmatmul.mubr.f32.gmra.mrb[0].mxu0 %v6211
  %v6213 = vpop.f32.mrb[0].mxu0
  %v6214 = vpop.f32.mrb[0].mxu0
  %v6215 = vadd.f32 %v6119, %v6214
  %6216 = vdwg.mxu0
  %v6217 = vand.u32 %v50, 4294901760
  %6218 = vmatprep.subr.mxu0 %v6217
  %v6219 = vand.u32 %v49, 4294901760
  %6220 = vmatpush1.msra.mxu0 %v6219
  %v6221 = vand.u32 %v55, 4294901760
  %6222 = vmatprep.subr.mxu0 %v6221
  %v6223 = vand.u32 %v54, 4294901760
  %6224 = vmatpush1.msra.mxu0 %v6223
  %v6225 = vand.u32 %v60, 4294901760
  %6226 = vmatprep.subr.mxu0 %v6225
  %v6227 = vand.u32 %v59, 4294901760
  %6228 = vmatpush1.msra.mxu0 %v6227
  %v6229 = vand.u32 %v65, 4294901760
  %6230 = vmatprep.subr.mxu0 %v6229
  %v6231 = vand.u32 %v64, 4294901760
  %6232 = vmatpush1.msra.mxu0 %v6231
  %6233 = vmatprep.subr.mxu0 0.0
  %6234 = vmatpush1.msra.mxu0 0.0
  %6235 = vmatprep.subr.mxu0 0.0
  %6236 = vmatpush1.msra.mxu0 0.0
  %6237 = vmatprep.subr.mxu0 0.0
  %6238 = vmatpush1.msra.mxu0 0.0
  %6239 = vmatprep.subr.mxu0 0.0
  %6240 = vmatpush1.msra.mxu0 0.0
  %6241 = vmatprep.subr.mxu0 0.0
  %6242 = vmatpush1.msra.mxu0 0.0
  %6243 = vmatprep.subr.mxu0 0.0
  %6244 = vmatpush1.msra.mxu0 0.0
  %6245 = vmatprep.subr.mxu0 0.0
  %6246 = vmatpush1.msra.mxu0 0.0
  %6247 = vmatprep.subr.mxu0 0.0
  %6248 = vmatpush1.msra.mxu0 0.0
  %6249 = vmatprep.subr.mxu0 0.0
  %6250 = vmatpush1.msra.mxu0 0.0
  %6251 = vmatprep.subr.mxu0 0.0
  %6252 = vmatpush1.msra.mxu0 0.0
  %6253 = vmatprep.subr.mxu0 0.0
  %6254 = vmatpush1.msra.mxu0 0.0
  %6255 = vmatprep.subr.mxu0 0.0
  %6256 = vmatpush1.msra.mxu0 0.0
  %6257 = vmatprep.subr.mxu0 0.0
  %6258 = vmatpush1.msra.mxu0 0.0
  %6259 = vmatprep.subr.mxu0 0.0
  %6260 = vmatpush1.msra.mxu0 0.0
  %6261 = vmatprep.subr.mxu0 0.0
  %6262 = vmatpush1.msra.mxu0 0.0
  %6263 = vmatprep.subr.mxu0 0.0
  %6264 = vmatpush1.msra.mxu0 0.0
  %6265 = vmatprep.subr.mxu0 0.0
  %6266 = vmatpush1.msra.mxu0 0.0
  %6267 = vmatprep.subr.mxu0 0.0
  %6268 = vmatpush1.msra.mxu0 0.0
  %6269 = vmatprep.subr.mxu0 0.0
  %6270 = vmatpush1.msra.mxu0 0.0
  %6271 = vmatprep.subr.mxu0 0.0
  %6272 = vmatpush1.msra.mxu0 0.0
  %6273 = vmatprep.subr.mxu0 0.0
  %6274 = vmatpush1.msra.mxu0 0.0
  %6275 = vmatprep.subr.mxu0 0.0
  %6276 = vmatpush1.msra.mxu0 0.0
  %6277 = vmatprep.subr.mxu0 0.0
  %6278 = vmatpush1.msra.mxu0 0.0
  %6279 = vmatprep.subr.mxu0 0.0
  %6280 = vmatpush1.msra.mxu0 0.0
  %6281 = vmatprep.subr.mxu0 0.0
  %6282 = vmatpush1.msra.mxu0 0.0
  %6283 = vmatprep.subr.mxu0 0.0
  %6284 = vmatpush1.msra.mxu0 0.0
  %6285 = vmatprep.subr.mxu0 0.0
  %6286 = vmatpush1.msra.mxu0 0.0
  %6287 = vmatprep.subr.mxu0 0.0
  %6288 = vmatpush1.msra.mxu0 0.0
  %6289 = vmatprep.mubr.f32.mxu0 0.0
  %v6290 = vand.u32 %v5904, 4294901760
  %v6291 = vsub.f32 %v5904, %v6290
  %v6292 = vand.u32 %v6291, 4294901760
  %6293 = vmatmul.mubr.f32.gmra.mrb[0].mxu0 %v6292
  %v6294 = vpop.f32.mrb[0].mxu0
  %v6295 = vadd.f32 %v6206, %v6294
  %v6296 = vpop.f32.mrb[0].mxu0
  %v6297 = vadd.f32 %v6208, %v6296
  %6298 = vmatprep.mubr.f32.mxu0 0.0
  %v6299 = vand.u32 %v5907, 4294901760
  %v6300 = vsub.f32 %v5907, %v6299
  %v6301 = vand.u32 %v6300, 4294901760
  %6302 = vmatmul.mubr.f32.gmra.mrb[0].mxu0 %v6301
  %v6303 = vpop.f32.mrb[0].mxu0
  %v6304 = vpop.f32.mrb[0].mxu0
  %v6305 = vadd.f32 %v6215, %v6304
  %6306 = vdwg.mxu0
  %v6307 = vand.u32 %v50, 4294901760
  %v6308 = vsub.f32 %v50, %v6307
  %v6309 = vand.u32 %v6308, 4294901760
  %6310 = vmatprep.subr.mxu0 %v6309
  %v6311 = vand.u32 %v49, 4294901760
  %v6312 = vsub.f32 %v49, %v6311
  %v6313 = vand.u32 %v6312, 4294901760
  %6314 = vmatpush1.msra.mxu0 %v6313
  %v6315 = vand.u32 %v55, 4294901760
  %v6316 = vsub.f32 %v55, %v6315
  %v6317 = vand.u32 %v6316, 4294901760
  %6318 = vmatprep.subr.mxu0 %v6317
  %v6319 = vand.u32 %v54, 4294901760
  %v6320 = vsub.f32 %v54, %v6319
  %v6321 = vand.u32 %v6320, 4294901760
  %6322 = vmatpush1.msra.mxu0 %v6321
  %v6323 = vand.u32 %v60, 4294901760
  %v6324 = vsub.f32 %v60, %v6323
  %v6325 = vand.u32 %v6324, 4294901760
  %6326 = vmatprep.subr.mxu0 %v6325
  %v6327 = vand.u32 %v59, 4294901760
  %v6328 = vsub.f32 %v59, %v6327
  %v6329 = vand.u32 %v6328, 4294901760
  %6330 = vmatpush1.msra.mxu0 %v6329
  %v6331 = vand.u32 %v65, 4294901760
  %v6332 = vsub.f32 %v65, %v6331
  %v6333 = vand.u32 %v6332, 4294901760
  %6334 = vmatprep.subr.mxu0 %v6333
  %v6335 = vand.u32 %v64, 4294901760
  %v6336 = vsub.f32 %v64, %v6335
  %v6337 = vand.u32 %v6336, 4294901760
  %6338 = vmatpush1.msra.mxu0 %v6337
  %6339 = vmatprep.subr.mxu0 0.0
  %6340 = vmatpush1.msra.mxu0 0.0
  %6341 = vmatprep.subr.mxu0 0.0
  %6342 = vmatpush1.msra.mxu0 0.0
  %6343 = vmatprep.subr.mxu0 0.0
  %6344 = vmatpush1.msra.mxu0 0.0
  %6345 = vmatprep.subr.mxu0 0.0
  %6346 = vmatpush1.msra.mxu0 0.0
  %6347 = vmatprep.subr.mxu0 0.0
  %6348 = vmatpush1.msra.mxu0 0.0
  %6349 = vmatprep.subr.mxu0 0.0
  %6350 = vmatpush1.msra.mxu0 0.0
  %6351 = vmatprep.subr.mxu0 0.0
  %6352 = vmatpush1.msra.mxu0 0.0
  %6353 = vmatprep.subr.mxu0 0.0
  %6354 = vmatpush1.msra.mxu0 0.0
  %6355 = vmatprep.subr.mxu0 0.0
  %6356 = vmatpush1.msra.mxu0 0.0
  %6357 = vmatprep.subr.mxu0 0.0
  %6358 = vmatpush1.msra.mxu0 0.0
  %6359 = vmatprep.subr.mxu0 0.0
  %6360 = vmatpush1.msra.mxu0 0.0
  %6361 = vmatprep.subr.mxu0 0.0
  %6362 = vmatpush1.msra.mxu0 0.0
  %6363 = vmatprep.subr.mxu0 0.0
  %6364 = vmatpush1.msra.mxu0 0.0
  %6365 = vmatprep.subr.mxu0 0.0
  %6366 = vmatpush1.msra.mxu0 0.0
  %6367 = vmatprep.subr.mxu0 0.0
  %6368 = vmatpush1.msra.mxu0 0.0
  %6369 = vmatprep.subr.mxu0 0.0
  %6370 = vmatpush1.msra.mxu0 0.0
  %6371 = vmatprep.subr.mxu0 0.0
  %6372 = vmatpush1.msra.mxu0 0.0
  %6373 = vmatprep.subr.mxu0 0.0
  %6374 = vmatpush1.msra.mxu0 0.0
  %6375 = vmatprep.subr.mxu0 0.0
  %6376 = vmatpush1.msra.mxu0 0.0
  %6377 = vmatprep.subr.mxu0 0.0
  %6378 = vmatpush1.msra.mxu0 0.0
  %6379 = vmatprep.subr.mxu0 0.0
  %6380 = vmatpush1.msra.mxu0 0.0
  %6381 = vmatprep.subr.mxu0 0.0
  %6382 = vmatpush1.msra.mxu0 0.0
  %6383 = vmatprep.subr.mxu0 0.0
  %6384 = vmatpush1.msra.mxu0 0.0
  %6385 = vmatprep.subr.mxu0 0.0
  %6386 = vmatpush1.msra.mxu0 0.0
  %6387 = vmatprep.subr.mxu0 0.0
  %6388 = vmatpush1.msra.mxu0 0.0
  %6389 = vmatprep.subr.mxu0 0.0
  %6390 = vmatpush1.msra.mxu0 0.0
  %6391 = vmatprep.subr.mxu0 0.0
  %6392 = vmatpush1.msra.mxu0 0.0
  %6393 = vmatprep.subr.mxu0 0.0
  %6394 = vmatpush1.msra.mxu0 0.0
  %6395 = vmatprep.mubr.f32.mxu0 0.0
  %v6396 = vand.u32 %v5904, 4294901760
  %6397 = vmatmul.mubr.f32.gmra.mrb[0].mxu0 %v6396
  %v6398 = vpop.f32.mrb[0].mxu0
  %v6399 = vadd.f32 %v6295, %v6398
  %v6400 = vpop.f32.mrb[0].mxu0
  %v6401 = vadd.f32 %v6297, %v6400
  %6402 = vmatprep.mubr.f32.mxu0 0.0
  %v6403 = vand.u32 %v5907, 4294901760
  %6404 = vmatmul.mubr.f32.gmra.mrb[0].mxu0 %v6403
  %v6405 = vpop.f32.mrb[0].mxu0
  %v6406 = vpop.f32.mrb[0].mxu0
  %v6407 = vadd.f32 %v6305, %v6406
  %6408 = vdwg.mxu0
  %v6409 = vand.u32 %v50, 4294901760
  %6410 = vmatprep.subr.mxu0 %v6409
  %v6411 = vand.u32 %v49, 4294901760
  %6412 = vmatpush1.msra.mxu0 %v6411
  %v6413 = vand.u32 %v55, 4294901760
  %6414 = vmatprep.subr.mxu0 %v6413
  %v6415 = vand.u32 %v54, 4294901760
  %6416 = vmatpush1.msra.mxu0 %v6415
  %v6417 = vand.u32 %v60, 4294901760
  %6418 = vmatprep.subr.mxu0 %v6417
  %v6419 = vand.u32 %v59, 4294901760
  %6420 = vmatpush1.msra.mxu0 %v6419
  %v6421 = vand.u32 %v65, 4294901760
  %6422 = vmatprep.subr.mxu0 %v6421
  %v6423 = vand.u32 %v64, 4294901760
  %6424 = vmatpush1.msra.mxu0 %v6423
  %6425 = vmatprep.subr.mxu0 0.0
  %6426 = vmatpush1.msra.mxu0 0.0
  %6427 = vmatprep.subr.mxu0 0.0
  %6428 = vmatpush1.msra.mxu0 0.0
  %6429 = vmatprep.subr.mxu0 0.0
  %6430 = vmatpush1.msra.mxu0 0.0
  %6431 = vmatprep.subr.mxu0 0.0
  %6432 = vmatpush1.msra.mxu0 0.0
  %6433 = vmatprep.subr.mxu0 0.0
  %6434 = vmatpush1.msra.mxu0 0.0
  %6435 = vmatprep.subr.mxu0 0.0
  %6436 = vmatpush1.msra.mxu0 0.0
  %6437 = vmatprep.subr.mxu0 0.0
  %6438 = vmatpush1.msra.mxu0 0.0
  %6439 = vmatprep.subr.mxu0 0.0
  %6440 = vmatpush1.msra.mxu0 0.0
  %6441 = vmatprep.subr.mxu0 0.0
  %6442 = vmatpush1.msra.mxu0 0.0
  %6443 = vmatprep.subr.mxu0 0.0
  %6444 = vmatpush1.msra.mxu0 0.0
  %6445 = vmatprep.subr.mxu0 0.0
  %6446 = vmatpush1.msra.mxu0 0.0
  %6447 = vmatprep.subr.mxu0 0.0
  %6448 = vmatpush1.msra.mxu0 0.0
  %6449 = vmatprep.subr.mxu0 0.0
  %6450 = vmatpush1.msra.mxu0 0.0
  %6451 = vmatprep.subr.mxu0 0.0
  %6452 = vmatpush1.msra.mxu0 0.0
  %6453 = vmatprep.subr.mxu0 0.0
  %6454 = vmatpush1.msra.mxu0 0.0
  %6455 = vmatprep.subr.mxu0 0.0
  %6456 = vmatpush1.msra.mxu0 0.0
  %6457 = vmatprep.subr.mxu0 0.0
  %6458 = vmatpush1.msra.mxu0 0.0
  %6459 = vmatprep.subr.mxu0 0.0
  %6460 = vmatpush1.msra.mxu0 0.0
  %6461 = vmatprep.subr.mxu0 0.0
  %6462 = vmatpush1.msra.mxu0 0.0
  %6463 = vmatprep.subr.mxu0 0.0
  %6464 = vmatpush1.msra.mxu0 0.0
  %6465 = vmatprep.subr.mxu0 0.0
  %6466 = vmatpush1.msra.mxu0 0.0
  %6467 = vmatprep.subr.mxu0 0.0
  %6468 = vmatpush1.msra.mxu0 0.0
  %6469 = vmatprep.subr.mxu0 0.0
  %6470 = vmatpush1.msra.mxu0 0.0
  %6471 = vmatprep.subr.mxu0 0.0
  %6472 = vmatpush1.msra.mxu0 0.0
  %6473 = vmatprep.subr.mxu0 0.0
  %6474 = vmatpush1.msra.mxu0 0.0
  %6475 = vmatprep.subr.mxu0 0.0
  %6476 = vmatpush1.msra.mxu0 0.0
  %6477 = vmatprep.subr.mxu0 0.0
  %6478 = vmatpush1.msra.mxu0 0.0
  %6479 = vmatprep.subr.mxu0 0.0
  %6480 = vmatpush1.msra.mxu0 0.0
  %6481 = vmatprep.mubr.f32.mxu0 0.0
  %v6482 = vand.u32 %v5904, 4294901760
  %6483 = vmatmul.mubr.f32.gmra.mrb[0].mxu0 %v6482
  %v6484 = vpop.f32.mrb[0].mxu0
  %v6485 = vadd.f32 %v6399, %v6484
  %v6486 = vpop.f32.mrb[0].mxu0
  %v6487 = vadd.f32 %v6401, %v6486
  %6488 = vmatprep.mubr.f32.mxu0 0.0
  %v6489 = vand.u32 %v5907, 4294901760
  %6490 = vmatmul.mubr.f32.gmra.mrb[0].mxu0 %v6489
  %v6491 = vpop.f32.mrb[0].mxu0
  %v6492 = vpop.f32.mrb[0].mxu0
  %v6493 = vadd.f32 %v6407, %v6492
  %6494 = vdwg.mxu0
  %v6495 = vand.u32 %v52, 4294901760
  %6496 = vmatprep.subr.mxu0 %v6495
  %v6497 = vand.u32 %v51, 4294901760
  %6498 = vmatpush1.msra.mxu0 %v6497
  %v6499 = vand.u32 %v57, 4294901760
  %6500 = vmatprep.subr.mxu0 %v6499
  %v6501 = vand.u32 %v56, 4294901760
  %6502 = vmatpush1.msra.mxu0 %v6501
  %v6503 = vand.u32 %v62, 4294901760
  %6504 = vmatprep.subr.mxu0 %v6503
  %v6505 = vand.u32 %v61, 4294901760
  %6506 = vmatpush1.msra.mxu0 %v6505
  %v6507 = vand.u32 %v67, 4294901760
  %6508 = vmatprep.subr.mxu0 %v6507
  %v6509 = vand.u32 %v66, 4294901760
  %6510 = vmatpush1.msra.mxu0 %v6509
  %6511 = vmatprep.subr.mxu0 0.0
  %6512 = vmatpush1.msra.mxu0 0.0
  %6513 = vmatprep.subr.mxu0 0.0
  %6514 = vmatpush1.msra.mxu0 0.0
  %6515 = vmatprep.subr.mxu0 0.0
  %6516 = vmatpush1.msra.mxu0 0.0
  %6517 = vmatprep.subr.mxu0 0.0
  %6518 = vmatpush1.msra.mxu0 0.0
  %6519 = vmatprep.subr.mxu0 0.0
  %6520 = vmatpush1.msra.mxu0 0.0
  %6521 = vmatprep.subr.mxu0 0.0
  %6522 = vmatpush1.msra.mxu0 0.0
  %6523 = vmatprep.subr.mxu0 0.0
  %6524 = vmatpush1.msra.mxu0 0.0
  %6525 = vmatprep.subr.mxu0 0.0
  %6526 = vmatpush1.msra.mxu0 0.0
  %6527 = vmatprep.subr.mxu0 0.0
  %6528 = vmatpush1.msra.mxu0 0.0
  %6529 = vmatprep.subr.mxu0 0.0
  %6530 = vmatpush1.msra.mxu0 0.0
  %6531 = vmatprep.subr.mxu0 0.0
  %6532 = vmatpush1.msra.mxu0 0.0
  %6533 = vmatprep.subr.mxu0 0.0
  %6534 = vmatpush1.msra.mxu0 0.0
  %6535 = vmatprep.subr.mxu0 0.0
  %6536 = vmatpush1.msra.mxu0 0.0
  %6537 = vmatprep.subr.mxu0 0.0
  %6538 = vmatpush1.msra.mxu0 0.0
  %6539 = vmatprep.subr.mxu0 0.0
  %6540 = vmatpush1.msra.mxu0 0.0
  %6541 = vmatprep.subr.mxu0 0.0
  %6542 = vmatpush1.msra.mxu0 0.0
  %6543 = vmatprep.subr.mxu0 0.0
  %6544 = vmatpush1.msra.mxu0 0.0
  %6545 = vmatprep.subr.mxu0 0.0
  %6546 = vmatpush1.msra.mxu0 0.0
  %6547 = vmatprep.subr.mxu0 0.0
  %6548 = vmatpush1.msra.mxu0 0.0
  %6549 = vmatprep.subr.mxu0 0.0
  %6550 = vmatpush1.msra.mxu0 0.0
  %6551 = vmatprep.subr.mxu0 0.0
  %6552 = vmatpush1.msra.mxu0 0.0
  %6553 = vmatprep.subr.mxu0 0.0
  %6554 = vmatpush1.msra.mxu0 0.0
  %6555 = vmatprep.subr.mxu0 0.0
  %6556 = vmatpush1.msra.mxu0 0.0
  %6557 = vmatprep.subr.mxu0 0.0
  %6558 = vmatpush1.msra.mxu0 0.0
  %6559 = vmatprep.subr.mxu0 0.0
  %6560 = vmatpush1.msra.mxu0 0.0
  %6561 = vmatprep.subr.mxu0 0.0
  %6562 = vmatpush1.msra.mxu0 0.0
  %6563 = vmatprep.subr.mxu0 0.0
  %6564 = vmatpush1.msra.mxu0 0.0
  %6565 = vmatprep.subr.mxu0 0.0
  %6566 = vmatpush1.msra.mxu0 0.0
  %6567 = vmatprep.mubr.f32.mxu0 0.0
  %v6568 = vand.u32 %v5904, 4294901760
  %v6569 = vsub.f32 %v5904, %v6568
  %v6570 = vand.u32 %v6569, 4294901760
  %v6571 = vsub.f32 %v6569, %v6570
  %v6572 = vand.u32 %v6571, 4294901760
  %6573 = vmatmul.mubr.f32.gmra.mrb[0].mxu0 %v6572
  %v6574 = vpop.f32.mrb[0].mxu0
  %v6575 = vadd.f32 0.0, %v6574
  %v6576 = vpop.f32.mrb[0].mxu0
  %v6577 = vadd.f32 0.0, %v6576
  %6578 = vmatprep.mubr.f32.mxu0 0.0
  %v6579 = vand.u32 %v5907, 4294901760
  %v6580 = vsub.f32 %v5907, %v6579
  %v6581 = vand.u32 %v6580, 4294901760
  %v6582 = vsub.f32 %v6580, %v6581
  %v6583 = vand.u32 %v6582, 4294901760
  %6584 = vmatmul.mubr.f32.gmra.mrb[0].mxu0 %v6583
  %v6585 = vpop.f32.mrb[0].mxu0
  %v6586 = vadd.f32 0.0, %v6585
  %v6587 = vpop.f32.mrb[0].mxu0
  %v6588 = vadd.f32 0.0, %v6587
  %6589 = vdwg.mxu0
  %v6590 = vand.u32 %v52, 4294901760
  %v6591 = vsub.f32 %v52, %v6590
  %v6592 = vand.u32 %v6591, 4294901760
  %v6593 = vsub.f32 %v6591, %v6592
  %v6594 = vand.u32 %v6593, 4294901760
  %6595 = vmatprep.subr.mxu0 %v6594
  %v6596 = vand.u32 %v51, 4294901760
  %v6597 = vsub.f32 %v51, %v6596
  %v6598 = vand.u32 %v6597, 4294901760
  %v6599 = vsub.f32 %v6597, %v6598
  %v6600 = vand.u32 %v6599, 4294901760
  %6601 = vmatpush1.msra.mxu0 %v6600
  %v6602 = vand.u32 %v57, 4294901760
  %v6603 = vsub.f32 %v57, %v6602
  %v6604 = vand.u32 %v6603, 4294901760
  %v6605 = vsub.f32 %v6603, %v6604
  %v6606 = vand.u32 %v6605, 4294901760
  %6607 = vmatprep.subr.mxu0 %v6606
  %v6608 = vand.u32 %v56, 4294901760
  %v6609 = vsub.f32 %v56, %v6608
  %v6610 = vand.u32 %v6609, 4294901760
  %v6611 = vsub.f32 %v6609, %v6610
  %v6612 = vand.u32 %v6611, 4294901760
  %6613 = vmatpush1.msra.mxu0 %v6612
  %v6614 = vand.u32 %v62, 4294901760
  %v6615 = vsub.f32 %v62, %v6614
  %v6616 = vand.u32 %v6615, 4294901760
  %v6617 = vsub.f32 %v6615, %v6616
  %v6618 = vand.u32 %v6617, 4294901760
  %6619 = vmatprep.subr.mxu0 %v6618
  %v6620 = vand.u32 %v61, 4294901760
  %v6621 = vsub.f32 %v61, %v6620
  %v6622 = vand.u32 %v6621, 4294901760
  %v6623 = vsub.f32 %v6621, %v6622
  %v6624 = vand.u32 %v6623, 4294901760
  %6625 = vmatpush1.msra.mxu0 %v6624
  %v6626 = vand.u32 %v67, 4294901760
  %v6627 = vsub.f32 %v67, %v6626
  %v6628 = vand.u32 %v6627, 4294901760
  %v6629 = vsub.f32 %v6627, %v6628
  %v6630 = vand.u32 %v6629, 4294901760
  %6631 = vmatprep.subr.mxu0 %v6630
  %v6632 = vand.u32 %v66, 4294901760
  %v6633 = vsub.f32 %v66, %v6632
  %v6634 = vand.u32 %v6633, 4294901760
  %v6635 = vsub.f32 %v6633, %v6634
  %v6636 = vand.u32 %v6635, 4294901760
  %6637 = vmatpush1.msra.mxu0 %v6636
  %6638 = vmatprep.subr.mxu0 0.0
  %6639 = vmatpush1.msra.mxu0 0.0
  %6640 = vmatprep.subr.mxu0 0.0
  %6641 = vmatpush1.msra.mxu0 0.0
  %6642 = vmatprep.subr.mxu0 0.0
  %6643 = vmatpush1.msra.mxu0 0.0
  %6644 = vmatprep.subr.mxu0 0.0
  %6645 = vmatpush1.msra.mxu0 0.0
  %6646 = vmatprep.subr.mxu0 0.0
  %6647 = vmatpush1.msra.mxu0 0.0
  %6648 = vmatprep.subr.mxu0 0.0
  %6649 = vmatpush1.msra.mxu0 0.0
  %6650 = vmatprep.subr.mxu0 0.0
  %6651 = vmatpush1.msra.mxu0 0.0
  %6652 = vmatprep.subr.mxu0 0.0
  %6653 = vmatpush1.msra.mxu0 0.0
  %6654 = vmatprep.subr.mxu0 0.0
  %6655 = vmatpush1.msra.mxu0 0.0
  %6656 = vmatprep.subr.mxu0 0.0
  %6657 = vmatpush1.msra.mxu0 0.0
  %6658 = vmatprep.subr.mxu0 0.0
  %6659 = vmatpush1.msra.mxu0 0.0
  %6660 = vmatprep.subr.mxu0 0.0
  %6661 = vmatpush1.msra.mxu0 0.0
  %6662 = vmatprep.subr.mxu0 0.0
  %6663 = vmatpush1.msra.mxu0 0.0
  %6664 = vmatprep.subr.mxu0 0.0
  %6665 = vmatpush1.msra.mxu0 0.0
  %6666 = vmatprep.subr.mxu0 0.0
  %6667 = vmatpush1.msra.mxu0 0.0
  %6668 = vmatprep.subr.mxu0 0.0
  %6669 = vmatpush1.msra.mxu0 0.0
  %6670 = vmatprep.subr.mxu0 0.0
  %6671 = vmatpush1.msra.mxu0 0.0
  %6672 = vmatprep.subr.mxu0 0.0
  %6673 = vmatpush1.msra.mxu0 0.0
  %6674 = vmatprep.subr.mxu0 0.0
  %6675 = vmatpush1.msra.mxu0 0.0
  %6676 = vmatprep.subr.mxu0 0.0
  %6677 = vmatpush1.msra.mxu0 0.0
  %6678 = vmatprep.subr.mxu0 0.0
  %6679 = vmatpush1.msra.mxu0 0.0
  %6680 = vmatprep.subr.mxu0 0.0
  %6681 = vmatpush1.msra.mxu0 0.0
  %6682 = vmatprep.subr.mxu0 0.0
  %6683 = vmatpush1.msra.mxu0 0.0
  %6684 = vmatprep.subr.mxu0 0.0
  %6685 = vmatpush1.msra.mxu0 0.0
  %6686 = vmatprep.subr.mxu0 0.0
  %6687 = vmatpush1.msra.mxu0 0.0
  %6688 = vmatprep.subr.mxu0 0.0
  %6689 = vmatpush1.msra.mxu0 0.0
  %6690 = vmatprep.subr.mxu0 0.0
  %6691 = vmatpush1.msra.mxu0 0.0
  %6692 = vmatprep.subr.mxu0 0.0
  %6693 = vmatpush1.msra.mxu0 0.0
  %6694 = vmatprep.mubr.f32.mxu0 0.0
  %v6695 = vand.u32 %v5904, 4294901760
  %6696 = vmatmul.mubr.f32.gmra.mrb[0].mxu0 %v6695
  %v6697 = vpop.f32.mrb[0].mxu0
  %v6698 = vadd.f32 %v6575, %v6697
  %v6699 = vpop.f32.mrb[0].mxu0
  %v6700 = vadd.f32 %v6577, %v6699
  %6701 = vmatprep.mubr.f32.mxu0 0.0
  %v6702 = vand.u32 %v5907, 4294901760
  %6703 = vmatmul.mubr.f32.gmra.mrb[0].mxu0 %v6702
  %v6704 = vpop.f32.mrb[0].mxu0
  %v6705 = vadd.f32 %v6586, %v6704
  %v6706 = vpop.f32.mrb[0].mxu0
  %v6707 = vadd.f32 %v6588, %v6706
  %6708 = vdwg.mxu0
  %v6709 = vand.u32 %v52, 4294901760
  %v6710 = vsub.f32 %v52, %v6709
  %6711 = vmatprep.subr.mxu0 %v6710
  %v6712 = vand.u32 %v51, 4294901760
  %v6713 = vsub.f32 %v51, %v6712
  %6714 = vmatpush1.msra.mxu0 %v6713
  %v6715 = vand.u32 %v57, 4294901760
  %v6716 = vsub.f32 %v57, %v6715
  %6717 = vmatprep.subr.mxu0 %v6716
  %v6718 = vand.u32 %v56, 4294901760
  %v6719 = vsub.f32 %v56, %v6718
  %6720 = vmatpush1.msra.mxu0 %v6719
  %v6721 = vand.u32 %v62, 4294901760
  %v6722 = vsub.f32 %v62, %v6721
  %6723 = vmatprep.subr.mxu0 %v6722
  %v6724 = vand.u32 %v61, 4294901760
  %v6725 = vsub.f32 %v61, %v6724
  %6726 = vmatpush1.msra.mxu0 %v6725
  %v6727 = vand.u32 %v67, 4294901760
  %v6728 = vsub.f32 %v67, %v6727
  %6729 = vmatprep.subr.mxu0 %v6728
  %v6730 = vand.u32 %v66, 4294901760
  %v6731 = vsub.f32 %v66, %v6730
  %6732 = vmatpush1.msra.mxu0 %v6731
  %6733 = vmatprep.subr.mxu0 0.0
  %6734 = vmatpush1.msra.mxu0 0.0
  %6735 = vmatprep.subr.mxu0 0.0
  %6736 = vmatpush1.msra.mxu0 0.0
  %6737 = vmatprep.subr.mxu0 0.0
  %6738 = vmatpush1.msra.mxu0 0.0
  %6739 = vmatprep.subr.mxu0 0.0
  %6740 = vmatpush1.msra.mxu0 0.0
  %6741 = vmatprep.subr.mxu0 0.0
  %6742 = vmatpush1.msra.mxu0 0.0
  %6743 = vmatprep.subr.mxu0 0.0
  %6744 = vmatpush1.msra.mxu0 0.0
  %6745 = vmatprep.subr.mxu0 0.0
  %6746 = vmatpush1.msra.mxu0 0.0
  %6747 = vmatprep.subr.mxu0 0.0
  %6748 = vmatpush1.msra.mxu0 0.0
  %6749 = vmatprep.subr.mxu0 0.0
  %6750 = vmatpush1.msra.mxu0 0.0
  %6751 = vmatprep.subr.mxu0 0.0
  %6752 = vmatpush1.msra.mxu0 0.0
  %6753 = vmatprep.subr.mxu0 0.0
  %6754 = vmatpush1.msra.mxu0 0.0
  %6755 = vmatprep.subr.mxu0 0.0
  %6756 = vmatpush1.msra.mxu0 0.0
  %6757 = vmatprep.subr.mxu0 0.0
  %6758 = vmatpush1.msra.mxu0 0.0
  %6759 = vmatprep.subr.mxu0 0.0
  %6760 = vmatpush1.msra.mxu0 0.0
  %6761 = vmatprep.subr.mxu0 0.0
  %6762 = vmatpush1.msra.mxu0 0.0
  %6763 = vmatprep.subr.mxu0 0.0
  %6764 = vmatpush1.msra.mxu0 0.0
  %6765 = vmatprep.subr.mxu0 0.0
  %6766 = vmatpush1.msra.mxu0 0.0
  %6767 = vmatprep.subr.mxu0 0.0
  %6768 = vmatpush1.msra.mxu0 0.0
  %6769 = vmatprep.subr.mxu0 0.0
  %6770 = vmatpush1.msra.mxu0 0.0
  %6771 = vmatprep.subr.mxu0 0.0
  %6772 = vmatpush1.msra.mxu0 0.0
  %6773 = vmatprep.subr.mxu0 0.0
  %6774 = vmatpush1.msra.mxu0 0.0
  %6775 = vmatprep.subr.mxu0 0.0
  %6776 = vmatpush1.msra.mxu0 0.0
  %6777 = vmatprep.subr.mxu0 0.0
  %6778 = vmatpush1.msra.mxu0 0.0
  %6779 = vmatprep.subr.mxu0 0.0
  %6780 = vmatpush1.msra.mxu0 0.0
  %6781 = vmatprep.subr.mxu0 0.0
  %6782 = vmatpush1.msra.mxu0 0.0
  %6783 = vmatprep.subr.mxu0 0.0
  %6784 = vmatpush1.msra.mxu0 0.0
  %6785 = vmatprep.subr.mxu0 0.0
  %6786 = vmatpush1.msra.mxu0 0.0
  %6787 = vmatprep.subr.mxu0 0.0
  %6788 = vmatpush1.msra.mxu0 0.0
  %6789 = vmatprep.mubr.f32.mxu0 0.0
  %v6790 = vand.u32 %v5904, 4294901760
  %v6791 = vsub.f32 %v5904, %v6790
  %6792 = vmatmul.mubr.f32.gmra.mrb[0].mxu0 %v6791
  %v6793 = vpop.f32.mrb[0].mxu0
  %v6794 = vadd.f32 %v6698, %v6793
  %v6795 = vpop.f32.mrb[0].mxu0
  %v6796 = vadd.f32 %v6700, %v6795
  %6797 = vmatprep.mubr.f32.mxu0 0.0
  %v6798 = vand.u32 %v5907, 4294901760
  %v6799 = vsub.f32 %v5907, %v6798
  %6800 = vmatmul.mubr.f32.gmra.mrb[0].mxu0 %v6799
  %v6801 = vpop.f32.mrb[0].mxu0
  %v6802 = vadd.f32 %v6705, %v6801
  %v6803 = vpop.f32.mrb[0].mxu0
  %v6804 = vadd.f32 %v6707, %v6803
  %6805 = vdwg.mxu0
  %v6806 = vand.u32 %v52, 4294901760
  %6807 = vmatprep.subr.mxu0 %v6806
  %v6808 = vand.u32 %v51, 4294901760
  %6809 = vmatpush1.msra.mxu0 %v6808
  %v6810 = vand.u32 %v57, 4294901760
  %6811 = vmatprep.subr.mxu0 %v6810
  %v6812 = vand.u32 %v56, 4294901760
  %6813 = vmatpush1.msra.mxu0 %v6812
  %v6814 = vand.u32 %v62, 4294901760
  %6815 = vmatprep.subr.mxu0 %v6814
  %v6816 = vand.u32 %v61, 4294901760
  %6817 = vmatpush1.msra.mxu0 %v6816
  %v6818 = vand.u32 %v67, 4294901760
  %6819 = vmatprep.subr.mxu0 %v6818
  %v6820 = vand.u32 %v66, 4294901760
  %6821 = vmatpush1.msra.mxu0 %v6820
  %6822 = vmatprep.subr.mxu0 0.0
  %6823 = vmatpush1.msra.mxu0 0.0
  %6824 = vmatprep.subr.mxu0 0.0
  %6825 = vmatpush1.msra.mxu0 0.0
  %6826 = vmatprep.subr.mxu0 0.0
  %6827 = vmatpush1.msra.mxu0 0.0
  %6828 = vmatprep.subr.mxu0 0.0
  %6829 = vmatpush1.msra.mxu0 0.0
  %6830 = vmatprep.subr.mxu0 0.0
  %6831 = vmatpush1.msra.mxu0 0.0
  %6832 = vmatprep.subr.mxu0 0.0
  %6833 = vmatpush1.msra.mxu0 0.0
  %6834 = vmatprep.subr.mxu0 0.0
  %6835 = vmatpush1.msra.mxu0 0.0
  %6836 = vmatprep.subr.mxu0 0.0
  %6837 = vmatpush1.msra.mxu0 0.0
  %6838 = vmatprep.subr.mxu0 0.0
  %6839 = vmatpush1.msra.mxu0 0.0
  %6840 = vmatprep.subr.mxu0 0.0
  %6841 = vmatpush1.msra.mxu0 0.0
  %6842 = vmatprep.subr.mxu0 0.0
  %6843 = vmatpush1.msra.mxu0 0.0
  %6844 = vmatprep.subr.mxu0 0.0
  %6845 = vmatpush1.msra.mxu0 0.0
  %6846 = vmatprep.subr.mxu0 0.0
  %6847 = vmatpush1.msra.mxu0 0.0
  %6848 = vmatprep.subr.mxu0 0.0
  %6849 = vmatpush1.msra.mxu0 0.0
  %6850 = vmatprep.subr.mxu0 0.0
  %6851 = vmatpush1.msra.mxu0 0.0
  %6852 = vmatprep.subr.mxu0 0.0
  %6853 = vmatpush1.msra.mxu0 0.0
  %6854 = vmatprep.subr.mxu0 0.0
  %6855 = vmatpush1.msra.mxu0 0.0
  %6856 = vmatprep.subr.mxu0 0.0
  %6857 = vmatpush1.msra.mxu0 0.0
  %6858 = vmatprep.subr.mxu0 0.0
  %6859 = vmatpush1.msra.mxu0 0.0
  %6860 = vmatprep.subr.mxu0 0.0
  %6861 = vmatpush1.msra.mxu0 0.0
  %6862 = vmatprep.subr.mxu0 0.0
  %6863 = vmatpush1.msra.mxu0 0.0
  %6864 = vmatprep.subr.mxu0 0.0
  %6865 = vmatpush1.msra.mxu0 0.0
  %6866 = vmatprep.subr.mxu0 0.0
  %6867 = vmatpush1.msra.mxu0 0.0
  %6868 = vmatprep.subr.mxu0 0.0
  %6869 = vmatpush1.msra.mxu0 0.0
  %6870 = vmatprep.subr.mxu0 0.0
  %6871 = vmatpush1.msra.mxu0 0.0
  %6872 = vmatprep.subr.mxu0 0.0
  %6873 = vmatpush1.msra.mxu0 0.0
  %6874 = vmatprep.subr.mxu0 0.0
  %6875 = vmatpush1.msra.mxu0 0.0
  %6876 = vmatprep.subr.mxu0 0.0
  %6877 = vmatpush1.msra.mxu0 0.0
  %6878 = vmatprep.mubr.f32.mxu0 0.0
  %v6879 = vand.u32 %v5904, 4294901760
  %v6880 = vsub.f32 %v5904, %v6879
  %v6881 = vand.u32 %v6880, 4294901760
  %6882 = vmatmul.mubr.f32.gmra.mrb[0].mxu0 %v6881
  %v6883 = vpop.f32.mrb[0].mxu0
  %v6884 = vadd.f32 %v6794, %v6883
  %v6885 = vpop.f32.mrb[0].mxu0
  %v6886 = vadd.f32 %v6796, %v6885
  %6887 = vmatprep.mubr.f32.mxu0 0.0
  %v6888 = vand.u32 %v5907, 4294901760
  %v6889 = vsub.f32 %v5907, %v6888
  %v6890 = vand.u32 %v6889, 4294901760
  %6891 = vmatmul.mubr.f32.gmra.mrb[0].mxu0 %v6890
  %v6892 = vpop.f32.mrb[0].mxu0
  %v6893 = vadd.f32 %v6802, %v6892
  %v6894 = vpop.f32.mrb[0].mxu0
  %v6895 = vadd.f32 %v6804, %v6894
  %6896 = vdwg.mxu0
  %v6897 = vand.u32 %v52, 4294901760
  %v6898 = vsub.f32 %v52, %v6897
  %v6899 = vand.u32 %v6898, 4294901760
  %6900 = vmatprep.subr.mxu0 %v6899
  %v6901 = vand.u32 %v51, 4294901760
  %v6902 = vsub.f32 %v51, %v6901
  %v6903 = vand.u32 %v6902, 4294901760
  %6904 = vmatpush1.msra.mxu0 %v6903
  %v6905 = vand.u32 %v57, 4294901760
  %v6906 = vsub.f32 %v57, %v6905
  %v6907 = vand.u32 %v6906, 4294901760
  %6908 = vmatprep.subr.mxu0 %v6907
  %v6909 = vand.u32 %v56, 4294901760
  %v6910 = vsub.f32 %v56, %v6909
  %v6911 = vand.u32 %v6910, 4294901760
  %6912 = vmatpush1.msra.mxu0 %v6911
  %v6913 = vand.u32 %v62, 4294901760
  %v6914 = vsub.f32 %v62, %v6913
  %v6915 = vand.u32 %v6914, 4294901760
  %6916 = vmatprep.subr.mxu0 %v6915
  %v6917 = vand.u32 %v61, 4294901760
  %v6918 = vsub.f32 %v61, %v6917
  %v6919 = vand.u32 %v6918, 4294901760
  %6920 = vmatpush1.msra.mxu0 %v6919
  %v6921 = vand.u32 %v67, 4294901760
  %v6922 = vsub.f32 %v67, %v6921
  %v6923 = vand.u32 %v6922, 4294901760
  %6924 = vmatprep.subr.mxu0 %v6923
  %v6925 = vand.u32 %v66, 4294901760
  %v6926 = vsub.f32 %v66, %v6925
  %v6927 = vand.u32 %v6926, 4294901760
  %6928 = vmatpush1.msra.mxu0 %v6927
  %6929 = vmatprep.subr.mxu0 0.0
  %6930 = vmatpush1.msra.mxu0 0.0
  %6931 = vmatprep.subr.mxu0 0.0
  %6932 = vmatpush1.msra.mxu0 0.0
  %6933 = vmatprep.subr.mxu0 0.0
  %6934 = vmatpush1.msra.mxu0 0.0
  %6935 = vmatprep.subr.mxu0 0.0
  %6936 = vmatpush1.msra.mxu0 0.0
  %6937 = vmatprep.subr.mxu0 0.0
  %6938 = vmatpush1.msra.mxu0 0.0
  %6939 = vmatprep.subr.mxu0 0.0
  %6940 = vmatpush1.msra.mxu0 0.0
  %6941 = vmatprep.subr.mxu0 0.0
  %6942 = vmatpush1.msra.mxu0 0.0
  %6943 = vmatprep.subr.mxu0 0.0
  %6944 = vmatpush1.msra.mxu0 0.0
  %6945 = vmatprep.subr.mxu0 0.0
  %6946 = vmatpush1.msra.mxu0 0.0
  %6947 = vmatprep.subr.mxu0 0.0
  %6948 = vmatpush1.msra.mxu0 0.0
  %6949 = vmatprep.subr.mxu0 0.0
  %6950 = vmatpush1.msra.mxu0 0.0
  %6951 = vmatprep.subr.mxu0 0.0
  %6952 = vmatpush1.msra.mxu0 0.0
  %6953 = vmatprep.subr.mxu0 0.0
  %6954 = vmatpush1.msra.mxu0 0.0
  %6955 = vmatprep.subr.mxu0 0.0
  %6956 = vmatpush1.msra.mxu0 0.0
  %6957 = vmatprep.subr.mxu0 0.0
  %6958 = vmatpush1.msra.mxu0 0.0
  %6959 = vmatprep.subr.mxu0 0.0
  %6960 = vmatpush1.msra.mxu0 0.0
  %6961 = vmatprep.subr.mxu0 0.0
  %6962 = vmatpush1.msra.mxu0 0.0
  %6963 = vmatprep.subr.mxu0 0.0
  %6964 = vmatpush1.msra.mxu0 0.0
  %6965 = vmatprep.subr.mxu0 0.0
  %6966 = vmatpush1.msra.mxu0 0.0
  %6967 = vmatprep.subr.mxu0 0.0
  %6968 = vmatpush1.msra.mxu0 0.0
  %6969 = vmatprep.subr.mxu0 0.0
  %6970 = vmatpush1.msra.mxu0 0.0
  %6971 = vmatprep.subr.mxu0 0.0
  %6972 = vmatpush1.msra.mxu0 0.0
  %6973 = vmatprep.subr.mxu0 0.0
  %6974 = vmatpush1.msra.mxu0 0.0
  %6975 = vmatprep.subr.mxu0 0.0
  %6976 = vmatpush1.msra.mxu0 0.0
  %6977 = vmatprep.subr.mxu0 0.0
  %6978 = vmatpush1.msra.mxu0 0.0
  %6979 = vmatprep.subr.mxu0 0.0
  %6980 = vmatpush1.msra.mxu0 0.0
  %6981 = vmatprep.subr.mxu0 0.0
  %6982 = vmatpush1.msra.mxu0 0.0
  %6983 = vmatprep.subr.mxu0 0.0
  %6984 = vmatpush1.msra.mxu0 0.0
  %6985 = vmatprep.mubr.f32.mxu0 0.0
  %v6986 = vand.u32 %v5904, 4294901760
  %6987 = vmatmul.mubr.f32.gmra.mrb[0].mxu0 %v6986
  %v6988 = vpop.f32.mrb[0].mxu0
  %v6989 = vadd.f32 %v6884, %v6988
  %v6990 = vpop.f32.mrb[0].mxu0
  %v6991 = vadd.f32 %v6886, %v6990
  %6992 = vmatprep.mubr.f32.mxu0 0.0
  %v6993 = vand.u32 %v5907, 4294901760
  %6994 = vmatmul.mubr.f32.gmra.mrb[0].mxu0 %v6993
  %v6995 = vpop.f32.mrb[0].mxu0
  %v6996 = vadd.f32 %v6893, %v6995
  %v6997 = vpop.f32.mrb[0].mxu0
  %v6998 = vadd.f32 %v6895, %v6997
  %6999 = vdwg.mxu0
  %v7000 = vand.u32 %v52, 4294901760
  %7001 = vmatprep.subr.mxu0 %v7000
  %v7002 = vand.u32 %v51, 4294901760
  %7003 = vmatpush1.msra.mxu0 %v7002
  %v7004 = vand.u32 %v57, 4294901760
  %7005 = vmatprep.subr.mxu0 %v7004
  %v7006 = vand.u32 %v56, 4294901760
  %7007 = vmatpush1.msra.mxu0 %v7006
  %v7008 = vand.u32 %v62, 4294901760
  %7009 = vmatprep.subr.mxu0 %v7008
  %v7010 = vand.u32 %v61, 4294901760
  %7011 = vmatpush1.msra.mxu0 %v7010
  %v7012 = vand.u32 %v67, 4294901760
  %7013 = vmatprep.subr.mxu0 %v7012
  %v7014 = vand.u32 %v66, 4294901760
  %7015 = vmatpush1.msra.mxu0 %v7014
  %7016 = vmatprep.subr.mxu0 0.0
  %7017 = vmatpush1.msra.mxu0 0.0
  %7018 = vmatprep.subr.mxu0 0.0
  %7019 = vmatpush1.msra.mxu0 0.0
  %7020 = vmatprep.subr.mxu0 0.0
  %7021 = vmatpush1.msra.mxu0 0.0
  %7022 = vmatprep.subr.mxu0 0.0
  %7023 = vmatpush1.msra.mxu0 0.0
  %7024 = vmatprep.subr.mxu0 0.0
  %7025 = vmatpush1.msra.mxu0 0.0
  %7026 = vmatprep.subr.mxu0 0.0
  %7027 = vmatpush1.msra.mxu0 0.0
  %7028 = vmatprep.subr.mxu0 0.0
  %7029 = vmatpush1.msra.mxu0 0.0
  %7030 = vmatprep.subr.mxu0 0.0
  %7031 = vmatpush1.msra.mxu0 0.0
  %7032 = vmatprep.subr.mxu0 0.0
  %7033 = vmatpush1.msra.mxu0 0.0
  %7034 = vmatprep.subr.mxu0 0.0
  %7035 = vmatpush1.msra.mxu0 0.0
  %7036 = vmatprep.subr.mxu0 0.0
  %7037 = vmatpush1.msra.mxu0 0.0
  %7038 = vmatprep.subr.mxu0 0.0
  %7039 = vmatpush1.msra.mxu0 0.0
  %7040 = vmatprep.subr.mxu0 0.0
  %7041 = vmatpush1.msra.mxu0 0.0
  %7042 = vmatprep.subr.mxu0 0.0
  %7043 = vmatpush1.msra.mxu0 0.0
  %7044 = vmatprep.subr.mxu0 0.0
  %7045 = vmatpush1.msra.mxu0 0.0
  %7046 = vmatprep.subr.mxu0 0.0
  %7047 = vmatpush1.msra.mxu0 0.0
  %7048 = vmatprep.subr.mxu0 0.0
  %7049 = vmatpush1.msra.mxu0 0.0
  %7050 = vmatprep.subr.mxu0 0.0
  %7051 = vmatpush1.msra.mxu0 0.0
  %7052 = vmatprep.subr.mxu0 0.0
  %7053 = vmatpush1.msra.mxu0 0.0
  %7054 = vmatprep.subr.mxu0 0.0
  %7055 = vmatpush1.msra.mxu0 0.0
  %7056 = vmatprep.subr.mxu0 0.0
  %7057 = vmatpush1.msra.mxu0 0.0
  %7058 = vmatprep.subr.mxu0 0.0
  %7059 = vmatpush1.msra.mxu0 0.0
  %7060 = vmatprep.subr.mxu0 0.0
  %7061 = vmatpush1.msra.mxu0 0.0
  %7062 = vmatprep.subr.mxu0 0.0
  %7063 = vmatpush1.msra.mxu0 0.0
  %7064 = vmatprep.subr.mxu0 0.0
  %7065 = vmatpush1.msra.mxu0 0.0
  %7066 = vmatprep.subr.mxu0 0.0
  %7067 = vmatpush1.msra.mxu0 0.0
  %7068 = vmatprep.subr.mxu0 0.0
  %7069 = vmatpush1.msra.mxu0 0.0
  %7070 = vmatprep.subr.mxu0 0.0
  %7071 = vmatpush1.msra.mxu0 0.0
  %7072 = vmatprep.mubr.f32.mxu0 0.0
  %v7073 = vand.u32 %v5904, 4294901760
  %7074 = vmatmul.mubr.f32.gmra.mrb[0].mxu0 %v7073
  %v7075 = vpop.f32.mrb[0].mxu0
  %v7076 = vadd.f32 %v6989, %v7075
  %v7077 = vpop.f32.mrb[0].mxu0
  %v7078 = vadd.f32 %v6991, %v7077
  %7079 = vmatprep.mubr.f32.mxu0 0.0
  %v7080 = vand.u32 %v5907, 4294901760
  %7081 = vmatmul.mubr.f32.gmra.mrb[0].mxu0 %v7080
  %v7082 = vpop.f32.mrb[0].mxu0
  %v7083 = vadd.f32 %v6996, %v7082
  %v7084 = vpop.f32.mrb[0].mxu0
  %v7085 = vadd.f32 %v6998, %v7084
  %7086 = vdwg.mxu0
  %7087 = vmatprep.subr.mxu0 0.0
  %v7088 = vand.u32 %v53, 4294901760
  %7089 = vmatpush1.msra.mxu0 %v7088
  %7090 = vmatprep.subr.mxu0 0.0
  %v7091 = vand.u32 %v58, 4294901760
  %7092 = vmatpush1.msra.mxu0 %v7091
  %7093 = vmatprep.subr.mxu0 0.0
  %v7094 = vand.u32 %v63, 4294901760
  %7095 = vmatpush1.msra.mxu0 %v7094
  %7096 = vmatprep.subr.mxu0 0.0
  %v7097 = vand.u32 %v68, 4294901760
  %7098 = vmatpush1.msra.mxu0 %v7097
  %7099 = vmatprep.subr.mxu0 0.0
  %7100 = vmatpush1.msra.mxu0 0.0
  %7101 = vmatprep.subr.mxu0 0.0
  %7102 = vmatpush1.msra.mxu0 0.0
  %7103 = vmatprep.subr.mxu0 0.0
  %7104 = vmatpush1.msra.mxu0 0.0
  %7105 = vmatprep.subr.mxu0 0.0
  %7106 = vmatpush1.msra.mxu0 0.0
  %7107 = vmatprep.subr.mxu0 0.0
  %7108 = vmatpush1.msra.mxu0 0.0
  %7109 = vmatprep.subr.mxu0 0.0
  %7110 = vmatpush1.msra.mxu0 0.0
  %7111 = vmatprep.subr.mxu0 0.0
  %7112 = vmatpush1.msra.mxu0 0.0
  %7113 = vmatprep.subr.mxu0 0.0
  %7114 = vmatpush1.msra.mxu0 0.0
  %7115 = vmatprep.subr.mxu0 0.0
  %7116 = vmatpush1.msra.mxu0 0.0
  %7117 = vmatprep.subr.mxu0 0.0
  %7118 = vmatpush1.msra.mxu0 0.0
  %7119 = vmatprep.subr.mxu0 0.0
  %7120 = vmatpush1.msra.mxu0 0.0
  %7121 = vmatprep.subr.mxu0 0.0
  %7122 = vmatpush1.msra.mxu0 0.0
  %7123 = vmatprep.subr.mxu0 0.0
  %7124 = vmatpush1.msra.mxu0 0.0
  %7125 = vmatprep.subr.mxu0 0.0
  %7126 = vmatpush1.msra.mxu0 0.0
  %7127 = vmatprep.subr.mxu0 0.0
  %7128 = vmatpush1.msra.mxu0 0.0
  %7129 = vmatprep.subr.mxu0 0.0
  %7130 = vmatpush1.msra.mxu0 0.0
  %7131 = vmatprep.subr.mxu0 0.0
  %7132 = vmatpush1.msra.mxu0 0.0
  %7133 = vmatprep.subr.mxu0 0.0
  %7134 = vmatpush1.msra.mxu0 0.0
  %7135 = vmatprep.subr.mxu0 0.0
  %7136 = vmatpush1.msra.mxu0 0.0
  %7137 = vmatprep.subr.mxu0 0.0
  %7138 = vmatpush1.msra.mxu0 0.0
  %7139 = vmatprep.subr.mxu0 0.0
  %7140 = vmatpush1.msra.mxu0 0.0
  %7141 = vmatprep.subr.mxu0 0.0
  %7142 = vmatpush1.msra.mxu0 0.0
  %7143 = vmatprep.subr.mxu0 0.0
  %7144 = vmatpush1.msra.mxu0 0.0
  %7145 = vmatprep.subr.mxu0 0.0
  %7146 = vmatpush1.msra.mxu0 0.0
  %7147 = vmatprep.subr.mxu0 0.0
  %7148 = vmatpush1.msra.mxu0 0.0
  %7149 = vmatprep.subr.mxu0 0.0
  %7150 = vmatpush1.msra.mxu0 0.0
  %7151 = vmatprep.subr.mxu0 0.0
  %7152 = vmatpush1.msra.mxu0 0.0
  %7153 = vmatprep.subr.mxu0 0.0
  %7154 = vmatpush1.msra.mxu0 0.0
  %7155 = vmatprep.mubr.f32.mxu0 0.0
  %v7156 = vand.u32 %v5904, 4294901760
  %v7157 = vsub.f32 %v5904, %v7156
  %v7158 = vand.u32 %v7157, 4294901760
  %v7159 = vsub.f32 %v7157, %v7158
  %v7160 = vand.u32 %v7159, 4294901760
  %7161 = vmatmul.mubr.f32.gmra.mrb[0].mxu0 %v7160
  %v7162 = vpop.f32.mrb[0].mxu0
  %v7163 = vadd.f32 0.0, %v7162
  %v7164 = vpop.f32.mrb[0].mxu0
  %7165 = vmatprep.mubr.f32.mxu0 0.0
  %v7166 = vand.u32 %v5907, 4294901760
  %v7167 = vsub.f32 %v5907, %v7166
  %v7168 = vand.u32 %v7167, 4294901760
  %v7169 = vsub.f32 %v7167, %v7168
  %v7170 = vand.u32 %v7169, 4294901760
  %7171 = vmatmul.mubr.f32.gmra.mrb[0].mxu0 %v7170
  %v7172 = vpop.f32.mrb[0].mxu0
  %v7173 = vadd.f32 0.0, %v7172
  %v7174 = vpop.f32.mrb[0].mxu0
  %7175 = vdwg.mxu0
  %7176 = vmatprep.subr.mxu0 0.0
  %v7177 = vand.u32 %v53, 4294901760
  %v7178 = vsub.f32 %v53, %v7177
  %v7179 = vand.u32 %v7178, 4294901760
  %v7180 = vsub.f32 %v7178, %v7179
  %v7181 = vand.u32 %v7180, 4294901760
  %7182 = vmatpush1.msra.mxu0 %v7181
  %7183 = vmatprep.subr.mxu0 0.0
  %v7184 = vand.u32 %v58, 4294901760
  %v7185 = vsub.f32 %v58, %v7184
  %v7186 = vand.u32 %v7185, 4294901760
  %v7187 = vsub.f32 %v7185, %v7186
  %v7188 = vand.u32 %v7187, 4294901760
  %7189 = vmatpush1.msra.mxu0 %v7188
  %7190 = vmatprep.subr.mxu0 0.0
  %v7191 = vand.u32 %v63, 4294901760
  %v7192 = vsub.f32 %v63, %v7191
  %v7193 = vand.u32 %v7192, 4294901760
  %v7194 = vsub.f32 %v7192, %v7193
  %v7195 = vand.u32 %v7194, 4294901760
  %7196 = vmatpush1.msra.mxu0 %v7195
  %7197 = vmatprep.subr.mxu0 0.0
  %v7198 = vand.u32 %v68, 4294901760
  %v7199 = vsub.f32 %v68, %v7198
  %v7200 = vand.u32 %v7199, 4294901760
  %v7201 = vsub.f32 %v7199, %v7200
  %v7202 = vand.u32 %v7201, 4294901760
  %7203 = vmatpush1.msra.mxu0 %v7202
  %7204 = vmatprep.subr.mxu0 0.0
  %7205 = vmatpush1.msra.mxu0 0.0
  %7206 = vmatprep.subr.mxu0 0.0
  %7207 = vmatpush1.msra.mxu0 0.0
  %7208 = vmatprep.subr.mxu0 0.0
  %7209 = vmatpush1.msra.mxu0 0.0
  %7210 = vmatprep.subr.mxu0 0.0
  %7211 = vmatpush1.msra.mxu0 0.0
  %7212 = vmatprep.subr.mxu0 0.0
  %7213 = vmatpush1.msra.mxu0 0.0
  %7214 = vmatprep.subr.mxu0 0.0
  %7215 = vmatpush1.msra.mxu0 0.0
  %7216 = vmatprep.subr.mxu0 0.0
  %7217 = vmatpush1.msra.mxu0 0.0
  %7218 = vmatprep.subr.mxu0 0.0
  %7219 = vmatpush1.msra.mxu0 0.0
  %7220 = vmatprep.subr.mxu0 0.0
  %7221 = vmatpush1.msra.mxu0 0.0
  %7222 = vmatprep.subr.mxu0 0.0
  %7223 = vmatpush1.msra.mxu0 0.0
  %7224 = vmatprep.subr.mxu0 0.0
  %7225 = vmatpush1.msra.mxu0 0.0
  %7226 = vmatprep.subr.mxu0 0.0
  %7227 = vmatpush1.msra.mxu0 0.0
  %7228 = vmatprep.subr.mxu0 0.0
  %7229 = vmatpush1.msra.mxu0 0.0
  %7230 = vmatprep.subr.mxu0 0.0
  %7231 = vmatpush1.msra.mxu0 0.0
  %7232 = vmatprep.subr.mxu0 0.0
  %7233 = vmatpush1.msra.mxu0 0.0
  %7234 = vmatprep.subr.mxu0 0.0
  %7235 = vmatpush1.msra.mxu0 0.0
  %7236 = vmatprep.subr.mxu0 0.0
  %7237 = vmatpush1.msra.mxu0 0.0
  %7238 = vmatprep.subr.mxu0 0.0
  %7239 = vmatpush1.msra.mxu0 0.0
  %7240 = vmatprep.subr.mxu0 0.0
  %7241 = vmatpush1.msra.mxu0 0.0
  %7242 = vmatprep.subr.mxu0 0.0
  %7243 = vmatpush1.msra.mxu0 0.0
  %7244 = vmatprep.subr.mxu0 0.0
  %7245 = vmatpush1.msra.mxu0 0.0
  %7246 = vmatprep.subr.mxu0 0.0
  %7247 = vmatpush1.msra.mxu0 0.0
  %7248 = vmatprep.subr.mxu0 0.0
  %7249 = vmatpush1.msra.mxu0 0.0
  %7250 = vmatprep.subr.mxu0 0.0
  %7251 = vmatpush1.msra.mxu0 0.0
  %7252 = vmatprep.subr.mxu0 0.0
  %7253 = vmatpush1.msra.mxu0 0.0
  %7254 = vmatprep.subr.mxu0 0.0
  %7255 = vmatpush1.msra.mxu0 0.0
  %7256 = vmatprep.subr.mxu0 0.0
  %7257 = vmatpush1.msra.mxu0 0.0
  %7258 = vmatprep.subr.mxu0 0.0
  %7259 = vmatpush1.msra.mxu0 0.0
  %7260 = vmatprep.mubr.f32.mxu0 0.0
  %v7261 = vand.u32 %v5904, 4294901760
  %7262 = vmatmul.mubr.f32.gmra.mrb[0].mxu0 %v7261
  %v7263 = vpop.f32.mrb[0].mxu0
  %v7264 = vadd.f32 %v7163, %v7263
  %v7265 = vpop.f32.mrb[0].mxu0
  %7266 = vmatprep.mubr.f32.mxu0 0.0
  %v7267 = vand.u32 %v5907, 4294901760
  %7268 = vmatmul.mubr.f32.gmra.mrb[0].mxu0 %v7267
  %v7269 = vpop.f32.mrb[0].mxu0
  %v7270 = vadd.f32 %v7173, %v7269
  %v7271 = vpop.f32.mrb[0].mxu0
  %7272 = vdwg.mxu0
  %7273 = vmatprep.subr.mxu0 0.0
  %v7274 = vand.u32 %v53, 4294901760
  %v7275 = vsub.f32 %v53, %v7274
  %7276 = vmatpush1.msra.mxu0 %v7275
  %7277 = vmatprep.subr.mxu0 0.0
  %v7278 = vand.u32 %v58, 4294901760
  %v7279 = vsub.f32 %v58, %v7278
  %7280 = vmatpush1.msra.mxu0 %v7279
  %7281 = vmatprep.subr.mxu0 0.0
  %v7282 = vand.u32 %v63, 4294901760
  %v7283 = vsub.f32 %v63, %v7282
  %7284 = vmatpush1.msra.mxu0 %v7283
  %7285 = vmatprep.subr.mxu0 0.0
  %v7286 = vand.u32 %v68, 4294901760
  %v7287 = vsub.f32 %v68, %v7286
  %7288 = vmatpush1.msra.mxu0 %v7287
  %7289 = vmatprep.subr.mxu0 0.0
  %7290 = vmatpush1.msra.mxu0 0.0
  %7291 = vmatprep.subr.mxu0 0.0
  %7292 = vmatpush1.msra.mxu0 0.0
  %7293 = vmatprep.subr.mxu0 0.0
  %7294 = vmatpush1.msra.mxu0 0.0
  %7295 = vmatprep.subr.mxu0 0.0
  %7296 = vmatpush1.msra.mxu0 0.0
  %7297 = vmatprep.subr.mxu0 0.0
  %7298 = vmatpush1.msra.mxu0 0.0
  %7299 = vmatprep.subr.mxu0 0.0
  %7300 = vmatpush1.msra.mxu0 0.0
  %7301 = vmatprep.subr.mxu0 0.0
  %7302 = vmatpush1.msra.mxu0 0.0
  %7303 = vmatprep.subr.mxu0 0.0
  %7304 = vmatpush1.msra.mxu0 0.0
  %7305 = vmatprep.subr.mxu0 0.0
  %7306 = vmatpush1.msra.mxu0 0.0
  %7307 = vmatprep.subr.mxu0 0.0
  %7308 = vmatpush1.msra.mxu0 0.0
  %7309 = vmatprep.subr.mxu0 0.0
  %7310 = vmatpush1.msra.mxu0 0.0
  %7311 = vmatprep.subr.mxu0 0.0
  %7312 = vmatpush1.msra.mxu0 0.0
  %7313 = vmatprep.subr.mxu0 0.0
  %7314 = vmatpush1.msra.mxu0 0.0
  %7315 = vmatprep.subr.mxu0 0.0
  %7316 = vmatpush1.msra.mxu0 0.0
  %7317 = vmatprep.subr.mxu0 0.0
  %7318 = vmatpush1.msra.mxu0 0.0
  %7319 = vmatprep.subr.mxu0 0.0
  %7320 = vmatpush1.msra.mxu0 0.0
  %7321 = vmatprep.subr.mxu0 0.0
  %7322 = vmatpush1.msra.mxu0 0.0
  %7323 = vmatprep.subr.mxu0 0.0
  %7324 = vmatpush1.msra.mxu0 0.0
  %7325 = vmatprep.subr.mxu0 0.0
  %7326 = vmatpush1.msra.mxu0 0.0
  %7327 = vmatprep.subr.mxu0 0.0
  %7328 = vmatpush1.msra.mxu0 0.0
  %7329 = vmatprep.subr.mxu0 0.0
  %7330 = vmatpush1.msra.mxu0 0.0
  %7331 = vmatprep.subr.mxu0 0.0
  %7332 = vmatpush1.msra.mxu0 0.0
  %7333 = vmatprep.subr.mxu0 0.0
  %7334 = vmatpush1.msra.mxu0 0.0
  %7335 = vmatprep.subr.mxu0 0.0
  %7336 = vmatpush1.msra.mxu0 0.0
  %7337 = vmatprep.subr.mxu0 0.0
  %7338 = vmatpush1.msra.mxu0 0.0
  %7339 = vmatprep.subr.mxu0 0.0
  %7340 = vmatpush1.msra.mxu0 0.0
  %7341 = vmatprep.subr.mxu0 0.0
  %7342 = vmatpush1.msra.mxu0 0.0
  %7343 = vmatprep.subr.mxu0 0.0
  %7344 = vmatpush1.msra.mxu0 0.0
  %7345 = vmatprep.mubr.f32.mxu0 0.0
  %v7346 = vand.u32 %v5904, 4294901760
  %v7347 = vsub.f32 %v5904, %v7346
  %7348 = vmatmul.mubr.f32.gmra.mrb[0].mxu0 %v7347
  %v7349 = vpop.f32.mrb[0].mxu0
  %v7350 = vadd.f32 %v7264, %v7349
  %v7351 = vpop.f32.mrb[0].mxu0
  %7352 = vmatprep.mubr.f32.mxu0 0.0
  %v7353 = vand.u32 %v5907, 4294901760
  %v7354 = vsub.f32 %v5907, %v7353
  %7355 = vmatmul.mubr.f32.gmra.mrb[0].mxu0 %v7354
  %v7356 = vpop.f32.mrb[0].mxu0
  %v7357 = vadd.f32 %v7270, %v7356
  %v7358 = vpop.f32.mrb[0].mxu0
  %7359 = vdwg.mxu0
  %7360 = vmatprep.subr.mxu0 0.0
  %v7361 = vand.u32 %v53, 4294901760
  %7362 = vmatpush1.msra.mxu0 %v7361
  %7363 = vmatprep.subr.mxu0 0.0
  %v7364 = vand.u32 %v58, 4294901760
  %7365 = vmatpush1.msra.mxu0 %v7364
  %7366 = vmatprep.subr.mxu0 0.0
  %v7367 = vand.u32 %v63, 4294901760
  %7368 = vmatpush1.msra.mxu0 %v7367
  %7369 = vmatprep.subr.mxu0 0.0
  %v7370 = vand.u32 %v68, 4294901760
  %7371 = vmatpush1.msra.mxu0 %v7370
  %7372 = vmatprep.subr.mxu0 0.0
  %7373 = vmatpush1.msra.mxu0 0.0
  %7374 = vmatprep.subr.mxu0 0.0
  %7375 = vmatpush1.msra.mxu0 0.0
  %7376 = vmatprep.subr.mxu0 0.0
  %7377 = vmatpush1.msra.mxu0 0.0
  %7378 = vmatprep.subr.mxu0 0.0
  %7379 = vmatpush1.msra.mxu0 0.0
  %7380 = vmatprep.subr.mxu0 0.0
  %7381 = vmatpush1.msra.mxu0 0.0
  %7382 = vmatprep.subr.mxu0 0.0
  %7383 = vmatpush1.msra.mxu0 0.0
  %7384 = vmatprep.subr.mxu0 0.0
  %7385 = vmatpush1.msra.mxu0 0.0
  %7386 = vmatprep.subr.mxu0 0.0
  %7387 = vmatpush1.msra.mxu0 0.0
  %7388 = vmatprep.subr.mxu0 0.0
  %7389 = vmatpush1.msra.mxu0 0.0
  %7390 = vmatprep.subr.mxu0 0.0
  %7391 = vmatpush1.msra.mxu0 0.0
  %7392 = vmatprep.subr.mxu0 0.0
  %7393 = vmatpush1.msra.mxu0 0.0
  %7394 = vmatprep.subr.mxu0 0.0
  %7395 = vmatpush1.msra.mxu0 0.0
  %7396 = vmatprep.subr.mxu0 0.0
  %7397 = vmatpush1.msra.mxu0 0.0
  %7398 = vmatprep.subr.mxu0 0.0
  %7399 = vmatpush1.msra.mxu0 0.0
  %7400 = vmatprep.subr.mxu0 0.0
  %7401 = vmatpush1.msra.mxu0 0.0
  %7402 = vmatprep.subr.mxu0 0.0
  %7403 = vmatpush1.msra.mxu0 0.0
  %7404 = vmatprep.subr.mxu0 0.0
  %7405 = vmatpush1.msra.mxu0 0.0
  %7406 = vmatprep.subr.mxu0 0.0
  %7407 = vmatpush1.msra.mxu0 0.0
  %7408 = vmatprep.subr.mxu0 0.0
  %7409 = vmatpush1.msra.mxu0 0.0
  %7410 = vmatprep.subr.mxu0 0.0
  %7411 = vmatpush1.msra.mxu0 0.0
  %7412 = vmatprep.subr.mxu0 0.0
  %7413 = vmatpush1.msra.mxu0 0.0
  %7414 = vmatprep.subr.mxu0 0.0
  %7415 = vmatpush1.msra.mxu0 0.0
  %7416 = vmatprep.subr.mxu0 0.0
  %7417 = vmatpush1.msra.mxu0 0.0
  %7418 = vmatprep.subr.mxu0 0.0
  %7419 = vmatpush1.msra.mxu0 0.0
  %7420 = vmatprep.subr.mxu0 0.0
  %7421 = vmatpush1.msra.mxu0 0.0
  %7422 = vmatprep.subr.mxu0 0.0
  %7423 = vmatpush1.msra.mxu0 0.0
  %7424 = vmatprep.subr.mxu0 0.0
  %7425 = vmatpush1.msra.mxu0 0.0
  %7426 = vmatprep.subr.mxu0 0.0
  %7427 = vmatpush1.msra.mxu0 0.0
  %7428 = vmatprep.mubr.f32.mxu0 0.0
  %v7429 = vand.u32 %v5904, 4294901760
  %v7430 = vsub.f32 %v5904, %v7429
  %v7431 = vand.u32 %v7430, 4294901760
  %7432 = vmatmul.mubr.f32.gmra.mrb[0].mxu0 %v7431
  %v7433 = vpop.f32.mrb[0].mxu0
  %v7434 = vadd.f32 %v7350, %v7433
  %v7435 = vpop.f32.mrb[0].mxu0
  %7436 = vmatprep.mubr.f32.mxu0 0.0
  %v7437 = vand.u32 %v5907, 4294901760
  %v7438 = vsub.f32 %v5907, %v7437
  %v7439 = vand.u32 %v7438, 4294901760
  %7440 = vmatmul.mubr.f32.gmra.mrb[0].mxu0 %v7439
  %v7441 = vpop.f32.mrb[0].mxu0
  %v7442 = vadd.f32 %v7357, %v7441
  %v7443 = vpop.f32.mrb[0].mxu0
  %7444 = vdwg.mxu0
  %7445 = vmatprep.subr.mxu0 0.0
  %v7446 = vand.u32 %v53, 4294901760
  %v7447 = vsub.f32 %v53, %v7446
  %v7448 = vand.u32 %v7447, 4294901760
  %7449 = vmatpush1.msra.mxu0 %v7448
  %7450 = vmatprep.subr.mxu0 0.0
  %v7451 = vand.u32 %v58, 4294901760
  %v7452 = vsub.f32 %v58, %v7451
  %v7453 = vand.u32 %v7452, 4294901760
  %7454 = vmatpush1.msra.mxu0 %v7453
  %7455 = vmatprep.subr.mxu0 0.0
  %v7456 = vand.u32 %v63, 4294901760
  %v7457 = vsub.f32 %v63, %v7456
  %v7458 = vand.u32 %v7457, 4294901760
  %7459 = vmatpush1.msra.mxu0 %v7458
  %7460 = vmatprep.subr.mxu0 0.0
  %v7461 = vand.u32 %v68, 4294901760
  %v7462 = vsub.f32 %v68, %v7461
  %v7463 = vand.u32 %v7462, 4294901760
  %7464 = vmatpush1.msra.mxu0 %v7463
  %7465 = vmatprep.subr.mxu0 0.0
  %7466 = vmatpush1.msra.mxu0 0.0
  %7467 = vmatprep.subr.mxu0 0.0
  %7468 = vmatpush1.msra.mxu0 0.0
  %7469 = vmatprep.subr.mxu0 0.0
  %7470 = vmatpush1.msra.mxu0 0.0
  %7471 = vmatprep.subr.mxu0 0.0
  %7472 = vmatpush1.msra.mxu0 0.0
  %7473 = vmatprep.subr.mxu0 0.0
  %7474 = vmatpush1.msra.mxu0 0.0
  %7475 = vmatprep.subr.mxu0 0.0
  %7476 = vmatpush1.msra.mxu0 0.0
  %7477 = vmatprep.subr.mxu0 0.0
  %7478 = vmatpush1.msra.mxu0 0.0
  %7479 = vmatprep.subr.mxu0 0.0
  %7480 = vmatpush1.msra.mxu0 0.0
  %7481 = vmatprep.subr.mxu0 0.0
  %7482 = vmatpush1.msra.mxu0 0.0
  %7483 = vmatprep.subr.mxu0 0.0
  %7484 = vmatpush1.msra.mxu0 0.0
  %7485 = vmatprep.subr.mxu0 0.0
  %7486 = vmatpush1.msra.mxu0 0.0
  %7487 = vmatprep.subr.mxu0 0.0
  %7488 = vmatpush1.msra.mxu0 0.0
  %7489 = vmatprep.subr.mxu0 0.0
  %7490 = vmatpush1.msra.mxu0 0.0
  %7491 = vmatprep.subr.mxu0 0.0
  %7492 = vmatpush1.msra.mxu0 0.0
  %7493 = vmatprep.subr.mxu0 0.0
  %7494 = vmatpush1.msra.mxu0 0.0
  %7495 = vmatprep.subr.mxu0 0.0
  %7496 = vmatpush1.msra.mxu0 0.0
  %7497 = vmatprep.subr.mxu0 0.0
  %7498 = vmatpush1.msra.mxu0 0.0
  %7499 = vmatprep.subr.mxu0 0.0
  %7500 = vmatpush1.msra.mxu0 0.0
  %7501 = vmatprep.subr.mxu0 0.0
  %7502 = vmatpush1.msra.mxu0 0.0
  %7503 = vmatprep.subr.mxu0 0.0
  %7504 = vmatpush1.msra.mxu0 0.0
  %7505 = vmatprep.subr.mxu0 0.0
  %7506 = vmatpush1.msra.mxu0 0.0
  %7507 = vmatprep.subr.mxu0 0.0
  %7508 = vmatpush1.msra.mxu0 0.0
  %7509 = vmatprep.subr.mxu0 0.0
  %7510 = vmatpush1.msra.mxu0 0.0
  %7511 = vmatprep.subr.mxu0 0.0
  %7512 = vmatpush1.msra.mxu0 0.0
  %7513 = vmatprep.subr.mxu0 0.0
  %7514 = vmatpush1.msra.mxu0 0.0
  %7515 = vmatprep.subr.mxu0 0.0
  %7516 = vmatpush1.msra.mxu0 0.0
  %7517 = vmatprep.subr.mxu0 0.0
  %7518 = vmatpush1.msra.mxu0 0.0
  %7519 = vmatprep.subr.mxu0 0.0
  %7520 = vmatpush1.msra.mxu0 0.0
  %7521 = vmatprep.mubr.f32.mxu0 0.0
  %v7522 = vand.u32 %v5904, 4294901760
  %7523 = vmatmul.mubr.f32.gmra.mrb[0].mxu0 %v7522
  %v7524 = vpop.f32.mrb[0].mxu0
  %v7525 = vadd.f32 %v7434, %v7524
  %v7526 = vpop.f32.mrb[0].mxu0
  %7527 = vmatprep.mubr.f32.mxu0 0.0
  %v7528 = vand.u32 %v5907, 4294901760
  %7529 = vmatmul.mubr.f32.gmra.mrb[0].mxu0 %v7528
  %v7530 = vpop.f32.mrb[0].mxu0
  %v7531 = vadd.f32 %v7442, %v7530
  %v7532 = vpop.f32.mrb[0].mxu0
  %7533 = vdwg.mxu0
  %7534 = vmatprep.subr.mxu0 0.0
  %v7535 = vand.u32 %v53, 4294901760
  %7536 = vmatpush1.msra.mxu0 %v7535
  %7537 = vmatprep.subr.mxu0 0.0
  %v7538 = vand.u32 %v58, 4294901760
  %7539 = vmatpush1.msra.mxu0 %v7538
  %7540 = vmatprep.subr.mxu0 0.0
  %v7541 = vand.u32 %v63, 4294901760
  %7542 = vmatpush1.msra.mxu0 %v7541
  %7543 = vmatprep.subr.mxu0 0.0
  %v7544 = vand.u32 %v68, 4294901760
  %7545 = vmatpush1.msra.mxu0 %v7544
  %7546 = vmatprep.subr.mxu0 0.0
  %7547 = vmatpush1.msra.mxu0 0.0
  %7548 = vmatprep.subr.mxu0 0.0
  %7549 = vmatpush1.msra.mxu0 0.0
  %7550 = vmatprep.subr.mxu0 0.0
  %7551 = vmatpush1.msra.mxu0 0.0
  %7552 = vmatprep.subr.mxu0 0.0
  %7553 = vmatpush1.msra.mxu0 0.0
  %7554 = vmatprep.subr.mxu0 0.0
  %7555 = vmatpush1.msra.mxu0 0.0
  %7556 = vmatprep.subr.mxu0 0.0
  %7557 = vmatpush1.msra.mxu0 0.0
  %7558 = vmatprep.subr.mxu0 0.0
  %7559 = vmatpush1.msra.mxu0 0.0
  %7560 = vmatprep.subr.mxu0 0.0
  %7561 = vmatpush1.msra.mxu0 0.0
  %7562 = vmatprep.subr.mxu0 0.0
  %7563 = vmatpush1.msra.mxu0 0.0
  %7564 = vmatprep.subr.mxu0 0.0
  %7565 = vmatpush1.msra.mxu0 0.0
  %7566 = vmatprep.subr.mxu0 0.0
  %7567 = vmatpush1.msra.mxu0 0.0
  %7568 = vmatprep.subr.mxu0 0.0
  %7569 = vmatpush1.msra.mxu0 0.0
  %7570 = vmatprep.subr.mxu0 0.0
  %7571 = vmatpush1.msra.mxu0 0.0
  %7572 = vmatprep.subr.mxu0 0.0
  %7573 = vmatpush1.msra.mxu0 0.0
  %7574 = vmatprep.subr.mxu0 0.0
  %7575 = vmatpush1.msra.mxu0 0.0
  %7576 = vmatprep.subr.mxu0 0.0
  %7577 = vmatpush1.msra.mxu0 0.0
  %7578 = vmatprep.subr.mxu0 0.0
  %7579 = vmatpush1.msra.mxu0 0.0
  %7580 = vmatprep.subr.mxu0 0.0
  %7581 = vmatpush1.msra.mxu0 0.0
  %7582 = vmatprep.subr.mxu0 0.0
  %7583 = vmatpush1.msra.mxu0 0.0
  %7584 = vmatprep.subr.mxu0 0.0
  %7585 = vmatpush1.msra.mxu0 0.0
  %7586 = vmatprep.subr.mxu0 0.0
  %7587 = vmatpush1.msra.mxu0 0.0
  %7588 = vmatprep.subr.mxu0 0.0
  %7589 = vmatpush1.msra.mxu0 0.0
  %7590 = vmatprep.subr.mxu0 0.0
  %7591 = vmatpush1.msra.mxu0 0.0
  %7592 = vmatprep.subr.mxu0 0.0
  %7593 = vmatpush1.msra.mxu0 0.0
  %7594 = vmatprep.subr.mxu0 0.0
  %7595 = vmatpush1.msra.mxu0 0.0
  %7596 = vmatprep.subr.mxu0 0.0
  %7597 = vmatpush1.msra.mxu0 0.0
  %7598 = vmatprep.subr.mxu0 0.0
  %7599 = vmatpush1.msra.mxu0 0.0
  %7600 = vmatprep.subr.mxu0 0.0
  %7601 = vmatpush1.msra.mxu0 0.0
  %7602 = vmatprep.mubr.f32.mxu0 0.0
  %v7603 = vand.u32 %v5904, 4294901760
  %7604 = vmatmul.mubr.f32.gmra.mrb[0].mxu0 %v7603
  %v7605 = vpop.f32.mrb[0].mxu0
  %v7606 = vadd.f32 %v7525, %v7605
  %v7607 = vpop.f32.mrb[0].mxu0
  %7608 = vmatprep.mubr.f32.mxu0 0.0
  %v7609 = vand.u32 %v5907, 4294901760
  %7610 = vmatmul.mubr.f32.gmra.mrb[0].mxu0 %v7609
  %v7611 = vpop.f32.mrb[0].mxu0
  %v7612 = vadd.f32 %v7531, %v7611
  %v7613 = vpop.f32.mrb[0].mxu0
  %7614 = vdwg.mxu0
  %v7616 = vrot.slane %v7076, 1
  %7617 = vrot.lane.b32.xlu0 %v7616, 64
  %v7618 = vpop.permute.xlu0 %7617
  %v7620 = vadd.f32 %v7076, %v7618
  %v7622 = vrot.slane %v7078, 4
  %7623 = vrot.lane.b32.xlu0 %v7622, 64
  %v7624 = vpop.permute.xlu0 %7623
  %v7626 = vadd.f32 %v7620, %v7624
  %v7628 = vrot.slane %v7606, 5
  %v7630 = vadd.f32 %v7626, %v7628
  %v7631 = vadd.f32 %v6487, %v7618
  %v7632 = vrot.slane %v7076, 2
  %v7634 = vadd.f32 %v7631, %v7632
  %v7635 = vadd.f32 %v7634, %v7624
  %v7636 = vrot.slane %v7078, 5
  %v7638 = vadd.f32 %v7635, %v7636
  %v7639 = vrot.slane %v7606, 6
  %7640 = vrot.lane.b32.xlu0 %v7639, 64
  %v7641 = vpop.permute.xlu0 %7640
  %v7643 = vadd.f32 %v7638, %v7641
  %v7645 = vrot.slane %v6487, 1
  %7646 = vrot.lane.b32.xlu0 %v7645, 64
  %v7647 = vpop.permute.xlu0 %7646
  %v7649 = vadd.f32 %v6485, %v7647
  %v7651 = vrot.slane %v7083, 4
  %7652 = vrot.lane.b32.xlu0 %v7651, 64
  %v7653 = vpop.permute.xlu0 %7652
  %v7655 = vadd.f32 %v7649, %v7653
  %v7656 = vrot.slane %v7083, 5
  %v7658 = vadd.f32 %v7655, %v7656
  %v7659 = vadd.f32 %v7658, %v7085
  %v7661 = vrot.slane %v7612, 1
  %7662 = vrot.lane.b32.xlu0 %v7661, 64
  %v7663 = vpop.permute.xlu0 %7662
  %v7665 = vadd.f32 %v7659, %v7663
  %v7667 = vrot.slane %v6485, 1
  %7668 = vrot.lane.b32.xlu0 %v7667, 64
  %v7669 = vpop.permute.xlu0 %7668
  %v7671 = vadd.f32 %v6485, %v7669
  %v7672 = vrot.slane %v6487, 2
  %v7674 = vadd.f32 %v7671, %v7672
  %v7676 = vrot.slane %v6493, 4
  %7677 = vrot.lane.b32.xlu0 %v7676, 64
  %v7678 = vpop.permute.xlu0 %7677
  %v7680 = vadd.f32 %v7674, %v7678
  %v7681 = vadd.f32 %v7680, %v7656
  %v7682 = vrot.slane %v7083, 6
  %7683 = vrot.lane.b32.xlu0 %v7682, 64
  %v7684 = vpop.permute.xlu0 %7683
  %v7686 = vadd.f32 %v7681, %v7684
  %v7687 = vadd.f32 %v7686, %v7085
  %v7689 = vrot.slane %v7085, 1
  %7690 = vrot.lane.b32.xlu0 %v7689, 64
  %v7691 = vpop.permute.xlu0 %7690
  %v7693 = vadd.f32 %v7687, %v7691
  %v7694 = vrot.slane %v7612, 2
  %v7696 = vadd.f32 %v7693, %v7694
  %v7698 = vrot.slane %v7643, 1
  %v7701 = vrot.slane %v7665, 4
  %7702 = vrot.lane.b32.xlu0 %v7701, 64
  %v7703 = vpop.permute.xlu0 %7702
  %v7706 = vrot.slane %v7696, 5
  %7707 = vrot.lane.b32.xlu0 %v7706, 64
  %v7708 = vpop.permute.xlu0 %7707
  %v7710 = vsel %vm1334, %v7630, %v7698
  %v7711 = vsel %vm1334, %v7703, %v7708
  %v7712 = vmul.f32 %v7710, %v4487
  %v7713 = vmul.f32 %v7711, %v4491
  %v7714 = vadd.f32 %v7712, %v4500
  %v7715 = vadd.f32 %v7713, %v4504
  %v7718 = vcombine.low %v7714, %v7715
  %v7720 = vunpack.c.l.s4 1966171168
  %v7721 = vunpack.c.0.s8 %v7720
  %v7722 = vlaneseq
  %v7723 = vshrl.u32 %v7722, 7
  %v7724 = vsub.s32 %v7721, %v7723
  %v7725 = vrot.slane %v7718, %v7724
  %v7727 = vunpack.c.l.s4 1966171168
  %v7728 = vunpack.c.0.s8 %v7727
  %v7729 = vlaneseq
  %v7730 = vshrl.u32 %v7729, 7
  %v7731 = vsub.s32 %v7728, %v7730
  %v7732 = vrot.slane %v7725, %v7731
  %s7734 = scalar_lea.vmem %s8, 2
  %7735 = vst.msk [vmem:[%s7734] sm:$0x3] %vm4530, %v7732
  %s7736 = scalar_lea.vmem %s1, 8
  %v7737 = vld [vmem:[%s7736] sm:$0x77]
  %v7739 = vlaneseq
  %v7740 = vshrl.u32 %v7739, 7
  %v7741 = vsub.s32 0, %v7740
  %v7742 = vrot.slane %v7737, %v7741
  %v7743 = vlaneseq
  %v7744 = vshrl.u32 %v7743, 7
  %v7745 = vsub.s32 4, %v7744
  %v7746 = vrot.slane %v7737, %v7745
  %v7749 = vlaneseq
  %v7750 = vshrl.u32 %v7749, 7
  %v7751 = vsub.s32 0, %v7750
  %v7752 = vrot.slane %v7742, %v7751
  %v7753 = vlaneseq
  %v7754 = vshrl.u32 %v7753, 7
  %v7755 = vsub.s32 0, %v7754
  %v7756 = vrot.slane %v7746, %v7755
  %v7757 = vmul.f32 %v4536, %v7752
  %v7758 = vmul.f32 %v4536, %v7756
  %v7759 = vadd.f32 %v4561, %v7757
  %v7760 = vadd.f32 %v4561, %v7758
  %v7761 = vlaneseq
  %v7762 = vshrl.u32 %v7761, 7
  %v7763 = vsub.s32 1, %v7762
  %v7764 = vrot.slane %v7737, %v7763
  %v7765 = vlaneseq
  %v7766 = vshrl.u32 %v7765, 7
  %v7767 = vsub.s32 5, %v7766
  %v7768 = vrot.slane %v7737, %v7767
  %v7771 = vlaneseq
  %v7772 = vshrl.u32 %v7771, 7
  %v7773 = vsub.s32 1, %v7772
  %v7774 = vrot.slane %v7764, %v7773
  %v7775 = vlaneseq
  %v7776 = vshrl.u32 %v7775, 7
  %v7777 = vsub.s32 1, %v7776
  %v7778 = vrot.slane %v7768, %v7777
  %v7779 = vmul.f32 %v4567, %v7774
  %v7780 = vmul.f32 %v4567, %v7778
  %v7781 = vadd.f32 %v7759, %v7779
  %v7782 = vadd.f32 %v7760, %v7780
  %v7783 = vlaneseq
  %v7784 = vshrl.u32 %v7783, 7
  %v7785 = vsub.s32 2, %v7784
  %v7786 = vrot.slane %v7737, %v7785
  %v7787 = vlaneseq
  %v7788 = vshrl.u32 %v7787, 7
  %v7789 = vsub.s32 6, %v7788
  %v7790 = vrot.slane %v7737, %v7789
  %v7793 = vlaneseq
  %v7794 = vshrl.u32 %v7793, 7
  %v7795 = vsub.s32 2, %v7794
  %v7796 = vrot.slane %v7786, %v7795
  %v7797 = vlaneseq
  %v7798 = vshrl.u32 %v7797, 7
  %v7799 = vsub.s32 2, %v7798
  %v7800 = vrot.slane %v7790, %v7799
  %v7801 = vmul.f32 %v4593, %v7796
  %v7802 = vmul.f32 %v4593, %v7800
  %v7803 = vadd.f32 %v7781, %v7801
  %v7804 = vadd.f32 %v7782, %v7802
  %s7805 = scalar_lea.vmem %s9, 16
  %7806 = vst [vmem:[%s7805] sm:$0x1f] %v7803
  %7807 = vst [vmem:[%s7805 + $0x8] sm:$0x1f] %v7804
  // Predicated region
  $region34: #{_lambda_.1} parent=0 // pred_check
    _
  $region35: #{_lambda_.1} parent=0 // pred_check_branch
    %7809 = sbr.rel (0) target = $region37
  $region36: #{_lambda_.1} parent=0 // pred_region
    _
  $region37: #{_lambda_.1} parent=0 // pred_fallthru
    _
  // Predicated region
  $region38: #{_lambda_.1} parent=0 // pred_check
    _
  $region39: #{_lambda_.1} parent=0 // pred_check_branch
    %7811 = sbr.rel (0) target = $region41
  $region40: #{_lambda_.1} parent=0 // pred_region
    _
  $region41: #{_lambda_.1} parent=0 // pred_fallthru
    _
  // Predicated region
  $region42: #{_lambda_.1} parent=0 // pred_check
    _
  $region43: #{_lambda_.1} parent=0 // pred_check_branch
    %7813 = sbr.rel (0) target = $region45
  $region44: #{_lambda_.1} parent=0 // pred_region
    _
  $region45: #{_lambda_.1} parent=0 // pred_fallthru
    _
  // Predicated region
  $region46: #{_lambda_.1} parent=0 // pred_check
    _
  $region47: #{_lambda_.1} parent=0 // pred_check_branch
    %7815 = sbr.rel (0) target = $region49
  $region48: #{_lambda_.1} parent=0 // pred_region
    _
  $region49: #{_lambda_.1} parent=0 // pred_fallthru
    _

</llo_original>
